<compile_context>
chip_gen: v7x
topology: tpu7x:2x2x1
jax: 0.10.0
libtpu: 0.0.40
codegen_flags: <defaults>
</compile_context>

<pallas_src>
import math
from functools import partial

import jax
import jax.numpy as jnp
from jax import lax
from jax.experimental import pallas as pl
from jax.experimental.pallas import tpu as pltpu


# ---------------------------------------------------------------------------
# Frame geometry (28x28 input, two valid 3x3 convs, 2x2 pool).
#   frame row r = row * 32 + col   (column stride padded 26 -> 32 for alignment)
# ---------------------------------------------------------------------------
_S = 32                  # frame column stride
_R1 = 26 * _S            # 832  conv1 frame rows / image (rows 0..25, cols 0..31)
_R2 = 24 * _S            # 768  conv2 frame rows / image
_CH = 256                # conv2 output chunk rows (3 chunks of 256 = 768)
_MP = 728                # pooled-window frame rows (max anchor 726, 8-aligned)
_K1 = 16                 # widened conv1 taps (3x5 patch = 15, padded to 16)
_K2 = 96                 # conv2 contraction after kj-folding (3 * 32)
_C1, _C2 = 32, 64
_NPOOL = 144             # 12*12 pooled positions
_FEAT = 9216             # 12*12*64


# ---------------------------------------------------------------------------
# Kernel 1: fused conv1 + ReLU + conv2 + ReLU + 2x2 max-pool (NIMG images/step)
# ---------------------------------------------------------------------------
def _conv_block_kernel(p_ref, w1_ref, b1_ref, w2_ref, b2_ref, sel_ref,
                       o_ref, y1_scr, acc_scr, *, nimg):
    for n in range(nimg):
        base = n * _R1

        # conv1 (widened, kj folded into lanes):  patches^T (16,832) contracted
        # with W1W (16,96) -> (832,96) f32; +bias, ReLU, cast bf16 into VMEM.
        y1 = lax.dot_general(p_ref[n], w1_ref[...],
                             dimension_numbers=(((0,), (0,)), ((), ())),
                             preferred_element_type=jnp.float32)
        y1_scr[base:base + _R1, :] = jnp.maximum(
            y1 + b1_ref[...], 0.0).astype(jnp.bfloat16)

        # conv2: 3 ki-taps (K=96, aligned sublane shifts 0/32/64), accumulated
        # as values per 256-row chunk; one fused store (+bias, ReLU) per chunk.
        for c in range(_R2 // _CH):
            r0 = base + c * _CH
            z = jnp.dot(y1_scr[r0:r0 + _CH, :], w2_ref[0],
                        preferred_element_type=jnp.float32)
            z = z + jnp.dot(y1_scr[r0 + _S:r0 + _S + _CH, :], w2_ref[1],
                            preferred_element_type=jnp.float32)
            z = z + jnp.dot(y1_scr[r0 + 2 * _S:r0 + 2 * _S + _CH, :], w2_ref[2],
                            preferred_element_type=jnp.float32)
            acc_scr[c * _CH:(c + 1) * _CH, :] = jnp.maximum(z + b2_ref[...], 0.0)

        # 2x2 max-pool: max of the 4 window corners (frame offsets 0,1,32,33),
        # cast to bf16, then two bf16 0/1 selector matmuls pick the 144 pool
        # anchors and pack two pooled positions per 128-lane output row.
        m = jnp.maximum(
            jnp.maximum(acc_scr[0:_MP, :], acc_scr[1:_MP + 1, :]),
            jnp.maximum(acc_scr[_S:_S + _MP, :],
                        acc_scr[_S + 1:_S + 1 + _MP, :])).astype(jnp.bfloat16)
        even = jnp.dot(sel_ref[0], m, preferred_element_type=jnp.float32)  # (72,64)
        odd = jnp.dot(sel_ref[1], m, preferred_element_type=jnp.float32)   # (72,64)
        o_ref[n] = jnp.concatenate([even, odd], axis=-1).astype(o_ref.dtype)


def conv_block(patches, w1w, b1w, w2k, b2, sel, *, nimg):
    B = patches.shape[0]
    assert B % nimg == 0
    steps = B // nimg
    flops = 2 * B * (_R1 * _K1 * _K2 + 3 * _R2 * _K2 * _C2 + 2 * 72 * _MP * _C2)
    bytes_accessed = (B * (_K1 * _R1 * 2 + 72 * 128 * 2)
                      + (_K1 * _K2 + 3 * _K2 * _C2 + 2 * 72 * _MP) * 2
                      + (_K2 + _C2) * 4)
    return pl.pallas_call(
        partial(_conv_block_kernel, nimg=nimg),
        out_shape=jax.ShapeDtypeStruct((B, 72, 128), jnp.bfloat16),
        grid_spec=pltpu.PrefetchScalarGridSpec(
            num_scalar_prefetch=0,
            grid=(steps,),
            in_specs=[
                pl.BlockSpec((nimg, _K1, _R1), lambda i: (i, 0, 0)),   # patches (bf16)
                pl.BlockSpec((_K1, _K2), lambda i: (0, 0)),            # w1w (resident)
                pl.BlockSpec((1, _K2), lambda i: (0, 0)),              # b1w (f32)
                pl.BlockSpec((3, _K2, _C2), lambda i: (0, 0, 0)),      # w2k (resident)
                pl.BlockSpec((1, _C2), lambda i: (0, 0)),              # b2 (f32)
                pl.BlockSpec((2, 72, _MP), lambda i: (0, 0, 0)),       # pool selectors
            ],
            out_specs=pl.BlockSpec((nimg, 72, 128), lambda i: (i, 0, 0)),
            scratch_shapes=[pltpu.VMEM((nimg * _R1, _K2), jnp.bfloat16),  # conv1 act
                            pltpu.VMEM((_R2, _C2), jnp.float32)],         # conv2 frame
        ),
        compiler_params=pltpu.CompilerParams(dimension_semantics=("parallel",)),
        cost_estimate=pl.CostEstimate(flops=flops, transcendentals=0,
                                      bytes_accessed=bytes_accessed),
    )(patches, w1w, b1w.reshape(1, _K2), w2k, b2.reshape(1, _C2), sel)


# ---------------------------------------------------------------------------
# Kernel 2: fused fc1 + ReLU + fc2 + log_softmax (row-tiled grid)
# ---------------------------------------------------------------------------
def _fc_head_kernel(x_ref, w1_ref, b1_ref, w2_ref, b2_ref, o_ref):
    # fc1: bf16 x bf16 on the MXU, f32 accumulation; bias/ReLU in f32.
    h = jnp.dot(x_ref[...], w1_ref[...], preferred_element_type=jnp.float32)
    h = jnp.maximum(h + b1_ref[...], 0.0)
    # dropout2 is identity at inference.
    y = jnp.dot(h, w2_ref[...], preferred_element_type=jnp.float32) + b2_ref[...]
    # log_softmax: class axis (N=10) is never tiled, so the reduction is local.
    y = y - jnp.max(y, axis=-1, keepdims=True)
    y = y - jnp.log(jnp.sum(jnp.exp(y), axis=-1, keepdims=True))
    o_ref[...] = y.astype(o_ref.dtype)


def fc_head(x, wfc1, bfc1, wfc2, bfc2, *, tile_m=256):
    # tile_m=256 is v5e-safe (scoped-VMEM default 16 MiB); 512 is better on
    # v6e / v7x at large batch.
    B, K = x.shape
    N1, N2 = wfc1.shape[1], wfc2.shape[1]
    tm = min(tile_m, B)
    grid = (pl.cdiv(B, tm),)
    flops = 2 * B * (K * N1 + N1 * N2)
    bytes_accessed = (B * K * x.dtype.itemsize + K * N1 * wfc1.dtype.itemsize
                      + (N1 + N1 * N2 + N2) * 4 + B * N2 * 4)
    return pl.pallas_call(
        _fc_head_kernel,
        out_shape=jax.ShapeDtypeStruct((B, N2), jnp.float32),
        grid_spec=pltpu.PrefetchScalarGridSpec(
            num_scalar_prefetch=0,
            grid=grid,
            in_specs=[
                pl.BlockSpec((tm, K), lambda i: (i, 0)),     # activation row tile
                pl.BlockSpec((K, N1), lambda i: (0, 0)),     # wfc1 (bf16, resident)
                pl.BlockSpec((1, N1), lambda i: (0, 0)),
                pl.BlockSpec((N1, N2), lambda i: (0, 0)),    # wfc2 (resident)
                pl.BlockSpec((1, N2), lambda i: (0, 0)),
            ],
            out_specs=pl.BlockSpec((tm, N2), lambda i: (i, 0)),
        ),
        compiler_params=pltpu.CompilerParams(dimension_semantics=("parallel",)),
        cost_estimate=pl.CostEstimate(flops=flops, transcendentals=11 * B,
                                      bytes_accessed=bytes_accessed),
    )(x, wfc1, bfc1.reshape(1, N1), wfc2, bfc2.reshape(1, N2))


# ---------------------------------------------------------------------------
# Glue (plain JAX): widened patch / weight construction, pool selectors
# ---------------------------------------------------------------------------
def _widened_conv1_patches(x):
    # x: [B, 28, 28] f32 -> [B, 16, 832] bf16 (lane-dense: 832 on the lane axis)
    # patch[b, i*5+j, row*32+col] = x[b, row+i, col+j]  (zero where col+j > 27).
    B = x.shape[0]
    xp = jnp.pad(x, ((0, 0), (0, 0), (0, 8)))          # width 28 -> 36
    taps = []
    for i in range(3):
        for j in range(5):
            taps.append(xp[:, i:i + 26, j:j + 32].reshape(B, _R1))
    p = jnp.stack(taps, axis=1)                        # [B, 15, 832]
    p = jnp.pad(p, ((0, 0), (0, 1), (0, 0)))           # [B, 16, 832]
    return p.astype(jnp.bfloat16)


def _widened_conv1_weights(w1, b1):
    # w1: [3,3,1,32] (HWIO) -> W1W[16,96]:  W1W[i*5 + kj + j2, 32*kj + c] = w1[i,j2,0,c]
    # so (patch @ W1W)[r, 32*kj + c] = conv1 pre-activation at (row, col+kj, c).
    w = jnp.zeros((_K1, _K2), jnp.float32)
    for kj in range(3):
        for i in range(3):
            for j2 in range(3):
                w = w.at[i * 5 + kj + j2, 32 * kj:32 * kj + 32].set(w1[i, j2, 0, :])
    b = jnp.tile(b1, 3)                                 # [96]
    return w.astype(jnp.bfloat16), b.astype(jnp.float32)


def _make_pool_select():
    # sel[parity, r, p] = 1 where p = 64*ph + 2*pw is the frame anchor of pooled
    # position q = 2*r + parity  (q = ph*12 + pw).  0/1 values are exact in bf16.
    q = jnp.arange(_NPOOL)
    p0 = 64 * (q // 12) + 2 * (q % 12)
    sel = (p0[:, None] == jnp.arange(_MP)[None, :]).astype(jnp.float32)   # (144,728)
    return jnp.stack([sel[0::2], sel[1::2]], axis=0).astype(jnp.bfloat16)  # (2,72,728)


def net_forward(x_nchw, params, *, fc_tile_m=256):
    B = x_nchw.shape[0]
    x = x_nchw[:, 0, :, :].astype(jnp.float32)          # [B, 28, 28] (1 channel)

    patches = _widened_conv1_patches(x)                 # [B, 16, 832] bf16
    w1w, b1w = _widened_conv1_weights(params["w1"], params["b1"])
    w2k = params["w2"].reshape(3, _K2, _C2).astype(jnp.bfloat16)   # (ki, 32*kj+cin, cout)
    sel = _make_pool_select()

    # Process 2 images per grid step when there is enough batch to both amortize
    # per-step pipeline overhead and still keep >=2 grid steps for v7x megacore.
    nimg = 2 if (B >= 4 and B % 2 == 0) else 1
    feat = conv_block(patches, w1w, b1w, w2k, params["b2"], sel, nimg=nimg)

    # dropout1: identity at inference.  Flatten is (h, w, c) ordered.
    xf = feat.reshape(B, _FEAT)                         # [B, 9216] bf16

    return fc_head(xf,
                   params["wfc1"].astype(jnp.bfloat16),
                   params["bfc1"],
                   params["wfc2"],
                   params["bfc2"],
                   tile_m=fc_tile_m)                    # [B, 10] f32


# ---------------------------------------------------------------------------
# Pure-JAX reference (same NHWC layout / flatten ordering)
# ---------------------------------------------------------------------------
def net_reference(x_nchw, params):
    x = jnp.transpose(x_nchw, (0, 2, 3, 1)).astype(jnp.float32)
    dn = ("NHWC", "HWIO", "NHWC")
    y = lax.conv_general_dilated(x, params["w1"], (1, 1), "VALID",
                                 dimension_numbers=dn,
                                 precision=lax.Precision.HIGHEST) + params["b1"]
    y = jnp.maximum(y, 0.0)
    y = lax.conv_general_dilated(y, params["w2"], (1, 1), "VALID",
                                 dimension_numbers=dn,
                                 precision=lax.Precision.HIGHEST) + params["b2"]
    y = jnp.maximum(y, 0.0)
    y = lax.reduce_window(y, -jnp.inf, lax.max, (1, 2, 2, 1), (1, 2, 2, 1), "VALID")
    y = y.reshape(y.shape[0], -1)
    y = jnp.maximum(jnp.dot(y, params["wfc1"], precision="highest") + params["bfc1"], 0.0)
    y = jnp.dot(y, params["wfc2"], precision="highest") + params["bfc2"]
    return jax.nn.log_softmax(y, axis=-1)


# ---------------------------------------------------------------------------
# Deterministic parameter init (shapes from Net.__init__)
# ---------------------------------------------------------------------------
def init_params(key):
    ks = jax.random.split(key, 8)
    f32 = jnp.float32
    return {
        "w1":   jax.random.normal(ks[0], (3, 3, 1, 32), f32) * (1.0 / 3.0),
        "b1":   jax.random.normal(ks[1], (32,), f32) * 0.1,
        "w2":   jax.random.normal(ks[2], (3, 3, 32, 64), f32) * (1.0 / math.sqrt(9 * 32)),
        "b2":   jax.random.normal(ks[3], (64,), f32) * 0.1,
        "wfc1": jax.random.normal(ks[4], (9216, 128), f32) * (1.0 / math.sqrt(9216.0)),
        "bfc1": jax.random.normal(ks[5], (128,), f32) * 0.1,
        "wfc2": jax.random.normal(ks[6], (128, 10), f32) * (1.0 / math.sqrt(128.0)),
        "bfc2": jax.random.normal(ks[7], (10,), f32) * 0.1,
    }


if __name__ == "__main__":
    key = jax.random.PRNGKey(0)
    pkey, xkey = jax.random.split(key)
    params = init_params(pkey)

    # MNIST-shaped input (required so the flatten gives 9216 = 64*12*12)
    x = jax.random.normal(xkey, (2, 1, 28, 28), jnp.float32)   # NCHW like PyTorch

    fwd = jax.jit(net_forward)
    out = jax.block_until_ready(fwd(x, params))
    ref = jax.block_until_ready(net_reference(x, params))

    assert out.shape == (2, 10), out.shape
    assert bool(jnp.all(jnp.isfinite(out)))
    # log_softmax property: each row exponentiates and sums to 1
    assert bool(jnp.allclose(jnp.sum(jnp.exp(out), axis=-1), 1.0, atol=1e-4))
    # match the pure-JAX f32 reference (bf16 MXU operands -> slightly looser tol)
    assert bool(jnp.allclose(out, ref, rtol=2e-2, atol=2e-2)), \
        float(jnp.max(jnp.abs(out - ref)))

    print("KERNEL_OK")
</pallas_src>

<mosaic_0001>
module attributes {stable_mosaic.version = 11 : i64} {
  func.func @_conv_block_kernel(%arg0: i32, %arg1: memref<1x16x832xbf16, #tpu.memory_space<vmem>>, %arg2: memref<16x96xbf16, #tpu.memory_space<vmem>>, %arg3: memref<1x96xf32, #tpu.memory_space<vmem>>, %arg4: memref<3x96x64xbf16, #tpu.memory_space<vmem>>, %arg5: memref<1x64xf32, #tpu.memory_space<vmem>>, %arg6: memref<2x72x728xbf16, #tpu.memory_space<vmem>>, %arg7: memref<1x72x128xbf16, #tpu.memory_space<vmem>>, %arg8: memref<832x96xbf16, #tpu.memory_space<vmem>>, %arg9: memref<768x64xf32, #tpu.memory_space<vmem>>) attributes {dimension_semantics = [#tpu.dimension_semantics<parallel>], iteration_bounds = array<i64: 2>, scalar_prefetch = 0 : i64, scratch_operands = 2 : i64, tpu.core_type = #tpu.core_type<tc>, window_params = [{transform_indices = @transform_0, window_bounds = array<i64: 1, 16, 832>}, {pipeline_mode = #tpu.pipeline_mode<synchronous>, transform_indices = @transform_1, window_bounds = array<i64: 16, 96>}, {pipeline_mode = #tpu.pipeline_mode<synchronous>, transform_indices = @transform_2, window_bounds = array<i64: 1, 96>}, {pipeline_mode = #tpu.pipeline_mode<synchronous>, transform_indices = @transform_3, window_bounds = array<i64: 3, 96, 64>}, {pipeline_mode = #tpu.pipeline_mode<synchronous>, transform_indices = @transform_4, window_bounds = array<i64: 1, 64>}, {pipeline_mode = #tpu.pipeline_mode<synchronous>, transform_indices = @transform_5, window_bounds = array<i64: 2, 72, 728>}, {transform_indices = @transform_6, window_bounds = array<i64: 1, 72, 128>}]} {
    %c0 = arith.constant 0 : index
    %c0_0 = arith.constant 0 : index
    %c0_1 = arith.constant 0 : index
    %0 = vector.load %arg1[%c0, %c0_0, %c0_1] : memref<1x16x832xbf16, #tpu.memory_space<vmem>>, vector<1x16x832xbf16>
    %1 = vector.shape_cast %0 : vector<1x16x832xbf16> to vector<16x832xbf16>
    %c0_2 = arith.constant 0 : index
    %c0_3 = arith.constant 0 : index
    %2 = vector.load %arg2[%c0_2, %c0_3] : memref<16x96xbf16, #tpu.memory_space<vmem>>, vector<16x96xbf16>
    %cst = arith.constant dense<0.000000e+00> : vector<832x96xf32>
    %3 = tpu.matmul %1, %2, %cst {dimension_numbers = #tpu.dot_dimension_numbers<[0], [0], [1], [1], [0, 1, 1, 1], [], []>} : vector<16x832xbf16>, vector<16x96xbf16>, vector<832x96xf32> -> vector<832x96xf32>
    %c0_4 = arith.constant 0 : index
    %c0_5 = arith.constant 0 : index
    %4 = vector.load %arg3[%c0_4, %c0_5] : memref<1x96xf32, #tpu.memory_space<vmem>>, vector<1x96xf32>
    %5 = vector.broadcast %4 : vector<1x96xf32> to vector<832x96xf32>
    %6 = arith.addf %3, %5 : vector<832x96xf32>
    %cst_6 = arith.constant 0.000000e+00 : f32
    %7 = vector.broadcast %cst_6 : f32 to vector<832x96xf32>
    %8 = arith.maximumf %6, %7 : vector<832x96xf32>
    %9 = arith.truncf %8 : vector<832x96xf32> to vector<832x96xbf16>
    %c0_7 = arith.constant 0 : index
    %c0_8 = arith.constant 0 : index
    %10 = vector.load %arg8[%c0_7, %c0_8] : memref<832x96xbf16, #tpu.memory_space<vmem>>, vector<832x96xbf16>
    tpu.vector_store %arg8[%c0_7, %c0_8], %9 {strides = array<i32>} : memref<832x96xbf16, #tpu.memory_space<vmem>>, vector<832x96xbf16>,
    %c0_9 = arith.constant 0 : index
    %c0_10 = arith.constant 0 : index
    %11 = vector.load %arg8[%c0_9, %c0_10] : memref<832x96xbf16, #tpu.memory_space<vmem>>, vector<256x96xbf16>
    %c0_11 = arith.constant 0 : index
    %c0_12 = arith.constant 0 : index
    %c0_13 = arith.constant 0 : index
    %12 = vector.load %arg4[%c0_11, %c0_12, %c0_13] : memref<3x96x64xbf16, #tpu.memory_space<vmem>>, vector<1x96x64xbf16>
    %13 = vector.shape_cast %12 : vector<1x96x64xbf16> to vector<96x64xbf16>
    %cst_14 = arith.constant dense<0.000000e+00> : vector<256x64xf32>
    %14 = tpu.matmul %11, %13, %cst_14 {dimension_numbers = #tpu.dot_dimension_numbers<[1], [0], [0], [1], [0, 0, 1, 1], [], []>} : vector<256x96xbf16>, vector<96x64xbf16>, vector<256x64xf32> -> vector<256x64xf32>
    %c32 = arith.constant 32 : index
    %c0_15 = arith.constant 0 : index
    %15 = vector.load %arg8[%c32, %c0_15] : memref<832x96xbf16, #tpu.memory_space<vmem>>, vector<256x96xbf16>
    %c1 = arith.constant 1 : index
    %c0_16 = arith.constant 0 : index
    %c0_17 = arith.constant 0 : index
    %16 = vector.load %arg4[%c1, %c0_16, %c0_17] : memref<3x96x64xbf16, #tpu.memory_space<vmem>>, vector<1x96x64xbf16>
    %17 = vector.shape_cast %16 : vector<1x96x64xbf16> to vector<96x64xbf16>
    %cst_18 = arith.constant dense<0.000000e+00> : vector<256x64xf32>
    %18 = tpu.matmul %15, %17, %cst_18 {dimension_numbers = #tpu.dot_dimension_numbers<[1], [0], [0], [1], [0, 0, 1, 1], [], []>} : vector<256x96xbf16>, vector<96x64xbf16>, vector<256x64xf32> -> vector<256x64xf32>
    %19 = arith.addf %14, %18 : vector<256x64xf32>
    %c64 = arith.constant 64 : index
    %c0_19 = arith.constant 0 : index
    %20 = vector.load %arg8[%c64, %c0_19] : memref<832x96xbf16, #tpu.memory_space<vmem>>, vector<256x96xbf16>
    %c2 = arith.constant 2 : index
    %c0_20 = arith.constant 0 : index
    %c0_21 = arith.constant 0 : index
    %21 = vector.load %arg4[%c2, %c0_20, %c0_21] : memref<3x96x64xbf16, #tpu.memory_space<vmem>>, vector<1x96x64xbf16>
    %22 = vector.shape_cast %21 : vector<1x96x64xbf16> to vector<96x64xbf16>
    %cst_22 = arith.constant dense<0.000000e+00> : vector<256x64xf32>
    %23 = tpu.matmul %20, %22, %cst_22 {dimension_numbers = #tpu.dot_dimension_numbers<[1], [0], [0], [1], [0, 0, 1, 1], [], []>} : vector<256x96xbf16>, vector<96x64xbf16>, vector<256x64xf32> -> vector<256x64xf32>
    %24 = arith.addf %19, %23 : vector<256x64xf32>
    %c0_23 = arith.constant 0 : index
    %c0_24 = arith.constant 0 : index
    %25 = vector.load %arg5[%c0_23, %c0_24] : memref<1x64xf32, #tpu.memory_space<vmem>>, vector<1x64xf32>
    %26 = vector.broadcast %25 : vector<1x64xf32> to vector<256x64xf32>
    %27 = arith.addf %24, %26 : vector<256x64xf32>
    %cst_25 = arith.constant 0.000000e+00 : f32
    %28 = vector.broadcast %cst_25 : f32 to vector<256x64xf32>
    %29 = arith.maximumf %27, %28 : vector<256x64xf32>
    %c0_26 = arith.constant 0 : index
    %c0_27 = arith.constant 0 : index
    %30 = vector.load %arg9[%c0_26, %c0_27] : memref<768x64xf32, #tpu.memory_space<vmem>>, vector<256x64xf32>
    tpu.vector_store %arg9[%c0_26, %c0_27], %29 {strides = array<i32>} : memref<768x64xf32, #tpu.memory_space<vmem>>, vector<256x64xf32>,
    %c256 = arith.constant 256 : index
    %c0_28 = arith.constant 0 : index
    %31 = vector.load %arg8[%c256, %c0_28] : memref<832x96xbf16, #tpu.memory_space<vmem>>, vector<256x96xbf16>
    %c0_29 = arith.constant 0 : index
    %c0_30 = arith.constant 0 : index
    %c0_31 = arith.constant 0 : index
    %32 = vector.load %arg4[%c0_29, %c0_30, %c0_31] : memref<3x96x64xbf16, #tpu.memory_space<vmem>>, vector<1x96x64xbf16>
    %33 = vector.shape_cast %32 : vector<1x96x64xbf16> to vector<96x64xbf16>
    %cst_32 = arith.constant dense<0.000000e+00> : vector<256x64xf32>
    %34 = tpu.matmul %31, %33, %cst_32 {dimension_numbers = #tpu.dot_dimension_numbers<[1], [0], [0], [1], [0, 0, 1, 1], [], []>} : vector<256x96xbf16>, vector<96x64xbf16>, vector<256x64xf32> -> vector<256x64xf32>
    %c288 = arith.constant 288 : index
    %c0_33 = arith.constant 0 : index
    %35 = vector.load %arg8[%c288, %c0_33] : memref<832x96xbf16, #tpu.memory_space<vmem>>, vector<256x96xbf16>
    %c1_34 = arith.constant 1 : index
    %c0_35 = arith.constant 0 : index
    %c0_36 = arith.constant 0 : index
    %36 = vector.load %arg4[%c1_34, %c0_35, %c0_36] : memref<3x96x64xbf16, #tpu.memory_space<vmem>>, vector<1x96x64xbf16>
    %37 = vector.shape_cast %36 : vector<1x96x64xbf16> to vector<96x64xbf16>
    %cst_37 = arith.constant dense<0.000000e+00> : vector<256x64xf32>
    %38 = tpu.matmul %35, %37, %cst_37 {dimension_numbers = #tpu.dot_dimension_numbers<[1], [0], [0], [1], [0, 0, 1, 1], [], []>} : vector<256x96xbf16>, vector<96x64xbf16>, vector<256x64xf32> -> vector<256x64xf32>
    %39 = arith.addf %34, %38 : vector<256x64xf32>
    %c320 = arith.constant 320 : index
    %c0_38 = arith.constant 0 : index
    %40 = vector.load %arg8[%c320, %c0_38] : memref<832x96xbf16, #tpu.memory_space<vmem>>, vector<256x96xbf16>
    %c2_39 = arith.constant 2 : index
    %c0_40 = arith.constant 0 : index
    %c0_41 = arith.constant 0 : index
    %41 = vector.load %arg4[%c2_39, %c0_40, %c0_41] : memref<3x96x64xbf16, #tpu.memory_space<vmem>>, vector<1x96x64xbf16>
    %42 = vector.shape_cast %41 : vector<1x96x64xbf16> to vector<96x64xbf16>
    %cst_42 = arith.constant dense<0.000000e+00> : vector<256x64xf32>
    %43 = tpu.matmul %40, %42, %cst_42 {dimension_numbers = #tpu.dot_dimension_numbers<[1], [0], [0], [1], [0, 0, 1, 1], [], []>} : vector<256x96xbf16>, vector<96x64xbf16>, vector<256x64xf32> -> vector<256x64xf32>
    %44 = arith.addf %39, %43 : vector<256x64xf32>
    %c0_43 = arith.constant 0 : index
    %c0_44 = arith.constant 0 : index
    %45 = vector.load %arg5[%c0_43, %c0_44] : memref<1x64xf32, #tpu.memory_space<vmem>>, vector<1x64xf32>
    %46 = vector.broadcast %45 : vector<1x64xf32> to vector<256x64xf32>
    %47 = arith.addf %44, %46 : vector<256x64xf32>
    %cst_45 = arith.constant 0.000000e+00 : f32
    %48 = vector.broadcast %cst_45 : f32 to vector<256x64xf32>
    %49 = arith.maximumf %47, %48 : vector<256x64xf32>
    %c256_46 = arith.constant 256 : index
    %c0_47 = arith.constant 0 : index
    %50 = vector.load %arg9[%c256_46, %c0_47] : memref<768x64xf32, #tpu.memory_space<vmem>>, vector<256x64xf32>
    tpu.vector_store %arg9[%c256_46, %c0_47], %49 {strides = array<i32>} : memref<768x64xf32, #tpu.memory_space<vmem>>, vector<256x64xf32>,
    %c512 = arith.constant 512 : index
    %c0_48 = arith.constant 0 : index
    %51 = vector.load %arg8[%c512, %c0_48] : memref<832x96xbf16, #tpu.memory_space<vmem>>, vector<256x96xbf16>
    %c0_49 = arith.constant 0 : index
    %c0_50 = arith.constant 0 : index
    %c0_51 = arith.constant 0 : index
    %52 = vector.load %arg4[%c0_49, %c0_50, %c0_51] : memref<3x96x64xbf16, #tpu.memory_space<vmem>>, vector<1x96x64xbf16>
    %53 = vector.shape_cast %52 : vector<1x96x64xbf16> to vector<96x64xbf16>
    %cst_52 = arith.constant dense<0.000000e+00> : vector<256x64xf32>
    %54 = tpu.matmul %51, %53, %cst_52 {dimension_numbers = #tpu.dot_dimension_numbers<[1], [0], [0], [1], [0, 0, 1, 1], [], []>} : vector<256x96xbf16>, vector<96x64xbf16>, vector<256x64xf32> -> vector<256x64xf32>
    %c544 = arith.constant 544 : index
    %c0_53 = arith.constant 0 : index
    %55 = vector.load %arg8[%c544, %c0_53] : memref<832x96xbf16, #tpu.memory_space<vmem>>, vector<256x96xbf16>
    %c1_54 = arith.constant 1 : index
    %c0_55 = arith.constant 0 : index
    %c0_56 = arith.constant 0 : index
    %56 = vector.load %arg4[%c1_54, %c0_55, %c0_56] : memref<3x96x64xbf16, #tpu.memory_space<vmem>>, vector<1x96x64xbf16>
    %57 = vector.shape_cast %56 : vector<1x96x64xbf16> to vector<96x64xbf16>
    %cst_57 = arith.constant dense<0.000000e+00> : vector<256x64xf32>
    %58 = tpu.matmul %55, %57, %cst_57 {dimension_numbers = #tpu.dot_dimension_numbers<[1], [0], [0], [1], [0, 0, 1, 1], [], []>} : vector<256x96xbf16>, vector<96x64xbf16>, vector<256x64xf32> -> vector<256x64xf32>
    %59 = arith.addf %54, %58 : vector<256x64xf32>
    %c576 = arith.constant 576 : index
    %c0_58 = arith.constant 0 : index
    %60 = vector.load %arg8[%c576, %c0_58] : memref<832x96xbf16, #tpu.memory_space<vmem>>, vector<256x96xbf16>
    %c2_59 = arith.constant 2 : index
    %c0_60 = arith.constant 0 : index
    %c0_61 = arith.constant 0 : index
    %61 = vector.load %arg4[%c2_59, %c0_60, %c0_61] : memref<3x96x64xbf16, #tpu.memory_space<vmem>>, vector<1x96x64xbf16>
    %62 = vector.shape_cast %61 : vector<1x96x64xbf16> to vector<96x64xbf16>
    %cst_62 = arith.constant dense<0.000000e+00> : vector<256x64xf32>
    %63 = tpu.matmul %60, %62, %cst_62 {dimension_numbers = #tpu.dot_dimension_numbers<[1], [0], [0], [1], [0, 0, 1, 1], [], []>} : vector<256x96xbf16>, vector<96x64xbf16>, vector<256x64xf32> -> vector<256x64xf32>
    %64 = arith.addf %59, %63 : vector<256x64xf32>
    %c0_63 = arith.constant 0 : index
    %c0_64 = arith.constant 0 : index
    %65 = vector.load %arg5[%c0_63, %c0_64] : memref<1x64xf32, #tpu.memory_space<vmem>>, vector<1x64xf32>
    %66 = vector.broadcast %65 : vector<1x64xf32> to vector<256x64xf32>
    %67 = arith.addf %64, %66 : vector<256x64xf32>
    %cst_65 = arith.constant 0.000000e+00 : f32
    %68 = vector.broadcast %cst_65 : f32 to vector<256x64xf32>
    %69 = arith.maximumf %67, %68 : vector<256x64xf32>
    %c512_66 = arith.constant 512 : index
    %c0_67 = arith.constant 0 : index
    %70 = vector.load %arg9[%c512_66, %c0_67] : memref<768x64xf32, #tpu.memory_space<vmem>>, vector<256x64xf32>
    tpu.vector_store %arg9[%c512_66, %c0_67], %69 {strides = array<i32>} : memref<768x64xf32, #tpu.memory_space<vmem>>, vector<256x64xf32>,
    %c0_68 = arith.constant 0 : index
    %c0_69 = arith.constant 0 : index
    %71 = vector.load %arg9[%c0_68, %c0_69] : memref<768x64xf32, #tpu.memory_space<vmem>>, vector<728x64xf32>
    %c1_70 = arith.constant 1 : index
    %c0_71 = arith.constant 0 : index
    %72 = vector.load %arg9[%c1_70, %c0_71] : memref<768x64xf32, #tpu.memory_space<vmem>>, vector<728x64xf32>
    %73 = arith.maximumf %71, %72 : vector<728x64xf32>
    %c32_72 = arith.constant 32 : index
    %c0_73 = arith.constant 0 : index
    %74 = vector.load %arg9[%c32_72, %c0_73] : memref<768x64xf32, #tpu.memory_space<vmem>>, vector<728x64xf32>
    %c33 = arith.constant 33 : index
    %c0_74 = arith.constant 0 : index
    %75 = vector.load %arg9[%c33, %c0_74] : memref<768x64xf32, #tpu.memory_space<vmem>>, vector<728x64xf32>
    %76 = arith.maximumf %74, %75 : vector<728x64xf32>
    %77 = arith.maximumf %73, %76 : vector<728x64xf32>
    %78 = arith.truncf %77 : vector<728x64xf32> to vector<728x64xbf16>
    %c0_75 = arith.constant 0 : index
    %c0_76 = arith.constant 0 : index
    %c0_77 = arith.constant 0 : index
    %79 = vector.load %arg6[%c0_75, %c0_76, %c0_77] : memref<2x72x728xbf16, #tpu.memory_space<vmem>>, vector<1x72x728xbf16>
    %80 = vector.shape_cast %79 : vector<1x72x728xbf16> to vector<72x728xbf16>
    %cst_78 = arith.constant dense<0.000000e+00> : vector<72x64xf32>
    %81 = tpu.matmul %80, %78, %cst_78 {dimension_numbers = #tpu.dot_dimension_numbers<[1], [0], [0], [1], [0, 0, 1, 1], [], []>} : vector<72x728xbf16>, vector<728x64xbf16>, vector<72x64xf32> -> vector<72x64xf32>
    %c1_79 = arith.constant 1 : index
    %c0_80 = arith.constant 0 : index
    %c0_81 = arith.constant 0 : index
    %82 = vector.load %arg6[%c1_79, %c0_80, %c0_81] : memref<2x72x728xbf16, #tpu.memory_space<vmem>>, vector<1x72x728xbf16>
    %83 = vector.shape_cast %82 : vector<1x72x728xbf16> to vector<72x728xbf16>
    %cst_82 = arith.constant dense<0.000000e+00> : vector<72x64xf32>
    %84 = tpu.matmul %83, %78, %cst_82 {dimension_numbers = #tpu.dot_dimension_numbers<[1], [0], [0], [1], [0, 0, 1, 1], [], []>} : vector<72x728xbf16>, vector<728x64xbf16>, vector<72x64xf32> -> vector<72x64xf32>
    %85 = tpu.concatenate %81, %84 in 1 : vector<72x64xf32>, vector<72x64xf32> -> vector<72x128xf32>
    %86 = arith.truncf %85 : vector<72x128xf32> to vector<72x128xbf16>
    %c0_83 = arith.constant 0 : index
    %c0_84 = arith.constant 0 : index
    %c0_85 = arith.constant 0 : index
    %87 = vector.load %arg7[%c0_83, %c0_84, %c0_85] : memref<1x72x128xbf16, #tpu.memory_space<vmem>>, vector<1x72x128xbf16>
    %88 = vector.shape_cast %87 : vector<1x72x128xbf16> to vector<72x128xbf16>
    %89 = vector.shape_cast %86 : vector<72x128xbf16> to vector<1x72x128xbf16>
    tpu.vector_store %arg7[%c0_83, %c0_84, %c0_85], %89 {strides = array<i32>} : memref<1x72x128xbf16, #tpu.memory_space<vmem>>, vector<1x72x128xbf16>,
    return
  }
  func.func @transform_0(%arg0: i32) -> (i32, i32, i32) {
    %c0_i32 = arith.constant 0 : i32
    %c0_i32_0 = arith.constant 0 : i32
    %c0_i32_1 = arith.constant 0 : i32
    return %arg0, %c0_i32, %c0_i32_0 : i32, i32, i32
  }
  func.func @transform_1(%arg0: i32) -> (i32, i32) {
    %c0_i32 = arith.constant 0 : i32
    %c0_i32_0 = arith.constant 0 : i32
    %c0_i32_1 = arith.constant 0 : i32
    return %c0_i32, %c0_i32_0 : i32, i32
  }
  func.func @transform_2(%arg0: i32) -> (i32, i32) {
    %c0_i32 = arith.constant 0 : i32
    %c0_i32_0 = arith.constant 0 : i32
    %c0_i32_1 = arith.constant 0 : i32
    return %c0_i32, %c0_i32_0 : i32, i32
  }
  func.func @transform_3(%arg0: i32) -> (i32, i32, i32) {
    %c0_i32 = arith.constant 0 : i32
    %c0_i32_0 = arith.constant 0 : i32
    %c0_i32_1 = arith.constant 0 : i32
    %c0_i32_2 = arith.constant 0 : i32
    return %c0_i32, %c0_i32_0, %c0_i32_1 : i32, i32, i32
  }
  func.func @transform_4(%arg0: i32) -> (i32, i32) {
    %c0_i32 = arith.constant 0 : i32
    %c0_i32_0 = arith.constant 0 : i32
    %c0_i32_1 = arith.constant 0 : i32
    return %c0_i32, %c0_i32_0 : i32, i32
  }
  func.func @transform_5(%arg0: i32) -> (i32, i32, i32) {
    %c0_i32 = arith.constant 0 : i32
    %c0_i32_0 = arith.constant 0 : i32
    %c0_i32_1 = arith.constant 0 : i32
    %c0_i32_2 = arith.constant 0 : i32
    return %c0_i32, %c0_i32_0, %c0_i32_1 : i32, i32, i32
  }
  func.func @transform_6(%arg0: i32) -> (i32, i32, i32) {
    %c0_i32 = arith.constant 0 : i32
    %c0_i32_0 = arith.constant 0 : i32
    %c0_i32_1 = arith.constant 0 : i32
    return %arg0, %c0_i32, %c0_i32_0 : i32, i32, i32
  }
}

module attributes {stable_mosaic.version = 11 : i64} {
  func.func @_fc_head_kernel(%arg0: i32, %arg1: memref<2x9216xbf16, #tpu.memory_space<vmem>>, %arg2: memref<9216x128xbf16, #tpu.memory_space<vmem>>, %arg3: memref<1x128xf32, #tpu.memory_space<vmem>>, %arg4: memref<128x10xf32, #tpu.memory_space<vmem>>, %arg5: memref<1x10xf32, #tpu.memory_space<vmem>>, %arg6: memref<2x10xf32, #tpu.memory_space<vmem>>) attributes {dimension_semantics = [#tpu.dimension_semantics<parallel>], iteration_bounds = array<i64: 1>, scalar_prefetch = 0 : i64, scratch_operands = 0 : i64, tpu.core_type = #tpu.core_type<tc>, window_params = [{transform_indices = @transform_0, window_bounds = array<i64: 2, 9216>}, {pipeline_mode = #tpu.pipeline_mode<synchronous>, transform_indices = @transform_1, window_bounds = array<i64: 9216, 128>}, {pipeline_mode = #tpu.pipeline_mode<synchronous>, transform_indices = @transform_2, window_bounds = array<i64: 1, 128>}, {pipeline_mode = #tpu.pipeline_mode<synchronous>, transform_indices = @transform_3, window_bounds = array<i64: 128, 10>}, {pipeline_mode = #tpu.pipeline_mode<synchronous>, transform_indices = @transform_4, window_bounds = array<i64: 1, 10>}, {transform_indices = @transform_5, window_bounds = array<i64: 2, 10>}]} {
    %c0 = arith.constant 0 : index
    %c0_0 = arith.constant 0 : index
    %0 = vector.load %arg1[%c0, %c0_0] : memref<2x9216xbf16, #tpu.memory_space<vmem>>, vector<2x9216xbf16>
    %c0_1 = arith.constant 0 : index
    %c0_2 = arith.constant 0 : index
    %1 = vector.load %arg2[%c0_1, %c0_2] : memref<9216x128xbf16, #tpu.memory_space<vmem>>, vector<9216x128xbf16>
    %cst = arith.constant dense<0.000000e+00> : vector<2x128xf32>
    %2 = tpu.matmul %0, %1, %cst {dimension_numbers = #tpu.dot_dimension_numbers<[1], [0], [0], [1], [0, 0, 1, 1], [], []>} : vector<2x9216xbf16>, vector<9216x128xbf16>, vector<2x128xf32> -> vector<2x128xf32>
    %c0_3 = arith.constant 0 : index
    %c0_4 = arith.constant 0 : index
    %3 = vector.load %arg3[%c0_3, %c0_4] : memref<1x128xf32, #tpu.memory_space<vmem>>, vector<1x128xf32>
    %4 = vector.broadcast %3 : vector<1x128xf32> to vector<2x128xf32>
    %5 = arith.addf %2, %4 : vector<2x128xf32>
    %cst_5 = arith.constant 0.000000e+00 : f32
    %6 = vector.broadcast %cst_5 : f32 to vector<2x128xf32>
    %7 = arith.maximumf %5, %6 : vector<2x128xf32>
    %c0_6 = arith.constant 0 : index
    %c0_7 = arith.constant 0 : index
    %8 = vector.load %arg4[%c0_6, %c0_7] : memref<128x10xf32, #tpu.memory_space<vmem>>, vector<128x10xf32>
    %cst_8 = arith.constant dense<0.000000e+00> : vector<2x10xf32>
    %9 = tpu.matmul %7, %8, %cst_8 {dimension_numbers = #tpu.dot_dimension_numbers<[1], [0], [0], [1], [0, 0, 1, 1], [], []>} : vector<2x128xf32>, vector<128x10xf32>, vector<2x10xf32> -> vector<2x10xf32>
    %c0_9 = arith.constant 0 : index
    %c0_10 = arith.constant 0 : index
    %10 = vector.load %arg5[%c0_9, %c0_10] : memref<1x10xf32, #tpu.memory_space<vmem>>, vector<1x10xf32>
    %11 = vector.broadcast %10 : vector<1x10xf32> to vector<2x10xf32>
    %12 = arith.addf %9, %11 : vector<2x10xf32>
    %cst_11 = arith.constant dense<0xFF800000> : vector<2xf32>
    %13 = vector.multi_reduction <maximumf>, %12, %cst_11 [1] : vector<2x10xf32> to vector<2xf32>
    %14 = vector.shape_cast %13 : vector<2xf32> to vector<2x1xf32>
    %15 = vector.broadcast %14 : vector<2x1xf32> to vector<2x10xf32>
    %16 = arith.subf %12, %15 : vector<2x10xf32>
    %17 = math.exp %16 : vector<2x10xf32>
    %cst_12 = arith.constant dense<0.000000e+00> : vector<2xf32>
    %18 = vector.multi_reduction <add>, %17, %cst_12 [1] : vector<2x10xf32> to vector<2xf32>
    %19 = vector.shape_cast %18 : vector<2xf32> to vector<2x1xf32>
    %20 = math.log %19 : vector<2x1xf32>
    %21 = vector.broadcast %20 : vector<2x1xf32> to vector<2x10xf32>
    %22 = arith.subf %16, %21 : vector<2x10xf32>
    %c0_13 = arith.constant 0 : index
    %c0_14 = arith.constant 0 : index
    %23 = vector.load %arg6[%c0_13, %c0_14] : memref<2x10xf32, #tpu.memory_space<vmem>>, vector<2x10xf32>
    tpu.vector_store %arg6[%c0_13, %c0_14], %22 {strides = array<i32>} : memref<2x10xf32, #tpu.memory_space<vmem>>, vector<2x10xf32>,
    return
  }
  func.func @transform_0(%arg0: i32) -> (i32, i32) {
    %c0_i32 = arith.constant 0 : i32
    %c0_i32_0 = arith.constant 0 : i32
    return %arg0, %c0_i32 : i32, i32
  }
  func.func @transform_1(%arg0: i32) -> (i32, i32) {
    %c0_i32 = arith.constant 0 : i32
    %c0_i32_0 = arith.constant 0 : i32
    %c0_i32_1 = arith.constant 0 : i32
    return %c0_i32, %c0_i32_0 : i32, i32
  }
  func.func @transform_2(%arg0: i32) -> (i32, i32) {
    %c0_i32 = arith.constant 0 : i32
    %c0_i32_0 = arith.constant 0 : i32
    %c0_i32_1 = arith.constant 0 : i32
    return %c0_i32, %c0_i32_0 : i32, i32
  }
  func.func @transform_3(%arg0: i32) -> (i32, i32) {
    %c0_i32 = arith.constant 0 : i32
    %c0_i32_0 = arith.constant 0 : i32
    %c0_i32_1 = arith.constant 0 : i32
    return %c0_i32, %c0_i32_0 : i32, i32
  }
  func.func @transform_4(%arg0: i32) -> (i32, i32) {
    %c0_i32 = arith.constant 0 : i32
    %c0_i32_0 = arith.constant 0 : i32
    %c0_i32_1 = arith.constant 0 : i32
    return %c0_i32, %c0_i32_0 : i32, i32
  }
  func.func @transform_5(%arg0: i32) -> (i32, i32) {
    %c0_i32 = arith.constant 0 : i32
    %c0_i32_0 = arith.constant 0 : i32
    return %arg0, %c0_i32 : i32, i32
  }
}

</mosaic_0001>

<llo_original>
// kernel: tile.9
$region0: #{tile.9}
  %s0 = inlined_call_operand.vmem [shape: f32[3,32], index: 0, kind: input, shape index: {}]
  %s1 = inlined_call_operand.vmem [shape: f32[1,96], index: 1, kind: output, shape index: {}]
  $region1: #{tile.9} parent=0
    #allocation0 [shape = 'u8[4096]{0}', space=vmem, size = 0x1000, scoped, tag = 'scoped mem for output reshape']
    #allocation1 [shape = 'u8[4096]{0}', space=vmem, size = 0x1000, scoped, tag = 'scoped mem for input reshape']
    %s3 = sshllo.u32 0, 4
    %v4 = vld [vmem:[%s0] sm:%s3]
    %5 = vst [vmem:[#allocation1] sm:%s3] %v4
    %v6 = vld [vmem:[#allocation1] sm:$0x1]
    %vm7 = vcmask 261120
    %8 = vst.msk [vmem:[#allocation0] sm:$0x1] %vm7, %v6
    %s9 = scalar_lea.vmem [#allocation1], 2
    %v10 = vld [vmem:[%s9] sm:$0x1]
    %11 = vrot.lane.b32.xlu0 %v10, 64
    %v12 = vpop.permute.xlu0 %11
    %vm13 = vcmask 785920
    %14 = vst.msk [vmem:[#allocation0] sm:$0x1] %vm13, %v12
    %s15 = scalar_lea.vmem [#allocation1], 1
    %v16 = vld [vmem:[%s15] sm:$0x1]
    %17 = vrot.lane.b32.xlu0 %v16, 32
    %v18 = vpop.permute.xlu0 %17
    %vm19 = vcmask 523520
    %20 = vst.msk [vmem:[#allocation0] sm:$0x1] %vm19, %v18
    %s22 = sshllo.u32 0, 1
    %v24 = vld [vmem:[#allocation0] sm:%s22]
    %s25 = sshllo.u32 0, 1
    %26 = vst [vmem:[%s1] sm:%s25] %v24

// kernel: tile.8
$region0: #{tile.8}
  #allocation2 [shape = 's32[1]{0}', space=sflag, size = 0x4, scoped, tag = 'scoped memory for tile.8']
  %s0 = inlined_call_operand.hbm [shape: f32[32], index: 0, kind: input, shape index: {}]
  %s1 = inlined_call_operand.vmem [shape: f32[3,32], index: 1, kind: output, shape index: {}]
  $region1: #{tile.8} parent=0
    #allocation0 [shape = 'u8[512]{0}', space=vmem, size = 0x400, scoped, tag = 'operand span for operand 0']
    #allocation1 [shape = 's32[1]{0}', space=sflag, size = 0x4, scoped, tag = 'scoped memory for tile.8']
    %2 = vsyncpa [#allocation1], 0
    // Predicated region
    $region2: #{tile.8} parent=1 // pred_check
      _
    $region3: #{tile.8} parent=1 // pred_check_branch
      %4 = sbr.rel (0) target = $region5
    $region4: #{tile.8} parent=1 // pred_region
      %s6 = ssub.s32 16, 16
      %7 = vsyncadd [#allocation1], %s6
      %s9 = sshll.u32 [#allocation0], 4
      %s10 = int_to_ptr.vmem [resolvable:$true] %s9
      %12 = dma.hbm_to_vmem [thread:$0]  %s0, 16, %s10, [#allocation1]
    $region5: #{tile.8} parent=1 // pred_fallthru
      _
    // Predicated region
    $region6: #{tile.8} parent=1 // pred_check
      _
    $region7: #{tile.8} parent=1 // pred_check_branch
      %14 = sbr.rel (0) target = $region9
    $region8: #{tile.8} parent=1 // pred_region
      %15 = dma.done [#allocation1], 16
    $region9: #{tile.8} parent=1 // pred_fallthru
      _
    %v16 = vld [vmem:[#allocation0] ss:$0 sm:$0xff]
    %17 = vst [vmem:[%s1] sm:$0xf] %v16
    %18 = vsyncpa [#allocation1], 1

// kernel: net_forward.2
$region0: #{net_forward.2}
  #allocation0 [shape = 'u32[]', space=smem, size = 0x4, offset = 0x4, fixed_abs, tag = 'smem constant byte address 0x4 - core index']
  #allocation1 [shape = 'u32[144,128]{1,0:T(1,128)}', space=vmem, size = 0x12000, scoped, tag = 'internal scratch']
  #allocation2 [shape = 'bf16[832,96]{1,0:T(16,128)(2,1)}', space=vmem, size = 0x34000, scoped, tag = 'scratch operand']
  #allocation3 [shape = 'f32[768,64]{1,0:T(8,128)}', space=vmem, size = 0x60000, scoped, tag = 'scratch operand']
  %s0 = inlined_call_operand.vmem [shape: bf16[2,16,832], index: 0, kind: input, shape index: {}]
  %s1 = inlined_call_operand.vmem [shape: bf16[16,96], index: 1, kind: input, shape index: {}]
  %s2 = inlined_call_operand.vmem [shape: f32[1,96], index: 2, kind: input, shape index: {}]
  %s3 = inlined_call_operand.vmem [shape: bf16[3,96,64], index: 3, kind: input, shape index: {}]
  %s4 = inlined_call_operand.hbm [shape: f32[1,64], index: 4, kind: input, shape index: {}]
  %s5 = inlined_call_operand.vmem [shape: bf16[2,72,728], index: 5, kind: input, shape index: {}]
  %s6 = inlined_call_operand.vmem [shape: bf16[2,72,128], index: 6, kind: output, shape index: {}]
  %s7 = sld [smem:[#allocation0]]
  $region61: #{net_forward.2} parent=0
    _
  %s9 = ssub.s32 1, %s7
  %s10 = scalar_select 0, %s9, %s7
  $region1: #{net_forward.2} parent=0
    #allocation4 [shape = 'u8[512]{0}', space=vmem, size = 0x400, scoped, tag = 'input window, operand 4, single buffered']
    #allocation5 [shape = 's32[2]{0}', space=sflag, size = 0x8, scoped, tag = 'scoped memory for net_forward.2']
    %11 = vsyncpa [#allocation5], 0
    loop: start=0, step=1, limit=4
    $region2: #{net_forward.2} parent=1 // loop_pre_header
      _
    $region3: #{net_forward.2} parent=1 // loop_header
      %s13 = sphi 0, %s17
      %p14 = scmp.ge.s32.totalorder %s13, 4
      %s23 = sphi 0, %s25
      %s26 = sphi 0, %s23
      %s27 = sphi 0, %s26
      %s43 = sphi 0, %s27
      %s47 = sphi 0, %s47
      %s49 = sphi 0, %s47
      %s50 = sphi 0, %s49
      %s64 = sphi 0, %s50
      %s68 = sphi 0, %s68
      %s70 = sphi 0, %s68
      %s71 = sphi 0, %s70
      %s85 = sphi 0, %s71
      %s89 = sphi 0, %s89
      %s91 = sphi 0, %s89
      %s92 = sphi 0, %s91
      %s106 = sphi 0, %s92
      %s110 = sphi 0, %s110
      %s112 = sphi 0, %s110
      %s113 = sphi 0, %s112
      %s127 = sphi 0, %s113
      %s131 = sphi 0, %s131
      %s133 = sphi 0, %s131
      %s134 = sphi 0, %s133
      %s148 = sphi 0, %s134
      %s154 = sphi 0, %s156
      %s157 = sphi 0, %s154
      %s158 = sphi 0, %s157
      %s174 = sphi 0, %s158
    $region4: #{net_forward.2} parent=1 // loop_header_branch
      %16 = sbr.rel (%p14) target = $region8
    $region5: #{net_forward.2} parent=1 // loop_body
      %s18 = ssub.s32 %s13, 1
      %s19 = ssub.s32 %s13, 2
      %s20 = sadd.s32 %s13, 1
      %s21 = ssub.s32 %s13, %s20
      %p22 = scmp.eq.s32.totalorder %s21, 0
      %s24 = sadd.s32 %s23, 1
      %s25 = scalar_select %p22, %s23, %s24
      %p28 = pneg %p22
      %p29 = scmp.eq.s32.totalorder %s13, 1
      %p30 = por %p28, %p29
      %p31 = scmp.ne.s32.totalorder %s23, %s26
      %p32 = scmp.eq.s32.totalorder %s13, 0
      %p33 = por %p31, %p32
      %p34 = scmp.ne.s32.totalorder %s23, %s26
      %p35 = scmp.eq.s32.totalorder %s18, 1
      %p36 = por %p34, %p35
      %p37 = scmp.ne.s32.totalorder %s26, %s27
      %p38 = scmp.eq.s32.totalorder %s18, 0
      %p39 = por %p37, %p38
      %p40 = scmp.ne.s32.totalorder %s26, %s27
      %p41 = scmp.eq.s32.totalorder %s19, 1
      %p42 = por %p40, %p41
      %p44 = scmp.ne.s32.totalorder %s27, %s43
      %p45 = scmp.eq.s32.totalorder %s19, 0
      %p46 = por %p44, %p45
      %s48 = sadd.s32 %s47, 1
      %p51 = scmp.eq.s32.totalorder %s13, 1
      %p52 = scmp.ne.s32.totalorder %s47, %s49
      %p53 = scmp.eq.s32.totalorder %s13, 0
      %p54 = por %p52, %p53
      %p55 = scmp.ne.s32.totalorder %s47, %s49
      %p56 = scmp.eq.s32.totalorder %s18, 1
      %p57 = por %p55, %p56
      %p58 = scmp.ne.s32.totalorder %s49, %s50
      %p59 = scmp.eq.s32.totalorder %s18, 0
      %p60 = por %p58, %p59
      %p61 = scmp.ne.s32.totalorder %s49, %s50
      %p62 = scmp.eq.s32.totalorder %s19, 1
      %p63 = por %p61, %p62
      %p65 = scmp.ne.s32.totalorder %s50, %s64
      %p66 = scmp.eq.s32.totalorder %s19, 0
      %p67 = por %p65, %p66
      %s69 = sadd.s32 %s68, 1
      %p72 = scmp.eq.s32.totalorder %s13, 1
      %p73 = scmp.ne.s32.totalorder %s68, %s70
      %p74 = scmp.eq.s32.totalorder %s13, 0
      %p75 = por %p73, %p74
      %p76 = scmp.ne.s32.totalorder %s68, %s70
      %p77 = scmp.eq.s32.totalorder %s18, 1
      %p78 = por %p76, %p77
      %p79 = scmp.ne.s32.totalorder %s70, %s71
      %p80 = scmp.eq.s32.totalorder %s18, 0
      %p81 = por %p79, %p80
      %p82 = scmp.ne.s32.totalorder %s70, %s71
      %p83 = scmp.eq.s32.totalorder %s19, 1
      %p84 = por %p82, %p83
      %p86 = scmp.ne.s32.totalorder %s71, %s85
      %p87 = scmp.eq.s32.totalorder %s19, 0
      %p88 = por %p86, %p87
      %s90 = sadd.s32 %s89, 1
      %p93 = scmp.eq.s32.totalorder %s13, 1
      %p94 = scmp.ne.s32.totalorder %s89, %s91
      %p95 = scmp.eq.s32.totalorder %s13, 0
      %p96 = por %p94, %p95
      %p97 = scmp.ne.s32.totalorder %s89, %s91
      %p98 = scmp.eq.s32.totalorder %s18, 1
      %p99 = por %p97, %p98
      %p100 = scmp.ne.s32.totalorder %s91, %s92
      %p101 = scmp.eq.s32.totalorder %s18, 0
      %p102 = por %p100, %p101
      %p103 = scmp.ne.s32.totalorder %s91, %s92
      %p104 = scmp.eq.s32.totalorder %s19, 1
      %p105 = por %p103, %p104
      %p107 = scmp.ne.s32.totalorder %s92, %s106
      %p108 = scmp.eq.s32.totalorder %s19, 0
      %p109 = por %p107, %p108
      %s111 = sadd.s32 %s110, 1
      %p114 = scmp.eq.s32.totalorder %s13, 1
      %p115 = scmp.ne.s32.totalorder %s110, %s112
      %p116 = scmp.eq.s32.totalorder %s13, 0
      %p117 = por %p115, %p116
      %p118 = scmp.ne.s32.totalorder %s110, %s112
      %p119 = scmp.eq.s32.totalorder %s18, 1
      %p120 = por %p118, %p119
      %p121 = scmp.ne.s32.totalorder %s112, %s113
      %p122 = scmp.eq.s32.totalorder %s18, 0
      %p123 = por %p121, %p122
      %p124 = scmp.ne.s32.totalorder %s112, %s113
      %p125 = scmp.eq.s32.totalorder %s19, 1
      %p126 = por %p124, %p125
      %p128 = scmp.ne.s32.totalorder %s113, %s127
      %p129 = scmp.eq.s32.totalorder %s19, 0
      %p130 = por %p128, %p129
      %s132 = sadd.s32 %s131, 1
      %p135 = scmp.eq.s32.totalorder %s13, 1
      %p136 = scmp.ne.s32.totalorder %s131, %s133
      %p137 = scmp.eq.s32.totalorder %s13, 0
      %p138 = por %p136, %p137
      %p139 = scmp.ne.s32.totalorder %s131, %s133
      %p140 = scmp.eq.s32.totalorder %s18, 1
      %p141 = por %p139, %p140
      %p142 = scmp.ne.s32.totalorder %s133, %s134
      %p143 = scmp.eq.s32.totalorder %s18, 0
      %p144 = por %p142, %p143
      %p145 = scmp.ne.s32.totalorder %s133, %s134
      %p146 = scmp.eq.s32.totalorder %s19, 1
      %p147 = por %p145, %p146
      %p149 = scmp.ne.s32.totalorder %s134, %s148
      %p150 = scmp.eq.s32.totalorder %s19, 0
      %p151 = por %p149, %p150
      %s152 = ssub.s32 %s13, %s20
      %p153 = scmp.eq.s32.totalorder %s152, 0
      %s155 = sadd.s32 %s154, 1
      %s156 = scalar_select %p153, %s154, %s155
      %p159 = pneg %p153
      %p160 = scmp.eq.s32.totalorder %s13, 1
      %p161 = por %p159, %p160
      %p162 = scmp.ne.s32.totalorder %s154, %s157
      %p163 = scmp.eq.s32.totalorder %s13, 0
      %p164 = por %p162, %p163
      %p165 = scmp.ne.s32.totalorder %s154, %s157
      %p166 = scmp.eq.s32.totalorder %s18, 1
      %p167 = por %p165, %p166
      %p168 = scmp.ne.s32.totalorder %s157, %s158
      %p169 = scmp.eq.s32.totalorder %s18, 0
      %p170 = por %p168, %p169
      %p171 = scmp.ne.s32.totalorder %s157, %s158
      %p172 = scmp.eq.s32.totalorder %s19, 1
      %p173 = por %p171, %p172
      %p175 = scmp.ne.s32.totalorder %s158, %s174
      %p176 = scmp.eq.s32.totalorder %s19, 0
      %p177 = por %p175, %p176
      %p178 = scmp.le.s32.totalorder 1, %s13
      %p179 = scmp.lt.s32.totalorder %s13, 3
      %p180 = pnand %p178, %p179
      %p181 = pneg %p180
      // Predicated region
      $region9: #{net_forward.2} parent=5 // pred_check
        _
      $region10: #{net_forward.2} parent=5 // pred_check_branch
        %183 = sbr.rel (%p180) target = $region12
      $region11: #{net_forward.2} parent=5 // pred_region
        %s184 = ssub.s32 %s13, 1
        // Predicated region
        $region13: #{net_forward.2} parent=11 // pred_check
          %p185 = pneg %p60
        $region14: #{net_forward.2} parent=11 // pred_check_branch
          %187 = sbr.rel (%p185) target = $region16
        $region15: #{net_forward.2} parent=11 // pred_region
          _
        $region16: #{net_forward.2} parent=11 // pred_fallthru
          _
        // Predicated region
        $region17: #{net_forward.2} parent=11 // pred_check
          %p188 = pneg %p81
        $region18: #{net_forward.2} parent=11 // pred_check_branch
          %190 = sbr.rel (%p188) target = $region20
        $region19: #{net_forward.2} parent=11 // pred_region
          _
        $region20: #{net_forward.2} parent=11 // pred_fallthru
          _
        // Predicated region
        $region21: #{net_forward.2} parent=11 // pred_check
          %p191 = pneg %p102
        $region22: #{net_forward.2} parent=11 // pred_check_branch
          %193 = sbr.rel (%p191) target = $region24
        $region23: #{net_forward.2} parent=11 // pred_region
          _
        $region24: #{net_forward.2} parent=11 // pred_fallthru
          _
        // Predicated region
        $region25: #{net_forward.2} parent=11 // pred_check
          %p194 = pneg %p123
        $region26: #{net_forward.2} parent=11 // pred_check_branch
          %196 = sbr.rel (%p194) target = $region28
        $region27: #{net_forward.2} parent=11 // pred_region
          %s198 = ssub.s32 16, 16
          %199 = vsyncadd [#allocation5], %s198
          %s201 = sshll.u32 [#allocation4], 4
          %s202 = int_to_ptr.vmem [resolvable:$true] %s201
          %204 = dma.hbm_to_vmem [thread:$0]  %s4, 16, %s202, [#allocation5]
        $region28: #{net_forward.2} parent=11 // pred_fallthru
          _
        // Predicated region
        $region29: #{net_forward.2} parent=11 // pred_check
          %p205 = pneg %p144
        $region30: #{net_forward.2} parent=11 // pred_check_branch
          %207 = sbr.rel (%p205) target = $region32
        $region31: #{net_forward.2} parent=11 // pred_region
          _
        $region32: #{net_forward.2} parent=11 // pred_fallthru
          _
      $region12: #{net_forward.2} parent=5 // pred_fallthru
        _
      %p208 = scmp.lt.s32.totalorder %s13, 2
      // Predicated region
      $region33: #{net_forward.2} parent=5 // pred_check
        %p209 = pneg %p208
      $region34: #{net_forward.2} parent=5 // pred_check_branch
        %211 = sbr.rel (%p209) target = $region36
      $region35: #{net_forward.2} parent=5 // pred_region
        // Predicated region
        $region37: #{net_forward.2} parent=35 // pred_check
          %p212 = pneg %p33
        $region38: #{net_forward.2} parent=35 // pred_check_branch
          %214 = sbr.rel (%p212) target = $region40
        $region39: #{net_forward.2} parent=35 // pred_region
          %p215 = scmp.lt.s32.totalorder %s13, 1
          %s216 = scalar_select %p215, %s13, 1
          %s217 = smul.addr %s216, 14
          %s218 = smul.addr %s217, 4
          %s219 = scalar_lea.vmem %s0, %s218
        $region40: #{net_forward.2} parent=35 // pred_fallthru
          _
      $region36: #{net_forward.2} parent=5 // pred_fallthru
        _
      %p220 = scmp.le.s32.totalorder 1, %s13
      %p221 = scmp.lt.s32.totalorder %s13, 3
      %p222 = pnand %p220, %p221
      %p223 = pneg %p222
      // Predicated region
      $region41: #{net_forward.2} parent=5 // pred_check
        _
      $region42: #{net_forward.2} parent=5 // pred_check_branch
        %225 = sbr.rel (%p222) target = $region44
      $region43: #{net_forward.2} parent=5 // pred_region
        %s226 = ssub.s32 %s13, 1
        // Predicated region
        $region45: #{net_forward.2} parent=43 // pred_check
          %p227 = pneg %p123
        $region46: #{net_forward.2} parent=43 // pred_check_branch
          %229 = sbr.rel (%p227) target = $region48
        $region47: #{net_forward.2} parent=43 // pred_region
          %230 = dma.done [#allocation5], 16
        $region48: #{net_forward.2} parent=43 // pred_fallthru
          _
        %p231 = scmp.lt.s32.totalorder %s18, 1
        %s232 = scalar_select %p231, %s18, 1
        %s233 = smul.addr %s232, 14
        %s234 = smul.addr %s233, 4
        %s235 = scalar_lea.vmem %s0, %s234
        %p236 = pneg %p39
        %p237 = pneg %p36
        %p238 = pneg %p60
        %p239 = pneg %p57
        %p240 = pneg %p81
        %p241 = pneg %p78
        %p242 = pneg %p102
        %p243 = pneg %p99
        %p244 = pneg %p123
        %p245 = pneg %p120
        %p246 = pneg %p144
        %p247 = pneg %p141
        %p248 = pneg %p170
        %p249 = pneg %p167
        %p250 = scmp.lt.s32.totalorder %s18, 1
        %s251 = scalar_select %p250, %s18, 1
        %s252 = smul.addr %s251, 9
        %s253 = smul.addr %s252, 4
        %s254 = scalar_lea.vmem %s6, %s253
        %p255 = scmp.lt.s32.totalorder %s18, 1
        %s256 = scalar_select %p255, %s18, 1
        %s257 = smul.addr %s256, 14
        %s258 = smul.addr %s257, 4
        %s259 = scalar_lea.vmem %s0, %s258
        %p260 = scmp.lt.s32.totalorder %s18, 1
        %s261 = scalar_select %p260, %s18, 1
        %s262 = smul.addr %s261, 9
        %s263 = smul.addr %s262, 4
        %s264 = scalar_lea.vmem %s6, %s263
        %v266 = vld [vmem:[%s259] sm:$0xff]
        %v267 = vld [vmem:[%s259 + $0x8] sm:$0xff]
        %v268 = vld [vmem:[%s259 + $0x10] sm:$0xff]
        %v269 = vld [vmem:[%s259 + $0x18] sm:$0xf]
        %v270 = vld [vmem:[%s259 + $0x1c] sm:$0xff]
        %v271 = vld [vmem:[%s259 + $0x24] sm:$0xff]
        %v272 = vld [vmem:[%s259 + $0x2c] sm:$0xff]
        %v273 = vld [vmem:[%s259 + $0x34] sm:$0xf]
        %v274 = vld [vmem:[%s1] sm:$0xf]
        %v275 = vld [vmem:[%s1 + $0x4] sm:$0xf]
        %v276 = vld [vmem:[%s2] sm:$0x1]
        %v278 = vlaneseq
        %v279 = vshrl.u32 %v278, 7
        %v280 = vsub.s32 0, %v279
        %v281 = vrot.slane %v276, %v280
        %v291 = vunpack.c.l.b16 %v266
        %v292 = vunpack.c.h.b16 %v266
        %v293 = vunpack.c.l.b16 %v267
        %v294 = vunpack.c.h.b16 %v267
        %v295 = vunpack.c.l.b16 %v268
        %v296 = vunpack.c.h.b16 %v268
        %v297 = vunpack.c.l.b16 %v269
        %v298 = vunpack.c.l.b16 %v270
        %v299 = vunpack.c.h.b16 %v270
        %v300 = vunpack.c.l.b16 %v271
        %v301 = vunpack.c.h.b16 %v271
        %v302 = vunpack.c.l.b16 %v272
        %v303 = vunpack.c.h.b16 %v272
        %v304 = vunpack.c.l.b16 %v273
        %v305 = vpack.c.b16 %v298, %v291
        %v306 = vpack.c.b16 %v299, %v292
        %v307 = vpack.c.b16 %v300, %v293
        %v308 = vpack.c.b16 %v301, %v294
        %v309 = vpack.c.b16 %v302, %v295
        %v310 = vpack.c.b16 %v303, %v296
        %v311 = vpack.c.b16 %v304, %v297
        %319 = vxpose.xlu0.c.b16.start [1/8] %v305, 128
        %320 = vxpose.xlu0.c.b16.cont [2/8] 0, 128
        %321 = vxpose.xlu0.c.b16.cont [3/8] 0, 128
        %322 = vxpose.xlu0.c.b16.cont [4/8] 0, 128
        %323 = vxpose.xlu0.c.b16.cont [5/8] 0, 128
        %324 = vxpose.xlu0.c.b16.cont [6/8] 0, 128
        %325 = vxpose.xlu0.c.b16.cont [7/8] 0, 128
        %326 = vxpose.xlu0.c.b16.end [8/8] 0, 128
        %v327 = vpop.trf.xlu0
        %v328 = vpop.trf.xlu0
        %v329 = vpop.trf.xlu0
        %v330 = vpop.trf.xlu0
        %v331 = vpop.trf.xlu0
        %v332 = vpop.trf.xlu0
        %v333 = vpop.trf.xlu0
        %v334 = vpop.trf.xlu0
        %335 = vxpose.xlu0.c.b16.start [1/8] %v306, 128
        %336 = vxpose.xlu0.c.b16.cont [2/8] 0, 128
        %337 = vxpose.xlu0.c.b16.cont [3/8] 0, 128
        %338 = vxpose.xlu0.c.b16.cont [4/8] 0, 128
        %339 = vxpose.xlu0.c.b16.cont [5/8] 0, 128
        %340 = vxpose.xlu0.c.b16.cont [6/8] 0, 128
        %341 = vxpose.xlu0.c.b16.cont [7/8] 0, 128
        %342 = vxpose.xlu0.c.b16.end [8/8] 0, 128
        %v343 = vpop.trf.xlu0
        %v344 = vpop.trf.xlu0
        %v345 = vpop.trf.xlu0
        %v346 = vpop.trf.xlu0
        %v347 = vpop.trf.xlu0
        %v348 = vpop.trf.xlu0
        %v349 = vpop.trf.xlu0
        %v350 = vpop.trf.xlu0
        %351 = vxpose.xlu0.c.b16.start [1/8] %v307, 128
        %352 = vxpose.xlu0.c.b16.cont [2/8] 0, 128
        %353 = vxpose.xlu0.c.b16.cont [3/8] 0, 128
        %354 = vxpose.xlu0.c.b16.cont [4/8] 0, 128
        %355 = vxpose.xlu0.c.b16.cont [5/8] 0, 128
        %356 = vxpose.xlu0.c.b16.cont [6/8] 0, 128
        %357 = vxpose.xlu0.c.b16.cont [7/8] 0, 128
        %358 = vxpose.xlu0.c.b16.end [8/8] 0, 128
        %v359 = vpop.trf.xlu0
        %v360 = vpop.trf.xlu0
        %v361 = vpop.trf.xlu0
        %v362 = vpop.trf.xlu0
        %v363 = vpop.trf.xlu0
        %v364 = vpop.trf.xlu0
        %v365 = vpop.trf.xlu0
        %v366 = vpop.trf.xlu0
        %367 = vxpose.xlu0.c.b16.start [1/8] %v308, 128
        %368 = vxpose.xlu0.c.b16.cont [2/8] 0, 128
        %369 = vxpose.xlu0.c.b16.cont [3/8] 0, 128
        %370 = vxpose.xlu0.c.b16.cont [4/8] 0, 128
        %371 = vxpose.xlu0.c.b16.cont [5/8] 0, 128
        %372 = vxpose.xlu0.c.b16.cont [6/8] 0, 128
        %373 = vxpose.xlu0.c.b16.cont [7/8] 0, 128
        %374 = vxpose.xlu0.c.b16.end [8/8] 0, 128
        %v375 = vpop.trf.xlu0
        %v376 = vpop.trf.xlu0
        %v377 = vpop.trf.xlu0
        %v378 = vpop.trf.xlu0
        %v379 = vpop.trf.xlu0
        %v380 = vpop.trf.xlu0
        %v381 = vpop.trf.xlu0
        %v382 = vpop.trf.xlu0
        %383 = vxpose.xlu0.c.b16.start [1/8] %v309, 128
        %384 = vxpose.xlu0.c.b16.cont [2/8] 0, 128
        %385 = vxpose.xlu0.c.b16.cont [3/8] 0, 128
        %386 = vxpose.xlu0.c.b16.cont [4/8] 0, 128
        %387 = vxpose.xlu0.c.b16.cont [5/8] 0, 128
        %388 = vxpose.xlu0.c.b16.cont [6/8] 0, 128
        %389 = vxpose.xlu0.c.b16.cont [7/8] 0, 128
        %390 = vxpose.xlu0.c.b16.end [8/8] 0, 128
        %v391 = vpop.trf.xlu0
        %v392 = vpop.trf.xlu0
        %v393 = vpop.trf.xlu0
        %v394 = vpop.trf.xlu0
        %v395 = vpop.trf.xlu0
        %v396 = vpop.trf.xlu0
        %v397 = vpop.trf.xlu0
        %v398 = vpop.trf.xlu0
        %399 = vxpose.xlu0.c.b16.start [1/8] %v310, 128
        %400 = vxpose.xlu0.c.b16.cont [2/8] 0, 128
        %401 = vxpose.xlu0.c.b16.cont [3/8] 0, 128
        %402 = vxpose.xlu0.c.b16.cont [4/8] 0, 128
        %403 = vxpose.xlu0.c.b16.cont [5/8] 0, 128
        %404 = vxpose.xlu0.c.b16.cont [6/8] 0, 128
        %405 = vxpose.xlu0.c.b16.cont [7/8] 0, 128
        %406 = vxpose.xlu0.c.b16.end [8/8] 0, 128
        %v407 = vpop.trf.xlu0
        %v408 = vpop.trf.xlu0
        %v409 = vpop.trf.xlu0
        %v410 = vpop.trf.xlu0
        %v411 = vpop.trf.xlu0
        %v412 = vpop.trf.xlu0
        %v413 = vpop.trf.xlu0
        %v414 = vpop.trf.xlu0
        %415 = vxpose.xlu0.c.b16.start [1/8] %v311, 128
        %416 = vxpose.xlu0.c.b16.cont [2/8] 0, 128
        %417 = vxpose.xlu0.c.b16.cont [3/8] 0, 128
        %418 = vxpose.xlu0.c.b16.cont [4/8] 0, 128
        %419 = vxpose.xlu0.c.b16.cont [5/8] 0, 128
        %420 = vxpose.xlu0.c.b16.cont [6/8] 0, 128
        %421 = vxpose.xlu0.c.b16.cont [7/8] 0, 128
        %422 = vxpose.xlu0.c.b16.end [8/8] 0, 128
        %v423 = vpop.trf.xlu0
        %v424 = vpop.trf.xlu0
        %v425 = vpop.trf.xlu0
        %v426 = vpop.trf.xlu0
        %v427 = vpop.trf.xlu0
        %v428 = vpop.trf.xlu0
        %v429 = vpop.trf.xlu0
        %v430 = vpop.trf.xlu0
        %v433 = vunpack.c.l.b16 %v274
        %v434 = vunpack.c.l.b16 %v275
        %v435 = vpack.c.b16 %v434, %v433
        %vm437 = vcmask 130048
        %v439 = vsel %vm437, %v327, 0
        %v442 = vsel %vm437, %v328, 0
        %v445 = vsel %vm437, %v329, 0
        %v448 = vsel %vm437, %v330, 0
        %v451 = vsel %vm437, %v331, 0
        %v454 = vsel %vm437, %v332, 0
        %v457 = vsel %vm437, %v333, 0
        %v460 = vsel %vm437, %v334, 0
        %v463 = vsel %vm437, %v343, 0
        %v466 = vsel %vm437, %v344, 0
        %v469 = vsel %vm437, %v345, 0
        %v472 = vsel %vm437, %v346, 0
        %v475 = vsel %vm437, %v347, 0
        %v478 = vsel %vm437, %v348, 0
        %v481 = vsel %vm437, %v349, 0
        %v484 = vsel %vm437, %v350, 0
        %v487 = vsel %vm437, %v359, 0
        %v490 = vsel %vm437, %v360, 0
        %v493 = vsel %vm437, %v361, 0
        %v496 = vsel %vm437, %v362, 0
        %v499 = vsel %vm437, %v363, 0
        %v502 = vsel %vm437, %v364, 0
        %v505 = vsel %vm437, %v365, 0
        %v508 = vsel %vm437, %v366, 0
        %v511 = vsel %vm437, %v375, 0
        %v514 = vsel %vm437, %v376, 0
        %v517 = vsel %vm437, %v377, 0
        %v520 = vsel %vm437, %v378, 0
        %v523 = vsel %vm437, %v379, 0
        %v526 = vsel %vm437, %v380, 0
        %v529 = vsel %vm437, %v381, 0
        %v532 = vsel %vm437, %v382, 0
        %v535 = vsel %vm437, %v391, 0
        %v538 = vsel %vm437, %v392, 0
        %v541 = vsel %vm437, %v393, 0
        %v544 = vsel %vm437, %v394, 0
        %v547 = vsel %vm437, %v395, 0
        %v550 = vsel %vm437, %v396, 0
        %v553 = vsel %vm437, %v397, 0
        %v556 = vsel %vm437, %v398, 0
        %v559 = vsel %vm437, %v407, 0
        %v562 = vsel %vm437, %v408, 0
        %v565 = vsel %vm437, %v409, 0
        %v568 = vsel %vm437, %v410, 0
        %v571 = vsel %vm437, %v411, 0
        %v574 = vsel %vm437, %v412, 0
        %v577 = vsel %vm437, %v413, 0
        %v580 = vsel %vm437, %v414, 0
        %v583 = vsel %vm437, %v423, 0
        %v586 = vsel %vm437, %v424, 0
        %v589 = vsel %vm437, %v425, 0
        %v592 = vsel %vm437, %v426, 0
        %594 = vmatprep.subr.bf16.mxu0 0
        %595 = vmatpush1.bf16.msra.mxu0 %v435
        %596 = vmatprep.subr.bf16.mxu0 0
        %597 = vmatpush1.bf16.msra.mxu0 0
        %598 = vmatprep.subr.bf16.mxu0 0
        %599 = vmatpush1.bf16.msra.mxu0 0
        %600 = vmatprep.subr.bf16.mxu0 0
        %601 = vmatpush1.bf16.msra.mxu0 0
        %602 = vmatprep.subr.bf16.mxu0 0
        %603 = vmatpush1.bf16.msra.mxu0 0
        %604 = vmatprep.subr.bf16.mxu0 0
        %605 = vmatpush1.bf16.msra.mxu0 0
        %606 = vmatprep.subr.bf16.mxu0 0
        %607 = vmatpush1.bf16.msra.mxu0 0
        %608 = vmatprep.subr.bf16.mxu0 0
        %609 = vmatpush1.bf16.msra.mxu0 0
        %610 = vmatprep.subr.bf16.mxu0 0
        %611 = vmatpush1.bf16.msra.mxu0 0
        %612 = vmatprep.subr.bf16.mxu0 0
        %613 = vmatpush1.bf16.msra.mxu0 0
        %614 = vmatprep.subr.bf16.mxu0 0
        %615 = vmatpush1.bf16.msra.mxu0 0
        %616 = vmatprep.subr.bf16.mxu0 0
        %617 = vmatpush1.bf16.msra.mxu0 0
        %618 = vmatprep.subr.bf16.mxu0 0
        %619 = vmatpush1.bf16.msra.mxu0 0
        %620 = vmatprep.subr.bf16.mxu0 0
        %621 = vmatpush1.bf16.msra.mxu0 0
        %622 = vmatprep.subr.bf16.mxu0 0
        %623 = vmatpush1.bf16.msra.mxu0 0
        %624 = vmatprep.subr.bf16.mxu0 0
        %625 = vmatpush1.bf16.msra.mxu0 0
        %626 = vmatprep.mubr.bf16.mxu0 0
        %627 = vmatmul.mubr.bf16.gmra.mrb[0].mxu0 %v439
        %v628 = vpop.f32.mrb[0].mxu0
        %v629 = vadd.f32 %v281, %v628
        %v630 = vpop.f32.mrb[0].mxu0
        %v631 = vpop.f32.mrb[0].mxu0
        %v632 = vadd.f32 %v281, %v631
        %v633 = vpop.f32.mrb[0].mxu0
        %634 = vmatprep.mubr.bf16.mxu0 0
        %635 = vmatmul.mubr.bf16.gmra.mrb[0].mxu0 %v442
        %v636 = vpop.f32.mrb[0].mxu0
        %v637 = vadd.f32 %v281, %v636
        %v638 = vpop.f32.mrb[0].mxu0
        %v639 = vpop.f32.mrb[0].mxu0
        %v640 = vadd.f32 %v281, %v639
        %v641 = vpop.f32.mrb[0].mxu0
        %642 = vmatprep.mubr.bf16.mxu0 0
        %643 = vmatmul.mubr.bf16.gmra.mrb[0].mxu0 %v445
        %v644 = vpop.f32.mrb[0].mxu0
        %v645 = vadd.f32 %v281, %v644
        %v646 = vpop.f32.mrb[0].mxu0
        %v647 = vpop.f32.mrb[0].mxu0
        %v648 = vadd.f32 %v281, %v647
        %v649 = vpop.f32.mrb[0].mxu0
        %650 = vmatprep.mubr.bf16.mxu0 0
        %651 = vmatmul.mubr.bf16.gmra.mrb[0].mxu0 %v448
        %v652 = vpop.f32.mrb[0].mxu0
        %v653 = vadd.f32 %v281, %v652
        %v654 = vpop.f32.mrb[0].mxu0
        %v655 = vpop.f32.mrb[0].mxu0
        %v656 = vadd.f32 %v281, %v655
        %v657 = vpop.f32.mrb[0].mxu0
        %658 = vmatprep.mubr.bf16.mxu0 0
        %659 = vmatmul.mubr.bf16.gmra.mrb[0].mxu0 %v451
        %v660 = vpop.f32.mrb[0].mxu0
        %v661 = vadd.f32 %v281, %v660
        %v662 = vpop.f32.mrb[0].mxu0
        %v663 = vpop.f32.mrb[0].mxu0
        %v664 = vadd.f32 %v281, %v663
        %v665 = vpop.f32.mrb[0].mxu0
        %666 = vmatprep.mubr.bf16.mxu0 0
        %667 = vmatmul.mubr.bf16.gmra.mrb[0].mxu0 %v454
        %v668 = vpop.f32.mrb[0].mxu0
        %v669 = vadd.f32 %v281, %v668
        %v670 = vpop.f32.mrb[0].mxu0
        %v671 = vpop.f32.mrb[0].mxu0
        %v672 = vadd.f32 %v281, %v671
        %v673 = vpop.f32.mrb[0].mxu0
        %674 = vmatprep.mubr.bf16.mxu0 0
        %675 = vmatmul.mubr.bf16.gmra.mrb[0].mxu0 %v457
        %v676 = vpop.f32.mrb[0].mxu0
        %v677 = vadd.f32 %v281, %v676
        %v678 = vpop.f32.mrb[0].mxu0
        %v679 = vpop.f32.mrb[0].mxu0
        %v680 = vadd.f32 %v281, %v679
        %v681 = vpop.f32.mrb[0].mxu0
        %682 = vmatprep.mubr.bf16.mxu0 0
        %683 = vmatmul.mubr.bf16.gmra.mrb[0].mxu0 %v460
        %v684 = vpop.f32.mrb[0].mxu0
        %v685 = vadd.f32 %v281, %v684
        %v686 = vpop.f32.mrb[0].mxu0
        %v687 = vpop.f32.mrb[0].mxu0
        %v688 = vadd.f32 %v281, %v687
        %v689 = vpop.f32.mrb[0].mxu0
        %690 = vmatprep.mubr.bf16.mxu0 0
        %691 = vmatmul.mubr.bf16.gmra.mrb[0].mxu0 %v463
        %v692 = vpop.f32.mrb[0].mxu0
        %v693 = vadd.f32 %v281, %v692
        %v694 = vpop.f32.mrb[0].mxu0
        %v695 = vpop.f32.mrb[0].mxu0
        %v696 = vadd.f32 %v281, %v695
        %v697 = vpop.f32.mrb[0].mxu0
        %698 = vmatprep.mubr.bf16.mxu0 0
        %699 = vmatmul.mubr.bf16.gmra.mrb[0].mxu0 %v466
        %v700 = vpop.f32.mrb[0].mxu0
        %v701 = vadd.f32 %v281, %v700
        %v702 = vpop.f32.mrb[0].mxu0
        %v703 = vpop.f32.mrb[0].mxu0
        %v704 = vadd.f32 %v281, %v703
        %v705 = vpop.f32.mrb[0].mxu0
        %706 = vmatprep.mubr.bf16.mxu0 0
        %707 = vmatmul.mubr.bf16.gmra.mrb[0].mxu0 %v469
        %v708 = vpop.f32.mrb[0].mxu0
        %v709 = vadd.f32 %v281, %v708
        %v710 = vpop.f32.mrb[0].mxu0
        %v711 = vpop.f32.mrb[0].mxu0
        %v712 = vadd.f32 %v281, %v711
        %v713 = vpop.f32.mrb[0].mxu0
        %714 = vmatprep.mubr.bf16.mxu0 0
        %715 = vmatmul.mubr.bf16.gmra.mrb[0].mxu0 %v472
        %v716 = vpop.f32.mrb[0].mxu0
        %v717 = vadd.f32 %v281, %v716
        %v718 = vpop.f32.mrb[0].mxu0
        %v719 = vpop.f32.mrb[0].mxu0
        %v720 = vadd.f32 %v281, %v719
        %v721 = vpop.f32.mrb[0].mxu0
        %722 = vmatprep.mubr.bf16.mxu0 0
        %723 = vmatmul.mubr.bf16.gmra.mrb[0].mxu0 %v475
        %v724 = vpop.f32.mrb[0].mxu0
        %v725 = vadd.f32 %v281, %v724
        %v726 = vpop.f32.mrb[0].mxu0
        %v727 = vpop.f32.mrb[0].mxu0
        %v728 = vadd.f32 %v281, %v727
        %v729 = vpop.f32.mrb[0].mxu0
        %730 = vmatprep.mubr.bf16.mxu0 0
        %731 = vmatmul.mubr.bf16.gmra.mrb[0].mxu0 %v478
        %v732 = vpop.f32.mrb[0].mxu0
        %v733 = vadd.f32 %v281, %v732
        %v734 = vpop.f32.mrb[0].mxu0
        %v735 = vpop.f32.mrb[0].mxu0
        %v736 = vadd.f32 %v281, %v735
        %v737 = vpop.f32.mrb[0].mxu0
        %738 = vmatprep.mubr.bf16.mxu0 0
        %739 = vmatmul.mubr.bf16.gmra.mrb[0].mxu0 %v481
        %v740 = vpop.f32.mrb[0].mxu0
        %v741 = vadd.f32 %v281, %v740
        %v742 = vpop.f32.mrb[0].mxu0
        %v743 = vpop.f32.mrb[0].mxu0
        %v744 = vadd.f32 %v281, %v743
        %v745 = vpop.f32.mrb[0].mxu0
        %746 = vmatprep.mubr.bf16.mxu0 0
        %747 = vmatmul.mubr.bf16.gmra.mrb[0].mxu0 %v484
        %v748 = vpop.f32.mrb[0].mxu0
        %v749 = vadd.f32 %v281, %v748
        %v750 = vpop.f32.mrb[0].mxu0
        %v751 = vpop.f32.mrb[0].mxu0
        %v752 = vadd.f32 %v281, %v751
        %v753 = vpop.f32.mrb[0].mxu0
        %754 = vmatprep.mubr.bf16.mxu0 0
        %755 = vmatmul.mubr.bf16.gmra.mrb[0].mxu0 %v487
        %v756 = vpop.f32.mrb[0].mxu0
        %v757 = vadd.f32 %v281, %v756
        %v758 = vpop.f32.mrb[0].mxu0
        %v759 = vpop.f32.mrb[0].mxu0
        %v760 = vadd.f32 %v281, %v759
        %v761 = vpop.f32.mrb[0].mxu0
        %762 = vmatprep.mubr.bf16.mxu0 0
        %763 = vmatmul.mubr.bf16.gmra.mrb[0].mxu0 %v490
        %v764 = vpop.f32.mrb[0].mxu0
        %v765 = vadd.f32 %v281, %v764
        %v766 = vpop.f32.mrb[0].mxu0
        %v767 = vpop.f32.mrb[0].mxu0
        %v768 = vadd.f32 %v281, %v767
        %v769 = vpop.f32.mrb[0].mxu0
        %770 = vmatprep.mubr.bf16.mxu0 0
        %771 = vmatmul.mubr.bf16.gmra.mrb[0].mxu0 %v493
        %v772 = vpop.f32.mrb[0].mxu0
        %v773 = vadd.f32 %v281, %v772
        %v774 = vpop.f32.mrb[0].mxu0
        %v775 = vpop.f32.mrb[0].mxu0
        %v776 = vadd.f32 %v281, %v775
        %v777 = vpop.f32.mrb[0].mxu0
        %778 = vmatprep.mubr.bf16.mxu0 0
        %779 = vmatmul.mubr.bf16.gmra.mrb[0].mxu0 %v496
        %v780 = vpop.f32.mrb[0].mxu0
        %v781 = vadd.f32 %v281, %v780
        %v782 = vpop.f32.mrb[0].mxu0
        %v783 = vpop.f32.mrb[0].mxu0
        %v784 = vadd.f32 %v281, %v783
        %v785 = vpop.f32.mrb[0].mxu0
        %786 = vmatprep.mubr.bf16.mxu0 0
        %787 = vmatmul.mubr.bf16.gmra.mrb[0].mxu0 %v499
        %v788 = vpop.f32.mrb[0].mxu0
        %v789 = vadd.f32 %v281, %v788
        %v790 = vpop.f32.mrb[0].mxu0
        %v791 = vpop.f32.mrb[0].mxu0
        %v792 = vadd.f32 %v281, %v791
        %v793 = vpop.f32.mrb[0].mxu0
        %794 = vmatprep.mubr.bf16.mxu0 0
        %795 = vmatmul.mubr.bf16.gmra.mrb[0].mxu0 %v502
        %v796 = vpop.f32.mrb[0].mxu0
        %v797 = vadd.f32 %v281, %v796
        %v798 = vpop.f32.mrb[0].mxu0
        %v799 = vpop.f32.mrb[0].mxu0
        %v800 = vadd.f32 %v281, %v799
        %v801 = vpop.f32.mrb[0].mxu0
        %802 = vmatprep.mubr.bf16.mxu0 0
        %803 = vmatmul.mubr.bf16.gmra.mrb[0].mxu0 %v505
        %v804 = vpop.f32.mrb[0].mxu0
        %v805 = vadd.f32 %v281, %v804
        %v806 = vpop.f32.mrb[0].mxu0
        %v807 = vpop.f32.mrb[0].mxu0
        %v808 = vadd.f32 %v281, %v807
        %v809 = vpop.f32.mrb[0].mxu0
        %810 = vmatprep.mubr.bf16.mxu0 0
        %811 = vmatmul.mubr.bf16.gmra.mrb[0].mxu0 %v508
        %v812 = vpop.f32.mrb[0].mxu0
        %v813 = vadd.f32 %v281, %v812
        %v814 = vpop.f32.mrb[0].mxu0
        %v815 = vpop.f32.mrb[0].mxu0
        %v816 = vadd.f32 %v281, %v815
        %v817 = vpop.f32.mrb[0].mxu0
        %818 = vmatprep.mubr.bf16.mxu0 0
        %819 = vmatmul.mubr.bf16.gmra.mrb[0].mxu0 %v511
        %v820 = vpop.f32.mrb[0].mxu0
        %v821 = vadd.f32 %v281, %v820
        %v822 = vpop.f32.mrb[0].mxu0
        %v823 = vpop.f32.mrb[0].mxu0
        %v824 = vadd.f32 %v281, %v823
        %v825 = vpop.f32.mrb[0].mxu0
        %826 = vmatprep.mubr.bf16.mxu0 0
        %827 = vmatmul.mubr.bf16.gmra.mrb[0].mxu0 %v514
        %v828 = vpop.f32.mrb[0].mxu0
        %v829 = vadd.f32 %v281, %v828
        %v830 = vpop.f32.mrb[0].mxu0
        %v831 = vpop.f32.mrb[0].mxu0
        %v832 = vadd.f32 %v281, %v831
        %v833 = vpop.f32.mrb[0].mxu0
        %834 = vmatprep.mubr.bf16.mxu0 0
        %835 = vmatmul.mubr.bf16.gmra.mrb[0].mxu0 %v517
        %v836 = vpop.f32.mrb[0].mxu0
        %v837 = vadd.f32 %v281, %v836
        %v838 = vpop.f32.mrb[0].mxu0
        %v839 = vpop.f32.mrb[0].mxu0
        %v840 = vadd.f32 %v281, %v839
        %v841 = vpop.f32.mrb[0].mxu0
        %842 = vmatprep.mubr.bf16.mxu0 0
        %843 = vmatmul.mubr.bf16.gmra.mrb[0].mxu0 %v520
        %v844 = vpop.f32.mrb[0].mxu0
        %v845 = vadd.f32 %v281, %v844
        %v846 = vpop.f32.mrb[0].mxu0
        %v847 = vpop.f32.mrb[0].mxu0
        %v848 = vadd.f32 %v281, %v847
        %v849 = vpop.f32.mrb[0].mxu0
        %850 = vmatprep.mubr.bf16.mxu0 0
        %851 = vmatmul.mubr.bf16.gmra.mrb[0].mxu0 %v523
        %v852 = vpop.f32.mrb[0].mxu0
        %v853 = vadd.f32 %v281, %v852
        %v854 = vpop.f32.mrb[0].mxu0
        %v855 = vpop.f32.mrb[0].mxu0
        %v856 = vadd.f32 %v281, %v855
        %v857 = vpop.f32.mrb[0].mxu0
        %858 = vmatprep.mubr.bf16.mxu0 0
        %859 = vmatmul.mubr.bf16.gmra.mrb[0].mxu0 %v526
        %v860 = vpop.f32.mrb[0].mxu0
        %v861 = vadd.f32 %v281, %v860
        %v862 = vpop.f32.mrb[0].mxu0
        %v863 = vpop.f32.mrb[0].mxu0
        %v864 = vadd.f32 %v281, %v863
        %v865 = vpop.f32.mrb[0].mxu0
        %866 = vmatprep.mubr.bf16.mxu0 0
        %867 = vmatmul.mubr.bf16.gmra.mrb[0].mxu0 %v529
        %v868 = vpop.f32.mrb[0].mxu0
        %v869 = vadd.f32 %v281, %v868
        %v870 = vpop.f32.mrb[0].mxu0
        %v871 = vpop.f32.mrb[0].mxu0
        %v872 = vadd.f32 %v281, %v871
        %v873 = vpop.f32.mrb[0].mxu0
        %874 = vmatprep.mubr.bf16.mxu0 0
        %875 = vmatmul.mubr.bf16.gmra.mrb[0].mxu0 %v532
        %v876 = vpop.f32.mrb[0].mxu0
        %v877 = vadd.f32 %v281, %v876
        %v878 = vpop.f32.mrb[0].mxu0
        %v879 = vpop.f32.mrb[0].mxu0
        %v880 = vadd.f32 %v281, %v879
        %v881 = vpop.f32.mrb[0].mxu0
        %882 = vmatprep.mubr.bf16.mxu0 0
        %883 = vmatmul.mubr.bf16.gmra.mrb[0].mxu0 %v535
        %v884 = vpop.f32.mrb[0].mxu0
        %v885 = vadd.f32 %v281, %v884
        %v886 = vpop.f32.mrb[0].mxu0
        %v887 = vpop.f32.mrb[0].mxu0
        %v888 = vadd.f32 %v281, %v887
        %v889 = vpop.f32.mrb[0].mxu0
        %890 = vmatprep.mubr.bf16.mxu0 0
        %891 = vmatmul.mubr.bf16.gmra.mrb[0].mxu0 %v538
        %v892 = vpop.f32.mrb[0].mxu0
        %v893 = vadd.f32 %v281, %v892
        %v894 = vpop.f32.mrb[0].mxu0
        %v895 = vpop.f32.mrb[0].mxu0
        %v896 = vadd.f32 %v281, %v895
        %v897 = vpop.f32.mrb[0].mxu0
        %898 = vmatprep.mubr.bf16.mxu0 0
        %899 = vmatmul.mubr.bf16.gmra.mrb[0].mxu0 %v541
        %v900 = vpop.f32.mrb[0].mxu0
        %v901 = vadd.f32 %v281, %v900
        %v902 = vpop.f32.mrb[0].mxu0
        %v903 = vpop.f32.mrb[0].mxu0
        %v904 = vadd.f32 %v281, %v903
        %v905 = vpop.f32.mrb[0].mxu0
        %906 = vmatprep.mubr.bf16.mxu0 0
        %907 = vmatmul.mubr.bf16.gmra.mrb[0].mxu0 %v544
        %v908 = vpop.f32.mrb[0].mxu0
        %v909 = vadd.f32 %v281, %v908
        %v910 = vpop.f32.mrb[0].mxu0
        %v911 = vpop.f32.mrb[0].mxu0
        %v912 = vadd.f32 %v281, %v911
        %v913 = vpop.f32.mrb[0].mxu0
        %914 = vmatprep.mubr.bf16.mxu0 0
        %915 = vmatmul.mubr.bf16.gmra.mrb[0].mxu0 %v547
        %v916 = vpop.f32.mrb[0].mxu0
        %v917 = vadd.f32 %v281, %v916
        %v918 = vpop.f32.mrb[0].mxu0
        %v919 = vpop.f32.mrb[0].mxu0
        %v920 = vadd.f32 %v281, %v919
        %v921 = vpop.f32.mrb[0].mxu0
        %922 = vmatprep.mubr.bf16.mxu0 0
        %923 = vmatmul.mubr.bf16.gmra.mrb[0].mxu0 %v550
        %v924 = vpop.f32.mrb[0].mxu0
        %v925 = vadd.f32 %v281, %v924
        %v926 = vpop.f32.mrb[0].mxu0
        %v927 = vpop.f32.mrb[0].mxu0
        %v928 = vadd.f32 %v281, %v927
        %v929 = vpop.f32.mrb[0].mxu0
        %930 = vmatprep.mubr.bf16.mxu0 0
        %931 = vmatmul.mubr.bf16.gmra.mrb[0].mxu0 %v553
        %v932 = vpop.f32.mrb[0].mxu0
        %v933 = vadd.f32 %v281, %v932
        %v934 = vpop.f32.mrb[0].mxu0
        %v935 = vpop.f32.mrb[0].mxu0
        %v936 = vadd.f32 %v281, %v935
        %v937 = vpop.f32.mrb[0].mxu0
        %938 = vmatprep.mubr.bf16.mxu0 0
        %939 = vmatmul.mubr.bf16.gmra.mrb[0].mxu0 %v556
        %v940 = vpop.f32.mrb[0].mxu0
        %v941 = vadd.f32 %v281, %v940
        %v942 = vpop.f32.mrb[0].mxu0
        %v943 = vpop.f32.mrb[0].mxu0
        %v944 = vadd.f32 %v281, %v943
        %v945 = vpop.f32.mrb[0].mxu0
        %946 = vmatprep.mubr.bf16.mxu0 0
        %947 = vmatmul.mubr.bf16.gmra.mrb[0].mxu0 %v559
        %v948 = vpop.f32.mrb[0].mxu0
        %v949 = vadd.f32 %v281, %v948
        %v950 = vpop.f32.mrb[0].mxu0
        %v951 = vpop.f32.mrb[0].mxu0
        %v952 = vadd.f32 %v281, %v951
        %v953 = vpop.f32.mrb[0].mxu0
        %954 = vmatprep.mubr.bf16.mxu0 0
        %955 = vmatmul.mubr.bf16.gmra.mrb[0].mxu0 %v562
        %v956 = vpop.f32.mrb[0].mxu0
        %v957 = vadd.f32 %v281, %v956
        %v958 = vpop.f32.mrb[0].mxu0
        %v959 = vpop.f32.mrb[0].mxu0
        %v960 = vadd.f32 %v281, %v959
        %v961 = vpop.f32.mrb[0].mxu0
        %962 = vmatprep.mubr.bf16.mxu0 0
        %963 = vmatmul.mubr.bf16.gmra.mrb[0].mxu0 %v565
        %v964 = vpop.f32.mrb[0].mxu0
        %v965 = vadd.f32 %v281, %v964
        %v966 = vpop.f32.mrb[0].mxu0
        %v967 = vpop.f32.mrb[0].mxu0
        %v968 = vadd.f32 %v281, %v967
        %v969 = vpop.f32.mrb[0].mxu0
        %970 = vmatprep.mubr.bf16.mxu0 0
        %971 = vmatmul.mubr.bf16.gmra.mrb[0].mxu0 %v568
        %v972 = vpop.f32.mrb[0].mxu0
        %v973 = vadd.f32 %v281, %v972
        %v974 = vpop.f32.mrb[0].mxu0
        %v975 = vpop.f32.mrb[0].mxu0
        %v976 = vadd.f32 %v281, %v975
        %v977 = vpop.f32.mrb[0].mxu0
        %978 = vmatprep.mubr.bf16.mxu0 0
        %979 = vmatmul.mubr.bf16.gmra.mrb[0].mxu0 %v571
        %v980 = vpop.f32.mrb[0].mxu0
        %v981 = vadd.f32 %v281, %v980
        %v982 = vpop.f32.mrb[0].mxu0
        %v983 = vpop.f32.mrb[0].mxu0
        %v984 = vadd.f32 %v281, %v983
        %v985 = vpop.f32.mrb[0].mxu0
        %986 = vmatprep.mubr.bf16.mxu0 0
        %987 = vmatmul.mubr.bf16.gmra.mrb[0].mxu0 %v574
        %v988 = vpop.f32.mrb[0].mxu0
        %v989 = vadd.f32 %v281, %v988
        %v990 = vpop.f32.mrb[0].mxu0
        %v991 = vpop.f32.mrb[0].mxu0
        %v992 = vadd.f32 %v281, %v991
        %v993 = vpop.f32.mrb[0].mxu0
        %994 = vmatprep.mubr.bf16.mxu0 0
        %995 = vmatmul.mubr.bf16.gmra.mrb[0].mxu0 %v577
        %v996 = vpop.f32.mrb[0].mxu0
        %v997 = vadd.f32 %v281, %v996
        %v998 = vpop.f32.mrb[0].mxu0
        %v999 = vpop.f32.mrb[0].mxu0
        %v1000 = vadd.f32 %v281, %v999
        %v1001 = vpop.f32.mrb[0].mxu0
        %1002 = vmatprep.mubr.bf16.mxu0 0
        %1003 = vmatmul.mubr.bf16.gmra.mrb[0].mxu0 %v580
        %v1004 = vpop.f32.mrb[0].mxu0
        %v1005 = vadd.f32 %v281, %v1004
        %v1006 = vpop.f32.mrb[0].mxu0
        %v1007 = vpop.f32.mrb[0].mxu0
        %v1008 = vadd.f32 %v281, %v1007
        %v1009 = vpop.f32.mrb[0].mxu0
        %1010 = vmatprep.mubr.bf16.mxu0 0
        %1011 = vmatmul.mubr.bf16.gmra.mrb[0].mxu0 %v583
        %v1012 = vpop.f32.mrb[0].mxu0
        %v1013 = vadd.f32 %v281, %v1012
        %v1014 = vpop.f32.mrb[0].mxu0
        %v1015 = vpop.f32.mrb[0].mxu0
        %v1016 = vadd.f32 %v281, %v1015
        %v1017 = vpop.f32.mrb[0].mxu0
        %1018 = vmatprep.mubr.bf16.mxu0 0
        %1019 = vmatmul.mubr.bf16.gmra.mrb[0].mxu0 %v586
        %v1020 = vpop.f32.mrb[0].mxu0
        %v1021 = vadd.f32 %v281, %v1020
        %v1022 = vpop.f32.mrb[0].mxu0
        %v1023 = vpop.f32.mrb[0].mxu0
        %v1024 = vadd.f32 %v281, %v1023
        %v1025 = vpop.f32.mrb[0].mxu0
        %1026 = vmatprep.mubr.bf16.mxu0 0
        %1027 = vmatmul.mubr.bf16.gmra.mrb[0].mxu0 %v589
        %v1028 = vpop.f32.mrb[0].mxu0
        %v1029 = vadd.f32 %v281, %v1028
        %v1030 = vpop.f32.mrb[0].mxu0
        %v1031 = vpop.f32.mrb[0].mxu0
        %v1032 = vadd.f32 %v281, %v1031
        %v1033 = vpop.f32.mrb[0].mxu0
        %1034 = vmatprep.mubr.bf16.mxu0 0
        %1035 = vmatmul.mubr.bf16.gmra.mrb[0].mxu0 %v592
        %v1036 = vpop.f32.mrb[0].mxu0
        %v1037 = vadd.f32 %v281, %v1036
        %v1038 = vpop.f32.mrb[0].mxu0
        %v1039 = vpop.f32.mrb[0].mxu0
        %v1040 = vadd.f32 %v281, %v1039
        %v1041 = vpop.f32.mrb[0].mxu0
        %1042 = vdwg.mxu0
        %v1043 = vmax.f32 %v629, 0.0
        %v1044 = vmax.f32 %v632, 0.0
        %v1045 = vmax.f32 %v637, 0.0
        %v1046 = vmax.f32 %v640, 0.0
        %v1047 = vmax.f32 %v645, 0.0
        %v1048 = vmax.f32 %v648, 0.0
        %v1049 = vmax.f32 %v653, 0.0
        %v1050 = vmax.f32 %v656, 0.0
        %v1051 = vmax.f32 %v661, 0.0
        %v1052 = vmax.f32 %v664, 0.0
        %v1053 = vmax.f32 %v669, 0.0
        %v1054 = vmax.f32 %v672, 0.0
        %v1055 = vmax.f32 %v677, 0.0
        %v1056 = vmax.f32 %v680, 0.0
        %v1057 = vmax.f32 %v685, 0.0
        %v1058 = vmax.f32 %v688, 0.0
        %v1059 = vmax.f32 %v693, 0.0
        %v1060 = vmax.f32 %v696, 0.0
        %v1061 = vmax.f32 %v701, 0.0
        %v1062 = vmax.f32 %v704, 0.0
        %v1063 = vmax.f32 %v709, 0.0
        %v1064 = vmax.f32 %v712, 0.0
        %v1065 = vmax.f32 %v717, 0.0
        %v1066 = vmax.f32 %v720, 0.0
        %v1067 = vmax.f32 %v725, 0.0
        %v1068 = vmax.f32 %v728, 0.0
        %v1069 = vmax.f32 %v733, 0.0
        %v1070 = vmax.f32 %v736, 0.0
        %v1071 = vmax.f32 %v741, 0.0
        %v1072 = vmax.f32 %v744, 0.0
        %v1073 = vmax.f32 %v749, 0.0
        %v1074 = vmax.f32 %v752, 0.0
        %v1075 = vmax.f32 %v757, 0.0
        %v1076 = vmax.f32 %v760, 0.0
        %v1077 = vmax.f32 %v765, 0.0
        %v1078 = vmax.f32 %v768, 0.0
        %v1079 = vmax.f32 %v773, 0.0
        %v1080 = vmax.f32 %v776, 0.0
        %v1081 = vmax.f32 %v781, 0.0
        %v1082 = vmax.f32 %v784, 0.0
        %v1083 = vmax.f32 %v789, 0.0
        %v1084 = vmax.f32 %v792, 0.0
        %v1085 = vmax.f32 %v797, 0.0
        %v1086 = vmax.f32 %v800, 0.0
        %v1087 = vmax.f32 %v805, 0.0
        %v1088 = vmax.f32 %v808, 0.0
        %v1089 = vmax.f32 %v813, 0.0
        %v1090 = vmax.f32 %v816, 0.0
        %v1091 = vmax.f32 %v821, 0.0
        %v1092 = vmax.f32 %v824, 0.0
        %v1093 = vmax.f32 %v829, 0.0
        %v1094 = vmax.f32 %v832, 0.0
        %v1095 = vmax.f32 %v837, 0.0
        %v1096 = vmax.f32 %v840, 0.0
        %v1097 = vmax.f32 %v845, 0.0
        %v1098 = vmax.f32 %v848, 0.0
        %v1099 = vmax.f32 %v853, 0.0
        %v1100 = vmax.f32 %v856, 0.0
        %v1101 = vmax.f32 %v861, 0.0
        %v1102 = vmax.f32 %v864, 0.0
        %v1103 = vmax.f32 %v869, 0.0
        %v1104 = vmax.f32 %v872, 0.0
        %v1105 = vmax.f32 %v877, 0.0
        %v1106 = vmax.f32 %v880, 0.0
        %v1107 = vmax.f32 %v885, 0.0
        %v1108 = vmax.f32 %v888, 0.0
        %v1109 = vmax.f32 %v893, 0.0
        %v1110 = vmax.f32 %v896, 0.0
        %v1111 = vmax.f32 %v901, 0.0
        %v1112 = vmax.f32 %v904, 0.0
        %v1113 = vmax.f32 %v909, 0.0
        %v1114 = vmax.f32 %v912, 0.0
        %v1115 = vmax.f32 %v917, 0.0
        %v1116 = vmax.f32 %v920, 0.0
        %v1117 = vmax.f32 %v925, 0.0
        %v1118 = vmax.f32 %v928, 0.0
        %v1119 = vmax.f32 %v933, 0.0
        %v1120 = vmax.f32 %v936, 0.0
        %v1121 = vmax.f32 %v941, 0.0
        %v1122 = vmax.f32 %v944, 0.0
        %v1123 = vmax.f32 %v949, 0.0
        %v1124 = vmax.f32 %v952, 0.0
        %v1125 = vmax.f32 %v957, 0.0
        %v1126 = vmax.f32 %v960, 0.0
        %v1127 = vmax.f32 %v965, 0.0
        %v1128 = vmax.f32 %v968, 0.0
        %v1129 = vmax.f32 %v973, 0.0
        %v1130 = vmax.f32 %v976, 0.0
        %v1131 = vmax.f32 %v981, 0.0
        %v1132 = vmax.f32 %v984, 0.0
        %v1133 = vmax.f32 %v989, 0.0
        %v1134 = vmax.f32 %v992, 0.0
        %v1135 = vmax.f32 %v997, 0.0
        %v1136 = vmax.f32 %v1000, 0.0
        %v1137 = vmax.f32 %v1005, 0.0
        %v1138 = vmax.f32 %v1008, 0.0
        %v1139 = vmax.f32 %v1013, 0.0
        %v1140 = vmax.f32 %v1016, 0.0
        %v1141 = vmax.f32 %v1021, 0.0
        %v1142 = vmax.f32 %v1024, 0.0
        %v1143 = vmax.f32 %v1029, 0.0
        %v1144 = vmax.f32 %v1032, 0.0
        %v1145 = vmax.f32 %v1037, 0.0
        %v1146 = vmax.f32 %v1040, 0.0
        %v1147 = vpack.c.bf16 %v1044, %v1043
        %v1148 = vpack.c.bf16 %v1046, %v1045
        %v1149 = vpack.c.bf16 %v1048, %v1047
        %v1150 = vpack.c.bf16 %v1050, %v1049
        %v1151 = vpack.c.bf16 %v1052, %v1051
        %v1152 = vpack.c.bf16 %v1054, %v1053
        %v1153 = vpack.c.bf16 %v1056, %v1055
        %v1154 = vpack.c.bf16 %v1058, %v1057
        %v1155 = vpack.c.bf16 %v1060, %v1059
        %v1156 = vpack.c.bf16 %v1062, %v1061
        %v1157 = vpack.c.bf16 %v1064, %v1063
        %v1158 = vpack.c.bf16 %v1066, %v1065
        %v1159 = vpack.c.bf16 %v1068, %v1067
        %v1160 = vpack.c.bf16 %v1070, %v1069
        %v1161 = vpack.c.bf16 %v1072, %v1071
        %v1162 = vpack.c.bf16 %v1074, %v1073
        %v1163 = vpack.c.bf16 %v1076, %v1075
        %v1164 = vpack.c.bf16 %v1078, %v1077
        %v1165 = vpack.c.bf16 %v1080, %v1079
        %v1166 = vpack.c.bf16 %v1082, %v1081
        %v1167 = vpack.c.bf16 %v1084, %v1083
        %v1168 = vpack.c.bf16 %v1086, %v1085
        %v1169 = vpack.c.bf16 %v1088, %v1087
        %v1170 = vpack.c.bf16 %v1090, %v1089
        %v1171 = vpack.c.bf16 %v1092, %v1091
        %v1172 = vpack.c.bf16 %v1094, %v1093
        %v1173 = vpack.c.bf16 %v1096, %v1095
        %v1174 = vpack.c.bf16 %v1098, %v1097
        %v1175 = vpack.c.bf16 %v1100, %v1099
        %v1176 = vpack.c.bf16 %v1102, %v1101
        %v1177 = vpack.c.bf16 %v1104, %v1103
        %v1178 = vpack.c.bf16 %v1106, %v1105
        %v1179 = vpack.c.bf16 %v1108, %v1107
        %v1180 = vpack.c.bf16 %v1110, %v1109
        %v1181 = vpack.c.bf16 %v1112, %v1111
        %v1182 = vpack.c.bf16 %v1114, %v1113
        %v1183 = vpack.c.bf16 %v1116, %v1115
        %v1184 = vpack.c.bf16 %v1118, %v1117
        %v1185 = vpack.c.bf16 %v1120, %v1119
        %v1186 = vpack.c.bf16 %v1122, %v1121
        %v1187 = vpack.c.bf16 %v1124, %v1123
        %v1188 = vpack.c.bf16 %v1126, %v1125
        %v1189 = vpack.c.bf16 %v1128, %v1127
        %v1190 = vpack.c.bf16 %v1130, %v1129
        %v1191 = vpack.c.bf16 %v1132, %v1131
        %v1192 = vpack.c.bf16 %v1134, %v1133
        %v1193 = vpack.c.bf16 %v1136, %v1135
        %v1194 = vpack.c.bf16 %v1138, %v1137
        %v1195 = vpack.c.bf16 %v1140, %v1139
        %v1196 = vpack.c.bf16 %v1142, %v1141
        %v1197 = vpack.c.bf16 %v1144, %v1143
        %v1198 = vpack.c.bf16 %v1146, %v1145
        %vm1199 = vcmask 785408
        %1200 = vst.msk [vmem:[#allocation2] sm:$0xff] %vm1199, %v1147
        %1201 = vst.msk [vmem:[#allocation2 + $0x8] sm:$0xff] %vm1199, %v1148
        %1202 = vst.msk [vmem:[#allocation2 + $0x10] sm:$0xff] %vm1199, %v1149
        %1203 = vst.msk [vmem:[#allocation2 + $0x18] sm:$0xff] %vm1199, %v1150
        %1204 = vst.msk [vmem:[#allocation2 + $0x20] sm:$0xff] %vm1199, %v1151
        %1205 = vst.msk [vmem:[#allocation2 + $0x28] sm:$0xff] %vm1199, %v1152
        %1206 = vst.msk [vmem:[#allocation2 + $0x30] sm:$0xff] %vm1199, %v1153
        %1207 = vst.msk [vmem:[#allocation2 + $0x38] sm:$0xff] %vm1199, %v1154
        %1208 = vst.msk [vmem:[#allocation2 + $0x40] sm:$0xff] %vm1199, %v1155
        %1209 = vst.msk [vmem:[#allocation2 + $0x48] sm:$0xff] %vm1199, %v1156
        %1210 = vst.msk [vmem:[#allocation2 + $0x50] sm:$0xff] %vm1199, %v1157
        %1211 = vst.msk [vmem:[#allocation2 + $0x58] sm:$0xff] %vm1199, %v1158
        %1212 = vst.msk [vmem:[#allocation2 + $0x60] sm:$0xff] %vm1199, %v1159
        %1213 = vst.msk [vmem:[#allocation2 + $0x68] sm:$0xff] %vm1199, %v1160
        %1214 = vst.msk [vmem:[#allocation2 + $0x70] sm:$0xff] %vm1199, %v1161
        %1215 = vst.msk [vmem:[#allocation2 + $0x78] sm:$0xff] %vm1199, %v1162
        %1216 = vst.msk [vmem:[#allocation2 + $0x80] sm:$0xff] %vm1199, %v1163
        %1217 = vst.msk [vmem:[#allocation2 + $0x88] sm:$0xff] %vm1199, %v1164
        %1218 = vst.msk [vmem:[#allocation2 + $0x90] sm:$0xff] %vm1199, %v1165
        %1219 = vst.msk [vmem:[#allocation2 + $0x98] sm:$0xff] %vm1199, %v1166
        %1220 = vst.msk [vmem:[#allocation2 + $0xa0] sm:$0xff] %vm1199, %v1167
        %1221 = vst.msk [vmem:[#allocation2 + $0xa8] sm:$0xff] %vm1199, %v1168
        %1222 = vst.msk [vmem:[#allocation2 + $0xb0] sm:$0xff] %vm1199, %v1169
        %1223 = vst.msk [vmem:[#allocation2 + $0xb8] sm:$0xff] %vm1199, %v1170
        %1224 = vst.msk [vmem:[#allocation2 + $0xc0] sm:$0xff] %vm1199, %v1171
        %1225 = vst.msk [vmem:[#allocation2 + $0xc8] sm:$0xff] %vm1199, %v1172
        %1226 = vst.msk [vmem:[#allocation2 + $0xd0] sm:$0xff] %vm1199, %v1173
        %1227 = vst.msk [vmem:[#allocation2 + $0xd8] sm:$0xff] %vm1199, %v1174
        %1228 = vst.msk [vmem:[#allocation2 + $0xe0] sm:$0xff] %vm1199, %v1175
        %1229 = vst.msk [vmem:[#allocation2 + $0xe8] sm:$0xff] %vm1199, %v1176
        %1230 = vst.msk [vmem:[#allocation2 + $0xf0] sm:$0xff] %vm1199, %v1177
        %1231 = vst.msk [vmem:[#allocation2 + $0xf8] sm:$0xff] %vm1199, %v1178
        %1232 = vst.msk [vmem:[#allocation2 + $0x100] sm:$0xff] %vm1199, %v1179
        %1233 = vst.msk [vmem:[#allocation2 + $0x108] sm:$0xff] %vm1199, %v1180
        %1234 = vst.msk [vmem:[#allocation2 + $0x110] sm:$0xff] %vm1199, %v1181
        %1235 = vst.msk [vmem:[#allocation2 + $0x118] sm:$0xff] %vm1199, %v1182
        %1236 = vst.msk [vmem:[#allocation2 + $0x120] sm:$0xff] %vm1199, %v1183
        %1237 = vst.msk [vmem:[#allocation2 + $0x128] sm:$0xff] %vm1199, %v1184
        %1238 = vst.msk [vmem:[#allocation2 + $0x130] sm:$0xff] %vm1199, %v1185
        %1239 = vst.msk [vmem:[#allocation2 + $0x138] sm:$0xff] %vm1199, %v1186
        %1240 = vst.msk [vmem:[#allocation2 + $0x140] sm:$0xff] %vm1199, %v1187
        %1241 = vst.msk [vmem:[#allocation2 + $0x148] sm:$0xff] %vm1199, %v1188
        %1242 = vst.msk [vmem:[#allocation2 + $0x150] sm:$0xff] %vm1199, %v1189
        %1243 = vst.msk [vmem:[#allocation2 + $0x158] sm:$0xff] %vm1199, %v1190
        %1244 = vst.msk [vmem:[#allocation2 + $0x160] sm:$0xff] %vm1199, %v1191
        %1245 = vst.msk [vmem:[#allocation2 + $0x168] sm:$0xff] %vm1199, %v1192
        %1246 = vst.msk [vmem:[#allocation2 + $0x170] sm:$0xff] %vm1199, %v1193
        %1247 = vst.msk [vmem:[#allocation2 + $0x178] sm:$0xff] %vm1199, %v1194
        %1248 = vst.msk [vmem:[#allocation2 + $0x180] sm:$0xff] %vm1199, %v1195
        %1249 = vst.msk [vmem:[#allocation2 + $0x188] sm:$0xff] %vm1199, %v1196
        %1250 = vst.msk [vmem:[#allocation2 + $0x190] sm:$0xff] %vm1199, %v1197
        %1251 = vst.msk [vmem:[#allocation2 + $0x198] sm:$0xff] %vm1199, %v1198
        %v1252 = vld [vmem:[#allocation2] sm:$0xff]
        %v1253 = vld [vmem:[#allocation2 + $0x8] sm:$0xff]
        %v1254 = vld [vmem:[#allocation2 + $0x10] sm:$0xff]
        %v1255 = vld [vmem:[#allocation2 + $0x18] sm:$0xff]
        %v1256 = vld [vmem:[#allocation2 + $0x20] sm:$0xff]
        %v1257 = vld [vmem:[#allocation2 + $0x28] sm:$0xff]
        %v1258 = vld [vmem:[#allocation2 + $0x30] sm:$0xff]
        %v1259 = vld [vmem:[#allocation2 + $0x38] sm:$0xff]
        %v1260 = vld [vmem:[#allocation2 + $0x40] sm:$0xff]
        %v1261 = vld [vmem:[#allocation2 + $0x48] sm:$0xff]
        %v1262 = vld [vmem:[#allocation2 + $0x50] sm:$0xff]
        %v1263 = vld [vmem:[#allocation2 + $0x58] sm:$0xff]
        %v1264 = vld [vmem:[#allocation2 + $0x60] sm:$0xff]
        %v1265 = vld [vmem:[#allocation2 + $0x68] sm:$0xff]
        %v1266 = vld [vmem:[#allocation2 + $0x70] sm:$0xff]
        %v1267 = vld [vmem:[#allocation2 + $0x78] sm:$0xff]
        %v1268 = vld [vmem:[%s3] sm:$0xf]
        %v1269 = vld [vmem:[%s3 + $0x4] sm:$0xf]
        %v1270 = vld [vmem:[%s3 + $0x8] sm:$0xf]
        %v1271 = vld [vmem:[%s3 + $0xc] sm:$0xf]
        %v1272 = vld [vmem:[%s3 + $0x10] sm:$0xf]
        %v1273 = vld [vmem:[%s3 + $0x14] sm:$0xf]
        %v1274 = vld [vmem:[%s3 + $0x18] sm:$0xf]
        %v1275 = vld [vmem:[%s3 + $0x1c] sm:$0xf]
        %v1276 = vld [vmem:[%s3 + $0x20] sm:$0xf]
        %v1277 = vld [vmem:[%s3 + $0x24] sm:$0xf]
        %v1278 = vld [vmem:[%s3 + $0x28] sm:$0xf]
        %v1279 = vld [vmem:[%s3 + $0x2c] sm:$0xf]
        %v1280 = vld [vmem:[#allocation2 + $0x80] sm:$0xff]
        %v1281 = vld [vmem:[#allocation2 + $0x88] sm:$0xff]
        %s1282 = scalar_lea.vmem %s3, 48
        %v1283 = vld [vmem:[%s1282] sm:$0xf]
        %v1284 = vld [vmem:[%s1282 + $0x4] sm:$0xf]
        %v1285 = vld [vmem:[%s1282 + $0x8] sm:$0xf]
        %v1286 = vld [vmem:[%s1282 + $0xc] sm:$0xf]
        %v1287 = vld [vmem:[%s1282 + $0x10] sm:$0xf]
        %v1288 = vld [vmem:[%s1282 + $0x14] sm:$0xf]
        %v1289 = vld [vmem:[%s1282 + $0x18] sm:$0xf]
        %v1290 = vld [vmem:[%s1282 + $0x1c] sm:$0xf]
        %v1291 = vld [vmem:[%s1282 + $0x20] sm:$0xf]
        %v1292 = vld [vmem:[%s1282 + $0x24] sm:$0xf]
        %v1293 = vld [vmem:[%s1282 + $0x28] sm:$0xf]
        %v1294 = vld [vmem:[%s1282 + $0x2c] sm:$0xf]
        %v1307 = vunpack.c.l.b16 %v1283
        %v1308 = vunpack.c.l.b16 %v1284
        %v1309 = vunpack.c.l.b16 %v1285
        %v1310 = vunpack.c.l.b16 %v1286
        %v1311 = vunpack.c.l.b16 %v1287
        %v1312 = vunpack.c.l.b16 %v1288
        %v1313 = vunpack.c.l.b16 %v1289
        %v1314 = vunpack.c.l.b16 %v1290
        %v1315 = vunpack.c.l.b16 %v1291
        %v1316 = vunpack.c.l.b16 %v1292
        %v1317 = vunpack.c.l.b16 %v1293
        %v1318 = vunpack.c.l.b16 %v1294
        %v1319 = vpack.c.b16 %v1308, %v1307
        %v1320 = vpack.c.b16 %v1310, %v1309
        %v1321 = vpack.c.b16 %v1312, %v1311
        %v1322 = vpack.c.b16 %v1314, %v1313
        %v1323 = vpack.c.b16 %v1316, %v1315
        %v1324 = vpack.c.b16 %v1318, %v1317
        %v1332 = vsel %vm1199, %v1254, 0
        %v1335 = vsel %vm1199, %v1255, 0
        %v1338 = vsel %vm1199, %v1256, 0
        %v1341 = vsel %vm1199, %v1257, 0
        %v1344 = vsel %vm1199, %v1258, 0
        %v1347 = vsel %vm1199, %v1259, 0
        %v1350 = vsel %vm1199, %v1260, 0
        %v1353 = vsel %vm1199, %v1261, 0
        %v1356 = vsel %vm1199, %v1262, 0
        %v1359 = vsel %vm1199, %v1263, 0
        %v1362 = vsel %vm1199, %v1264, 0
        %v1365 = vsel %vm1199, %v1265, 0
        %v1368 = vsel %vm1199, %v1266, 0
        %v1371 = vsel %vm1199, %v1267, 0
        %v1374 = vsel %vm1199, %v1280, 0
        %v1377 = vsel %vm1199, %v1281, 0
        %1379 = vmatprep.subr.bf16.mxu0 0
        %1380 = vmatpush1.bf16.msra.mxu0 %v1319
        %1381 = vmatprep.subr.bf16.mxu0 0
        %1382 = vmatpush1.bf16.msra.mxu0 %v1320
        %1383 = vmatprep.subr.bf16.mxu0 0
        %1384 = vmatpush1.bf16.msra.mxu0 %v1321
        %1385 = vmatprep.subr.bf16.mxu0 0
        %1386 = vmatpush1.bf16.msra.mxu0 %v1322
        %1387 = vmatprep.subr.bf16.mxu0 0
        %1388 = vmatpush1.bf16.msra.mxu0 %v1323
        %1389 = vmatprep.subr.bf16.mxu0 0
        %1390 = vmatpush1.bf16.msra.mxu0 %v1324
        %1391 = vmatprep.subr.bf16.mxu0 0
        %1392 = vmatpush1.bf16.msra.mxu0 0
        %1393 = vmatprep.subr.bf16.mxu0 0
        %1394 = vmatpush1.bf16.msra.mxu0 0
        %1395 = vmatprep.subr.bf16.mxu0 0
        %1396 = vmatpush1.bf16.msra.mxu0 0
        %1397 = vmatprep.subr.bf16.mxu0 0
        %1398 = vmatpush1.bf16.msra.mxu0 0
        %1399 = vmatprep.subr.bf16.mxu0 0
        %1400 = vmatpush1.bf16.msra.mxu0 0
        %1401 = vmatprep.subr.bf16.mxu0 0
        %1402 = vmatpush1.bf16.msra.mxu0 0
        %1403 = vmatprep.subr.bf16.mxu0 0
        %1404 = vmatpush1.bf16.msra.mxu0 0
        %1405 = vmatprep.subr.bf16.mxu0 0
        %1406 = vmatpush1.bf16.msra.mxu0 0
        %1407 = vmatprep.subr.bf16.mxu0 0
        %1408 = vmatpush1.bf16.msra.mxu0 0
        %1409 = vmatprep.subr.bf16.mxu0 0
        %1410 = vmatpush1.bf16.msra.mxu0 0
        %1411 = vmatprep.mubr.bf16.mxu0 0
        %1412 = vmatmul.mubr.bf16.gmra.mrb[0].mxu0 %v1332
        %v1413 = vpop.f32.mrb[0].mxu0
        %v1414 = vadd.f32 0.0, %v1413
        %v1415 = vpop.f32.mrb[0].mxu0
        %v1416 = vpop.f32.mrb[0].mxu0
        %v1417 = vadd.f32 0.0, %v1416
        %v1418 = vpop.f32.mrb[0].mxu0
        %1419 = vmatprep.mubr.bf16.mxu0 0
        %1420 = vmatmul.mubr.bf16.gmra.mrb[0].mxu0 %v1335
        %v1421 = vpop.f32.mrb[0].mxu0
        %v1422 = vadd.f32 0.0, %v1421
        %v1423 = vpop.f32.mrb[0].mxu0
        %v1424 = vpop.f32.mrb[0].mxu0
        %v1425 = vadd.f32 0.0, %v1424
        %v1426 = vpop.f32.mrb[0].mxu0
        %1427 = vmatprep.mubr.bf16.mxu0 0
        %1428 = vmatmul.mubr.bf16.gmra.mrb[0].mxu0 %v1338
        %v1429 = vpop.f32.mrb[0].mxu0
        %v1430 = vadd.f32 0.0, %v1429
        %v1431 = vpop.f32.mrb[0].mxu0
        %v1432 = vpop.f32.mrb[0].mxu0
        %v1433 = vadd.f32 0.0, %v1432
        %v1434 = vpop.f32.mrb[0].mxu0
        %1435 = vmatprep.mubr.bf16.mxu0 0
        %1436 = vmatmul.mubr.bf16.gmra.mrb[0].mxu0 %v1341
        %v1437 = vpop.f32.mrb[0].mxu0
        %v1438 = vadd.f32 0.0, %v1437
        %v1439 = vpop.f32.mrb[0].mxu0
        %v1440 = vpop.f32.mrb[0].mxu0
        %v1441 = vadd.f32 0.0, %v1440
        %v1442 = vpop.f32.mrb[0].mxu0
        %1443 = vmatprep.mubr.bf16.mxu0 0
        %1444 = vmatmul.mubr.bf16.gmra.mrb[0].mxu0 %v1344
        %v1445 = vpop.f32.mrb[0].mxu0
        %v1446 = vadd.f32 0.0, %v1445
        %v1447 = vpop.f32.mrb[0].mxu0
        %v1448 = vpop.f32.mrb[0].mxu0
        %v1449 = vadd.f32 0.0, %v1448
        %v1450 = vpop.f32.mrb[0].mxu0
        %1451 = vmatprep.mubr.bf16.mxu0 0
        %1452 = vmatmul.mubr.bf16.gmra.mrb[0].mxu0 %v1347
        %v1453 = vpop.f32.mrb[0].mxu0
        %v1454 = vadd.f32 0.0, %v1453
        %v1455 = vpop.f32.mrb[0].mxu0
        %v1456 = vpop.f32.mrb[0].mxu0
        %v1457 = vadd.f32 0.0, %v1456
        %v1458 = vpop.f32.mrb[0].mxu0
        %1459 = vmatprep.mubr.bf16.mxu0 0
        %1460 = vmatmul.mubr.bf16.gmra.mrb[0].mxu0 %v1350
        %v1461 = vpop.f32.mrb[0].mxu0
        %v1462 = vadd.f32 0.0, %v1461
        %v1463 = vpop.f32.mrb[0].mxu0
        %v1464 = vpop.f32.mrb[0].mxu0
        %v1465 = vadd.f32 0.0, %v1464
        %v1466 = vpop.f32.mrb[0].mxu0
        %1467 = vmatprep.mubr.bf16.mxu0 0
        %1468 = vmatmul.mubr.bf16.gmra.mrb[0].mxu0 %v1353
        %v1469 = vpop.f32.mrb[0].mxu0
        %v1470 = vadd.f32 0.0, %v1469
        %v1471 = vpop.f32.mrb[0].mxu0
        %v1472 = vpop.f32.mrb[0].mxu0
        %v1473 = vadd.f32 0.0, %v1472
        %v1474 = vpop.f32.mrb[0].mxu0
        %1475 = vmatprep.mubr.bf16.mxu0 0
        %1476 = vmatmul.mubr.bf16.gmra.mrb[0].mxu0 %v1356
        %v1477 = vpop.f32.mrb[0].mxu0
        %v1478 = vadd.f32 0.0, %v1477
        %v1479 = vpop.f32.mrb[0].mxu0
        %v1480 = vpop.f32.mrb[0].mxu0
        %v1481 = vadd.f32 0.0, %v1480
        %v1482 = vpop.f32.mrb[0].mxu0
        %1483 = vmatprep.mubr.bf16.mxu0 0
        %1484 = vmatmul.mubr.bf16.gmra.mrb[0].mxu0 %v1359
        %v1485 = vpop.f32.mrb[0].mxu0
        %v1486 = vadd.f32 0.0, %v1485
        %v1487 = vpop.f32.mrb[0].mxu0
        %v1488 = vpop.f32.mrb[0].mxu0
        %v1489 = vadd.f32 0.0, %v1488
        %v1490 = vpop.f32.mrb[0].mxu0
        %1491 = vmatprep.mubr.bf16.mxu0 0
        %1492 = vmatmul.mubr.bf16.gmra.mrb[0].mxu0 %v1362
        %v1493 = vpop.f32.mrb[0].mxu0
        %v1494 = vadd.f32 0.0, %v1493
        %v1495 = vpop.f32.mrb[0].mxu0
        %v1496 = vpop.f32.mrb[0].mxu0
        %v1497 = vadd.f32 0.0, %v1496
        %v1498 = vpop.f32.mrb[0].mxu0
        %1499 = vmatprep.mubr.bf16.mxu0 0
        %1500 = vmatmul.mubr.bf16.gmra.mrb[0].mxu0 %v1365
        %v1501 = vpop.f32.mrb[0].mxu0
        %v1502 = vadd.f32 0.0, %v1501
        %v1503 = vpop.f32.mrb[0].mxu0
        %v1504 = vpop.f32.mrb[0].mxu0
        %v1505 = vadd.f32 0.0, %v1504
        %v1506 = vpop.f32.mrb[0].mxu0
        %1507 = vmatprep.mubr.bf16.mxu0 0
        %1508 = vmatmul.mubr.bf16.gmra.mrb[0].mxu0 %v1368
        %v1509 = vpop.f32.mrb[0].mxu0
        %v1510 = vadd.f32 0.0, %v1509
        %v1511 = vpop.f32.mrb[0].mxu0
        %v1512 = vpop.f32.mrb[0].mxu0
        %v1513 = vadd.f32 0.0, %v1512
        %v1514 = vpop.f32.mrb[0].mxu0
        %1515 = vmatprep.mubr.bf16.mxu0 0
        %1516 = vmatmul.mubr.bf16.gmra.mrb[0].mxu0 %v1371
        %v1517 = vpop.f32.mrb[0].mxu0
        %v1518 = vadd.f32 0.0, %v1517
        %v1519 = vpop.f32.mrb[0].mxu0
        %v1520 = vpop.f32.mrb[0].mxu0
        %v1521 = vadd.f32 0.0, %v1520
        %v1522 = vpop.f32.mrb[0].mxu0
        %1523 = vmatprep.mubr.bf16.mxu0 0
        %1524 = vmatmul.mubr.bf16.gmra.mrb[0].mxu0 %v1374
        %v1525 = vpop.f32.mrb[0].mxu0
        %v1526 = vadd.f32 0.0, %v1525
        %v1527 = vpop.f32.mrb[0].mxu0
        %v1528 = vpop.f32.mrb[0].mxu0
        %v1529 = vadd.f32 0.0, %v1528
        %v1530 = vpop.f32.mrb[0].mxu0
        %1531 = vmatprep.mubr.bf16.mxu0 0
        %1532 = vmatmul.mubr.bf16.gmra.mrb[0].mxu0 %v1377
        %v1533 = vpop.f32.mrb[0].mxu0
        %v1534 = vadd.f32 0.0, %v1533
        %v1535 = vpop.f32.mrb[0].mxu0
        %v1536 = vpop.f32.mrb[0].mxu0
        %v1537 = vadd.f32 0.0, %v1536
        %v1538 = vpop.f32.mrb[0].mxu0
        %1539 = vdwg.mxu0
        %v1552 = vunpack.c.l.b16 %v1268
        %v1553 = vunpack.c.l.b16 %v1269
        %v1554 = vunpack.c.l.b16 %v1270
        %v1555 = vunpack.c.l.b16 %v1271
        %v1556 = vunpack.c.l.b16 %v1272
        %v1557 = vunpack.c.l.b16 %v1273
        %v1558 = vunpack.c.l.b16 %v1274
        %v1559 = vunpack.c.l.b16 %v1275
        %v1560 = vunpack.c.l.b16 %v1276
        %v1561 = vunpack.c.l.b16 %v1277
        %v1562 = vunpack.c.l.b16 %v1278
        %v1563 = vunpack.c.l.b16 %v1279
        %v1564 = vpack.c.b16 %v1553, %v1552
        %v1565 = vpack.c.b16 %v1555, %v1554
        %v1566 = vpack.c.b16 %v1557, %v1556
        %v1567 = vpack.c.b16 %v1559, %v1558
        %v1568 = vpack.c.b16 %v1561, %v1560
        %v1569 = vpack.c.b16 %v1563, %v1562
        %v1577 = vsel %vm1199, %v1252, 0
        %v1580 = vsel %vm1199, %v1253, 0
        %1582 = vmatprep.subr.bf16.mxu0 0
        %1583 = vmatpush1.bf16.msra.mxu0 %v1564
        %1584 = vmatprep.subr.bf16.mxu0 0
        %1585 = vmatpush1.bf16.msra.mxu0 %v1565
        %1586 = vmatprep.subr.bf16.mxu0 0
        %1587 = vmatpush1.bf16.msra.mxu0 %v1566
        %1588 = vmatprep.subr.bf16.mxu0 0
        %1589 = vmatpush1.bf16.msra.mxu0 %v1567
        %1590 = vmatprep.subr.bf16.mxu0 0
        %1591 = vmatpush1.bf16.msra.mxu0 %v1568
        %1592 = vmatprep.subr.bf16.mxu0 0
        %1593 = vmatpush1.bf16.msra.mxu0 %v1569
        %1594 = vmatprep.subr.bf16.mxu0 0
        %1595 = vmatpush1.bf16.msra.mxu0 0
        %1596 = vmatprep.subr.bf16.mxu0 0
        %1597 = vmatpush1.bf16.msra.mxu0 0
        %1598 = vmatprep.subr.bf16.mxu0 0
        %1599 = vmatpush1.bf16.msra.mxu0 0
        %1600 = vmatprep.subr.bf16.mxu0 0
        %1601 = vmatpush1.bf16.msra.mxu0 0
        %1602 = vmatprep.subr.bf16.mxu0 0
        %1603 = vmatpush1.bf16.msra.mxu0 0
        %1604 = vmatprep.subr.bf16.mxu0 0
        %1605 = vmatpush1.bf16.msra.mxu0 0
        %1606 = vmatprep.subr.bf16.mxu0 0
        %1607 = vmatpush1.bf16.msra.mxu0 0
        %1608 = vmatprep.subr.bf16.mxu0 0
        %1609 = vmatpush1.bf16.msra.mxu0 0
        %1610 = vmatprep.subr.bf16.mxu0 0
        %1611 = vmatpush1.bf16.msra.mxu0 0
        %1612 = vmatprep.subr.bf16.mxu0 0
        %1613 = vmatpush1.bf16.msra.mxu0 0
        %1614 = vmatprep.mubr.bf16.mxu0 0
        %1615 = vmatmul.mubr.bf16.gmra.mrb[0].mxu0 %v1577
        %v1616 = vpop.f32.mrb[0].mxu0
        %v1617 = vadd.f32 %v1414, %v1616
        %v1618 = vpop.f32.mrb[0].mxu0
        %v1619 = vpop.f32.mrb[0].mxu0
        %v1620 = vadd.f32 %v1417, %v1619
        %v1621 = vpop.f32.mrb[0].mxu0
        %1622 = vmatprep.mubr.bf16.mxu0 0
        %1623 = vmatmul.mubr.bf16.gmra.mrb[0].mxu0 %v1580
        %v1624 = vpop.f32.mrb[0].mxu0
        %v1625 = vadd.f32 %v1422, %v1624
        %v1626 = vpop.f32.mrb[0].mxu0
        %v1627 = vpop.f32.mrb[0].mxu0
        %v1628 = vadd.f32 %v1425, %v1627
        %v1629 = vpop.f32.mrb[0].mxu0
        %1630 = vmatprep.mubr.bf16.mxu0 0
        %1631 = vmatmul.mubr.bf16.gmra.mrb[0].mxu0 %v1332
        %v1632 = vpop.f32.mrb[0].mxu0
        %v1633 = vadd.f32 %v1430, %v1632
        %v1634 = vpop.f32.mrb[0].mxu0
        %v1635 = vpop.f32.mrb[0].mxu0
        %v1636 = vadd.f32 %v1433, %v1635
        %v1637 = vpop.f32.mrb[0].mxu0
        %1638 = vmatprep.mubr.bf16.mxu0 0
        %1639 = vmatmul.mubr.bf16.gmra.mrb[0].mxu0 %v1335
        %v1640 = vpop.f32.mrb[0].mxu0
        %v1641 = vadd.f32 %v1438, %v1640
        %v1642 = vpop.f32.mrb[0].mxu0
        %v1643 = vpop.f32.mrb[0].mxu0
        %v1644 = vadd.f32 %v1441, %v1643
        %v1645 = vpop.f32.mrb[0].mxu0
        %1646 = vmatprep.mubr.bf16.mxu0 0
        %1647 = vmatmul.mubr.bf16.gmra.mrb[0].mxu0 %v1338
        %v1648 = vpop.f32.mrb[0].mxu0
        %v1649 = vadd.f32 %v1446, %v1648
        %v1650 = vpop.f32.mrb[0].mxu0
        %v1651 = vpop.f32.mrb[0].mxu0
        %v1652 = vadd.f32 %v1449, %v1651
        %v1653 = vpop.f32.mrb[0].mxu0
        %1654 = vmatprep.mubr.bf16.mxu0 0
        %1655 = vmatmul.mubr.bf16.gmra.mrb[0].mxu0 %v1341
        %v1656 = vpop.f32.mrb[0].mxu0
        %v1657 = vadd.f32 %v1454, %v1656
        %v1658 = vpop.f32.mrb[0].mxu0
        %v1659 = vpop.f32.mrb[0].mxu0
        %v1660 = vadd.f32 %v1457, %v1659
        %v1661 = vpop.f32.mrb[0].mxu0
        %1662 = vmatprep.mubr.bf16.mxu0 0
        %1663 = vmatmul.mubr.bf16.gmra.mrb[0].mxu0 %v1344
        %v1664 = vpop.f32.mrb[0].mxu0
        %v1665 = vadd.f32 %v1462, %v1664
        %v1666 = vpop.f32.mrb[0].mxu0
        %v1667 = vpop.f32.mrb[0].mxu0
        %v1668 = vadd.f32 %v1465, %v1667
        %v1669 = vpop.f32.mrb[0].mxu0
        %1670 = vmatprep.mubr.bf16.mxu0 0
        %1671 = vmatmul.mubr.bf16.gmra.mrb[0].mxu0 %v1347
        %v1672 = vpop.f32.mrb[0].mxu0
        %v1673 = vadd.f32 %v1470, %v1672
        %v1674 = vpop.f32.mrb[0].mxu0
        %v1675 = vpop.f32.mrb[0].mxu0
        %v1676 = vadd.f32 %v1473, %v1675
        %v1677 = vpop.f32.mrb[0].mxu0
        %1678 = vmatprep.mubr.bf16.mxu0 0
        %1679 = vmatmul.mubr.bf16.gmra.mrb[0].mxu0 %v1350
        %v1680 = vpop.f32.mrb[0].mxu0
        %v1681 = vadd.f32 %v1478, %v1680
        %v1682 = vpop.f32.mrb[0].mxu0
        %v1683 = vpop.f32.mrb[0].mxu0
        %v1684 = vadd.f32 %v1481, %v1683
        %v1685 = vpop.f32.mrb[0].mxu0
        %1686 = vmatprep.mubr.bf16.mxu0 0
        %1687 = vmatmul.mubr.bf16.gmra.mrb[0].mxu0 %v1353
        %v1688 = vpop.f32.mrb[0].mxu0
        %v1689 = vadd.f32 %v1486, %v1688
        %v1690 = vpop.f32.mrb[0].mxu0
        %v1691 = vpop.f32.mrb[0].mxu0
        %v1692 = vadd.f32 %v1489, %v1691
        %v1693 = vpop.f32.mrb[0].mxu0
        %1694 = vmatprep.mubr.bf16.mxu0 0
        %1695 = vmatmul.mubr.bf16.gmra.mrb[0].mxu0 %v1356
        %v1696 = vpop.f32.mrb[0].mxu0
        %v1697 = vadd.f32 %v1494, %v1696
        %v1698 = vpop.f32.mrb[0].mxu0
        %v1699 = vpop.f32.mrb[0].mxu0
        %v1700 = vadd.f32 %v1497, %v1699
        %v1701 = vpop.f32.mrb[0].mxu0
        %1702 = vmatprep.mubr.bf16.mxu0 0
        %1703 = vmatmul.mubr.bf16.gmra.mrb[0].mxu0 %v1359
        %v1704 = vpop.f32.mrb[0].mxu0
        %v1705 = vadd.f32 %v1502, %v1704
        %v1706 = vpop.f32.mrb[0].mxu0
        %v1707 = vpop.f32.mrb[0].mxu0
        %v1708 = vadd.f32 %v1505, %v1707
        %v1709 = vpop.f32.mrb[0].mxu0
        %1710 = vmatprep.mubr.bf16.mxu0 0
        %1711 = vmatmul.mubr.bf16.gmra.mrb[0].mxu0 %v1362
        %v1712 = vpop.f32.mrb[0].mxu0
        %v1713 = vadd.f32 %v1510, %v1712
        %v1714 = vpop.f32.mrb[0].mxu0
        %v1715 = vpop.f32.mrb[0].mxu0
        %v1716 = vadd.f32 %v1513, %v1715
        %v1717 = vpop.f32.mrb[0].mxu0
        %1718 = vmatprep.mubr.bf16.mxu0 0
        %1719 = vmatmul.mubr.bf16.gmra.mrb[0].mxu0 %v1365
        %v1720 = vpop.f32.mrb[0].mxu0
        %v1721 = vadd.f32 %v1518, %v1720
        %v1722 = vpop.f32.mrb[0].mxu0
        %v1723 = vpop.f32.mrb[0].mxu0
        %v1724 = vadd.f32 %v1521, %v1723
        %v1725 = vpop.f32.mrb[0].mxu0
        %1726 = vmatprep.mubr.bf16.mxu0 0
        %1727 = vmatmul.mubr.bf16.gmra.mrb[0].mxu0 %v1368
        %v1728 = vpop.f32.mrb[0].mxu0
        %v1729 = vadd.f32 %v1526, %v1728
        %v1730 = vpop.f32.mrb[0].mxu0
        %v1731 = vpop.f32.mrb[0].mxu0
        %v1732 = vadd.f32 %v1529, %v1731
        %v1733 = vpop.f32.mrb[0].mxu0
        %1734 = vmatprep.mubr.bf16.mxu0 0
        %1735 = vmatmul.mubr.bf16.gmra.mrb[0].mxu0 %v1371
        %v1736 = vpop.f32.mrb[0].mxu0
        %v1737 = vadd.f32 %v1534, %v1736
        %v1738 = vpop.f32.mrb[0].mxu0
        %v1739 = vpop.f32.mrb[0].mxu0
        %v1740 = vadd.f32 %v1537, %v1739
        %v1741 = vpop.f32.mrb[0].mxu0
        %1742 = vdwg.mxu0
        %v1743 = vld [vmem:[#allocation2 + $0x20] sm:$0xff]
        %v1744 = vld [vmem:[#allocation2 + $0x28] sm:$0xff]
        %v1745 = vld [vmem:[#allocation2 + $0x30] sm:$0xff]
        %v1746 = vld [vmem:[#allocation2 + $0x38] sm:$0xff]
        %v1747 = vld [vmem:[#allocation2 + $0x40] sm:$0xff]
        %v1748 = vld [vmem:[#allocation2 + $0x48] sm:$0xff]
        %v1749 = vld [vmem:[#allocation2 + $0x50] sm:$0xff]
        %v1750 = vld [vmem:[#allocation2 + $0x58] sm:$0xff]
        %v1751 = vld [vmem:[#allocation2 + $0x60] sm:$0xff]
        %v1752 = vld [vmem:[#allocation2 + $0x68] sm:$0xff]
        %v1753 = vld [vmem:[#allocation2 + $0x70] sm:$0xff]
        %v1754 = vld [vmem:[#allocation2 + $0x78] sm:$0xff]
        %v1755 = vld [vmem:[#allocation2 + $0x80] sm:$0xff]
        %v1756 = vld [vmem:[#allocation2 + $0x88] sm:$0xff]
        %v1757 = vld [vmem:[#allocation2 + $0x90] sm:$0xff]
        %v1758 = vld [vmem:[#allocation2 + $0x98] sm:$0xff]
        %s1759 = scalar_lea.vmem %s3, 96
        %v1760 = vld [vmem:[%s1759] sm:$0xf]
        %v1761 = vld [vmem:[%s1759 + $0x4] sm:$0xf]
        %v1762 = vld [vmem:[%s1759 + $0x8] sm:$0xf]
        %v1763 = vld [vmem:[%s1759 + $0xc] sm:$0xf]
        %v1764 = vld [vmem:[%s1759 + $0x10] sm:$0xf]
        %v1765 = vld [vmem:[%s1759 + $0x14] sm:$0xf]
        %v1766 = vld [vmem:[%s1759 + $0x18] sm:$0xf]
        %v1767 = vld [vmem:[%s1759 + $0x1c] sm:$0xf]
        %v1768 = vld [vmem:[%s1759 + $0x20] sm:$0xf]
        %v1769 = vld [vmem:[%s1759 + $0x24] sm:$0xf]
        %v1770 = vld [vmem:[%s1759 + $0x28] sm:$0xf]
        %v1771 = vld [vmem:[%s1759 + $0x2c] sm:$0xf]
        %v1784 = vunpack.c.l.b16 %v1760
        %v1785 = vunpack.c.l.b16 %v1761
        %v1786 = vunpack.c.l.b16 %v1762
        %v1787 = vunpack.c.l.b16 %v1763
        %v1788 = vunpack.c.l.b16 %v1764
        %v1789 = vunpack.c.l.b16 %v1765
        %v1790 = vunpack.c.l.b16 %v1766
        %v1791 = vunpack.c.l.b16 %v1767
        %v1792 = vunpack.c.l.b16 %v1768
        %v1793 = vunpack.c.l.b16 %v1769
        %v1794 = vunpack.c.l.b16 %v1770
        %v1795 = vunpack.c.l.b16 %v1771
        %v1796 = vpack.c.b16 %v1785, %v1784
        %v1797 = vpack.c.b16 %v1787, %v1786
        %v1798 = vpack.c.b16 %v1789, %v1788
        %v1799 = vpack.c.b16 %v1791, %v1790
        %v1800 = vpack.c.b16 %v1793, %v1792
        %v1801 = vpack.c.b16 %v1795, %v1794
        %v1809 = vsel %vm1199, %v1743, 0
        %v1812 = vsel %vm1199, %v1744, 0
        %v1815 = vsel %vm1199, %v1745, 0
        %v1818 = vsel %vm1199, %v1746, 0
        %v1821 = vsel %vm1199, %v1747, 0
        %v1824 = vsel %vm1199, %v1748, 0
        %v1827 = vsel %vm1199, %v1749, 0
        %v1830 = vsel %vm1199, %v1750, 0
        %v1833 = vsel %vm1199, %v1751, 0
        %v1836 = vsel %vm1199, %v1752, 0
        %v1839 = vsel %vm1199, %v1753, 0
        %v1842 = vsel %vm1199, %v1754, 0
        %v1845 = vsel %vm1199, %v1755, 0
        %v1848 = vsel %vm1199, %v1756, 0
        %v1851 = vsel %vm1199, %v1757, 0
        %v1854 = vsel %vm1199, %v1758, 0
        %1856 = vmatprep.subr.bf16.mxu0 0
        %1857 = vmatpush1.bf16.msra.mxu0 %v1796
        %1858 = vmatprep.subr.bf16.mxu0 0
        %1859 = vmatpush1.bf16.msra.mxu0 %v1797
        %1860 = vmatprep.subr.bf16.mxu0 0
        %1861 = vmatpush1.bf16.msra.mxu0 %v1798
        %1862 = vmatprep.subr.bf16.mxu0 0
        %1863 = vmatpush1.bf16.msra.mxu0 %v1799
        %1864 = vmatprep.subr.bf16.mxu0 0
        %1865 = vmatpush1.bf16.msra.mxu0 %v1800
        %1866 = vmatprep.subr.bf16.mxu0 0
        %1867 = vmatpush1.bf16.msra.mxu0 %v1801
        %1868 = vmatprep.subr.bf16.mxu0 0
        %1869 = vmatpush1.bf16.msra.mxu0 0
        %1870 = vmatprep.subr.bf16.mxu0 0
        %1871 = vmatpush1.bf16.msra.mxu0 0
        %1872 = vmatprep.subr.bf16.mxu0 0
        %1873 = vmatpush1.bf16.msra.mxu0 0
        %1874 = vmatprep.subr.bf16.mxu0 0
        %1875 = vmatpush1.bf16.msra.mxu0 0
        %1876 = vmatprep.subr.bf16.mxu0 0
        %1877 = vmatpush1.bf16.msra.mxu0 0
        %1878 = vmatprep.subr.bf16.mxu0 0
        %1879 = vmatpush1.bf16.msra.mxu0 0
        %1880 = vmatprep.subr.bf16.mxu0 0
        %1881 = vmatpush1.bf16.msra.mxu0 0
        %1882 = vmatprep.subr.bf16.mxu0 0
        %1883 = vmatpush1.bf16.msra.mxu0 0
        %1884 = vmatprep.subr.bf16.mxu0 0
        %1885 = vmatpush1.bf16.msra.mxu0 0
        %1886 = vmatprep.subr.bf16.mxu0 0
        %1887 = vmatpush1.bf16.msra.mxu0 0
        %1888 = vmatprep.mubr.bf16.mxu0 0
        %1889 = vmatmul.mubr.bf16.gmra.mrb[0].mxu0 %v1809
        %v1890 = vpop.f32.mrb[0].mxu0
        %v1891 = vadd.f32 0.0, %v1890
        %v1892 = vpop.f32.mrb[0].mxu0
        %v1893 = vpop.f32.mrb[0].mxu0
        %v1894 = vadd.f32 0.0, %v1893
        %v1895 = vpop.f32.mrb[0].mxu0
        %1896 = vmatprep.mubr.bf16.mxu0 0
        %1897 = vmatmul.mubr.bf16.gmra.mrb[0].mxu0 %v1812
        %v1898 = vpop.f32.mrb[0].mxu0
        %v1899 = vadd.f32 0.0, %v1898
        %v1900 = vpop.f32.mrb[0].mxu0
        %v1901 = vpop.f32.mrb[0].mxu0
        %v1902 = vadd.f32 0.0, %v1901
        %v1903 = vpop.f32.mrb[0].mxu0
        %1904 = vmatprep.mubr.bf16.mxu0 0
        %1905 = vmatmul.mubr.bf16.gmra.mrb[0].mxu0 %v1815
        %v1906 = vpop.f32.mrb[0].mxu0
        %v1907 = vadd.f32 0.0, %v1906
        %v1908 = vpop.f32.mrb[0].mxu0
        %v1909 = vpop.f32.mrb[0].mxu0
        %v1910 = vadd.f32 0.0, %v1909
        %v1911 = vpop.f32.mrb[0].mxu0
        %1912 = vmatprep.mubr.bf16.mxu0 0
        %1913 = vmatmul.mubr.bf16.gmra.mrb[0].mxu0 %v1818
        %v1914 = vpop.f32.mrb[0].mxu0
        %v1915 = vadd.f32 0.0, %v1914
        %v1916 = vpop.f32.mrb[0].mxu0
        %v1917 = vpop.f32.mrb[0].mxu0
        %v1918 = vadd.f32 0.0, %v1917
        %v1919 = vpop.f32.mrb[0].mxu0
        %1920 = vmatprep.mubr.bf16.mxu0 0
        %1921 = vmatmul.mubr.bf16.gmra.mrb[0].mxu0 %v1821
        %v1922 = vpop.f32.mrb[0].mxu0
        %v1923 = vadd.f32 0.0, %v1922
        %v1924 = vpop.f32.mrb[0].mxu0
        %v1925 = vpop.f32.mrb[0].mxu0
        %v1926 = vadd.f32 0.0, %v1925
        %v1927 = vpop.f32.mrb[0].mxu0
        %1928 = vmatprep.mubr.bf16.mxu0 0
        %1929 = vmatmul.mubr.bf16.gmra.mrb[0].mxu0 %v1824
        %v1930 = vpop.f32.mrb[0].mxu0
        %v1931 = vadd.f32 0.0, %v1930
        %v1932 = vpop.f32.mrb[0].mxu0
        %v1933 = vpop.f32.mrb[0].mxu0
        %v1934 = vadd.f32 0.0, %v1933
        %v1935 = vpop.f32.mrb[0].mxu0
        %1936 = vmatprep.mubr.bf16.mxu0 0
        %1937 = vmatmul.mubr.bf16.gmra.mrb[0].mxu0 %v1827
        %v1938 = vpop.f32.mrb[0].mxu0
        %v1939 = vadd.f32 0.0, %v1938
        %v1940 = vpop.f32.mrb[0].mxu0
        %v1941 = vpop.f32.mrb[0].mxu0
        %v1942 = vadd.f32 0.0, %v1941
        %v1943 = vpop.f32.mrb[0].mxu0
        %1944 = vmatprep.mubr.bf16.mxu0 0
        %1945 = vmatmul.mubr.bf16.gmra.mrb[0].mxu0 %v1830
        %v1946 = vpop.f32.mrb[0].mxu0
        %v1947 = vadd.f32 0.0, %v1946
        %v1948 = vpop.f32.mrb[0].mxu0
        %v1949 = vpop.f32.mrb[0].mxu0
        %v1950 = vadd.f32 0.0, %v1949
        %v1951 = vpop.f32.mrb[0].mxu0
        %1952 = vmatprep.mubr.bf16.mxu0 0
        %1953 = vmatmul.mubr.bf16.gmra.mrb[0].mxu0 %v1833
        %v1954 = vpop.f32.mrb[0].mxu0
        %v1955 = vadd.f32 0.0, %v1954
        %v1956 = vpop.f32.mrb[0].mxu0
        %v1957 = vpop.f32.mrb[0].mxu0
        %v1958 = vadd.f32 0.0, %v1957
        %v1959 = vpop.f32.mrb[0].mxu0
        %1960 = vmatprep.mubr.bf16.mxu0 0
        %1961 = vmatmul.mubr.bf16.gmra.mrb[0].mxu0 %v1836
        %v1962 = vpop.f32.mrb[0].mxu0
        %v1963 = vadd.f32 0.0, %v1962
        %v1964 = vpop.f32.mrb[0].mxu0
        %v1965 = vpop.f32.mrb[0].mxu0
        %v1966 = vadd.f32 0.0, %v1965
        %v1967 = vpop.f32.mrb[0].mxu0
        %1968 = vmatprep.mubr.bf16.mxu0 0
        %1969 = vmatmul.mubr.bf16.gmra.mrb[0].mxu0 %v1839
        %v1970 = vpop.f32.mrb[0].mxu0
        %v1971 = vadd.f32 0.0, %v1970
        %v1972 = vpop.f32.mrb[0].mxu0
        %v1973 = vpop.f32.mrb[0].mxu0
        %v1974 = vadd.f32 0.0, %v1973
        %v1975 = vpop.f32.mrb[0].mxu0
        %1976 = vmatprep.mubr.bf16.mxu0 0
        %1977 = vmatmul.mubr.bf16.gmra.mrb[0].mxu0 %v1842
        %v1978 = vpop.f32.mrb[0].mxu0
        %v1979 = vadd.f32 0.0, %v1978
        %v1980 = vpop.f32.mrb[0].mxu0
        %v1981 = vpop.f32.mrb[0].mxu0
        %v1982 = vadd.f32 0.0, %v1981
        %v1983 = vpop.f32.mrb[0].mxu0
        %1984 = vmatprep.mubr.bf16.mxu0 0
        %1985 = vmatmul.mubr.bf16.gmra.mrb[0].mxu0 %v1845
        %v1986 = vpop.f32.mrb[0].mxu0
        %v1987 = vadd.f32 0.0, %v1986
        %v1988 = vpop.f32.mrb[0].mxu0
        %v1989 = vpop.f32.mrb[0].mxu0
        %v1990 = vadd.f32 0.0, %v1989
        %v1991 = vpop.f32.mrb[0].mxu0
        %1992 = vmatprep.mubr.bf16.mxu0 0
        %1993 = vmatmul.mubr.bf16.gmra.mrb[0].mxu0 %v1848
        %v1994 = vpop.f32.mrb[0].mxu0
        %v1995 = vadd.f32 0.0, %v1994
        %v1996 = vpop.f32.mrb[0].mxu0
        %v1997 = vpop.f32.mrb[0].mxu0
        %v1998 = vadd.f32 0.0, %v1997
        %v1999 = vpop.f32.mrb[0].mxu0
        %2000 = vmatprep.mubr.bf16.mxu0 0
        %2001 = vmatmul.mubr.bf16.gmra.mrb[0].mxu0 %v1851
        %v2002 = vpop.f32.mrb[0].mxu0
        %v2003 = vadd.f32 0.0, %v2002
        %v2004 = vpop.f32.mrb[0].mxu0
        %v2005 = vpop.f32.mrb[0].mxu0
        %v2006 = vadd.f32 0.0, %v2005
        %v2007 = vpop.f32.mrb[0].mxu0
        %2008 = vmatprep.mubr.bf16.mxu0 0
        %2009 = vmatmul.mubr.bf16.gmra.mrb[0].mxu0 %v1854
        %v2010 = vpop.f32.mrb[0].mxu0
        %v2011 = vadd.f32 0.0, %v2010
        %v2012 = vpop.f32.mrb[0].mxu0
        %v2013 = vpop.f32.mrb[0].mxu0
        %v2014 = vadd.f32 0.0, %v2013
        %v2015 = vpop.f32.mrb[0].mxu0
        %2016 = vdwg.mxu0
        %v2017 = vadd.f32 %v1617, %v1891
        %v2018 = vadd.f32 %v1620, %v1894
        %v2019 = vadd.f32 %v1625, %v1899
        %v2020 = vadd.f32 %v1628, %v1902
        %v2021 = vadd.f32 %v1633, %v1907
        %v2022 = vadd.f32 %v1636, %v1910
        %v2023 = vadd.f32 %v1641, %v1915
        %v2024 = vadd.f32 %v1644, %v1918
        %v2025 = vadd.f32 %v1649, %v1923
        %v2026 = vadd.f32 %v1652, %v1926
        %v2027 = vadd.f32 %v1657, %v1931
        %v2028 = vadd.f32 %v1660, %v1934
        %v2029 = vadd.f32 %v1665, %v1939
        %v2030 = vadd.f32 %v1668, %v1942
        %v2031 = vadd.f32 %v1673, %v1947
        %v2032 = vadd.f32 %v1676, %v1950
        %v2033 = vadd.f32 %v1681, %v1955
        %v2034 = vadd.f32 %v1684, %v1958
        %v2035 = vadd.f32 %v1689, %v1963
        %v2036 = vadd.f32 %v1692, %v1966
        %v2037 = vadd.f32 %v1697, %v1971
        %v2038 = vadd.f32 %v1700, %v1974
        %v2039 = vadd.f32 %v1705, %v1979
        %v2040 = vadd.f32 %v1708, %v1982
        %v2041 = vadd.f32 %v1713, %v1987
        %v2042 = vadd.f32 %v1716, %v1990
        %v2043 = vadd.f32 %v1721, %v1995
        %v2044 = vadd.f32 %v1724, %v1998
        %v2045 = vadd.f32 %v1729, %v2003
        %v2046 = vadd.f32 %v1732, %v2006
        %v2047 = vadd.f32 %v1737, %v2011
        %v2048 = vadd.f32 %v1740, %v2014
        %v2049 = vld [vmem:[#allocation4] sm:$0x1]
        %v2051 = vlaneseq
        %v2052 = vshrl.u32 %v2051, 7
        %v2053 = vsub.s32 0, %v2052
        %v2054 = vrot.slane %v2049, %v2053
        %v2056 = vadd.f32 %v2017, %v2054
        %v2057 = vadd.f32 %v2018, %v2054
        %v2058 = vadd.f32 %v2019, %v2054
        %v2059 = vadd.f32 %v2020, %v2054
        %v2060 = vadd.f32 %v2021, %v2054
        %v2061 = vadd.f32 %v2022, %v2054
        %v2062 = vadd.f32 %v2023, %v2054
        %v2063 = vadd.f32 %v2024, %v2054
        %v2064 = vadd.f32 %v2025, %v2054
        %v2065 = vadd.f32 %v2026, %v2054
        %v2066 = vadd.f32 %v2027, %v2054
        %v2067 = vadd.f32 %v2028, %v2054
        %v2068 = vadd.f32 %v2029, %v2054
        %v2069 = vadd.f32 %v2030, %v2054
        %v2070 = vadd.f32 %v2031, %v2054
        %v2071 = vadd.f32 %v2032, %v2054
        %v2072 = vadd.f32 %v2033, %v2054
        %v2073 = vadd.f32 %v2034, %v2054
        %v2074 = vadd.f32 %v2035, %v2054
        %v2075 = vadd.f32 %v2036, %v2054
        %v2076 = vadd.f32 %v2037, %v2054
        %v2077 = vadd.f32 %v2038, %v2054
        %v2078 = vadd.f32 %v2039, %v2054
        %v2079 = vadd.f32 %v2040, %v2054
        %v2080 = vadd.f32 %v2041, %v2054
        %v2081 = vadd.f32 %v2042, %v2054
        %v2082 = vadd.f32 %v2043, %v2054
        %v2083 = vadd.f32 %v2044, %v2054
        %v2084 = vadd.f32 %v2045, %v2054
        %v2085 = vadd.f32 %v2046, %v2054
        %v2086 = vadd.f32 %v2047, %v2054
        %v2087 = vadd.f32 %v2048, %v2054
        %v2088 = vmax.f32 %v2056, 0.0
        %v2089 = vmax.f32 %v2057, 0.0
        %v2090 = vmax.f32 %v2058, 0.0
        %v2091 = vmax.f32 %v2059, 0.0
        %v2092 = vmax.f32 %v2060, 0.0
        %v2093 = vmax.f32 %v2061, 0.0
        %v2094 = vmax.f32 %v2062, 0.0
        %v2095 = vmax.f32 %v2063, 0.0
        %v2096 = vmax.f32 %v2064, 0.0
        %v2097 = vmax.f32 %v2065, 0.0
        %v2098 = vmax.f32 %v2066, 0.0
        %v2099 = vmax.f32 %v2067, 0.0
        %v2100 = vmax.f32 %v2068, 0.0
        %v2101 = vmax.f32 %v2069, 0.0
        %v2102 = vmax.f32 %v2070, 0.0
        %v2103 = vmax.f32 %v2071, 0.0
        %v2104 = vmax.f32 %v2072, 0.0
        %v2105 = vmax.f32 %v2073, 0.0
        %v2106 = vmax.f32 %v2074, 0.0
        %v2107 = vmax.f32 %v2075, 0.0
        %v2108 = vmax.f32 %v2076, 0.0
        %v2109 = vmax.f32 %v2077, 0.0
        %v2110 = vmax.f32 %v2078, 0.0
        %v2111 = vmax.f32 %v2079, 0.0
        %v2112 = vmax.f32 %v2080, 0.0
        %v2113 = vmax.f32 %v2081, 0.0
        %v2114 = vmax.f32 %v2082, 0.0
        %v2115 = vmax.f32 %v2083, 0.0
        %v2116 = vmax.f32 %v2084, 0.0
        %v2117 = vmax.f32 %v2085, 0.0
        %v2118 = vmax.f32 %v2086, 0.0
        %v2119 = vmax.f32 %v2087, 0.0
        %vm2120 = vcmask 523264
        %2121 = vst.msk [vmem:[#allocation3] sm:$0xff] %vm2120, %v2088
        %2122 = vst.msk [vmem:[#allocation3 + $0x8] sm:$0xff] %vm2120, %v2089
        %2123 = vst.msk [vmem:[#allocation3 + $0x10] sm:$0xff] %vm2120, %v2090
        %2124 = vst.msk [vmem:[#allocation3 + $0x18] sm:$0xff] %vm2120, %v2091
        %2125 = vst.msk [vmem:[#allocation3 + $0x20] sm:$0xff] %vm2120, %v2092
        %2126 = vst.msk [vmem:[#allocation3 + $0x28] sm:$0xff] %vm2120, %v2093
        %2127 = vst.msk [vmem:[#allocation3 + $0x30] sm:$0xff] %vm2120, %v2094
        %2128 = vst.msk [vmem:[#allocation3 + $0x38] sm:$0xff] %vm2120, %v2095
        %2129 = vst.msk [vmem:[#allocation3 + $0x40] sm:$0xff] %vm2120, %v2096
        %2130 = vst.msk [vmem:[#allocation3 + $0x48] sm:$0xff] %vm2120, %v2097
        %2131 = vst.msk [vmem:[#allocation3 + $0x50] sm:$0xff] %vm2120, %v2098
        %2132 = vst.msk [vmem:[#allocation3 + $0x58] sm:$0xff] %vm2120, %v2099
        %2133 = vst.msk [vmem:[#allocation3 + $0x60] sm:$0xff] %vm2120, %v2100
        %2134 = vst.msk [vmem:[#allocation3 + $0x68] sm:$0xff] %vm2120, %v2101
        %2135 = vst.msk [vmem:[#allocation3 + $0x70] sm:$0xff] %vm2120, %v2102
        %2136 = vst.msk [vmem:[#allocation3 + $0x78] sm:$0xff] %vm2120, %v2103
        %2137 = vst.msk [vmem:[#allocation3 + $0x80] sm:$0xff] %vm2120, %v2104
        %2138 = vst.msk [vmem:[#allocation3 + $0x88] sm:$0xff] %vm2120, %v2105
        %2139 = vst.msk [vmem:[#allocation3 + $0x90] sm:$0xff] %vm2120, %v2106
        %2140 = vst.msk [vmem:[#allocation3 + $0x98] sm:$0xff] %vm2120, %v2107
        %2141 = vst.msk [vmem:[#allocation3 + $0xa0] sm:$0xff] %vm2120, %v2108
        %2142 = vst.msk [vmem:[#allocation3 + $0xa8] sm:$0xff] %vm2120, %v2109
        %2143 = vst.msk [vmem:[#allocation3 + $0xb0] sm:$0xff] %vm2120, %v2110
        %2144 = vst.msk [vmem:[#allocation3 + $0xb8] sm:$0xff] %vm2120, %v2111
        %2145 = vst.msk [vmem:[#allocation3 + $0xc0] sm:$0xff] %vm2120, %v2112
        %2146 = vst.msk [vmem:[#allocation3 + $0xc8] sm:$0xff] %vm2120, %v2113
        %2147 = vst.msk [vmem:[#allocation3 + $0xd0] sm:$0xff] %vm2120, %v2114
        %2148 = vst.msk [vmem:[#allocation3 + $0xd8] sm:$0xff] %vm2120, %v2115
        %2149 = vst.msk [vmem:[#allocation3 + $0xe0] sm:$0xff] %vm2120, %v2116
        %2150 = vst.msk [vmem:[#allocation3 + $0xe8] sm:$0xff] %vm2120, %v2117
        %2151 = vst.msk [vmem:[#allocation3 + $0xf0] sm:$0xff] %vm2120, %v2118
        %2152 = vst.msk [vmem:[#allocation3 + $0xf8] sm:$0xff] %vm2120, %v2119
        %v2153 = vld [vmem:[#allocation2 + $0x80] sm:$0xff]
        %v2154 = vld [vmem:[#allocation2 + $0x88] sm:$0xff]
        %v2155 = vld [vmem:[#allocation2 + $0x90] sm:$0xff]
        %v2156 = vld [vmem:[#allocation2 + $0x98] sm:$0xff]
        %v2157 = vld [vmem:[#allocation2 + $0xa0] sm:$0xff]
        %v2158 = vld [vmem:[#allocation2 + $0xa8] sm:$0xff]
        %v2159 = vld [vmem:[#allocation2 + $0xb0] sm:$0xff]
        %v2160 = vld [vmem:[#allocation2 + $0xb8] sm:$0xff]
        %v2161 = vld [vmem:[#allocation2 + $0xc0] sm:$0xff]
        %v2162 = vld [vmem:[#allocation2 + $0xc8] sm:$0xff]
        %v2163 = vld [vmem:[#allocation2 + $0xd0] sm:$0xff]
        %v2164 = vld [vmem:[#allocation2 + $0xd8] sm:$0xff]
        %v2165 = vld [vmem:[#allocation2 + $0xe0] sm:$0xff]
        %v2166 = vld [vmem:[#allocation2 + $0xe8] sm:$0xff]
        %v2167 = vld [vmem:[#allocation2 + $0xf0] sm:$0xff]
        %v2168 = vld [vmem:[#allocation2 + $0xf8] sm:$0xff]
        %v2169 = vld [vmem:[%s3] sm:$0xf]
        %v2170 = vld [vmem:[%s3 + $0x4] sm:$0xf]
        %v2171 = vld [vmem:[%s3 + $0x8] sm:$0xf]
        %v2172 = vld [vmem:[%s3 + $0xc] sm:$0xf]
        %v2173 = vld [vmem:[%s3 + $0x10] sm:$0xf]
        %v2174 = vld [vmem:[%s3 + $0x14] sm:$0xf]
        %v2175 = vld [vmem:[%s3 + $0x18] sm:$0xf]
        %v2176 = vld [vmem:[%s3 + $0x1c] sm:$0xf]
        %v2177 = vld [vmem:[%s3 + $0x20] sm:$0xf]
        %v2178 = vld [vmem:[%s3 + $0x24] sm:$0xf]
        %v2179 = vld [vmem:[%s3 + $0x28] sm:$0xf]
        %v2180 = vld [vmem:[%s3 + $0x2c] sm:$0xf]
        %v2181 = vld [vmem:[#allocation2 + $0x100] sm:$0xff]
        %v2182 = vld [vmem:[#allocation2 + $0x108] sm:$0xff]
        %v2183 = vld [vmem:[%s1282] sm:$0xf]
        %v2184 = vld [vmem:[%s1282 + $0x4] sm:$0xf]
        %v2185 = vld [vmem:[%s1282 + $0x8] sm:$0xf]
        %v2186 = vld [vmem:[%s1282 + $0xc] sm:$0xf]
        %v2187 = vld [vmem:[%s1282 + $0x10] sm:$0xf]
        %v2188 = vld [vmem:[%s1282 + $0x14] sm:$0xf]
        %v2189 = vld [vmem:[%s1282 + $0x18] sm:$0xf]
        %v2190 = vld [vmem:[%s1282 + $0x1c] sm:$0xf]
        %v2191 = vld [vmem:[%s1282 + $0x20] sm:$0xf]
        %v2192 = vld [vmem:[%s1282 + $0x24] sm:$0xf]
        %v2193 = vld [vmem:[%s1282 + $0x28] sm:$0xf]
        %v2194 = vld [vmem:[%s1282 + $0x2c] sm:$0xf]
        %v2207 = vunpack.c.l.b16 %v2183
        %v2208 = vunpack.c.l.b16 %v2184
        %v2209 = vunpack.c.l.b16 %v2185
        %v2210 = vunpack.c.l.b16 %v2186
        %v2211 = vunpack.c.l.b16 %v2187
        %v2212 = vunpack.c.l.b16 %v2188
        %v2213 = vunpack.c.l.b16 %v2189
        %v2214 = vunpack.c.l.b16 %v2190
        %v2215 = vunpack.c.l.b16 %v2191
        %v2216 = vunpack.c.l.b16 %v2192
        %v2217 = vunpack.c.l.b16 %v2193
        %v2218 = vunpack.c.l.b16 %v2194
        %v2219 = vpack.c.b16 %v2208, %v2207
        %v2220 = vpack.c.b16 %v2210, %v2209
        %v2221 = vpack.c.b16 %v2212, %v2211
        %v2222 = vpack.c.b16 %v2214, %v2213
        %v2223 = vpack.c.b16 %v2216, %v2215
        %v2224 = vpack.c.b16 %v2218, %v2217
        %v2232 = vsel %vm1199, %v2155, 0
        %v2235 = vsel %vm1199, %v2156, 0
        %v2238 = vsel %vm1199, %v2157, 0
        %v2241 = vsel %vm1199, %v2158, 0
        %v2244 = vsel %vm1199, %v2159, 0
        %v2247 = vsel %vm1199, %v2160, 0
        %v2250 = vsel %vm1199, %v2161, 0
        %v2253 = vsel %vm1199, %v2162, 0
        %v2256 = vsel %vm1199, %v2163, 0
        %v2259 = vsel %vm1199, %v2164, 0
        %v2262 = vsel %vm1199, %v2165, 0
        %v2265 = vsel %vm1199, %v2166, 0
        %v2268 = vsel %vm1199, %v2167, 0
        %v2271 = vsel %vm1199, %v2168, 0
        %v2274 = vsel %vm1199, %v2181, 0
        %v2277 = vsel %vm1199, %v2182, 0
        %2279 = vmatprep.subr.bf16.mxu0 0
        %2280 = vmatpush1.bf16.msra.mxu0 %v2219
        %2281 = vmatprep.subr.bf16.mxu0 0
        %2282 = vmatpush1.bf16.msra.mxu0 %v2220
        %2283 = vmatprep.subr.bf16.mxu0 0
        %2284 = vmatpush1.bf16.msra.mxu0 %v2221
        %2285 = vmatprep.subr.bf16.mxu0 0
        %2286 = vmatpush1.bf16.msra.mxu0 %v2222
        %2287 = vmatprep.subr.bf16.mxu0 0
        %2288 = vmatpush1.bf16.msra.mxu0 %v2223
        %2289 = vmatprep.subr.bf16.mxu0 0
        %2290 = vmatpush1.bf16.msra.mxu0 %v2224
        %2291 = vmatprep.subr.bf16.mxu0 0
        %2292 = vmatpush1.bf16.msra.mxu0 0
        %2293 = vmatprep.subr.bf16.mxu0 0
        %2294 = vmatpush1.bf16.msra.mxu0 0
        %2295 = vmatprep.subr.bf16.mxu0 0
        %2296 = vmatpush1.bf16.msra.mxu0 0
        %2297 = vmatprep.subr.bf16.mxu0 0
        %2298 = vmatpush1.bf16.msra.mxu0 0
        %2299 = vmatprep.subr.bf16.mxu0 0
        %2300 = vmatpush1.bf16.msra.mxu0 0
        %2301 = vmatprep.subr.bf16.mxu0 0
        %2302 = vmatpush1.bf16.msra.mxu0 0
        %2303 = vmatprep.subr.bf16.mxu0 0
        %2304 = vmatpush1.bf16.msra.mxu0 0
        %2305 = vmatprep.subr.bf16.mxu0 0
        %2306 = vmatpush1.bf16.msra.mxu0 0
        %2307 = vmatprep.subr.bf16.mxu0 0
        %2308 = vmatpush1.bf16.msra.mxu0 0
        %2309 = vmatprep.subr.bf16.mxu0 0
        %2310 = vmatpush1.bf16.msra.mxu0 0
        %2311 = vmatprep.mubr.bf16.mxu0 0
        %2312 = vmatmul.mubr.bf16.gmra.mrb[0].mxu0 %v2232
        %v2313 = vpop.f32.mrb[0].mxu0
        %v2314 = vadd.f32 0.0, %v2313
        %v2315 = vpop.f32.mrb[0].mxu0
        %v2316 = vpop.f32.mrb[0].mxu0
        %v2317 = vadd.f32 0.0, %v2316
        %v2318 = vpop.f32.mrb[0].mxu0
        %2319 = vmatprep.mubr.bf16.mxu0 0
        %2320 = vmatmul.mubr.bf16.gmra.mrb[0].mxu0 %v2235
        %v2321 = vpop.f32.mrb[0].mxu0
        %v2322 = vadd.f32 0.0, %v2321
        %v2323 = vpop.f32.mrb[0].mxu0
        %v2324 = vpop.f32.mrb[0].mxu0
        %v2325 = vadd.f32 0.0, %v2324
        %v2326 = vpop.f32.mrb[0].mxu0
        %2327 = vmatprep.mubr.bf16.mxu0 0
        %2328 = vmatmul.mubr.bf16.gmra.mrb[0].mxu0 %v2238
        %v2329 = vpop.f32.mrb[0].mxu0
        %v2330 = vadd.f32 0.0, %v2329
        %v2331 = vpop.f32.mrb[0].mxu0
        %v2332 = vpop.f32.mrb[0].mxu0
        %v2333 = vadd.f32 0.0, %v2332
        %v2334 = vpop.f32.mrb[0].mxu0
        %2335 = vmatprep.mubr.bf16.mxu0 0
        %2336 = vmatmul.mubr.bf16.gmra.mrb[0].mxu0 %v2241
        %v2337 = vpop.f32.mrb[0].mxu0
        %v2338 = vadd.f32 0.0, %v2337
        %v2339 = vpop.f32.mrb[0].mxu0
        %v2340 = vpop.f32.mrb[0].mxu0
        %v2341 = vadd.f32 0.0, %v2340
        %v2342 = vpop.f32.mrb[0].mxu0
        %2343 = vmatprep.mubr.bf16.mxu0 0
        %2344 = vmatmul.mubr.bf16.gmra.mrb[0].mxu0 %v2244
        %v2345 = vpop.f32.mrb[0].mxu0
        %v2346 = vadd.f32 0.0, %v2345
        %v2347 = vpop.f32.mrb[0].mxu0
        %v2348 = vpop.f32.mrb[0].mxu0
        %v2349 = vadd.f32 0.0, %v2348
        %v2350 = vpop.f32.mrb[0].mxu0
        %2351 = vmatprep.mubr.bf16.mxu0 0
        %2352 = vmatmul.mubr.bf16.gmra.mrb[0].mxu0 %v2247
        %v2353 = vpop.f32.mrb[0].mxu0
        %v2354 = vadd.f32 0.0, %v2353
        %v2355 = vpop.f32.mrb[0].mxu0
        %v2356 = vpop.f32.mrb[0].mxu0
        %v2357 = vadd.f32 0.0, %v2356
        %v2358 = vpop.f32.mrb[0].mxu0
        %2359 = vmatprep.mubr.bf16.mxu0 0
        %2360 = vmatmul.mubr.bf16.gmra.mrb[0].mxu0 %v2250
        %v2361 = vpop.f32.mrb[0].mxu0
        %v2362 = vadd.f32 0.0, %v2361
        %v2363 = vpop.f32.mrb[0].mxu0
        %v2364 = vpop.f32.mrb[0].mxu0
        %v2365 = vadd.f32 0.0, %v2364
        %v2366 = vpop.f32.mrb[0].mxu0
        %2367 = vmatprep.mubr.bf16.mxu0 0
        %2368 = vmatmul.mubr.bf16.gmra.mrb[0].mxu0 %v2253
        %v2369 = vpop.f32.mrb[0].mxu0
        %v2370 = vadd.f32 0.0, %v2369
        %v2371 = vpop.f32.mrb[0].mxu0
        %v2372 = vpop.f32.mrb[0].mxu0
        %v2373 = vadd.f32 0.0, %v2372
        %v2374 = vpop.f32.mrb[0].mxu0
        %2375 = vmatprep.mubr.bf16.mxu0 0
        %2376 = vmatmul.mubr.bf16.gmra.mrb[0].mxu0 %v2256
        %v2377 = vpop.f32.mrb[0].mxu0
        %v2378 = vadd.f32 0.0, %v2377
        %v2379 = vpop.f32.mrb[0].mxu0
        %v2380 = vpop.f32.mrb[0].mxu0
        %v2381 = vadd.f32 0.0, %v2380
        %v2382 = vpop.f32.mrb[0].mxu0
        %2383 = vmatprep.mubr.bf16.mxu0 0
        %2384 = vmatmul.mubr.bf16.gmra.mrb[0].mxu0 %v2259
        %v2385 = vpop.f32.mrb[0].mxu0
        %v2386 = vadd.f32 0.0, %v2385
        %v2387 = vpop.f32.mrb[0].mxu0
        %v2388 = vpop.f32.mrb[0].mxu0
        %v2389 = vadd.f32 0.0, %v2388
        %v2390 = vpop.f32.mrb[0].mxu0
        %2391 = vmatprep.mubr.bf16.mxu0 0
        %2392 = vmatmul.mubr.bf16.gmra.mrb[0].mxu0 %v2262
        %v2393 = vpop.f32.mrb[0].mxu0
        %v2394 = vadd.f32 0.0, %v2393
        %v2395 = vpop.f32.mrb[0].mxu0
        %v2396 = vpop.f32.mrb[0].mxu0
        %v2397 = vadd.f32 0.0, %v2396
        %v2398 = vpop.f32.mrb[0].mxu0
        %2399 = vmatprep.mubr.bf16.mxu0 0
        %2400 = vmatmul.mubr.bf16.gmra.mrb[0].mxu0 %v2265
        %v2401 = vpop.f32.mrb[0].mxu0
        %v2402 = vadd.f32 0.0, %v2401
        %v2403 = vpop.f32.mrb[0].mxu0
        %v2404 = vpop.f32.mrb[0].mxu0
        %v2405 = vadd.f32 0.0, %v2404
        %v2406 = vpop.f32.mrb[0].mxu0
        %2407 = vmatprep.mubr.bf16.mxu0 0
        %2408 = vmatmul.mubr.bf16.gmra.mrb[0].mxu0 %v2268
        %v2409 = vpop.f32.mrb[0].mxu0
        %v2410 = vadd.f32 0.0, %v2409
        %v2411 = vpop.f32.mrb[0].mxu0
        %v2412 = vpop.f32.mrb[0].mxu0
        %v2413 = vadd.f32 0.0, %v2412
        %v2414 = vpop.f32.mrb[0].mxu0
        %2415 = vmatprep.mubr.bf16.mxu0 0
        %2416 = vmatmul.mubr.bf16.gmra.mrb[0].mxu0 %v2271
        %v2417 = vpop.f32.mrb[0].mxu0
        %v2418 = vadd.f32 0.0, %v2417
        %v2419 = vpop.f32.mrb[0].mxu0
        %v2420 = vpop.f32.mrb[0].mxu0
        %v2421 = vadd.f32 0.0, %v2420
        %v2422 = vpop.f32.mrb[0].mxu0
        %2423 = vmatprep.mubr.bf16.mxu0 0
        %2424 = vmatmul.mubr.bf16.gmra.mrb[0].mxu0 %v2274
        %v2425 = vpop.f32.mrb[0].mxu0
        %v2426 = vadd.f32 0.0, %v2425
        %v2427 = vpop.f32.mrb[0].mxu0
        %v2428 = vpop.f32.mrb[0].mxu0
        %v2429 = vadd.f32 0.0, %v2428
        %v2430 = vpop.f32.mrb[0].mxu0
        %2431 = vmatprep.mubr.bf16.mxu0 0
        %2432 = vmatmul.mubr.bf16.gmra.mrb[0].mxu0 %v2277
        %v2433 = vpop.f32.mrb[0].mxu0
        %v2434 = vadd.f32 0.0, %v2433
        %v2435 = vpop.f32.mrb[0].mxu0
        %v2436 = vpop.f32.mrb[0].mxu0
        %v2437 = vadd.f32 0.0, %v2436
        %v2438 = vpop.f32.mrb[0].mxu0
        %2439 = vdwg.mxu0
        %v2452 = vunpack.c.l.b16 %v2169
        %v2453 = vunpack.c.l.b16 %v2170
        %v2454 = vunpack.c.l.b16 %v2171
        %v2455 = vunpack.c.l.b16 %v2172
        %v2456 = vunpack.c.l.b16 %v2173
        %v2457 = vunpack.c.l.b16 %v2174
        %v2458 = vunpack.c.l.b16 %v2175
        %v2459 = vunpack.c.l.b16 %v2176
        %v2460 = vunpack.c.l.b16 %v2177
        %v2461 = vunpack.c.l.b16 %v2178
        %v2462 = vunpack.c.l.b16 %v2179
        %v2463 = vunpack.c.l.b16 %v2180
        %v2464 = vpack.c.b16 %v2453, %v2452
        %v2465 = vpack.c.b16 %v2455, %v2454
        %v2466 = vpack.c.b16 %v2457, %v2456
        %v2467 = vpack.c.b16 %v2459, %v2458
        %v2468 = vpack.c.b16 %v2461, %v2460
        %v2469 = vpack.c.b16 %v2463, %v2462
        %v2477 = vsel %vm1199, %v2153, 0
        %v2480 = vsel %vm1199, %v2154, 0
        %2482 = vmatprep.subr.bf16.mxu0 0
        %2483 = vmatpush1.bf16.msra.mxu0 %v2464
        %2484 = vmatprep.subr.bf16.mxu0 0
        %2485 = vmatpush1.bf16.msra.mxu0 %v2465
        %2486 = vmatprep.subr.bf16.mxu0 0
        %2487 = vmatpush1.bf16.msra.mxu0 %v2466
        %2488 = vmatprep.subr.bf16.mxu0 0
        %2489 = vmatpush1.bf16.msra.mxu0 %v2467
        %2490 = vmatprep.subr.bf16.mxu0 0
        %2491 = vmatpush1.bf16.msra.mxu0 %v2468
        %2492 = vmatprep.subr.bf16.mxu0 0
        %2493 = vmatpush1.bf16.msra.mxu0 %v2469
        %2494 = vmatprep.subr.bf16.mxu0 0
        %2495 = vmatpush1.bf16.msra.mxu0 0
        %2496 = vmatprep.subr.bf16.mxu0 0
        %2497 = vmatpush1.bf16.msra.mxu0 0
        %2498 = vmatprep.subr.bf16.mxu0 0
        %2499 = vmatpush1.bf16.msra.mxu0 0
        %2500 = vmatprep.subr.bf16.mxu0 0
        %2501 = vmatpush1.bf16.msra.mxu0 0
        %2502 = vmatprep.subr.bf16.mxu0 0
        %2503 = vmatpush1.bf16.msra.mxu0 0
        %2504 = vmatprep.subr.bf16.mxu0 0
        %2505 = vmatpush1.bf16.msra.mxu0 0
        %2506 = vmatprep.subr.bf16.mxu0 0
        %2507 = vmatpush1.bf16.msra.mxu0 0
        %2508 = vmatprep.subr.bf16.mxu0 0
        %2509 = vmatpush1.bf16.msra.mxu0 0
        %2510 = vmatprep.subr.bf16.mxu0 0
        %2511 = vmatpush1.bf16.msra.mxu0 0
        %2512 = vmatprep.subr.bf16.mxu0 0
        %2513 = vmatpush1.bf16.msra.mxu0 0
        %2514 = vmatprep.mubr.bf16.mxu0 0
        %2515 = vmatmul.mubr.bf16.gmra.mrb[0].mxu0 %v2477
        %v2516 = vpop.f32.mrb[0].mxu0
        %v2517 = vadd.f32 %v2314, %v2516
        %v2518 = vpop.f32.mrb[0].mxu0
        %v2519 = vpop.f32.mrb[0].mxu0
        %v2520 = vadd.f32 %v2317, %v2519
        %v2521 = vpop.f32.mrb[0].mxu0
        %2522 = vmatprep.mubr.bf16.mxu0 0
        %2523 = vmatmul.mubr.bf16.gmra.mrb[0].mxu0 %v2480
        %v2524 = vpop.f32.mrb[0].mxu0
        %v2525 = vadd.f32 %v2322, %v2524
        %v2526 = vpop.f32.mrb[0].mxu0
        %v2527 = vpop.f32.mrb[0].mxu0
        %v2528 = vadd.f32 %v2325, %v2527
        %v2529 = vpop.f32.mrb[0].mxu0
        %2530 = vmatprep.mubr.bf16.mxu0 0
        %2531 = vmatmul.mubr.bf16.gmra.mrb[0].mxu0 %v2232
        %v2532 = vpop.f32.mrb[0].mxu0
        %v2533 = vadd.f32 %v2330, %v2532
        %v2534 = vpop.f32.mrb[0].mxu0
        %v2535 = vpop.f32.mrb[0].mxu0
        %v2536 = vadd.f32 %v2333, %v2535
        %v2537 = vpop.f32.mrb[0].mxu0
        %2538 = vmatprep.mubr.bf16.mxu0 0
        %2539 = vmatmul.mubr.bf16.gmra.mrb[0].mxu0 %v2235
        %v2540 = vpop.f32.mrb[0].mxu0
        %v2541 = vadd.f32 %v2338, %v2540
        %v2542 = vpop.f32.mrb[0].mxu0
        %v2543 = vpop.f32.mrb[0].mxu0
        %v2544 = vadd.f32 %v2341, %v2543
        %v2545 = vpop.f32.mrb[0].mxu0
        %2546 = vmatprep.mubr.bf16.mxu0 0
        %2547 = vmatmul.mubr.bf16.gmra.mrb[0].mxu0 %v2238
        %v2548 = vpop.f32.mrb[0].mxu0
        %v2549 = vadd.f32 %v2346, %v2548
        %v2550 = vpop.f32.mrb[0].mxu0
        %v2551 = vpop.f32.mrb[0].mxu0
        %v2552 = vadd.f32 %v2349, %v2551
        %v2553 = vpop.f32.mrb[0].mxu0
        %2554 = vmatprep.mubr.bf16.mxu0 0
        %2555 = vmatmul.mubr.bf16.gmra.mrb[0].mxu0 %v2241
        %v2556 = vpop.f32.mrb[0].mxu0
        %v2557 = vadd.f32 %v2354, %v2556
        %v2558 = vpop.f32.mrb[0].mxu0
        %v2559 = vpop.f32.mrb[0].mxu0
        %v2560 = vadd.f32 %v2357, %v2559
        %v2561 = vpop.f32.mrb[0].mxu0
        %2562 = vmatprep.mubr.bf16.mxu0 0
        %2563 = vmatmul.mubr.bf16.gmra.mrb[0].mxu0 %v2244
        %v2564 = vpop.f32.mrb[0].mxu0
        %v2565 = vadd.f32 %v2362, %v2564
        %v2566 = vpop.f32.mrb[0].mxu0
        %v2567 = vpop.f32.mrb[0].mxu0
        %v2568 = vadd.f32 %v2365, %v2567
        %v2569 = vpop.f32.mrb[0].mxu0
        %2570 = vmatprep.mubr.bf16.mxu0 0
        %2571 = vmatmul.mubr.bf16.gmra.mrb[0].mxu0 %v2247
        %v2572 = vpop.f32.mrb[0].mxu0
        %v2573 = vadd.f32 %v2370, %v2572
        %v2574 = vpop.f32.mrb[0].mxu0
        %v2575 = vpop.f32.mrb[0].mxu0
        %v2576 = vadd.f32 %v2373, %v2575
        %v2577 = vpop.f32.mrb[0].mxu0
        %2578 = vmatprep.mubr.bf16.mxu0 0
        %2579 = vmatmul.mubr.bf16.gmra.mrb[0].mxu0 %v2250
        %v2580 = vpop.f32.mrb[0].mxu0
        %v2581 = vadd.f32 %v2378, %v2580
        %v2582 = vpop.f32.mrb[0].mxu0
        %v2583 = vpop.f32.mrb[0].mxu0
        %v2584 = vadd.f32 %v2381, %v2583
        %v2585 = vpop.f32.mrb[0].mxu0
        %2586 = vmatprep.mubr.bf16.mxu0 0
        %2587 = vmatmul.mubr.bf16.gmra.mrb[0].mxu0 %v2253
        %v2588 = vpop.f32.mrb[0].mxu0
        %v2589 = vadd.f32 %v2386, %v2588
        %v2590 = vpop.f32.mrb[0].mxu0
        %v2591 = vpop.f32.mrb[0].mxu0
        %v2592 = vadd.f32 %v2389, %v2591
        %v2593 = vpop.f32.mrb[0].mxu0
        %2594 = vmatprep.mubr.bf16.mxu0 0
        %2595 = vmatmul.mubr.bf16.gmra.mrb[0].mxu0 %v2256
        %v2596 = vpop.f32.mrb[0].mxu0
        %v2597 = vadd.f32 %v2394, %v2596
        %v2598 = vpop.f32.mrb[0].mxu0
        %v2599 = vpop.f32.mrb[0].mxu0
        %v2600 = vadd.f32 %v2397, %v2599
        %v2601 = vpop.f32.mrb[0].mxu0
        %2602 = vmatprep.mubr.bf16.mxu0 0
        %2603 = vmatmul.mubr.bf16.gmra.mrb[0].mxu0 %v2259
        %v2604 = vpop.f32.mrb[0].mxu0
        %v2605 = vadd.f32 %v2402, %v2604
        %v2606 = vpop.f32.mrb[0].mxu0
        %v2607 = vpop.f32.mrb[0].mxu0
        %v2608 = vadd.f32 %v2405, %v2607
        %v2609 = vpop.f32.mrb[0].mxu0
        %2610 = vmatprep.mubr.bf16.mxu0 0
        %2611 = vmatmul.mubr.bf16.gmra.mrb[0].mxu0 %v2262
        %v2612 = vpop.f32.mrb[0].mxu0
        %v2613 = vadd.f32 %v2410, %v2612
        %v2614 = vpop.f32.mrb[0].mxu0
        %v2615 = vpop.f32.mrb[0].mxu0
        %v2616 = vadd.f32 %v2413, %v2615
        %v2617 = vpop.f32.mrb[0].mxu0
        %2618 = vmatprep.mubr.bf16.mxu0 0
        %2619 = vmatmul.mubr.bf16.gmra.mrb[0].mxu0 %v2265
        %v2620 = vpop.f32.mrb[0].mxu0
        %v2621 = vadd.f32 %v2418, %v2620
        %v2622 = vpop.f32.mrb[0].mxu0
        %v2623 = vpop.f32.mrb[0].mxu0
        %v2624 = vadd.f32 %v2421, %v2623
        %v2625 = vpop.f32.mrb[0].mxu0
        %2626 = vmatprep.mubr.bf16.mxu0 0
        %2627 = vmatmul.mubr.bf16.gmra.mrb[0].mxu0 %v2268
        %v2628 = vpop.f32.mrb[0].mxu0
        %v2629 = vadd.f32 %v2426, %v2628
        %v2630 = vpop.f32.mrb[0].mxu0
        %v2631 = vpop.f32.mrb[0].mxu0
        %v2632 = vadd.f32 %v2429, %v2631
        %v2633 = vpop.f32.mrb[0].mxu0
        %2634 = vmatprep.mubr.bf16.mxu0 0
        %2635 = vmatmul.mubr.bf16.gmra.mrb[0].mxu0 %v2271
        %v2636 = vpop.f32.mrb[0].mxu0
        %v2637 = vadd.f32 %v2434, %v2636
        %v2638 = vpop.f32.mrb[0].mxu0
        %v2639 = vpop.f32.mrb[0].mxu0
        %v2640 = vadd.f32 %v2437, %v2639
        %v2641 = vpop.f32.mrb[0].mxu0
        %2642 = vdwg.mxu0
        %v2643 = vld [vmem:[#allocation2 + $0xa0] sm:$0xff]
        %v2644 = vld [vmem:[#allocation2 + $0xa8] sm:$0xff]
        %v2645 = vld [vmem:[#allocation2 + $0xb0] sm:$0xff]
        %v2646 = vld [vmem:[#allocation2 + $0xb8] sm:$0xff]
        %v2647 = vld [vmem:[#allocation2 + $0xc0] sm:$0xff]
        %v2648 = vld [vmem:[#allocation2 + $0xc8] sm:$0xff]
        %v2649 = vld [vmem:[#allocation2 + $0xd0] sm:$0xff]
        %v2650 = vld [vmem:[#allocation2 + $0xd8] sm:$0xff]
        %v2651 = vld [vmem:[#allocation2 + $0xe0] sm:$0xff]
        %v2652 = vld [vmem:[#allocation2 + $0xe8] sm:$0xff]
        %v2653 = vld [vmem:[#allocation2 + $0xf0] sm:$0xff]
        %v2654 = vld [vmem:[#allocation2 + $0xf8] sm:$0xff]
        %v2655 = vld [vmem:[#allocation2 + $0x100] sm:$0xff]
        %v2656 = vld [vmem:[#allocation2 + $0x108] sm:$0xff]
        %v2657 = vld [vmem:[#allocation2 + $0x110] sm:$0xff]
        %v2658 = vld [vmem:[#allocation2 + $0x118] sm:$0xff]
        %v2659 = vld [vmem:[%s1759] sm:$0xf]
        %v2660 = vld [vmem:[%s1759 + $0x4] sm:$0xf]
        %v2661 = vld [vmem:[%s1759 + $0x8] sm:$0xf]
        %v2662 = vld [vmem:[%s1759 + $0xc] sm:$0xf]
        %v2663 = vld [vmem:[%s1759 + $0x10] sm:$0xf]
        %v2664 = vld [vmem:[%s1759 + $0x14] sm:$0xf]
        %v2665 = vld [vmem:[%s1759 + $0x18] sm:$0xf]
        %v2666 = vld [vmem:[%s1759 + $0x1c] sm:$0xf]
        %v2667 = vld [vmem:[%s1759 + $0x20] sm:$0xf]
        %v2668 = vld [vmem:[%s1759 + $0x24] sm:$0xf]
        %v2669 = vld [vmem:[%s1759 + $0x28] sm:$0xf]
        %v2670 = vld [vmem:[%s1759 + $0x2c] sm:$0xf]
        %v2683 = vunpack.c.l.b16 %v2659
        %v2684 = vunpack.c.l.b16 %v2660
        %v2685 = vunpack.c.l.b16 %v2661
        %v2686 = vunpack.c.l.b16 %v2662
        %v2687 = vunpack.c.l.b16 %v2663
        %v2688 = vunpack.c.l.b16 %v2664
        %v2689 = vunpack.c.l.b16 %v2665
        %v2690 = vunpack.c.l.b16 %v2666
        %v2691 = vunpack.c.l.b16 %v2667
        %v2692 = vunpack.c.l.b16 %v2668
        %v2693 = vunpack.c.l.b16 %v2669
        %v2694 = vunpack.c.l.b16 %v2670
        %v2695 = vpack.c.b16 %v2684, %v2683
        %v2696 = vpack.c.b16 %v2686, %v2685
        %v2697 = vpack.c.b16 %v2688, %v2687
        %v2698 = vpack.c.b16 %v2690, %v2689
        %v2699 = vpack.c.b16 %v2692, %v2691
        %v2700 = vpack.c.b16 %v2694, %v2693
        %v2708 = vsel %vm1199, %v2643, 0
        %v2711 = vsel %vm1199, %v2644, 0
        %v2714 = vsel %vm1199, %v2645, 0
        %v2717 = vsel %vm1199, %v2646, 0
        %v2720 = vsel %vm1199, %v2647, 0
        %v2723 = vsel %vm1199, %v2648, 0
        %v2726 = vsel %vm1199, %v2649, 0
        %v2729 = vsel %vm1199, %v2650, 0
        %v2732 = vsel %vm1199, %v2651, 0
        %v2735 = vsel %vm1199, %v2652, 0
        %v2738 = vsel %vm1199, %v2653, 0
        %v2741 = vsel %vm1199, %v2654, 0
        %v2744 = vsel %vm1199, %v2655, 0
        %v2747 = vsel %vm1199, %v2656, 0
        %v2750 = vsel %vm1199, %v2657, 0
        %v2753 = vsel %vm1199, %v2658, 0
        %2755 = vmatprep.subr.bf16.mxu0 0
        %2756 = vmatpush1.bf16.msra.mxu0 %v2695
        %2757 = vmatprep.subr.bf16.mxu0 0
        %2758 = vmatpush1.bf16.msra.mxu0 %v2696
        %2759 = vmatprep.subr.bf16.mxu0 0
        %2760 = vmatpush1.bf16.msra.mxu0 %v2697
        %2761 = vmatprep.subr.bf16.mxu0 0
        %2762 = vmatpush1.bf16.msra.mxu0 %v2698
        %2763 = vmatprep.subr.bf16.mxu0 0
        %2764 = vmatpush1.bf16.msra.mxu0 %v2699
        %2765 = vmatprep.subr.bf16.mxu0 0
        %2766 = vmatpush1.bf16.msra.mxu0 %v2700
        %2767 = vmatprep.subr.bf16.mxu0 0
        %2768 = vmatpush1.bf16.msra.mxu0 0
        %2769 = vmatprep.subr.bf16.mxu0 0
        %2770 = vmatpush1.bf16.msra.mxu0 0
        %2771 = vmatprep.subr.bf16.mxu0 0
        %2772 = vmatpush1.bf16.msra.mxu0 0
        %2773 = vmatprep.subr.bf16.mxu0 0
        %2774 = vmatpush1.bf16.msra.mxu0 0
        %2775 = vmatprep.subr.bf16.mxu0 0
        %2776 = vmatpush1.bf16.msra.mxu0 0
        %2777 = vmatprep.subr.bf16.mxu0 0
        %2778 = vmatpush1.bf16.msra.mxu0 0
        %2779 = vmatprep.subr.bf16.mxu0 0
        %2780 = vmatpush1.bf16.msra.mxu0 0
        %2781 = vmatprep.subr.bf16.mxu0 0
        %2782 = vmatpush1.bf16.msra.mxu0 0
        %2783 = vmatprep.subr.bf16.mxu0 0
        %2784 = vmatpush1.bf16.msra.mxu0 0
        %2785 = vmatprep.subr.bf16.mxu0 0
        %2786 = vmatpush1.bf16.msra.mxu0 0
        %2787 = vmatprep.mubr.bf16.mxu0 0
        %2788 = vmatmul.mubr.bf16.gmra.mrb[0].mxu0 %v2708
        %v2789 = vpop.f32.mrb[0].mxu0
        %v2790 = vadd.f32 0.0, %v2789
        %v2791 = vpop.f32.mrb[0].mxu0
        %v2792 = vpop.f32.mrb[0].mxu0
        %v2793 = vadd.f32 0.0, %v2792
        %v2794 = vpop.f32.mrb[0].mxu0
        %2795 = vmatprep.mubr.bf16.mxu0 0
        %2796 = vmatmul.mubr.bf16.gmra.mrb[0].mxu0 %v2711
        %v2797 = vpop.f32.mrb[0].mxu0
        %v2798 = vadd.f32 0.0, %v2797
        %v2799 = vpop.f32.mrb[0].mxu0
        %v2800 = vpop.f32.mrb[0].mxu0
        %v2801 = vadd.f32 0.0, %v2800
        %v2802 = vpop.f32.mrb[0].mxu0
        %2803 = vmatprep.mubr.bf16.mxu0 0
        %2804 = vmatmul.mubr.bf16.gmra.mrb[0].mxu0 %v2714
        %v2805 = vpop.f32.mrb[0].mxu0
        %v2806 = vadd.f32 0.0, %v2805
        %v2807 = vpop.f32.mrb[0].mxu0
        %v2808 = vpop.f32.mrb[0].mxu0
        %v2809 = vadd.f32 0.0, %v2808
        %v2810 = vpop.f32.mrb[0].mxu0
        %2811 = vmatprep.mubr.bf16.mxu0 0
        %2812 = vmatmul.mubr.bf16.gmra.mrb[0].mxu0 %v2717
        %v2813 = vpop.f32.mrb[0].mxu0
        %v2814 = vadd.f32 0.0, %v2813
        %v2815 = vpop.f32.mrb[0].mxu0
        %v2816 = vpop.f32.mrb[0].mxu0
        %v2817 = vadd.f32 0.0, %v2816
        %v2818 = vpop.f32.mrb[0].mxu0
        %2819 = vmatprep.mubr.bf16.mxu0 0
        %2820 = vmatmul.mubr.bf16.gmra.mrb[0].mxu0 %v2720
        %v2821 = vpop.f32.mrb[0].mxu0
        %v2822 = vadd.f32 0.0, %v2821
        %v2823 = vpop.f32.mrb[0].mxu0
        %v2824 = vpop.f32.mrb[0].mxu0
        %v2825 = vadd.f32 0.0, %v2824
        %v2826 = vpop.f32.mrb[0].mxu0
        %2827 = vmatprep.mubr.bf16.mxu0 0
        %2828 = vmatmul.mubr.bf16.gmra.mrb[0].mxu0 %v2723
        %v2829 = vpop.f32.mrb[0].mxu0
        %v2830 = vadd.f32 0.0, %v2829
        %v2831 = vpop.f32.mrb[0].mxu0
        %v2832 = vpop.f32.mrb[0].mxu0
        %v2833 = vadd.f32 0.0, %v2832
        %v2834 = vpop.f32.mrb[0].mxu0
        %2835 = vmatprep.mubr.bf16.mxu0 0
        %2836 = vmatmul.mubr.bf16.gmra.mrb[0].mxu0 %v2726
        %v2837 = vpop.f32.mrb[0].mxu0
        %v2838 = vadd.f32 0.0, %v2837
        %v2839 = vpop.f32.mrb[0].mxu0
        %v2840 = vpop.f32.mrb[0].mxu0
        %v2841 = vadd.f32 0.0, %v2840
        %v2842 = vpop.f32.mrb[0].mxu0
        %2843 = vmatprep.mubr.bf16.mxu0 0
        %2844 = vmatmul.mubr.bf16.gmra.mrb[0].mxu0 %v2729
        %v2845 = vpop.f32.mrb[0].mxu0
        %v2846 = vadd.f32 0.0, %v2845
        %v2847 = vpop.f32.mrb[0].mxu0
        %v2848 = vpop.f32.mrb[0].mxu0
        %v2849 = vadd.f32 0.0, %v2848
        %v2850 = vpop.f32.mrb[0].mxu0
        %2851 = vmatprep.mubr.bf16.mxu0 0
        %2852 = vmatmul.mubr.bf16.gmra.mrb[0].mxu0 %v2732
        %v2853 = vpop.f32.mrb[0].mxu0
        %v2854 = vadd.f32 0.0, %v2853
        %v2855 = vpop.f32.mrb[0].mxu0
        %v2856 = vpop.f32.mrb[0].mxu0
        %v2857 = vadd.f32 0.0, %v2856
        %v2858 = vpop.f32.mrb[0].mxu0
        %2859 = vmatprep.mubr.bf16.mxu0 0
        %2860 = vmatmul.mubr.bf16.gmra.mrb[0].mxu0 %v2735
        %v2861 = vpop.f32.mrb[0].mxu0
        %v2862 = vadd.f32 0.0, %v2861
        %v2863 = vpop.f32.mrb[0].mxu0
        %v2864 = vpop.f32.mrb[0].mxu0
        %v2865 = vadd.f32 0.0, %v2864
        %v2866 = vpop.f32.mrb[0].mxu0
        %2867 = vmatprep.mubr.bf16.mxu0 0
        %2868 = vmatmul.mubr.bf16.gmra.mrb[0].mxu0 %v2738
        %v2869 = vpop.f32.mrb[0].mxu0
        %v2870 = vadd.f32 0.0, %v2869
        %v2871 = vpop.f32.mrb[0].mxu0
        %v2872 = vpop.f32.mrb[0].mxu0
        %v2873 = vadd.f32 0.0, %v2872
        %v2874 = vpop.f32.mrb[0].mxu0
        %2875 = vmatprep.mubr.bf16.mxu0 0
        %2876 = vmatmul.mubr.bf16.gmra.mrb[0].mxu0 %v2741
        %v2877 = vpop.f32.mrb[0].mxu0
        %v2878 = vadd.f32 0.0, %v2877
        %v2879 = vpop.f32.mrb[0].mxu0
        %v2880 = vpop.f32.mrb[0].mxu0
        %v2881 = vadd.f32 0.0, %v2880
        %v2882 = vpop.f32.mrb[0].mxu0
        %2883 = vmatprep.mubr.bf16.mxu0 0
        %2884 = vmatmul.mubr.bf16.gmra.mrb[0].mxu0 %v2744
        %v2885 = vpop.f32.mrb[0].mxu0
        %v2886 = vadd.f32 0.0, %v2885
        %v2887 = vpop.f32.mrb[0].mxu0
        %v2888 = vpop.f32.mrb[0].mxu0
        %v2889 = vadd.f32 0.0, %v2888
        %v2890 = vpop.f32.mrb[0].mxu0
        %2891 = vmatprep.mubr.bf16.mxu0 0
        %2892 = vmatmul.mubr.bf16.gmra.mrb[0].mxu0 %v2747
        %v2893 = vpop.f32.mrb[0].mxu0
        %v2894 = vadd.f32 0.0, %v2893
        %v2895 = vpop.f32.mrb[0].mxu0
        %v2896 = vpop.f32.mrb[0].mxu0
        %v2897 = vadd.f32 0.0, %v2896
        %v2898 = vpop.f32.mrb[0].mxu0
        %2899 = vmatprep.mubr.bf16.mxu0 0
        %2900 = vmatmul.mubr.bf16.gmra.mrb[0].mxu0 %v2750
        %v2901 = vpop.f32.mrb[0].mxu0
        %v2902 = vadd.f32 0.0, %v2901
        %v2903 = vpop.f32.mrb[0].mxu0
        %v2904 = vpop.f32.mrb[0].mxu0
        %v2905 = vadd.f32 0.0, %v2904
        %v2906 = vpop.f32.mrb[0].mxu0
        %2907 = vmatprep.mubr.bf16.mxu0 0
        %2908 = vmatmul.mubr.bf16.gmra.mrb[0].mxu0 %v2753
        %v2909 = vpop.f32.mrb[0].mxu0
        %v2910 = vadd.f32 0.0, %v2909
        %v2911 = vpop.f32.mrb[0].mxu0
        %v2912 = vpop.f32.mrb[0].mxu0
        %v2913 = vadd.f32 0.0, %v2912
        %v2914 = vpop.f32.mrb[0].mxu0
        %2915 = vdwg.mxu0
        %v2916 = vadd.f32 %v2517, %v2790
        %v2917 = vadd.f32 %v2520, %v2793
        %v2918 = vadd.f32 %v2525, %v2798
        %v2919 = vadd.f32 %v2528, %v2801
        %v2920 = vadd.f32 %v2533, %v2806
        %v2921 = vadd.f32 %v2536, %v2809
        %v2922 = vadd.f32 %v2541, %v2814
        %v2923 = vadd.f32 %v2544, %v2817
        %v2924 = vadd.f32 %v2549, %v2822
        %v2925 = vadd.f32 %v2552, %v2825
        %v2926 = vadd.f32 %v2557, %v2830
        %v2927 = vadd.f32 %v2560, %v2833
        %v2928 = vadd.f32 %v2565, %v2838
        %v2929 = vadd.f32 %v2568, %v2841
        %v2930 = vadd.f32 %v2573, %v2846
        %v2931 = vadd.f32 %v2576, %v2849
        %v2932 = vadd.f32 %v2581, %v2854
        %v2933 = vadd.f32 %v2584, %v2857
        %v2934 = vadd.f32 %v2589, %v2862
        %v2935 = vadd.f32 %v2592, %v2865
        %v2936 = vadd.f32 %v2597, %v2870
        %v2937 = vadd.f32 %v2600, %v2873
        %v2938 = vadd.f32 %v2605, %v2878
        %v2939 = vadd.f32 %v2608, %v2881
        %v2940 = vadd.f32 %v2613, %v2886
        %v2941 = vadd.f32 %v2616, %v2889
        %v2942 = vadd.f32 %v2621, %v2894
        %v2943 = vadd.f32 %v2624, %v2897
        %v2944 = vadd.f32 %v2629, %v2902
        %v2945 = vadd.f32 %v2632, %v2905
        %v2946 = vadd.f32 %v2637, %v2910
        %v2947 = vadd.f32 %v2640, %v2913
        %v2948 = vld [vmem:[#allocation4] sm:$0x1]
        %v2950 = vlaneseq
        %v2951 = vshrl.u32 %v2950, 7
        %v2952 = vsub.s32 0, %v2951
        %v2953 = vrot.slane %v2948, %v2952
        %v2955 = vadd.f32 %v2916, %v2953
        %v2956 = vadd.f32 %v2917, %v2953
        %v2957 = vadd.f32 %v2918, %v2953
        %v2958 = vadd.f32 %v2919, %v2953
        %v2959 = vadd.f32 %v2920, %v2953
        %v2960 = vadd.f32 %v2921, %v2953
        %v2961 = vadd.f32 %v2922, %v2953
        %v2962 = vadd.f32 %v2923, %v2953
        %v2963 = vadd.f32 %v2924, %v2953
        %v2964 = vadd.f32 %v2925, %v2953
        %v2965 = vadd.f32 %v2926, %v2953
        %v2966 = vadd.f32 %v2927, %v2953
        %v2967 = vadd.f32 %v2928, %v2953
        %v2968 = vadd.f32 %v2929, %v2953
        %v2969 = vadd.f32 %v2930, %v2953
        %v2970 = vadd.f32 %v2931, %v2953
        %v2971 = vadd.f32 %v2932, %v2953
        %v2972 = vadd.f32 %v2933, %v2953
        %v2973 = vadd.f32 %v2934, %v2953
        %v2974 = vadd.f32 %v2935, %v2953
        %v2975 = vadd.f32 %v2936, %v2953
        %v2976 = vadd.f32 %v2937, %v2953
        %v2977 = vadd.f32 %v2938, %v2953
        %v2978 = vadd.f32 %v2939, %v2953
        %v2979 = vadd.f32 %v2940, %v2953
        %v2980 = vadd.f32 %v2941, %v2953
        %v2981 = vadd.f32 %v2942, %v2953
        %v2982 = vadd.f32 %v2943, %v2953
        %v2983 = vadd.f32 %v2944, %v2953
        %v2984 = vadd.f32 %v2945, %v2953
        %v2985 = vadd.f32 %v2946, %v2953
        %v2986 = vadd.f32 %v2947, %v2953
        %v2987 = vmax.f32 %v2955, 0.0
        %v2988 = vmax.f32 %v2956, 0.0
        %v2989 = vmax.f32 %v2957, 0.0
        %v2990 = vmax.f32 %v2958, 0.0
        %v2991 = vmax.f32 %v2959, 0.0
        %v2992 = vmax.f32 %v2960, 0.0
        %v2993 = vmax.f32 %v2961, 0.0
        %v2994 = vmax.f32 %v2962, 0.0
        %v2995 = vmax.f32 %v2963, 0.0
        %v2996 = vmax.f32 %v2964, 0.0
        %v2997 = vmax.f32 %v2965, 0.0
        %v2998 = vmax.f32 %v2966, 0.0
        %v2999 = vmax.f32 %v2967, 0.0
        %v3000 = vmax.f32 %v2968, 0.0
        %v3001 = vmax.f32 %v2969, 0.0
        %v3002 = vmax.f32 %v2970, 0.0
        %v3003 = vmax.f32 %v2971, 0.0
        %v3004 = vmax.f32 %v2972, 0.0
        %v3005 = vmax.f32 %v2973, 0.0
        %v3006 = vmax.f32 %v2974, 0.0
        %v3007 = vmax.f32 %v2975, 0.0
        %v3008 = vmax.f32 %v2976, 0.0
        %v3009 = vmax.f32 %v2977, 0.0
        %v3010 = vmax.f32 %v2978, 0.0
        %v3011 = vmax.f32 %v2979, 0.0
        %v3012 = vmax.f32 %v2980, 0.0
        %v3013 = vmax.f32 %v2981, 0.0
        %v3014 = vmax.f32 %v2982, 0.0
        %v3015 = vmax.f32 %v2983, 0.0
        %v3016 = vmax.f32 %v2984, 0.0
        %v3017 = vmax.f32 %v2985, 0.0
        %v3018 = vmax.f32 %v2986, 0.0
        %3019 = vst.msk [vmem:[#allocation3 + $0x100] sm:$0xff] %vm2120, %v2987
        %3020 = vst.msk [vmem:[#allocation3 + $0x108] sm:$0xff] %vm2120, %v2988
        %3021 = vst.msk [vmem:[#allocation3 + $0x110] sm:$0xff] %vm2120, %v2989
        %3022 = vst.msk [vmem:[#allocation3 + $0x118] sm:$0xff] %vm2120, %v2990
        %3023 = vst.msk [vmem:[#allocation3 + $0x120] sm:$0xff] %vm2120, %v2991
        %3024 = vst.msk [vmem:[#allocation3 + $0x128] sm:$0xff] %vm2120, %v2992
        %3025 = vst.msk [vmem:[#allocation3 + $0x130] sm:$0xff] %vm2120, %v2993
        %3026 = vst.msk [vmem:[#allocation3 + $0x138] sm:$0xff] %vm2120, %v2994
        %3027 = vst.msk [vmem:[#allocation3 + $0x140] sm:$0xff] %vm2120, %v2995
        %3028 = vst.msk [vmem:[#allocation3 + $0x148] sm:$0xff] %vm2120, %v2996
        %3029 = vst.msk [vmem:[#allocation3 + $0x150] sm:$0xff] %vm2120, %v2997
        %3030 = vst.msk [vmem:[#allocation3 + $0x158] sm:$0xff] %vm2120, %v2998
        %3031 = vst.msk [vmem:[#allocation3 + $0x160] sm:$0xff] %vm2120, %v2999
        %3032 = vst.msk [vmem:[#allocation3 + $0x168] sm:$0xff] %vm2120, %v3000
        %3033 = vst.msk [vmem:[#allocation3 + $0x170] sm:$0xff] %vm2120, %v3001
        %3034 = vst.msk [vmem:[#allocation3 + $0x178] sm:$0xff] %vm2120, %v3002
        %3035 = vst.msk [vmem:[#allocation3 + $0x180] sm:$0xff] %vm2120, %v3003
        %3036 = vst.msk [vmem:[#allocation3 + $0x188] sm:$0xff] %vm2120, %v3004
        %3037 = vst.msk [vmem:[#allocation3 + $0x190] sm:$0xff] %vm2120, %v3005
        %3038 = vst.msk [vmem:[#allocation3 + $0x198] sm:$0xff] %vm2120, %v3006
        %3039 = vst.msk [vmem:[#allocation3 + $0x1a0] sm:$0xff] %vm2120, %v3007
        %3040 = vst.msk [vmem:[#allocation3 + $0x1a8] sm:$0xff] %vm2120, %v3008
        %3041 = vst.msk [vmem:[#allocation3 + $0x1b0] sm:$0xff] %vm2120, %v3009
        %3042 = vst.msk [vmem:[#allocation3 + $0x1b8] sm:$0xff] %vm2120, %v3010
        %3043 = vst.msk [vmem:[#allocation3 + $0x1c0] sm:$0xff] %vm2120, %v3011
        %3044 = vst.msk [vmem:[#allocation3 + $0x1c8] sm:$0xff] %vm2120, %v3012
        %3045 = vst.msk [vmem:[#allocation3 + $0x1d0] sm:$0xff] %vm2120, %v3013
        %3046 = vst.msk [vmem:[#allocation3 + $0x1d8] sm:$0xff] %vm2120, %v3014
        %3047 = vst.msk [vmem:[#allocation3 + $0x1e0] sm:$0xff] %vm2120, %v3015
        %3048 = vst.msk [vmem:[#allocation3 + $0x1e8] sm:$0xff] %vm2120, %v3016
        %3049 = vst.msk [vmem:[#allocation3 + $0x1f0] sm:$0xff] %vm2120, %v3017
        %3050 = vst.msk [vmem:[#allocation3 + $0x1f8] sm:$0xff] %vm2120, %v3018
        %v3051 = vld [vmem:[#allocation2 + $0x100] sm:$0xff]
        %v3052 = vld [vmem:[#allocation2 + $0x108] sm:$0xff]
        %v3053 = vld [vmem:[#allocation2 + $0x110] sm:$0xff]
        %v3054 = vld [vmem:[#allocation2 + $0x118] sm:$0xff]
        %v3055 = vld [vmem:[#allocation2 + $0x120] sm:$0xff]
        %v3056 = vld [vmem:[#allocation2 + $0x128] sm:$0xff]
        %v3057 = vld [vmem:[#allocation2 + $0x130] sm:$0xff]
        %v3058 = vld [vmem:[#allocation2 + $0x138] sm:$0xff]
        %v3059 = vld [vmem:[#allocation2 + $0x140] sm:$0xff]
        %v3060 = vld [vmem:[#allocation2 + $0x148] sm:$0xff]
        %v3061 = vld [vmem:[#allocation2 + $0x150] sm:$0xff]
        %v3062 = vld [vmem:[#allocation2 + $0x158] sm:$0xff]
        %v3063 = vld [vmem:[#allocation2 + $0x160] sm:$0xff]
        %v3064 = vld [vmem:[#allocation2 + $0x168] sm:$0xff]
        %v3065 = vld [vmem:[#allocation2 + $0x170] sm:$0xff]
        %v3066 = vld [vmem:[#allocation2 + $0x178] sm:$0xff]
        %v3067 = vld [vmem:[%s3] sm:$0xf]
        %v3068 = vld [vmem:[%s3 + $0x4] sm:$0xf]
        %v3069 = vld [vmem:[%s3 + $0x8] sm:$0xf]
        %v3070 = vld [vmem:[%s3 + $0xc] sm:$0xf]
        %v3071 = vld [vmem:[%s3 + $0x10] sm:$0xf]
        %v3072 = vld [vmem:[%s3 + $0x14] sm:$0xf]
        %v3073 = vld [vmem:[%s3 + $0x18] sm:$0xf]
        %v3074 = vld [vmem:[%s3 + $0x1c] sm:$0xf]
        %v3075 = vld [vmem:[%s3 + $0x20] sm:$0xf]
        %v3076 = vld [vmem:[%s3 + $0x24] sm:$0xf]
        %v3077 = vld [vmem:[%s3 + $0x28] sm:$0xf]
        %v3078 = vld [vmem:[%s3 + $0x2c] sm:$0xf]
        %v3079 = vld [vmem:[#allocation2 + $0x180] sm:$0xff]
        %v3080 = vld [vmem:[#allocation2 + $0x188] sm:$0xff]
        %v3081 = vld [vmem:[%s1282] sm:$0xf]
        %v3082 = vld [vmem:[%s1282 + $0x4] sm:$0xf]
        %v3083 = vld [vmem:[%s1282 + $0x8] sm:$0xf]
        %v3084 = vld [vmem:[%s1282 + $0xc] sm:$0xf]
        %v3085 = vld [vmem:[%s1282 + $0x10] sm:$0xf]
        %v3086 = vld [vmem:[%s1282 + $0x14] sm:$0xf]
        %v3087 = vld [vmem:[%s1282 + $0x18] sm:$0xf]
        %v3088 = vld [vmem:[%s1282 + $0x1c] sm:$0xf]
        %v3089 = vld [vmem:[%s1282 + $0x20] sm:$0xf]
        %v3090 = vld [vmem:[%s1282 + $0x24] sm:$0xf]
        %v3091 = vld [vmem:[%s1282 + $0x28] sm:$0xf]
        %v3092 = vld [vmem:[%s1282 + $0x2c] sm:$0xf]
        %v3105 = vunpack.c.l.b16 %v3081
        %v3106 = vunpack.c.l.b16 %v3082
        %v3107 = vunpack.c.l.b16 %v3083
        %v3108 = vunpack.c.l.b16 %v3084
        %v3109 = vunpack.c.l.b16 %v3085
        %v3110 = vunpack.c.l.b16 %v3086
        %v3111 = vunpack.c.l.b16 %v3087
        %v3112 = vunpack.c.l.b16 %v3088
        %v3113 = vunpack.c.l.b16 %v3089
        %v3114 = vunpack.c.l.b16 %v3090
        %v3115 = vunpack.c.l.b16 %v3091
        %v3116 = vunpack.c.l.b16 %v3092
        %v3117 = vpack.c.b16 %v3106, %v3105
        %v3118 = vpack.c.b16 %v3108, %v3107
        %v3119 = vpack.c.b16 %v3110, %v3109
        %v3120 = vpack.c.b16 %v3112, %v3111
        %v3121 = vpack.c.b16 %v3114, %v3113
        %v3122 = vpack.c.b16 %v3116, %v3115
        %v3130 = vsel %vm1199, %v3053, 0
        %v3133 = vsel %vm1199, %v3054, 0
        %v3136 = vsel %vm1199, %v3055, 0
        %v3139 = vsel %vm1199, %v3056, 0
        %v3142 = vsel %vm1199, %v3057, 0
        %v3145 = vsel %vm1199, %v3058, 0
        %v3148 = vsel %vm1199, %v3059, 0
        %v3151 = vsel %vm1199, %v3060, 0
        %v3154 = vsel %vm1199, %v3061, 0
        %v3157 = vsel %vm1199, %v3062, 0
        %v3160 = vsel %vm1199, %v3063, 0
        %v3163 = vsel %vm1199, %v3064, 0
        %v3166 = vsel %vm1199, %v3065, 0
        %v3169 = vsel %vm1199, %v3066, 0
        %v3172 = vsel %vm1199, %v3079, 0
        %v3175 = vsel %vm1199, %v3080, 0
        %3177 = vmatprep.subr.bf16.mxu0 0
        %3178 = vmatpush1.bf16.msra.mxu0 %v3117
        %3179 = vmatprep.subr.bf16.mxu0 0
        %3180 = vmatpush1.bf16.msra.mxu0 %v3118
        %3181 = vmatprep.subr.bf16.mxu0 0
        %3182 = vmatpush1.bf16.msra.mxu0 %v3119
        %3183 = vmatprep.subr.bf16.mxu0 0
        %3184 = vmatpush1.bf16.msra.mxu0 %v3120
        %3185 = vmatprep.subr.bf16.mxu0 0
        %3186 = vmatpush1.bf16.msra.mxu0 %v3121
        %3187 = vmatprep.subr.bf16.mxu0 0
        %3188 = vmatpush1.bf16.msra.mxu0 %v3122
        %3189 = vmatprep.subr.bf16.mxu0 0
        %3190 = vmatpush1.bf16.msra.mxu0 0
        %3191 = vmatprep.subr.bf16.mxu0 0
        %3192 = vmatpush1.bf16.msra.mxu0 0
        %3193 = vmatprep.subr.bf16.mxu0 0
        %3194 = vmatpush1.bf16.msra.mxu0 0
        %3195 = vmatprep.subr.bf16.mxu0 0
        %3196 = vmatpush1.bf16.msra.mxu0 0
        %3197 = vmatprep.subr.bf16.mxu0 0
        %3198 = vmatpush1.bf16.msra.mxu0 0
        %3199 = vmatprep.subr.bf16.mxu0 0
        %3200 = vmatpush1.bf16.msra.mxu0 0
        %3201 = vmatprep.subr.bf16.mxu0 0
        %3202 = vmatpush1.bf16.msra.mxu0 0
        %3203 = vmatprep.subr.bf16.mxu0 0
        %3204 = vmatpush1.bf16.msra.mxu0 0
        %3205 = vmatprep.subr.bf16.mxu0 0
        %3206 = vmatpush1.bf16.msra.mxu0 0
        %3207 = vmatprep.subr.bf16.mxu0 0
        %3208 = vmatpush1.bf16.msra.mxu0 0
        %3209 = vmatprep.mubr.bf16.mxu0 0
        %3210 = vmatmul.mubr.bf16.gmra.mrb[0].mxu0 %v3130
        %v3211 = vpop.f32.mrb[0].mxu0
        %v3212 = vadd.f32 0.0, %v3211
        %v3213 = vpop.f32.mrb[0].mxu0
        %v3214 = vpop.f32.mrb[0].mxu0
        %v3215 = vadd.f32 0.0, %v3214
        %v3216 = vpop.f32.mrb[0].mxu0
        %3217 = vmatprep.mubr.bf16.mxu0 0
        %3218 = vmatmul.mubr.bf16.gmra.mrb[0].mxu0 %v3133
        %v3219 = vpop.f32.mrb[0].mxu0
        %v3220 = vadd.f32 0.0, %v3219
        %v3221 = vpop.f32.mrb[0].mxu0
        %v3222 = vpop.f32.mrb[0].mxu0
        %v3223 = vadd.f32 0.0, %v3222
        %v3224 = vpop.f32.mrb[0].mxu0
        %3225 = vmatprep.mubr.bf16.mxu0 0
        %3226 = vmatmul.mubr.bf16.gmra.mrb[0].mxu0 %v3136
        %v3227 = vpop.f32.mrb[0].mxu0
        %v3228 = vadd.f32 0.0, %v3227
        %v3229 = vpop.f32.mrb[0].mxu0
        %v3230 = vpop.f32.mrb[0].mxu0
        %v3231 = vadd.f32 0.0, %v3230
        %v3232 = vpop.f32.mrb[0].mxu0
        %3233 = vmatprep.mubr.bf16.mxu0 0
        %3234 = vmatmul.mubr.bf16.gmra.mrb[0].mxu0 %v3139
        %v3235 = vpop.f32.mrb[0].mxu0
        %v3236 = vadd.f32 0.0, %v3235
        %v3237 = vpop.f32.mrb[0].mxu0
        %v3238 = vpop.f32.mrb[0].mxu0
        %v3239 = vadd.f32 0.0, %v3238
        %v3240 = vpop.f32.mrb[0].mxu0
        %3241 = vmatprep.mubr.bf16.mxu0 0
        %3242 = vmatmul.mubr.bf16.gmra.mrb[0].mxu0 %v3142
        %v3243 = vpop.f32.mrb[0].mxu0
        %v3244 = vadd.f32 0.0, %v3243
        %v3245 = vpop.f32.mrb[0].mxu0
        %v3246 = vpop.f32.mrb[0].mxu0
        %v3247 = vadd.f32 0.0, %v3246
        %v3248 = vpop.f32.mrb[0].mxu0
        %3249 = vmatprep.mubr.bf16.mxu0 0
        %3250 = vmatmul.mubr.bf16.gmra.mrb[0].mxu0 %v3145
        %v3251 = vpop.f32.mrb[0].mxu0
        %v3252 = vadd.f32 0.0, %v3251
        %v3253 = vpop.f32.mrb[0].mxu0
        %v3254 = vpop.f32.mrb[0].mxu0
        %v3255 = vadd.f32 0.0, %v3254
        %v3256 = vpop.f32.mrb[0].mxu0
        %3257 = vmatprep.mubr.bf16.mxu0 0
        %3258 = vmatmul.mubr.bf16.gmra.mrb[0].mxu0 %v3148
        %v3259 = vpop.f32.mrb[0].mxu0
        %v3260 = vadd.f32 0.0, %v3259
        %v3261 = vpop.f32.mrb[0].mxu0
        %v3262 = vpop.f32.mrb[0].mxu0
        %v3263 = vadd.f32 0.0, %v3262
        %v3264 = vpop.f32.mrb[0].mxu0
        %3265 = vmatprep.mubr.bf16.mxu0 0
        %3266 = vmatmul.mubr.bf16.gmra.mrb[0].mxu0 %v3151
        %v3267 = vpop.f32.mrb[0].mxu0
        %v3268 = vadd.f32 0.0, %v3267
        %v3269 = vpop.f32.mrb[0].mxu0
        %v3270 = vpop.f32.mrb[0].mxu0
        %v3271 = vadd.f32 0.0, %v3270
        %v3272 = vpop.f32.mrb[0].mxu0
        %3273 = vmatprep.mubr.bf16.mxu0 0
        %3274 = vmatmul.mubr.bf16.gmra.mrb[0].mxu0 %v3154
        %v3275 = vpop.f32.mrb[0].mxu0
        %v3276 = vadd.f32 0.0, %v3275
        %v3277 = vpop.f32.mrb[0].mxu0
        %v3278 = vpop.f32.mrb[0].mxu0
        %v3279 = vadd.f32 0.0, %v3278
        %v3280 = vpop.f32.mrb[0].mxu0
        %3281 = vmatprep.mubr.bf16.mxu0 0
        %3282 = vmatmul.mubr.bf16.gmra.mrb[0].mxu0 %v3157
        %v3283 = vpop.f32.mrb[0].mxu0
        %v3284 = vadd.f32 0.0, %v3283
        %v3285 = vpop.f32.mrb[0].mxu0
        %v3286 = vpop.f32.mrb[0].mxu0
        %v3287 = vadd.f32 0.0, %v3286
        %v3288 = vpop.f32.mrb[0].mxu0
        %3289 = vmatprep.mubr.bf16.mxu0 0
        %3290 = vmatmul.mubr.bf16.gmra.mrb[0].mxu0 %v3160
        %v3291 = vpop.f32.mrb[0].mxu0
        %v3292 = vadd.f32 0.0, %v3291
        %v3293 = vpop.f32.mrb[0].mxu0
        %v3294 = vpop.f32.mrb[0].mxu0
        %v3295 = vadd.f32 0.0, %v3294
        %v3296 = vpop.f32.mrb[0].mxu0
        %3297 = vmatprep.mubr.bf16.mxu0 0
        %3298 = vmatmul.mubr.bf16.gmra.mrb[0].mxu0 %v3163
        %v3299 = vpop.f32.mrb[0].mxu0
        %v3300 = vadd.f32 0.0, %v3299
        %v3301 = vpop.f32.mrb[0].mxu0
        %v3302 = vpop.f32.mrb[0].mxu0
        %v3303 = vadd.f32 0.0, %v3302
        %v3304 = vpop.f32.mrb[0].mxu0
        %3305 = vmatprep.mubr.bf16.mxu0 0
        %3306 = vmatmul.mubr.bf16.gmra.mrb[0].mxu0 %v3166
        %v3307 = vpop.f32.mrb[0].mxu0
        %v3308 = vadd.f32 0.0, %v3307
        %v3309 = vpop.f32.mrb[0].mxu0
        %v3310 = vpop.f32.mrb[0].mxu0
        %v3311 = vadd.f32 0.0, %v3310
        %v3312 = vpop.f32.mrb[0].mxu0
        %3313 = vmatprep.mubr.bf16.mxu0 0
        %3314 = vmatmul.mubr.bf16.gmra.mrb[0].mxu0 %v3169
        %v3315 = vpop.f32.mrb[0].mxu0
        %v3316 = vadd.f32 0.0, %v3315
        %v3317 = vpop.f32.mrb[0].mxu0
        %v3318 = vpop.f32.mrb[0].mxu0
        %v3319 = vadd.f32 0.0, %v3318
        %v3320 = vpop.f32.mrb[0].mxu0
        %3321 = vmatprep.mubr.bf16.mxu0 0
        %3322 = vmatmul.mubr.bf16.gmra.mrb[0].mxu0 %v3172
        %v3323 = vpop.f32.mrb[0].mxu0
        %v3324 = vadd.f32 0.0, %v3323
        %v3325 = vpop.f32.mrb[0].mxu0
        %v3326 = vpop.f32.mrb[0].mxu0
        %v3327 = vadd.f32 0.0, %v3326
        %v3328 = vpop.f32.mrb[0].mxu0
        %3329 = vmatprep.mubr.bf16.mxu0 0
        %3330 = vmatmul.mubr.bf16.gmra.mrb[0].mxu0 %v3175
        %v3331 = vpop.f32.mrb[0].mxu0
        %v3332 = vadd.f32 0.0, %v3331
        %v3333 = vpop.f32.mrb[0].mxu0
        %v3334 = vpop.f32.mrb[0].mxu0
        %v3335 = vadd.f32 0.0, %v3334
        %v3336 = vpop.f32.mrb[0].mxu0
        %3337 = vdwg.mxu0
        %v3350 = vunpack.c.l.b16 %v3067
        %v3351 = vunpack.c.l.b16 %v3068
        %v3352 = vunpack.c.l.b16 %v3069
        %v3353 = vunpack.c.l.b16 %v3070
        %v3354 = vunpack.c.l.b16 %v3071
        %v3355 = vunpack.c.l.b16 %v3072
        %v3356 = vunpack.c.l.b16 %v3073
        %v3357 = vunpack.c.l.b16 %v3074
        %v3358 = vunpack.c.l.b16 %v3075
        %v3359 = vunpack.c.l.b16 %v3076
        %v3360 = vunpack.c.l.b16 %v3077
        %v3361 = vunpack.c.l.b16 %v3078
        %v3362 = vpack.c.b16 %v3351, %v3350
        %v3363 = vpack.c.b16 %v3353, %v3352
        %v3364 = vpack.c.b16 %v3355, %v3354
        %v3365 = vpack.c.b16 %v3357, %v3356
        %v3366 = vpack.c.b16 %v3359, %v3358
        %v3367 = vpack.c.b16 %v3361, %v3360
        %v3375 = vsel %vm1199, %v3051, 0
        %v3378 = vsel %vm1199, %v3052, 0
        %3380 = vmatprep.subr.bf16.mxu0 0
        %3381 = vmatpush1.bf16.msra.mxu0 %v3362
        %3382 = vmatprep.subr.bf16.mxu0 0
        %3383 = vmatpush1.bf16.msra.mxu0 %v3363
        %3384 = vmatprep.subr.bf16.mxu0 0
        %3385 = vmatpush1.bf16.msra.mxu0 %v3364
        %3386 = vmatprep.subr.bf16.mxu0 0
        %3387 = vmatpush1.bf16.msra.mxu0 %v3365
        %3388 = vmatprep.subr.bf16.mxu0 0
        %3389 = vmatpush1.bf16.msra.mxu0 %v3366
        %3390 = vmatprep.subr.bf16.mxu0 0
        %3391 = vmatpush1.bf16.msra.mxu0 %v3367
        %3392 = vmatprep.subr.bf16.mxu0 0
        %3393 = vmatpush1.bf16.msra.mxu0 0
        %3394 = vmatprep.subr.bf16.mxu0 0
        %3395 = vmatpush1.bf16.msra.mxu0 0
        %3396 = vmatprep.subr.bf16.mxu0 0
        %3397 = vmatpush1.bf16.msra.mxu0 0
        %3398 = vmatprep.subr.bf16.mxu0 0
        %3399 = vmatpush1.bf16.msra.mxu0 0
        %3400 = vmatprep.subr.bf16.mxu0 0
        %3401 = vmatpush1.bf16.msra.mxu0 0
        %3402 = vmatprep.subr.bf16.mxu0 0
        %3403 = vmatpush1.bf16.msra.mxu0 0
        %3404 = vmatprep.subr.bf16.mxu0 0
        %3405 = vmatpush1.bf16.msra.mxu0 0
        %3406 = vmatprep.subr.bf16.mxu0 0
        %3407 = vmatpush1.bf16.msra.mxu0 0
        %3408 = vmatprep.subr.bf16.mxu0 0
        %3409 = vmatpush1.bf16.msra.mxu0 0
        %3410 = vmatprep.subr.bf16.mxu0 0
        %3411 = vmatpush1.bf16.msra.mxu0 0
        %3412 = vmatprep.mubr.bf16.mxu0 0
        %3413 = vmatmul.mubr.bf16.gmra.mrb[0].mxu0 %v3375
        %v3414 = vpop.f32.mrb[0].mxu0
        %v3415 = vadd.f32 %v3212, %v3414
        %v3416 = vpop.f32.mrb[0].mxu0
        %v3417 = vpop.f32.mrb[0].mxu0
        %v3418 = vadd.f32 %v3215, %v3417
        %v3419 = vpop.f32.mrb[0].mxu0
        %3420 = vmatprep.mubr.bf16.mxu0 0
        %3421 = vmatmul.mubr.bf16.gmra.mrb[0].mxu0 %v3378
        %v3422 = vpop.f32.mrb[0].mxu0
        %v3423 = vadd.f32 %v3220, %v3422
        %v3424 = vpop.f32.mrb[0].mxu0
        %v3425 = vpop.f32.mrb[0].mxu0
        %v3426 = vadd.f32 %v3223, %v3425
        %v3427 = vpop.f32.mrb[0].mxu0
        %3428 = vmatprep.mubr.bf16.mxu0 0
        %3429 = vmatmul.mubr.bf16.gmra.mrb[0].mxu0 %v3130
        %v3430 = vpop.f32.mrb[0].mxu0
        %v3431 = vadd.f32 %v3228, %v3430
        %v3432 = vpop.f32.mrb[0].mxu0
        %v3433 = vpop.f32.mrb[0].mxu0
        %v3434 = vadd.f32 %v3231, %v3433
        %v3435 = vpop.f32.mrb[0].mxu0
        %3436 = vmatprep.mubr.bf16.mxu0 0
        %3437 = vmatmul.mubr.bf16.gmra.mrb[0].mxu0 %v3133
        %v3438 = vpop.f32.mrb[0].mxu0
        %v3439 = vadd.f32 %v3236, %v3438
        %v3440 = vpop.f32.mrb[0].mxu0
        %v3441 = vpop.f32.mrb[0].mxu0
        %v3442 = vadd.f32 %v3239, %v3441
        %v3443 = vpop.f32.mrb[0].mxu0
        %3444 = vmatprep.mubr.bf16.mxu0 0
        %3445 = vmatmul.mubr.bf16.gmra.mrb[0].mxu0 %v3136
        %v3446 = vpop.f32.mrb[0].mxu0
        %v3447 = vadd.f32 %v3244, %v3446
        %v3448 = vpop.f32.mrb[0].mxu0
        %v3449 = vpop.f32.mrb[0].mxu0
        %v3450 = vadd.f32 %v3247, %v3449
        %v3451 = vpop.f32.mrb[0].mxu0
        %3452 = vmatprep.mubr.bf16.mxu0 0
        %3453 = vmatmul.mubr.bf16.gmra.mrb[0].mxu0 %v3139
        %v3454 = vpop.f32.mrb[0].mxu0
        %v3455 = vadd.f32 %v3252, %v3454
        %v3456 = vpop.f32.mrb[0].mxu0
        %v3457 = vpop.f32.mrb[0].mxu0
        %v3458 = vadd.f32 %v3255, %v3457
        %v3459 = vpop.f32.mrb[0].mxu0
        %3460 = vmatprep.mubr.bf16.mxu0 0
        %3461 = vmatmul.mubr.bf16.gmra.mrb[0].mxu0 %v3142
        %v3462 = vpop.f32.mrb[0].mxu0
        %v3463 = vadd.f32 %v3260, %v3462
        %v3464 = vpop.f32.mrb[0].mxu0
        %v3465 = vpop.f32.mrb[0].mxu0
        %v3466 = vadd.f32 %v3263, %v3465
        %v3467 = vpop.f32.mrb[0].mxu0
        %3468 = vmatprep.mubr.bf16.mxu0 0
        %3469 = vmatmul.mubr.bf16.gmra.mrb[0].mxu0 %v3145
        %v3470 = vpop.f32.mrb[0].mxu0
        %v3471 = vadd.f32 %v3268, %v3470
        %v3472 = vpop.f32.mrb[0].mxu0
        %v3473 = vpop.f32.mrb[0].mxu0
        %v3474 = vadd.f32 %v3271, %v3473
        %v3475 = vpop.f32.mrb[0].mxu0
        %3476 = vmatprep.mubr.bf16.mxu0 0
        %3477 = vmatmul.mubr.bf16.gmra.mrb[0].mxu0 %v3148
        %v3478 = vpop.f32.mrb[0].mxu0
        %v3479 = vadd.f32 %v3276, %v3478
        %v3480 = vpop.f32.mrb[0].mxu0
        %v3481 = vpop.f32.mrb[0].mxu0
        %v3482 = vadd.f32 %v3279, %v3481
        %v3483 = vpop.f32.mrb[0].mxu0
        %3484 = vmatprep.mubr.bf16.mxu0 0
        %3485 = vmatmul.mubr.bf16.gmra.mrb[0].mxu0 %v3151
        %v3486 = vpop.f32.mrb[0].mxu0
        %v3487 = vadd.f32 %v3284, %v3486
        %v3488 = vpop.f32.mrb[0].mxu0
        %v3489 = vpop.f32.mrb[0].mxu0
        %v3490 = vadd.f32 %v3287, %v3489
        %v3491 = vpop.f32.mrb[0].mxu0
        %3492 = vmatprep.mubr.bf16.mxu0 0
        %3493 = vmatmul.mubr.bf16.gmra.mrb[0].mxu0 %v3154
        %v3494 = vpop.f32.mrb[0].mxu0
        %v3495 = vadd.f32 %v3292, %v3494
        %v3496 = vpop.f32.mrb[0].mxu0
        %v3497 = vpop.f32.mrb[0].mxu0
        %v3498 = vadd.f32 %v3295, %v3497
        %v3499 = vpop.f32.mrb[0].mxu0
        %3500 = vmatprep.mubr.bf16.mxu0 0
        %3501 = vmatmul.mubr.bf16.gmra.mrb[0].mxu0 %v3157
        %v3502 = vpop.f32.mrb[0].mxu0
        %v3503 = vadd.f32 %v3300, %v3502
        %v3504 = vpop.f32.mrb[0].mxu0
        %v3505 = vpop.f32.mrb[0].mxu0
        %v3506 = vadd.f32 %v3303, %v3505
        %v3507 = vpop.f32.mrb[0].mxu0
        %3508 = vmatprep.mubr.bf16.mxu0 0
        %3509 = vmatmul.mubr.bf16.gmra.mrb[0].mxu0 %v3160
        %v3510 = vpop.f32.mrb[0].mxu0
        %v3511 = vadd.f32 %v3308, %v3510
        %v3512 = vpop.f32.mrb[0].mxu0
        %v3513 = vpop.f32.mrb[0].mxu0
        %v3514 = vadd.f32 %v3311, %v3513
        %v3515 = vpop.f32.mrb[0].mxu0
        %3516 = vmatprep.mubr.bf16.mxu0 0
        %3517 = vmatmul.mubr.bf16.gmra.mrb[0].mxu0 %v3163
        %v3518 = vpop.f32.mrb[0].mxu0
        %v3519 = vadd.f32 %v3316, %v3518
        %v3520 = vpop.f32.mrb[0].mxu0
        %v3521 = vpop.f32.mrb[0].mxu0
        %v3522 = vadd.f32 %v3319, %v3521
        %v3523 = vpop.f32.mrb[0].mxu0
        %3524 = vmatprep.mubr.bf16.mxu0 0
        %3525 = vmatmul.mubr.bf16.gmra.mrb[0].mxu0 %v3166
        %v3526 = vpop.f32.mrb[0].mxu0
        %v3527 = vadd.f32 %v3324, %v3526
        %v3528 = vpop.f32.mrb[0].mxu0
        %v3529 = vpop.f32.mrb[0].mxu0
        %v3530 = vadd.f32 %v3327, %v3529
        %v3531 = vpop.f32.mrb[0].mxu0
        %3532 = vmatprep.mubr.bf16.mxu0 0
        %3533 = vmatmul.mubr.bf16.gmra.mrb[0].mxu0 %v3169
        %v3534 = vpop.f32.mrb[0].mxu0
        %v3535 = vadd.f32 %v3332, %v3534
        %v3536 = vpop.f32.mrb[0].mxu0
        %v3537 = vpop.f32.mrb[0].mxu0
        %v3538 = vadd.f32 %v3335, %v3537
        %v3539 = vpop.f32.mrb[0].mxu0
        %3540 = vdwg.mxu0
        %v3541 = vld [vmem:[#allocation2 + $0x120] sm:$0xff]
        %v3542 = vld [vmem:[#allocation2 + $0x128] sm:$0xff]
        %v3543 = vld [vmem:[#allocation2 + $0x130] sm:$0xff]
        %v3544 = vld [vmem:[#allocation2 + $0x138] sm:$0xff]
        %v3545 = vld [vmem:[#allocation2 + $0x140] sm:$0xff]
        %v3546 = vld [vmem:[#allocation2 + $0x148] sm:$0xff]
        %v3547 = vld [vmem:[#allocation2 + $0x150] sm:$0xff]
        %v3548 = vld [vmem:[#allocation2 + $0x158] sm:$0xff]
        %v3549 = vld [vmem:[#allocation2 + $0x160] sm:$0xff]
        %v3550 = vld [vmem:[#allocation2 + $0x168] sm:$0xff]
        %v3551 = vld [vmem:[#allocation2 + $0x170] sm:$0xff]
        %v3552 = vld [vmem:[#allocation2 + $0x178] sm:$0xff]
        %v3553 = vld [vmem:[#allocation2 + $0x180] sm:$0xff]
        %v3554 = vld [vmem:[#allocation2 + $0x188] sm:$0xff]
        %v3555 = vld [vmem:[#allocation2 + $0x190] sm:$0xff]
        %v3556 = vld [vmem:[#allocation2 + $0x198] sm:$0xff]
        %v3557 = vld [vmem:[%s1759] sm:$0xf]
        %v3558 = vld [vmem:[%s1759 + $0x4] sm:$0xf]
        %v3559 = vld [vmem:[%s1759 + $0x8] sm:$0xf]
        %v3560 = vld [vmem:[%s1759 + $0xc] sm:$0xf]
        %v3561 = vld [vmem:[%s1759 + $0x10] sm:$0xf]
        %v3562 = vld [vmem:[%s1759 + $0x14] sm:$0xf]
        %v3563 = vld [vmem:[%s1759 + $0x18] sm:$0xf]
        %v3564 = vld [vmem:[%s1759 + $0x1c] sm:$0xf]
        %v3565 = vld [vmem:[%s1759 + $0x20] sm:$0xf]
        %v3566 = vld [vmem:[%s1759 + $0x24] sm:$0xf]
        %v3567 = vld [vmem:[%s1759 + $0x28] sm:$0xf]
        %v3568 = vld [vmem:[%s1759 + $0x2c] sm:$0xf]
        %v3581 = vunpack.c.l.b16 %v3557
        %v3582 = vunpack.c.l.b16 %v3558
        %v3583 = vunpack.c.l.b16 %v3559
        %v3584 = vunpack.c.l.b16 %v3560
        %v3585 = vunpack.c.l.b16 %v3561
        %v3586 = vunpack.c.l.b16 %v3562
        %v3587 = vunpack.c.l.b16 %v3563
        %v3588 = vunpack.c.l.b16 %v3564
        %v3589 = vunpack.c.l.b16 %v3565
        %v3590 = vunpack.c.l.b16 %v3566
        %v3591 = vunpack.c.l.b16 %v3567
        %v3592 = vunpack.c.l.b16 %v3568
        %v3593 = vpack.c.b16 %v3582, %v3581
        %v3594 = vpack.c.b16 %v3584, %v3583
        %v3595 = vpack.c.b16 %v3586, %v3585
        %v3596 = vpack.c.b16 %v3588, %v3587
        %v3597 = vpack.c.b16 %v3590, %v3589
        %v3598 = vpack.c.b16 %v3592, %v3591
        %v3606 = vsel %vm1199, %v3541, 0
        %v3609 = vsel %vm1199, %v3542, 0
        %v3612 = vsel %vm1199, %v3543, 0
        %v3615 = vsel %vm1199, %v3544, 0
        %v3618 = vsel %vm1199, %v3545, 0
        %v3621 = vsel %vm1199, %v3546, 0
        %v3624 = vsel %vm1199, %v3547, 0
        %v3627 = vsel %vm1199, %v3548, 0
        %v3630 = vsel %vm1199, %v3549, 0
        %v3633 = vsel %vm1199, %v3550, 0
        %v3636 = vsel %vm1199, %v3551, 0
        %v3639 = vsel %vm1199, %v3552, 0
        %v3642 = vsel %vm1199, %v3553, 0
        %v3645 = vsel %vm1199, %v3554, 0
        %v3648 = vsel %vm1199, %v3555, 0
        %v3651 = vsel %vm1199, %v3556, 0
        %3653 = vmatprep.subr.bf16.mxu0 0
        %3654 = vmatpush1.bf16.msra.mxu0 %v3593
        %3655 = vmatprep.subr.bf16.mxu0 0
        %3656 = vmatpush1.bf16.msra.mxu0 %v3594
        %3657 = vmatprep.subr.bf16.mxu0 0
        %3658 = vmatpush1.bf16.msra.mxu0 %v3595
        %3659 = vmatprep.subr.bf16.mxu0 0
        %3660 = vmatpush1.bf16.msra.mxu0 %v3596
        %3661 = vmatprep.subr.bf16.mxu0 0
        %3662 = vmatpush1.bf16.msra.mxu0 %v3597
        %3663 = vmatprep.subr.bf16.mxu0 0
        %3664 = vmatpush1.bf16.msra.mxu0 %v3598
        %3665 = vmatprep.subr.bf16.mxu0 0
        %3666 = vmatpush1.bf16.msra.mxu0 0
        %3667 = vmatprep.subr.bf16.mxu0 0
        %3668 = vmatpush1.bf16.msra.mxu0 0
        %3669 = vmatprep.subr.bf16.mxu0 0
        %3670 = vmatpush1.bf16.msra.mxu0 0
        %3671 = vmatprep.subr.bf16.mxu0 0
        %3672 = vmatpush1.bf16.msra.mxu0 0
        %3673 = vmatprep.subr.bf16.mxu0 0
        %3674 = vmatpush1.bf16.msra.mxu0 0
        %3675 = vmatprep.subr.bf16.mxu0 0
        %3676 = vmatpush1.bf16.msra.mxu0 0
        %3677 = vmatprep.subr.bf16.mxu0 0
        %3678 = vmatpush1.bf16.msra.mxu0 0
        %3679 = vmatprep.subr.bf16.mxu0 0
        %3680 = vmatpush1.bf16.msra.mxu0 0
        %3681 = vmatprep.subr.bf16.mxu0 0
        %3682 = vmatpush1.bf16.msra.mxu0 0
        %3683 = vmatprep.subr.bf16.mxu0 0
        %3684 = vmatpush1.bf16.msra.mxu0 0
        %3685 = vmatprep.mubr.bf16.mxu0 0
        %3686 = vmatmul.mubr.bf16.gmra.mrb[0].mxu0 %v3606
        %v3687 = vpop.f32.mrb[0].mxu0
        %v3688 = vadd.f32 0.0, %v3687
        %v3689 = vpop.f32.mrb[0].mxu0
        %v3690 = vpop.f32.mrb[0].mxu0
        %v3691 = vadd.f32 0.0, %v3690
        %v3692 = vpop.f32.mrb[0].mxu0
        %3693 = vmatprep.mubr.bf16.mxu0 0
        %3694 = vmatmul.mubr.bf16.gmra.mrb[0].mxu0 %v3609
        %v3695 = vpop.f32.mrb[0].mxu0
        %v3696 = vadd.f32 0.0, %v3695
        %v3697 = vpop.f32.mrb[0].mxu0
        %v3698 = vpop.f32.mrb[0].mxu0
        %v3699 = vadd.f32 0.0, %v3698
        %v3700 = vpop.f32.mrb[0].mxu0
        %3701 = vmatprep.mubr.bf16.mxu0 0
        %3702 = vmatmul.mubr.bf16.gmra.mrb[0].mxu0 %v3612
        %v3703 = vpop.f32.mrb[0].mxu0
        %v3704 = vadd.f32 0.0, %v3703
        %v3705 = vpop.f32.mrb[0].mxu0
        %v3706 = vpop.f32.mrb[0].mxu0
        %v3707 = vadd.f32 0.0, %v3706
        %v3708 = vpop.f32.mrb[0].mxu0
        %3709 = vmatprep.mubr.bf16.mxu0 0
        %3710 = vmatmul.mubr.bf16.gmra.mrb[0].mxu0 %v3615
        %v3711 = vpop.f32.mrb[0].mxu0
        %v3712 = vadd.f32 0.0, %v3711
        %v3713 = vpop.f32.mrb[0].mxu0
        %v3714 = vpop.f32.mrb[0].mxu0
        %v3715 = vadd.f32 0.0, %v3714
        %v3716 = vpop.f32.mrb[0].mxu0
        %3717 = vmatprep.mubr.bf16.mxu0 0
        %3718 = vmatmul.mubr.bf16.gmra.mrb[0].mxu0 %v3618
        %v3719 = vpop.f32.mrb[0].mxu0
        %v3720 = vadd.f32 0.0, %v3719
        %v3721 = vpop.f32.mrb[0].mxu0
        %v3722 = vpop.f32.mrb[0].mxu0
        %v3723 = vadd.f32 0.0, %v3722
        %v3724 = vpop.f32.mrb[0].mxu0
        %3725 = vmatprep.mubr.bf16.mxu0 0
        %3726 = vmatmul.mubr.bf16.gmra.mrb[0].mxu0 %v3621
        %v3727 = vpop.f32.mrb[0].mxu0
        %v3728 = vadd.f32 0.0, %v3727
        %v3729 = vpop.f32.mrb[0].mxu0
        %v3730 = vpop.f32.mrb[0].mxu0
        %v3731 = vadd.f32 0.0, %v3730
        %v3732 = vpop.f32.mrb[0].mxu0
        %3733 = vmatprep.mubr.bf16.mxu0 0
        %3734 = vmatmul.mubr.bf16.gmra.mrb[0].mxu0 %v3624
        %v3735 = vpop.f32.mrb[0].mxu0
        %v3736 = vadd.f32 0.0, %v3735
        %v3737 = vpop.f32.mrb[0].mxu0
        %v3738 = vpop.f32.mrb[0].mxu0
        %v3739 = vadd.f32 0.0, %v3738
        %v3740 = vpop.f32.mrb[0].mxu0
        %3741 = vmatprep.mubr.bf16.mxu0 0
        %3742 = vmatmul.mubr.bf16.gmra.mrb[0].mxu0 %v3627
        %v3743 = vpop.f32.mrb[0].mxu0
        %v3744 = vadd.f32 0.0, %v3743
        %v3745 = vpop.f32.mrb[0].mxu0
        %v3746 = vpop.f32.mrb[0].mxu0
        %v3747 = vadd.f32 0.0, %v3746
        %v3748 = vpop.f32.mrb[0].mxu0
        %3749 = vmatprep.mubr.bf16.mxu0 0
        %3750 = vmatmul.mubr.bf16.gmra.mrb[0].mxu0 %v3630
        %v3751 = vpop.f32.mrb[0].mxu0
        %v3752 = vadd.f32 0.0, %v3751
        %v3753 = vpop.f32.mrb[0].mxu0
        %v3754 = vpop.f32.mrb[0].mxu0
        %v3755 = vadd.f32 0.0, %v3754
        %v3756 = vpop.f32.mrb[0].mxu0
        %3757 = vmatprep.mubr.bf16.mxu0 0
        %3758 = vmatmul.mubr.bf16.gmra.mrb[0].mxu0 %v3633
        %v3759 = vpop.f32.mrb[0].mxu0
        %v3760 = vadd.f32 0.0, %v3759
        %v3761 = vpop.f32.mrb[0].mxu0
        %v3762 = vpop.f32.mrb[0].mxu0
        %v3763 = vadd.f32 0.0, %v3762
        %v3764 = vpop.f32.mrb[0].mxu0
        %3765 = vmatprep.mubr.bf16.mxu0 0
        %3766 = vmatmul.mubr.bf16.gmra.mrb[0].mxu0 %v3636
        %v3767 = vpop.f32.mrb[0].mxu0
        %v3768 = vadd.f32 0.0, %v3767
        %v3769 = vpop.f32.mrb[0].mxu0
        %v3770 = vpop.f32.mrb[0].mxu0
        %v3771 = vadd.f32 0.0, %v3770
        %v3772 = vpop.f32.mrb[0].mxu0
        %3773 = vmatprep.mubr.bf16.mxu0 0
        %3774 = vmatmul.mubr.bf16.gmra.mrb[0].mxu0 %v3639
        %v3775 = vpop.f32.mrb[0].mxu0
        %v3776 = vadd.f32 0.0, %v3775
        %v3777 = vpop.f32.mrb[0].mxu0
        %v3778 = vpop.f32.mrb[0].mxu0
        %v3779 = vadd.f32 0.0, %v3778
        %v3780 = vpop.f32.mrb[0].mxu0
        %3781 = vmatprep.mubr.bf16.mxu0 0
        %3782 = vmatmul.mubr.bf16.gmra.mrb[0].mxu0 %v3642
        %v3783 = vpop.f32.mrb[0].mxu0
        %v3784 = vadd.f32 0.0, %v3783
        %v3785 = vpop.f32.mrb[0].mxu0
        %v3786 = vpop.f32.mrb[0].mxu0
        %v3787 = vadd.f32 0.0, %v3786
        %v3788 = vpop.f32.mrb[0].mxu0
        %3789 = vmatprep.mubr.bf16.mxu0 0
        %3790 = vmatmul.mubr.bf16.gmra.mrb[0].mxu0 %v3645
        %v3791 = vpop.f32.mrb[0].mxu0
        %v3792 = vadd.f32 0.0, %v3791
        %v3793 = vpop.f32.mrb[0].mxu0
        %v3794 = vpop.f32.mrb[0].mxu0
        %v3795 = vadd.f32 0.0, %v3794
        %v3796 = vpop.f32.mrb[0].mxu0
        %3797 = vmatprep.mubr.bf16.mxu0 0
        %3798 = vmatmul.mubr.bf16.gmra.mrb[0].mxu0 %v3648
        %v3799 = vpop.f32.mrb[0].mxu0
        %v3800 = vadd.f32 0.0, %v3799
        %v3801 = vpop.f32.mrb[0].mxu0
        %v3802 = vpop.f32.mrb[0].mxu0
        %v3803 = vadd.f32 0.0, %v3802
        %v3804 = vpop.f32.mrb[0].mxu0
        %3805 = vmatprep.mubr.bf16.mxu0 0
        %3806 = vmatmul.mubr.bf16.gmra.mrb[0].mxu0 %v3651
        %v3807 = vpop.f32.mrb[0].mxu0
        %v3808 = vadd.f32 0.0, %v3807
        %v3809 = vpop.f32.mrb[0].mxu0
        %v3810 = vpop.f32.mrb[0].mxu0
        %v3811 = vadd.f32 0.0, %v3810
        %v3812 = vpop.f32.mrb[0].mxu0
        %3813 = vdwg.mxu0
        %v3814 = vadd.f32 %v3415, %v3688
        %v3815 = vadd.f32 %v3418, %v3691
        %v3816 = vadd.f32 %v3423, %v3696
        %v3817 = vadd.f32 %v3426, %v3699
        %v3818 = vadd.f32 %v3431, %v3704
        %v3819 = vadd.f32 %v3434, %v3707
        %v3820 = vadd.f32 %v3439, %v3712
        %v3821 = vadd.f32 %v3442, %v3715
        %v3822 = vadd.f32 %v3447, %v3720
        %v3823 = vadd.f32 %v3450, %v3723
        %v3824 = vadd.f32 %v3455, %v3728
        %v3825 = vadd.f32 %v3458, %v3731
        %v3826 = vadd.f32 %v3463, %v3736
        %v3827 = vadd.f32 %v3466, %v3739
        %v3828 = vadd.f32 %v3471, %v3744
        %v3829 = vadd.f32 %v3474, %v3747
        %v3830 = vadd.f32 %v3479, %v3752
        %v3831 = vadd.f32 %v3482, %v3755
        %v3832 = vadd.f32 %v3487, %v3760
        %v3833 = vadd.f32 %v3490, %v3763
        %v3834 = vadd.f32 %v3495, %v3768
        %v3835 = vadd.f32 %v3498, %v3771
        %v3836 = vadd.f32 %v3503, %v3776
        %v3837 = vadd.f32 %v3506, %v3779
        %v3838 = vadd.f32 %v3511, %v3784
        %v3839 = vadd.f32 %v3514, %v3787
        %v3840 = vadd.f32 %v3519, %v3792
        %v3841 = vadd.f32 %v3522, %v3795
        %v3842 = vadd.f32 %v3527, %v3800
        %v3843 = vadd.f32 %v3530, %v3803
        %v3844 = vadd.f32 %v3535, %v3808
        %v3845 = vadd.f32 %v3538, %v3811
        %v3846 = vld [vmem:[#allocation4] sm:$0x1]
        %v3848 = vlaneseq
        %v3849 = vshrl.u32 %v3848, 7
        %v3850 = vsub.s32 0, %v3849
        %v3851 = vrot.slane %v3846, %v3850
        %v3853 = vadd.f32 %v3814, %v3851
        %v3854 = vadd.f32 %v3815, %v3851
        %v3855 = vadd.f32 %v3816, %v3851
        %v3856 = vadd.f32 %v3817, %v3851
        %v3857 = vadd.f32 %v3818, %v3851
        %v3858 = vadd.f32 %v3819, %v3851
        %v3859 = vadd.f32 %v3820, %v3851
        %v3860 = vadd.f32 %v3821, %v3851
        %v3861 = vadd.f32 %v3822, %v3851
        %v3862 = vadd.f32 %v3823, %v3851
        %v3863 = vadd.f32 %v3824, %v3851
        %v3864 = vadd.f32 %v3825, %v3851
        %v3865 = vadd.f32 %v3826, %v3851
        %v3866 = vadd.f32 %v3827, %v3851
        %v3867 = vadd.f32 %v3828, %v3851
        %v3868 = vadd.f32 %v3829, %v3851
        %v3869 = vadd.f32 %v3830, %v3851
        %v3870 = vadd.f32 %v3831, %v3851
        %v3871 = vadd.f32 %v3832, %v3851
        %v3872 = vadd.f32 %v3833, %v3851
        %v3873 = vadd.f32 %v3834, %v3851
        %v3874 = vadd.f32 %v3835, %v3851
        %v3875 = vadd.f32 %v3836, %v3851
        %v3876 = vadd.f32 %v3837, %v3851
        %v3877 = vadd.f32 %v3838, %v3851
        %v3878 = vadd.f32 %v3839, %v3851
        %v3879 = vadd.f32 %v3840, %v3851
        %v3880 = vadd.f32 %v3841, %v3851
        %v3881 = vadd.f32 %v3842, %v3851
        %v3882 = vadd.f32 %v3843, %v3851
        %v3883 = vadd.f32 %v3844, %v3851
        %v3884 = vadd.f32 %v3845, %v3851
        %v3885 = vmax.f32 %v3853, 0.0
        %v3886 = vmax.f32 %v3854, 0.0
        %v3887 = vmax.f32 %v3855, 0.0
        %v3888 = vmax.f32 %v3856, 0.0
        %v3889 = vmax.f32 %v3857, 0.0
        %v3890 = vmax.f32 %v3858, 0.0
        %v3891 = vmax.f32 %v3859, 0.0
        %v3892 = vmax.f32 %v3860, 0.0
        %v3893 = vmax.f32 %v3861, 0.0
        %v3894 = vmax.f32 %v3862, 0.0
        %v3895 = vmax.f32 %v3863, 0.0
        %v3896 = vmax.f32 %v3864, 0.0
        %v3897 = vmax.f32 %v3865, 0.0
        %v3898 = vmax.f32 %v3866, 0.0
        %v3899 = vmax.f32 %v3867, 0.0
        %v3900 = vmax.f32 %v3868, 0.0
        %v3901 = vmax.f32 %v3869, 0.0
        %v3902 = vmax.f32 %v3870, 0.0
        %v3903 = vmax.f32 %v3871, 0.0
        %v3904 = vmax.f32 %v3872, 0.0
        %v3905 = vmax.f32 %v3873, 0.0
        %v3906 = vmax.f32 %v3874, 0.0
        %v3907 = vmax.f32 %v3875, 0.0
        %v3908 = vmax.f32 %v3876, 0.0
        %v3909 = vmax.f32 %v3877, 0.0
        %v3910 = vmax.f32 %v3878, 0.0
        %v3911 = vmax.f32 %v3879, 0.0
        %v3912 = vmax.f32 %v3880, 0.0
        %v3913 = vmax.f32 %v3881, 0.0
        %v3914 = vmax.f32 %v3882, 0.0
        %v3915 = vmax.f32 %v3883, 0.0
        %v3916 = vmax.f32 %v3884, 0.0
        %3917 = vst.msk [vmem:[#allocation3 + $0x200] sm:$0xff] %vm2120, %v3885
        %3918 = vst.msk [vmem:[#allocation3 + $0x208] sm:$0xff] %vm2120, %v3886
        %3919 = vst.msk [vmem:[#allocation3 + $0x210] sm:$0xff] %vm2120, %v3887
        %3920 = vst.msk [vmem:[#allocation3 + $0x218] sm:$0xff] %vm2120, %v3888
        %3921 = vst.msk [vmem:[#allocation3 + $0x220] sm:$0xff] %vm2120, %v3889
        %3922 = vst.msk [vmem:[#allocation3 + $0x228] sm:$0xff] %vm2120, %v3890
        %3923 = vst.msk [vmem:[#allocation3 + $0x230] sm:$0xff] %vm2120, %v3891
        %3924 = vst.msk [vmem:[#allocation3 + $0x238] sm:$0xff] %vm2120, %v3892
        %3925 = vst.msk [vmem:[#allocation3 + $0x240] sm:$0xff] %vm2120, %v3893
        %3926 = vst.msk [vmem:[#allocation3 + $0x248] sm:$0xff] %vm2120, %v3894
        %3927 = vst.msk [vmem:[#allocation3 + $0x250] sm:$0xff] %vm2120, %v3895
        %3928 = vst.msk [vmem:[#allocation3 + $0x258] sm:$0xff] %vm2120, %v3896
        %3929 = vst.msk [vmem:[#allocation3 + $0x260] sm:$0xff] %vm2120, %v3897
        %3930 = vst.msk [vmem:[#allocation3 + $0x268] sm:$0xff] %vm2120, %v3898
        %3931 = vst.msk [vmem:[#allocation3 + $0x270] sm:$0xff] %vm2120, %v3899
        %3932 = vst.msk [vmem:[#allocation3 + $0x278] sm:$0xff] %vm2120, %v3900
        %3933 = vst.msk [vmem:[#allocation3 + $0x280] sm:$0xff] %vm2120, %v3901
        %3934 = vst.msk [vmem:[#allocation3 + $0x288] sm:$0xff] %vm2120, %v3902
        %3935 = vst.msk [vmem:[#allocation3 + $0x290] sm:$0xff] %vm2120, %v3903
        %3936 = vst.msk [vmem:[#allocation3 + $0x298] sm:$0xff] %vm2120, %v3904
        %3937 = vst.msk [vmem:[#allocation3 + $0x2a0] sm:$0xff] %vm2120, %v3905
        %3938 = vst.msk [vmem:[#allocation3 + $0x2a8] sm:$0xff] %vm2120, %v3906
        %3939 = vst.msk [vmem:[#allocation3 + $0x2b0] sm:$0xff] %vm2120, %v3907
        %3940 = vst.msk [vmem:[#allocation3 + $0x2b8] sm:$0xff] %vm2120, %v3908
        %3941 = vst.msk [vmem:[#allocation3 + $0x2c0] sm:$0xff] %vm2120, %v3909
        %3942 = vst.msk [vmem:[#allocation3 + $0x2c8] sm:$0xff] %vm2120, %v3910
        %3943 = vst.msk [vmem:[#allocation3 + $0x2d0] sm:$0xff] %vm2120, %v3911
        %3944 = vst.msk [vmem:[#allocation3 + $0x2d8] sm:$0xff] %vm2120, %v3912
        %3945 = vst.msk [vmem:[#allocation3 + $0x2e0] sm:$0xff] %vm2120, %v3913
        %3946 = vst.msk [vmem:[#allocation3 + $0x2e8] sm:$0xff] %vm2120, %v3914
        %3947 = vst.msk [vmem:[#allocation3 + $0x2f0] sm:$0xff] %vm2120, %v3915
        %3948 = vst.msk [vmem:[#allocation3 + $0x2f8] sm:$0xff] %vm2120, %v3916
        %v3949 = vld [vmem:[#allocation3] sm:$0xff]
        %v3950 = vld [vmem:[#allocation3 + $0x8] sm:$0xff]
        %v3951 = vld [vmem:[#allocation3 + $0x10] sm:$0xff]
        %v3952 = vld [vmem:[#allocation3 + $0x18] sm:$0xff]
        %v3953 = vld [vmem:[#allocation3 + $0x20] sm:$0xff]
        %v3954 = vld [vmem:[#allocation3 + $0x28] sm:$0xff]
        %v3955 = vld [vmem:[#allocation3 + $0x30] sm:$0xff]
        %v3956 = vld [vmem:[#allocation3 + $0x38] sm:$0xff]
        %v3957 = vld [vmem:[#allocation3 + $0x40] sm:$0xff]
        %v3958 = vld [vmem:[#allocation3 + $0x48] sm:$0xff]
        %v3959 = vld [vmem:[#allocation3 + $0x50] sm:$0xff]
        %v3960 = vld [vmem:[#allocation3 + $0x58] sm:$0xff]
        %v3961 = vld [vmem:[#allocation3 + $0x60] sm:$0xff]
        %v3962 = vld [vmem:[#allocation3 + $0x68] sm:$0xff]
        %v3963 = vld [vmem:[#allocation3 + $0x70] sm:$0xff]
        %v3964 = vld [vmem:[#allocation3 + $0x78] sm:$0xff]
        %v3965 = vld [vmem:[#allocation3 + $0x80] sm:$0xff]
        %v3966 = vld [vmem:[#allocation3 + $0x88] sm:$0xff]
        %v3967 = vld [vmem:[#allocation3 + $0x90] sm:$0xff]
        %v3968 = vld [vmem:[#allocation3 + $0x98] sm:$0xff]
        %v3969 = vld [vmem:[#allocation3 + $0xa0] sm:$0xff]
        %v3970 = vld [vmem:[#allocation3 + $0xa8] sm:$0xff]
        %v3971 = vld [vmem:[#allocation3 + $0xb0] sm:$0xff]
        %v3972 = vld [vmem:[#allocation3 + $0xb8] sm:$0xff]
        %v3973 = vld [vmem:[#allocation3 + $0xc0] sm:$0xff]
        %v3974 = vld [vmem:[#allocation3 + $0xc8] sm:$0xff]
        %v3975 = vld [vmem:[#allocation3 + $0xd0] sm:$0xff]
        %v3976 = vld [vmem:[#allocation3 + $0xd8] sm:$0xff]
        %v3977 = vld [vmem:[#allocation3 + $0xe0] sm:$0xff]
        %v3978 = vld [vmem:[#allocation3 + $0xe8] sm:$0xff]
        %v3979 = vld [vmem:[#allocation3 + $0xf0] sm:$0xff]
        %v3980 = vld [vmem:[#allocation3 + $0xf8] sm:$0xff]
        %v3981 = vld [vmem:[#allocation3 + $0x100] sm:$0xff]
        %v3982 = vld [vmem:[#allocation3 + $0x108] sm:$0xff]
        %v3983 = vld [vmem:[#allocation3 + $0x110] sm:$0xff]
        %v3984 = vld [vmem:[#allocation3 + $0x118] sm:$0xff]
        %v3985 = vld [vmem:[#allocation3 + $0x120] sm:$0xff]
        %v3986 = vld [vmem:[#allocation3 + $0x128] sm:$0xff]
        %v3987 = vld [vmem:[#allocation3 + $0x130] sm:$0xff]
        %v3988 = vld [vmem:[#allocation3 + $0x138] sm:$0xff]
        %v3989 = vld [vmem:[#allocation3 + $0x140] sm:$0xff]
        %v3990 = vld [vmem:[#allocation3 + $0x148] sm:$0xff]
        %v3991 = vld [vmem:[#allocation3 + $0x150] sm:$0xff]
        %v3992 = vld [vmem:[#allocation3 + $0x158] sm:$0xff]
        %v3993 = vld [vmem:[#allocation3 + $0x160] sm:$0xff]
        %v3994 = vld [vmem:[#allocation3 + $0x168] sm:$0xff]
        %v3995 = vld [vmem:[#allocation3 + $0x170] sm:$0xff]
        %v3996 = vld [vmem:[#allocation3 + $0x178] sm:$0xff]
        %v3997 = vld [vmem:[#allocation3 + $0x180] sm:$0xff]
        %v3998 = vld [vmem:[#allocation3 + $0x188] sm:$0xff]
        %v3999 = vld [vmem:[#allocation3 + $0x190] sm:$0xff]
        %v4000 = vld [vmem:[#allocation3 + $0x198] sm:$0xff]
        %v4001 = vld [vmem:[#allocation3 + $0x1a0] sm:$0xff]
        %v4002 = vld [vmem:[#allocation3 + $0x1a8] sm:$0xff]
        %v4003 = vld [vmem:[#allocation3 + $0x1b0] sm:$0xff]
        %v4004 = vld [vmem:[#allocation3 + $0x1b8] sm:$0xff]
        %v4005 = vld [vmem:[#allocation3 + $0x1c0] sm:$0xff]
        %v4006 = vld [vmem:[#allocation3 + $0x1c8] sm:$0xff]
        %v4007 = vld [vmem:[#allocation3 + $0x1d0] sm:$0xff]
        %v4008 = vld [vmem:[#allocation3 + $0x1d8] sm:$0xff]
        %v4009 = vld [vmem:[#allocation3 + $0x1e0] sm:$0xff]
        %v4010 = vld [vmem:[#allocation3 + $0x1e8] sm:$0xff]
        %v4011 = vld [vmem:[#allocation3 + $0x1f0] sm:$0xff]
        %v4012 = vld [vmem:[#allocation3 + $0x1f8] sm:$0xff]
        %v4013 = vld [vmem:[#allocation3 + $0x200] sm:$0xff]
        %v4014 = vld [vmem:[#allocation3 + $0x208] sm:$0xff]
        %v4015 = vld [vmem:[#allocation3 + $0x210] sm:$0xff]
        %v4016 = vld [vmem:[#allocation3 + $0x218] sm:$0xff]
        %v4017 = vld [vmem:[#allocation3 + $0x220] sm:$0xff]
        %v4018 = vld [vmem:[#allocation3 + $0x228] sm:$0xff]
        %v4019 = vld [vmem:[#allocation3 + $0x230] sm:$0xff]
        %v4020 = vld [vmem:[#allocation3 + $0x238] sm:$0xff]
        %v4021 = vld [vmem:[#allocation3 + $0x240] sm:$0xff]
        %v4022 = vld [vmem:[#allocation3 + $0x248] sm:$0xff]
        %v4023 = vld [vmem:[#allocation3 + $0x250] sm:$0xff]
        %v4024 = vld [vmem:[#allocation3 + $0x258] sm:$0xff]
        %v4025 = vld [vmem:[#allocation3 + $0x260] sm:$0xff]
        %v4026 = vld [vmem:[#allocation3 + $0x268] sm:$0xff]
        %v4027 = vld [vmem:[#allocation3 + $0x270] sm:$0xff]
        %v4028 = vld [vmem:[#allocation3 + $0x278] sm:$0xff]
        %v4029 = vld [vmem:[#allocation3 + $0x280] sm:$0xff]
        %v4030 = vld [vmem:[#allocation3 + $0x288] sm:$0xff]
        %v4031 = vld [vmem:[#allocation3 + $0x290] sm:$0xff]
        %v4032 = vld [vmem:[#allocation3 + $0x298] sm:$0xff]
        %v4033 = vld [vmem:[#allocation3 + $0x2a0] sm:$0xff]
        %v4034 = vld [vmem:[#allocation3 + $0x2a8] sm:$0xff]
        %v4035 = vld [vmem:[#allocation3 + $0x2b0] sm:$0xff]
        %v4036 = vld [vmem:[#allocation3 + $0x2b8] sm:$0xff]
        %v4037 = vld [vmem:[#allocation3 + $0x2c0] sm:$0xff]
        %v4038 = vld [vmem:[#allocation3 + $0x2c8] sm:$0xff]
        %v4039 = vld [vmem:[#allocation3 + $0x2d0] sm:$0xff]
        %v4040 = vld [vmem:[#allocation3 + $0x1] sm:$0xff]
        %v4041 = vld [vmem:[#allocation3 + $0x9] sm:$0xff]
        %v4042 = vld [vmem:[#allocation3 + $0x11] sm:$0xff]
        %v4043 = vld [vmem:[#allocation3 + $0x19] sm:$0xff]
        %v4044 = vld [vmem:[#allocation3 + $0x21] sm:$0xff]
        %v4045 = vld [vmem:[#allocation3 + $0x29] sm:$0xff]
        %v4046 = vld [vmem:[#allocation3 + $0x31] sm:$0xff]
        %v4047 = vld [vmem:[#allocation3 + $0x39] sm:$0xff]
        %v4048 = vld [vmem:[#allocation3 + $0x41] sm:$0xff]
        %v4049 = vld [vmem:[#allocation3 + $0x49] sm:$0xff]
        %v4050 = vld [vmem:[#allocation3 + $0x51] sm:$0xff]
        %v4051 = vld [vmem:[#allocation3 + $0x59] sm:$0xff]
        %v4052 = vld [vmem:[#allocation3 + $0x61] sm:$0xff]
        %v4053 = vld [vmem:[#allocation3 + $0x69] sm:$0xff]
        %v4054 = vld [vmem:[#allocation3 + $0x71] sm:$0xff]
        %v4055 = vld [vmem:[#allocation3 + $0x79] sm:$0xff]
        %v4056 = vld [vmem:[#allocation3 + $0x81] sm:$0xff]
        %v4057 = vld [vmem:[#allocation3 + $0x89] sm:$0xff]
        %v4058 = vld [vmem:[#allocation3 + $0x91] sm:$0xff]
        %v4059 = vld [vmem:[#allocation3 + $0x99] sm:$0xff]
        %v4060 = vld [vmem:[#allocation3 + $0xa1] sm:$0xff]
        %v4061 = vld [vmem:[#allocation3 + $0xa9] sm:$0xff]
        %v4062 = vld [vmem:[#allocation3 + $0xb1] sm:$0xff]
        %v4063 = vld [vmem:[#allocation3 + $0xb9] sm:$0xff]
        %v4064 = vld [vmem:[#allocation3 + $0xc1] sm:$0xff]
        %v4065 = vld [vmem:[#allocation3 + $0xc9] sm:$0xff]
        %v4066 = vld [vmem:[#allocation3 + $0xd1] sm:$0xff]
        %v4067 = vld [vmem:[#allocation3 + $0xd9] sm:$0xff]
        %v4068 = vld [vmem:[#allocation3 + $0xe1] sm:$0xff]
        %v4069 = vld [vmem:[#allocation3 + $0xe9] sm:$0xff]
        %v4070 = vld [vmem:[#allocation3 + $0xf1] sm:$0xff]
        %v4071 = vld [vmem:[#allocation3 + $0xf9] sm:$0xff]
        %v4072 = vld [vmem:[#allocation3 + $0x101] sm:$0xff]
        %v4073 = vld [vmem:[#allocation3 + $0x109] sm:$0xff]
        %v4074 = vld [vmem:[#allocation3 + $0x111] sm:$0xff]
        %v4075 = vld [vmem:[#allocation3 + $0x119] sm:$0xff]
        %v4076 = vld [vmem:[#allocation3 + $0x121] sm:$0xff]
        %v4077 = vld [vmem:[#allocation3 + $0x129] sm:$0xff]
        %v4078 = vld [vmem:[#allocation3 + $0x131] sm:$0xff]
        %v4079 = vld [vmem:[#allocation3 + $0x139] sm:$0xff]
        %v4080 = vld [vmem:[#allocation3 + $0x141] sm:$0xff]
        %v4081 = vld [vmem:[#allocation3 + $0x149] sm:$0xff]
        %v4082 = vld [vmem:[#allocation3 + $0x151] sm:$0xff]
        %v4083 = vld [vmem:[#allocation3 + $0x159] sm:$0xff]
        %v4084 = vld [vmem:[#allocation3 + $0x161] sm:$0xff]
        %v4085 = vld [vmem:[#allocation3 + $0x169] sm:$0xff]
        %v4086 = vld [vmem:[#allocation3 + $0x171] sm:$0xff]
        %v4087 = vld [vmem:[#allocation3 + $0x179] sm:$0xff]
        %v4088 = vld [vmem:[#allocation3 + $0x181] sm:$0xff]
        %v4089 = vld [vmem:[#allocation3 + $0x189] sm:$0xff]
        %v4090 = vld [vmem:[#allocation3 + $0x191] sm:$0xff]
        %v4091 = vld [vmem:[#allocation3 + $0x199] sm:$0xff]
        %v4092 = vld [vmem:[#allocation3 + $0x1a1] sm:$0xff]
        %v4093 = vld [vmem:[#allocation3 + $0x1a9] sm:$0xff]
        %v4094 = vld [vmem:[#allocation3 + $0x1b1] sm:$0xff]
        %v4095 = vld [vmem:[#allocation3 + $0x1b9] sm:$0xff]
        %v4096 = vld [vmem:[#allocation3 + $0x1c1] sm:$0xff]
        %v4097 = vld [vmem:[#allocation3 + $0x1c9] sm:$0xff]
        %v4098 = vld [vmem:[#allocation3 + $0x1d1] sm:$0xff]
        %v4099 = vld [vmem:[#allocation3 + $0x1d9] sm:$0xff]
        %v4100 = vld [vmem:[#allocation3 + $0x1e1] sm:$0xff]
        %v4101 = vld [vmem:[#allocation3 + $0x1e9] sm:$0xff]
        %v4102 = vld [vmem:[#allocation3 + $0x1f1] sm:$0xff]
        %v4103 = vld [vmem:[#allocation3 + $0x1f9] sm:$0xff]
        %v4104 = vld [vmem:[#allocation3 + $0x201] sm:$0xff]
        %v4105 = vld [vmem:[#allocation3 + $0x209] sm:$0xff]
        %v4106 = vld [vmem:[#allocation3 + $0x211] sm:$0xff]
        %v4107 = vld [vmem:[#allocation3 + $0x219] sm:$0xff]
        %v4108 = vld [vmem:[#allocation3 + $0x221] sm:$0xff]
        %v4109 = vld [vmem:[#allocation3 + $0x229] sm:$0xff]
        %v4110 = vld [vmem:[#allocation3 + $0x231] sm:$0xff]
        %v4111 = vld [vmem:[#allocation3 + $0x239] sm:$0xff]
        %v4112 = vld [vmem:[#allocation3 + $0x241] sm:$0xff]
        %v4113 = vld [vmem:[#allocation3 + $0x249] sm:$0xff]
        %v4114 = vld [vmem:[#allocation3 + $0x251] sm:$0xff]
        %v4115 = vld [vmem:[#allocation3 + $0x259] sm:$0xff]
        %v4116 = vld [vmem:[#allocation3 + $0x261] sm:$0xff]
        %v4117 = vld [vmem:[#allocation3 + $0x269] sm:$0xff]
        %v4118 = vld [vmem:[#allocation3 + $0x271] sm:$0xff]
        %v4119 = vld [vmem:[#allocation3 + $0x279] sm:$0xff]
        %v4120 = vld [vmem:[#allocation3 + $0x281] sm:$0xff]
        %v4121 = vld [vmem:[#allocation3 + $0x289] sm:$0xff]
        %v4122 = vld [vmem:[#allocation3 + $0x291] sm:$0xff]
        %v4123 = vld [vmem:[#allocation3 + $0x299] sm:$0xff]
        %v4124 = vld [vmem:[#allocation3 + $0x2a1] sm:$0xff]
        %v4125 = vld [vmem:[#allocation3 + $0x2a9] sm:$0xff]
        %v4126 = vld [vmem:[#allocation3 + $0x2b1] sm:$0xff]
        %v4127 = vld [vmem:[#allocation3 + $0x2b9] sm:$0xff]
        %v4128 = vld [vmem:[#allocation3 + $0x2c1] sm:$0xff]
        %v4129 = vld [vmem:[#allocation3 + $0x2c9] sm:$0xff]
        %v4130 = vld [vmem:[#allocation3 + $0x2d1] sm:$0xff]
        %v4131 = vmax.f32 %v3949, %v4040
        %v4132 = vmax.f32 %v3950, %v4041
        %v4133 = vmax.f32 %v3951, %v4042
        %v4134 = vmax.f32 %v3952, %v4043
        %v4135 = vmax.f32 %v3953, %v4044
        %v4136 = vmax.f32 %v3954, %v4045
        %v4137 = vmax.f32 %v3955, %v4046
        %v4138 = vmax.f32 %v3956, %v4047
        %v4139 = vmax.f32 %v3957, %v4048
        %v4140 = vmax.f32 %v3958, %v4049
        %v4141 = vmax.f32 %v3959, %v4050
        %v4142 = vmax.f32 %v3960, %v4051
        %v4143 = vmax.f32 %v3961, %v4052
        %v4144 = vmax.f32 %v3962, %v4053
        %v4145 = vmax.f32 %v3963, %v4054
        %v4146 = vmax.f32 %v3964, %v4055
        %v4147 = vmax.f32 %v3965, %v4056
        %v4148 = vmax.f32 %v3966, %v4057
        %v4149 = vmax.f32 %v3967, %v4058
        %v4150 = vmax.f32 %v3968, %v4059
        %v4151 = vmax.f32 %v3969, %v4060
        %v4152 = vmax.f32 %v3970, %v4061
        %v4153 = vmax.f32 %v3971, %v4062
        %v4154 = vmax.f32 %v3972, %v4063
        %v4155 = vmax.f32 %v3973, %v4064
        %v4156 = vmax.f32 %v3974, %v4065
        %v4157 = vmax.f32 %v3975, %v4066
        %v4158 = vmax.f32 %v3976, %v4067
        %v4159 = vmax.f32 %v3977, %v4068
        %v4160 = vmax.f32 %v3978, %v4069
        %v4161 = vmax.f32 %v3979, %v4070
        %v4162 = vmax.f32 %v3980, %v4071
        %v4163 = vmax.f32 %v3981, %v4072
        %v4164 = vmax.f32 %v3982, %v4073
        %v4165 = vmax.f32 %v3983, %v4074
        %v4166 = vmax.f32 %v3984, %v4075
        %v4167 = vmax.f32 %v3985, %v4076
        %v4168 = vmax.f32 %v3986, %v4077
        %v4169 = vmax.f32 %v3987, %v4078
        %v4170 = vmax.f32 %v3988, %v4079
        %v4171 = vmax.f32 %v3989, %v4080
        %v4172 = vmax.f32 %v3990, %v4081
        %v4173 = vmax.f32 %v3991, %v4082
        %v4174 = vmax.f32 %v3992, %v4083
        %v4175 = vmax.f32 %v3993, %v4084
        %v4176 = vmax.f32 %v3994, %v4085
        %v4177 = vmax.f32 %v3995, %v4086
        %v4178 = vmax.f32 %v3996, %v4087
        %v4179 = vmax.f32 %v3997, %v4088
        %v4180 = vmax.f32 %v3998, %v4089
        %v4181 = vmax.f32 %v3999, %v4090
        %v4182 = vmax.f32 %v4000, %v4091
        %v4183 = vmax.f32 %v4001, %v4092
        %v4184 = vmax.f32 %v4002, %v4093
        %v4185 = vmax.f32 %v4003, %v4094
        %v4186 = vmax.f32 %v4004, %v4095
        %v4187 = vmax.f32 %v4005, %v4096
        %v4188 = vmax.f32 %v4006, %v4097
        %v4189 = vmax.f32 %v4007, %v4098
        %v4190 = vmax.f32 %v4008, %v4099
        %v4191 = vmax.f32 %v4009, %v4100
        %v4192 = vmax.f32 %v4010, %v4101
        %v4193 = vmax.f32 %v4011, %v4102
        %v4194 = vmax.f32 %v4012, %v4103
        %v4195 = vmax.f32 %v4013, %v4104
        %v4196 = vmax.f32 %v4014, %v4105
        %v4197 = vmax.f32 %v4015, %v4106
        %v4198 = vmax.f32 %v4016, %v4107
        %v4199 = vmax.f32 %v4017, %v4108
        %v4200 = vmax.f32 %v4018, %v4109
        %v4201 = vmax.f32 %v4019, %v4110
        %v4202 = vmax.f32 %v4020, %v4111
        %v4203 = vmax.f32 %v4021, %v4112
        %v4204 = vmax.f32 %v4022, %v4113
        %v4205 = vmax.f32 %v4023, %v4114
        %v4206 = vmax.f32 %v4024, %v4115
        %v4207 = vmax.f32 %v4025, %v4116
        %v4208 = vmax.f32 %v4026, %v4117
        %v4209 = vmax.f32 %v4027, %v4118
        %v4210 = vmax.f32 %v4028, %v4119
        %v4211 = vmax.f32 %v4029, %v4120
        %v4212 = vmax.f32 %v4030, %v4121
        %v4213 = vmax.f32 %v4031, %v4122
        %v4214 = vmax.f32 %v4032, %v4123
        %v4215 = vmax.f32 %v4033, %v4124
        %v4216 = vmax.f32 %v4034, %v4125
        %v4217 = vmax.f32 %v4035, %v4126
        %v4218 = vmax.f32 %v4036, %v4127
        %v4219 = vmax.f32 %v4037, %v4128
        %v4220 = vmax.f32 %v4038, %v4129
        %v4221 = vmax.f32 %v4039, %v4130
        %v4222 = vld [vmem:[#allocation3 + $0x2d8] sm:$0xff]
        %v4223 = vld [vmem:[#allocation3 + $0x2e0] sm:$0xff]
        %v4224 = vld [vmem:[#allocation3 + $0x2e8] sm:$0xff]
        %v4225 = vld [vmem:[#allocation3 + $0x2f0] sm:$0xff]
        %v4226 = vld [vmem:[#allocation3 + $0x2d9] sm:$0xff]
        %v4227 = vld [vmem:[#allocation3 + $0x2e1] sm:$0xff]
        %v4228 = vld [vmem:[#allocation3 + $0x2e9] sm:$0xff]
        %v4229 = vld [vmem:[#allocation3 + $0x2f1] sm:$0xff]
        %v4230 = vmax.f32 %v4222, %v4226
        %v4231 = vmax.f32 %v4223, %v4227
        %v4232 = vmax.f32 %v4224, %v4228
        %v4233 = vmax.f32 %v4225, %v4229
        %v4234 = vmax.f32 %v4131, %v4135
        %v4235 = vmax.f32 %v4132, %v4136
        %v4236 = vmax.f32 %v4133, %v4137
        %v4237 = vmax.f32 %v4134, %v4138
        %v4238 = vmax.f32 %v4135, %v4139
        %v4239 = vmax.f32 %v4136, %v4140
        %v4240 = vmax.f32 %v4137, %v4141
        %v4241 = vmax.f32 %v4138, %v4142
        %v4242 = vmax.f32 %v4139, %v4143
        %v4243 = vmax.f32 %v4140, %v4144
        %v4244 = vmax.f32 %v4141, %v4145
        %v4245 = vmax.f32 %v4142, %v4146
        %v4246 = vmax.f32 %v4143, %v4147
        %v4247 = vmax.f32 %v4144, %v4148
        %v4248 = vmax.f32 %v4145, %v4149
        %v4249 = vmax.f32 %v4146, %v4150
        %v4250 = vmax.f32 %v4147, %v4151
        %v4251 = vmax.f32 %v4148, %v4152
        %v4252 = vmax.f32 %v4149, %v4153
        %v4253 = vmax.f32 %v4150, %v4154
        %v4254 = vmax.f32 %v4151, %v4155
        %v4255 = vmax.f32 %v4152, %v4156
        %v4256 = vmax.f32 %v4153, %v4157
        %v4257 = vmax.f32 %v4154, %v4158
        %v4258 = vmax.f32 %v4155, %v4159
        %v4259 = vmax.f32 %v4156, %v4160
        %v4260 = vmax.f32 %v4157, %v4161
        %v4261 = vmax.f32 %v4158, %v4162
        %v4262 = vmax.f32 %v4159, %v4163
        %v4263 = vmax.f32 %v4160, %v4164
        %v4264 = vmax.f32 %v4161, %v4165
        %v4265 = vmax.f32 %v4162, %v4166
        %v4266 = vmax.f32 %v4163, %v4167
        %v4267 = vmax.f32 %v4164, %v4168
        %v4268 = vmax.f32 %v4165, %v4169
        %v4269 = vmax.f32 %v4166, %v4170
        %v4270 = vmax.f32 %v4167, %v4171
        %v4271 = vmax.f32 %v4168, %v4172
        %v4272 = vmax.f32 %v4169, %v4173
        %v4273 = vmax.f32 %v4170, %v4174
        %v4274 = vmax.f32 %v4171, %v4175
        %v4275 = vmax.f32 %v4172, %v4176
        %v4276 = vmax.f32 %v4173, %v4177
        %v4277 = vmax.f32 %v4174, %v4178
        %v4278 = vmax.f32 %v4175, %v4179
        %v4279 = vmax.f32 %v4176, %v4180
        %v4280 = vmax.f32 %v4177, %v4181
        %v4281 = vmax.f32 %v4178, %v4182
        %v4282 = vmax.f32 %v4179, %v4183
        %v4283 = vmax.f32 %v4180, %v4184
        %v4284 = vmax.f32 %v4181, %v4185
        %v4285 = vmax.f32 %v4182, %v4186
        %v4286 = vmax.f32 %v4183, %v4187
        %v4287 = vmax.f32 %v4184, %v4188
        %v4288 = vmax.f32 %v4185, %v4189
        %v4289 = vmax.f32 %v4186, %v4190
        %v4290 = vmax.f32 %v4187, %v4191
        %v4291 = vmax.f32 %v4188, %v4192
        %v4292 = vmax.f32 %v4189, %v4193
        %v4293 = vmax.f32 %v4190, %v4194
        %v4294 = vmax.f32 %v4191, %v4195
        %v4295 = vmax.f32 %v4192, %v4196
        %v4296 = vmax.f32 %v4193, %v4197
        %v4297 = vmax.f32 %v4194, %v4198
        %v4298 = vmax.f32 %v4195, %v4199
        %v4299 = vmax.f32 %v4196, %v4200
        %v4300 = vmax.f32 %v4197, %v4201
        %v4301 = vmax.f32 %v4198, %v4202
        %v4302 = vmax.f32 %v4199, %v4203
        %v4303 = vmax.f32 %v4200, %v4204
        %v4304 = vmax.f32 %v4201, %v4205
        %v4305 = vmax.f32 %v4202, %v4206
        %v4306 = vmax.f32 %v4203, %v4207
        %v4307 = vmax.f32 %v4204, %v4208
        %v4308 = vmax.f32 %v4205, %v4209
        %v4309 = vmax.f32 %v4206, %v4210
        %v4310 = vmax.f32 %v4207, %v4211
        %v4311 = vmax.f32 %v4208, %v4212
        %v4312 = vmax.f32 %v4209, %v4213
        %v4313 = vmax.f32 %v4210, %v4214
        %v4314 = vmax.f32 %v4211, %v4215
        %v4315 = vmax.f32 %v4212, %v4216
        %v4316 = vmax.f32 %v4213, %v4217
        %v4317 = vmax.f32 %v4214, %v4218
        %v4318 = vmax.f32 %v4215, %v4219
        %v4319 = vmax.f32 %v4216, %v4220
        %v4320 = vmax.f32 %v4217, %v4221
        %v4321 = vmax.f32 %v4218, %v4230
        %v4322 = vmax.f32 %v4219, %v4231
        %v4323 = vmax.f32 %v4220, %v4232
        %v4324 = vmax.f32 %v4221, %v4233
        %v4325 = vpack.c.bf16 %v4235, %v4234
        %v4326 = vpack.c.bf16 %v4237, %v4236
        %v4327 = vpack.c.bf16 %v4239, %v4238
        %v4328 = vpack.c.bf16 %v4241, %v4240
        %v4329 = vpack.c.bf16 %v4243, %v4242
        %v4330 = vpack.c.bf16 %v4245, %v4244
        %v4331 = vpack.c.bf16 %v4247, %v4246
        %v4332 = vpack.c.bf16 %v4249, %v4248
        %v4333 = vpack.c.bf16 %v4251, %v4250
        %v4334 = vpack.c.bf16 %v4253, %v4252
        %v4335 = vpack.c.bf16 %v4255, %v4254
        %v4336 = vpack.c.bf16 %v4257, %v4256
        %v4337 = vpack.c.bf16 %v4259, %v4258
        %v4338 = vpack.c.bf16 %v4261, %v4260
        %v4339 = vpack.c.bf16 %v4263, %v4262
        %v4340 = vpack.c.bf16 %v4265, %v4264
        %v4341 = vpack.c.bf16 %v4267, %v4266
        %v4342 = vpack.c.bf16 %v4269, %v4268
        %v4343 = vpack.c.bf16 %v4271, %v4270
        %v4344 = vpack.c.bf16 %v4273, %v4272
        %v4345 = vpack.c.bf16 %v4275, %v4274
        %v4346 = vpack.c.bf16 %v4277, %v4276
        %v4347 = vpack.c.bf16 %v4279, %v4278
        %v4348 = vpack.c.bf16 %v4281, %v4280
        %v4349 = vpack.c.bf16 %v4283, %v4282
        %v4350 = vpack.c.bf16 %v4285, %v4284
        %v4351 = vpack.c.bf16 %v4287, %v4286
        %v4352 = vpack.c.bf16 %v4289, %v4288
        %v4353 = vpack.c.bf16 %v4291, %v4290
        %v4354 = vpack.c.bf16 %v4293, %v4292
        %v4355 = vpack.c.bf16 %v4295, %v4294
        %v4356 = vpack.c.bf16 %v4297, %v4296
        %v4357 = vpack.c.bf16 %v4299, %v4298
        %v4358 = vpack.c.bf16 %v4301, %v4300
        %v4359 = vpack.c.bf16 %v4303, %v4302
        %v4360 = vpack.c.bf16 %v4305, %v4304
        %v4361 = vpack.c.bf16 %v4307, %v4306
        %v4362 = vpack.c.bf16 %v4309, %v4308
        %v4363 = vpack.c.bf16 %v4311, %v4310
        %v4364 = vpack.c.bf16 %v4313, %v4312
        %v4365 = vpack.c.bf16 %v4315, %v4314
        %v4366 = vpack.c.bf16 %v4317, %v4316
        %v4367 = vpack.c.bf16 %v4319, %v4318
        %v4368 = vpack.c.bf16 %v4321, %v4320
        %v4369 = vpack.c.bf16 %v4323, %v4322
        %v4370 = vpack.c.bf16 %v4324, %v4324
        %v4371 = vld [vmem:[%s5] sm:$0xff]
        %v4372 = vld [vmem:[%s5 + $0x8] sm:$0xff]
        %v4373 = vld [vmem:[%s5 + $0x10] sm:$0xff]
        %v4374 = vld [vmem:[%s5 + $0x18] sm:$0xff]
        %v4375 = vld [vmem:[%s5 + $0x20] sm:$0xff]
        %v4376 = vld [vmem:[%s5 + $0x28] sm:$0xff]
        %v4377 = vld [vmem:[%s5 + $0x30] sm:$0xff]
        %v4378 = vld [vmem:[%s5 + $0x38] sm:$0xff]
        %v4379 = vld [vmem:[%s5 + $0x40] sm:$0xff]
        %v4380 = vld [vmem:[%s5 + $0x48] sm:$0xff]
        %v4381 = vld [vmem:[%s5 + $0x50] sm:$0xff]
        %v4382 = vld [vmem:[%s5 + $0x58] sm:$0xff]
        %v4383 = vld [vmem:[%s5 + $0x60] sm:$0xff]
        %v4384 = vld [vmem:[%s5 + $0x68] sm:$0xff]
        %v4385 = vld [vmem:[%s5 + $0x70] sm:$0xff]
        %v4386 = vld [vmem:[%s5 + $0x78] sm:$0xff]
        %v4387 = vld [vmem:[%s5 + $0x80] sm:$0xff]
        %v4388 = vld [vmem:[%s5 + $0x88] sm:$0xff]
        %v4389 = vld [vmem:[%s5 + $0x90] sm:$0xff]
        %v4390 = vld [vmem:[%s5 + $0x98] sm:$0xff]
        %v4391 = vld [vmem:[%s5 + $0xa0] sm:$0xff]
        %v4392 = vld [vmem:[%s5 + $0xa8] sm:$0xff]
        %v4393 = vld [vmem:[%s5 + $0xb0] sm:$0xff]
        %v4394 = vld [vmem:[%s5 + $0xb8] sm:$0xff]
        %v4395 = vld [vmem:[%s5 + $0xc0] sm:$0xff]
        %v4396 = vld [vmem:[%s5 + $0xc8] sm:$0xff]
        %v4397 = vld [vmem:[%s5 + $0xd0] sm:$0xff]
        %v4425 = vunpack.c.l.b16 %v4371
        %v4426 = vunpack.c.h.b16 %v4371
        %v4427 = vunpack.c.l.b16 %v4372
        %v4428 = vunpack.c.h.b16 %v4372
        %v4429 = vunpack.c.l.b16 %v4373
        %v4430 = vunpack.c.h.b16 %v4373
        %v4431 = vunpack.c.l.b16 %v4374
        %v4432 = vunpack.c.h.b16 %v4374
        %v4433 = vunpack.c.l.b16 %v4375
        %v4434 = vunpack.c.h.b16 %v4375
        %v4435 = vunpack.c.l.b16 %v4376
        %v4436 = vunpack.c.h.b16 %v4376
        %v4437 = vunpack.c.l.b16 %v4377
        %v4438 = vunpack.c.h.b16 %v4377
        %v4439 = vunpack.c.l.b16 %v4378
        %v4440 = vunpack.c.h.b16 %v4378
        %v4441 = vunpack.c.l.b16 %v4379
        %v4442 = vunpack.c.h.b16 %v4379
        %v4443 = vunpack.c.l.b16 %v4380
        %v4444 = vunpack.c.h.b16 %v4380
        %v4445 = vunpack.c.l.b16 %v4381
        %v4446 = vunpack.c.h.b16 %v4381
        %v4447 = vunpack.c.l.b16 %v4382
        %v4448 = vunpack.c.h.b16 %v4382
        %v4449 = vunpack.c.l.b16 %v4383
        %v4450 = vunpack.c.h.b16 %v4383
        %v4451 = vunpack.c.l.b16 %v4384
        %v4452 = vunpack.c.h.b16 %v4384
        %v4453 = vunpack.c.l.b16 %v4385
        %v4454 = vunpack.c.h.b16 %v4385
        %v4455 = vunpack.c.l.b16 %v4386
        %v4456 = vunpack.c.h.b16 %v4386
        %v4457 = vunpack.c.l.b16 %v4387
        %v4458 = vunpack.c.h.b16 %v4387
        %v4459 = vunpack.c.l.b16 %v4388
        %v4460 = vunpack.c.h.b16 %v4388
        %v4461 = vunpack.c.l.b16 %v4389
        %v4462 = vunpack.c.h.b16 %v4389
        %v4463 = vunpack.c.l.b16 %v4390
        %v4464 = vunpack.c.h.b16 %v4390
        %v4465 = vunpack.c.l.b16 %v4391
        %v4466 = vunpack.c.h.b16 %v4391
        %v4467 = vunpack.c.l.b16 %v4392
        %v4468 = vunpack.c.h.b16 %v4392
        %v4469 = vunpack.c.l.b16 %v4393
        %v4470 = vunpack.c.h.b16 %v4393
        %v4471 = vunpack.c.l.b16 %v4394
        %v4472 = vunpack.c.h.b16 %v4394
        %v4473 = vunpack.c.l.b16 %v4395
        %v4474 = vunpack.c.h.b16 %v4395
        %v4475 = vunpack.c.l.b16 %v4396
        %v4476 = vunpack.c.h.b16 %v4396
        %v4477 = vunpack.c.l.b16 %v4397
        %v4478 = vunpack.c.h.b16 %v4397
        %v4479 = vpack.c.b16 %v4431, %v4425
        %v4480 = vpack.c.b16 %v4432, %v4426
        %v4481 = vpack.c.b16 %v4433, %v4427
        %v4482 = vpack.c.b16 %v4434, %v4428
        %v4483 = vpack.c.b16 %v4435, %v4429
        %v4484 = vpack.c.b16 %v4436, %v4430
        %v4485 = vpack.c.b16 %v4443, %v4437
        %v4486 = vpack.c.b16 %v4444, %v4438
        %v4487 = vpack.c.b16 %v4445, %v4439
        %v4488 = vpack.c.b16 %v4446, %v4440
        %v4489 = vpack.c.b16 %v4447, %v4441
        %v4490 = vpack.c.b16 %v4448, %v4442
        %v4491 = vpack.c.b16 %v4455, %v4449
        %v4492 = vpack.c.b16 %v4456, %v4450
        %v4493 = vpack.c.b16 %v4457, %v4451
        %v4494 = vpack.c.b16 %v4458, %v4452
        %v4495 = vpack.c.b16 %v4459, %v4453
        %v4496 = vpack.c.b16 %v4460, %v4454
        %v4497 = vpack.c.b16 %v4467, %v4461
        %v4498 = vpack.c.b16 %v4468, %v4462
        %v4499 = vpack.c.b16 %v4469, %v4463
        %v4500 = vpack.c.b16 %v4470, %v4464
        %v4501 = vpack.c.b16 %v4471, %v4465
        %v4502 = vpack.c.b16 %v4472, %v4466
        %v4503 = vpack.c.b16 %v4473, %v4473
        %v4504 = vpack.c.b16 %v4474, %v4474
        %v4505 = vpack.c.b16 %v4475, %v4475
        %v4506 = vpack.c.b16 %v4476, %v4476
        %v4507 = vpack.c.b16 %v4477, %v4477
        %v4508 = vpack.c.b16 %v4478, %v4478
        %vm4534 = vcmask 719872
        %v4536 = vsel %vm4534, %v4484, 0
        %v4539 = vsel %vm4534, %v4490, 0
        %v4542 = vsel %vm4534, %v4496, 0
        %v4545 = vsel %vm4534, %v4502, 0
        %v4548 = vsel %vm4534, %v4508, 0
        %vm4550 = vcmask 1043456
        %v4552 = vsel %vm4550, %v4370, 0
        %4554 = vmatprep.subr.bf16.mxu0 0
        %4555 = vmatpush1.bf16.msra.mxu0 %v4325
        %4556 = vmatprep.subr.bf16.mxu0 0
        %4557 = vmatpush1.bf16.msra.mxu0 %v4326
        %4558 = vmatprep.subr.bf16.mxu0 0
        %4559 = vmatpush1.bf16.msra.mxu0 %v4327
        %4560 = vmatprep.subr.bf16.mxu0 0
        %4561 = vmatpush1.bf16.msra.mxu0 %v4328
        %4562 = vmatprep.subr.bf16.mxu0 0
        %4563 = vmatpush1.bf16.msra.mxu0 %v4329
        %4564 = vmatprep.subr.bf16.mxu0 0
        %4565 = vmatpush1.bf16.msra.mxu0 %v4330
        %4566 = vmatprep.subr.bf16.mxu0 0
        %4567 = vmatpush1.bf16.msra.mxu0 %v4331
        %4568 = vmatprep.subr.bf16.mxu0 0
        %4569 = vmatpush1.bf16.msra.mxu0 %v4332
        %4570 = vmatprep.subr.bf16.mxu0 0
        %4571 = vmatpush1.bf16.msra.mxu0 %v4333
        %4572 = vmatprep.subr.bf16.mxu0 0
        %4573 = vmatpush1.bf16.msra.mxu0 %v4334
        %4574 = vmatprep.subr.bf16.mxu0 0
        %4575 = vmatpush1.bf16.msra.mxu0 %v4335
        %4576 = vmatprep.subr.bf16.mxu0 0
        %4577 = vmatpush1.bf16.msra.mxu0 %v4336
        %4578 = vmatprep.subr.bf16.mxu0 0
        %4579 = vmatpush1.bf16.msra.mxu0 %v4337
        %4580 = vmatprep.subr.bf16.mxu0 0
        %4581 = vmatpush1.bf16.msra.mxu0 %v4338
        %4582 = vmatprep.subr.bf16.mxu0 0
        %4583 = vmatpush1.bf16.msra.mxu0 %v4339
        %4584 = vmatprep.subr.bf16.mxu0 0
        %4585 = vmatpush1.bf16.msra.mxu0 %v4340
        %4586 = vmatprep.mubr.bf16.mxu0 %v4480
        %4587 = vmatmul.mubr.bf16.gmra.mrb[0].mxu0 %v4479
        %v4588 = vpop.f32.mrb[0].mxu0
        %v4589 = vadd.f32 0.0, %v4588
        %v4590 = vpop.f32.mrb[0].mxu0
        %v4591 = vpop.f32.mrb[0].mxu0
        %v4592 = vadd.f32 0.0, %v4591
        %v4593 = vpop.f32.mrb[0].mxu0
        %4594 = vmatprep.mubr.bf16.mxu0 %v4486
        %4595 = vmatmul.mubr.bf16.gmra.mrb[0].mxu0 %v4485
        %v4596 = vpop.f32.mrb[0].mxu0
        %v4597 = vadd.f32 0.0, %v4596
        %v4598 = vpop.f32.mrb[0].mxu0
        %v4599 = vpop.f32.mrb[0].mxu0
        %v4600 = vadd.f32 0.0, %v4599
        %v4601 = vpop.f32.mrb[0].mxu0
        %4602 = vmatprep.mubr.bf16.mxu0 %v4492
        %4603 = vmatmul.mubr.bf16.gmra.mrb[0].mxu0 %v4491
        %v4604 = vpop.f32.mrb[0].mxu0
        %v4605 = vadd.f32 0.0, %v4604
        %v4606 = vpop.f32.mrb[0].mxu0
        %v4607 = vpop.f32.mrb[0].mxu0
        %v4608 = vadd.f32 0.0, %v4607
        %v4609 = vpop.f32.mrb[0].mxu0
        %4610 = vmatprep.mubr.bf16.mxu0 %v4498
        %4611 = vmatmul.mubr.bf16.gmra.mrb[0].mxu0 %v4497
        %v4612 = vpop.f32.mrb[0].mxu0
        %v4613 = vadd.f32 0.0, %v4612
        %v4614 = vpop.f32.mrb[0].mxu0
        %v4615 = vpop.f32.mrb[0].mxu0
        %v4616 = vadd.f32 0.0, %v4615
        %v4617 = vpop.f32.mrb[0].mxu0
        %4618 = vmatprep.mubr.bf16.mxu0 %v4504
        %4619 = vmatmul.mubr.bf16.gmra.mrb[0].mxu0 %v4503
        %v4620 = vpop.f32.mrb[0].mxu0
        %v4621 = vadd.f32 0.0, %v4620
        %v4622 = vpop.f32.mrb[0].mxu0
        %v4623 = vpop.f32.mrb[0].mxu0
        %v4624 = vpop.f32.mrb[0].mxu0
        %4625 = vdwg.mxu0
        %4626 = vmatprep.subr.bf16.mxu0 0
        %4627 = vmatpush1.bf16.msra.mxu0 %v4341
        %4628 = vmatprep.subr.bf16.mxu0 0
        %4629 = vmatpush1.bf16.msra.mxu0 %v4342
        %4630 = vmatprep.subr.bf16.mxu0 0
        %4631 = vmatpush1.bf16.msra.mxu0 %v4343
        %4632 = vmatprep.subr.bf16.mxu0 0
        %4633 = vmatpush1.bf16.msra.mxu0 %v4344
        %4634 = vmatprep.subr.bf16.mxu0 0
        %4635 = vmatpush1.bf16.msra.mxu0 %v4345
        %4636 = vmatprep.subr.bf16.mxu0 0
        %4637 = vmatpush1.bf16.msra.mxu0 %v4346
        %4638 = vmatprep.subr.bf16.mxu0 0
        %4639 = vmatpush1.bf16.msra.mxu0 %v4347
        %4640 = vmatprep.subr.bf16.mxu0 0
        %4641 = vmatpush1.bf16.msra.mxu0 %v4348
        %4642 = vmatprep.subr.bf16.mxu0 0
        %4643 = vmatpush1.bf16.msra.mxu0 %v4349
        %4644 = vmatprep.subr.bf16.mxu0 0
        %4645 = vmatpush1.bf16.msra.mxu0 %v4350
        %4646 = vmatprep.subr.bf16.mxu0 0
        %4647 = vmatpush1.bf16.msra.mxu0 %v4351
        %4648 = vmatprep.subr.bf16.mxu0 0
        %4649 = vmatpush1.bf16.msra.mxu0 %v4352
        %4650 = vmatprep.subr.bf16.mxu0 0
        %4651 = vmatpush1.bf16.msra.mxu0 %v4353
        %4652 = vmatprep.subr.bf16.mxu0 0
        %4653 = vmatpush1.bf16.msra.mxu0 %v4354
        %4654 = vmatprep.subr.bf16.mxu0 0
        %4655 = vmatpush1.bf16.msra.mxu0 %v4355
        %4656 = vmatprep.subr.bf16.mxu0 0
        %4657 = vmatpush1.bf16.msra.mxu0 %v4356
        %4658 = vmatprep.mubr.bf16.mxu0 %v4482
        %4659 = vmatmul.mubr.bf16.gmra.mrb[0].mxu0 %v4481
        %v4660 = vpop.f32.mrb[0].mxu0
        %v4661 = vadd.f32 %v4589, %v4660
        %v4662 = vpop.f32.mrb[0].mxu0
        %v4663 = vpop.f32.mrb[0].mxu0
        %v4664 = vadd.f32 %v4592, %v4663
        %v4665 = vpop.f32.mrb[0].mxu0
        %4666 = vmatprep.mubr.bf16.mxu0 %v4488
        %4667 = vmatmul.mubr.bf16.gmra.mrb[0].mxu0 %v4487
        %v4668 = vpop.f32.mrb[0].mxu0
        %v4669 = vadd.f32 %v4597, %v4668
        %v4670 = vpop.f32.mrb[0].mxu0
        %v4671 = vpop.f32.mrb[0].mxu0
        %v4672 = vadd.f32 %v4600, %v4671
        %v4673 = vpop.f32.mrb[0].mxu0
        %4674 = vmatprep.mubr.bf16.mxu0 %v4494
        %4675 = vmatmul.mubr.bf16.gmra.mrb[0].mxu0 %v4493
        %v4676 = vpop.f32.mrb[0].mxu0
        %v4677 = vadd.f32 %v4605, %v4676
        %v4678 = vpop.f32.mrb[0].mxu0
        %v4679 = vpop.f32.mrb[0].mxu0
        %v4680 = vadd.f32 %v4608, %v4679
        %v4681 = vpop.f32.mrb[0].mxu0
        %4682 = vmatprep.mubr.bf16.mxu0 %v4500
        %4683 = vmatmul.mubr.bf16.gmra.mrb[0].mxu0 %v4499
        %v4684 = vpop.f32.mrb[0].mxu0
        %v4685 = vadd.f32 %v4613, %v4684
        %v4686 = vpop.f32.mrb[0].mxu0
        %v4687 = vpop.f32.mrb[0].mxu0
        %v4688 = vadd.f32 %v4616, %v4687
        %v4689 = vpop.f32.mrb[0].mxu0
        %4690 = vmatprep.mubr.bf16.mxu0 %v4506
        %4691 = vmatmul.mubr.bf16.gmra.mrb[0].mxu0 %v4505
        %v4692 = vpop.f32.mrb[0].mxu0
        %v4693 = vadd.f32 %v4621, %v4692
        %v4694 = vpop.f32.mrb[0].mxu0
        %v4695 = vpop.f32.mrb[0].mxu0
        %v4696 = vpop.f32.mrb[0].mxu0
        %4697 = vdwg.mxu0
        %4698 = vmatprep.subr.bf16.mxu0 0
        %4699 = vmatpush1.bf16.msra.mxu0 %v4357
        %4700 = vmatprep.subr.bf16.mxu0 0
        %4701 = vmatpush1.bf16.msra.mxu0 %v4358
        %4702 = vmatprep.subr.bf16.mxu0 0
        %4703 = vmatpush1.bf16.msra.mxu0 %v4359
        %4704 = vmatprep.subr.bf16.mxu0 0
        %4705 = vmatpush1.bf16.msra.mxu0 %v4360
        %4706 = vmatprep.subr.bf16.mxu0 0
        %4707 = vmatpush1.bf16.msra.mxu0 %v4361
        %4708 = vmatprep.subr.bf16.mxu0 0
        %4709 = vmatpush1.bf16.msra.mxu0 %v4362
        %4710 = vmatprep.subr.bf16.mxu0 0
        %4711 = vmatpush1.bf16.msra.mxu0 %v4363
        %4712 = vmatprep.subr.bf16.mxu0 0
        %4713 = vmatpush1.bf16.msra.mxu0 %v4364
        %4714 = vmatprep.subr.bf16.mxu0 0
        %4715 = vmatpush1.bf16.msra.mxu0 %v4365
        %4716 = vmatprep.subr.bf16.mxu0 0
        %4717 = vmatpush1.bf16.msra.mxu0 %v4366
        %4718 = vmatprep.subr.bf16.mxu0 0
        %4719 = vmatpush1.bf16.msra.mxu0 %v4367
        %4720 = vmatprep.subr.bf16.mxu0 0
        %4721 = vmatpush1.bf16.msra.mxu0 %v4368
        %4722 = vmatprep.subr.bf16.mxu0 0
        %4723 = vmatpush1.bf16.msra.mxu0 %v4369
        %4724 = vmatprep.subr.bf16.mxu0 0
        %4725 = vmatpush1.bf16.msra.mxu0 %v4552
        %4726 = vmatprep.subr.bf16.mxu0 0
        %4727 = vmatpush1.bf16.msra.mxu0 0
        %4728 = vmatprep.subr.bf16.mxu0 0
        %4729 = vmatpush1.bf16.msra.mxu0 0
        %4730 = vmatprep.mubr.bf16.mxu0 %v4536
        %4731 = vmatmul.mubr.bf16.gmra.mrb[0].mxu0 %v4483
        %v4732 = vpop.f32.mrb[0].mxu0
        %v4733 = vadd.f32 %v4661, %v4732
        %v4734 = vpop.f32.mrb[0].mxu0
        %v4735 = vpop.f32.mrb[0].mxu0
        %v4736 = vadd.f32 %v4664, %v4735
        %v4737 = vpop.f32.mrb[0].mxu0
        %4738 = vmatprep.mubr.bf16.mxu0 %v4539
        %4739 = vmatmul.mubr.bf16.gmra.mrb[0].mxu0 %v4489
        %v4740 = vpop.f32.mrb[0].mxu0
        %v4741 = vadd.f32 %v4669, %v4740
        %v4742 = vpop.f32.mrb[0].mxu0
        %v4743 = vpop.f32.mrb[0].mxu0
        %v4744 = vadd.f32 %v4672, %v4743
        %v4745 = vpop.f32.mrb[0].mxu0
        %4746 = vmatprep.mubr.bf16.mxu0 %v4542
        %4747 = vmatmul.mubr.bf16.gmra.mrb[0].mxu0 %v4495
        %v4748 = vpop.f32.mrb[0].mxu0
        %v4749 = vadd.f32 %v4677, %v4748
        %v4750 = vpop.f32.mrb[0].mxu0
        %v4751 = vpop.f32.mrb[0].mxu0
        %v4752 = vadd.f32 %v4680, %v4751
        %v4753 = vpop.f32.mrb[0].mxu0
        %4754 = vmatprep.mubr.bf16.mxu0 %v4545
        %4755 = vmatmul.mubr.bf16.gmra.mrb[0].mxu0 %v4501
        %v4756 = vpop.f32.mrb[0].mxu0
        %v4757 = vadd.f32 %v4685, %v4756
        %v4758 = vpop.f32.mrb[0].mxu0
        %v4759 = vpop.f32.mrb[0].mxu0
        %v4760 = vadd.f32 %v4688, %v4759
        %v4761 = vpop.f32.mrb[0].mxu0
        %4762 = vmatprep.mubr.bf16.mxu0 %v4548
        %4763 = vmatmul.mubr.bf16.gmra.mrb[0].mxu0 %v4507
        %v4764 = vpop.f32.mrb[0].mxu0
        %v4765 = vadd.f32 %v4693, %v4764
        %v4766 = vpop.f32.mrb[0].mxu0
        %v4767 = vpop.f32.mrb[0].mxu0
        %v4768 = vpop.f32.mrb[0].mxu0
        %4769 = vdwg.mxu0
        %s4770 = scalar_lea.vmem %s5, 216
        %v4771 = vld [vmem:[%s4770] sm:$0xff]
        %v4772 = vld [vmem:[%s4770 + $0x8] sm:$0xff]
        %v4773 = vld [vmem:[%s4770 + $0x10] sm:$0xff]
        %v4774 = vld [vmem:[%s4770 + $0x18] sm:$0xff]
        %v4775 = vld [vmem:[%s4770 + $0x20] sm:$0xff]
        %v4776 = vld [vmem:[%s4770 + $0x28] sm:$0xff]
        %v4777 = vld [vmem:[%s4770 + $0x30] sm:$0xff]
        %v4778 = vld [vmem:[%s4770 + $0x38] sm:$0xff]
        %v4779 = vld [vmem:[%s4770 + $0x40] sm:$0xff]
        %v4780 = vld [vmem:[%s4770 + $0x48] sm:$0xff]
        %v4781 = vld [vmem:[%s4770 + $0x50] sm:$0xff]
        %v4782 = vld [vmem:[%s4770 + $0x58] sm:$0xff]
        %v4783 = vld [vmem:[%s4770 + $0x60] sm:$0xff]
        %v4784 = vld [vmem:[%s4770 + $0x68] sm:$0xff]
        %v4785 = vld [vmem:[%s4770 + $0x70] sm:$0xff]
        %v4786 = vld [vmem:[%s4770 + $0x78] sm:$0xff]
        %v4787 = vld [vmem:[%s4770 + $0x80] sm:$0xff]
        %v4788 = vld [vmem:[%s4770 + $0x88] sm:$0xff]
        %v4789 = vld [vmem:[%s4770 + $0x90] sm:$0xff]
        %v4790 = vld [vmem:[%s4770 + $0x98] sm:$0xff]
        %v4791 = vld [vmem:[%s4770 + $0xa0] sm:$0xff]
        %v4792 = vld [vmem:[%s4770 + $0xa8] sm:$0xff]
        %v4793 = vld [vmem:[%s4770 + $0xb0] sm:$0xff]
        %v4794 = vld [vmem:[%s4770 + $0xb8] sm:$0xff]
        %v4795 = vld [vmem:[%s4770 + $0xc0] sm:$0xff]
        %v4796 = vld [vmem:[%s4770 + $0xc8] sm:$0xff]
        %v4797 = vld [vmem:[%s4770 + $0xd0] sm:$0xff]
        %v4825 = vunpack.c.l.b16 %v4771
        %v4826 = vunpack.c.h.b16 %v4771
        %v4827 = vunpack.c.l.b16 %v4772
        %v4828 = vunpack.c.h.b16 %v4772
        %v4829 = vunpack.c.l.b16 %v4773
        %v4830 = vunpack.c.h.b16 %v4773
        %v4831 = vunpack.c.l.b16 %v4774
        %v4832 = vunpack.c.h.b16 %v4774
        %v4833 = vunpack.c.l.b16 %v4775
        %v4834 = vunpack.c.h.b16 %v4775
        %v4835 = vunpack.c.l.b16 %v4776
        %v4836 = vunpack.c.h.b16 %v4776
        %v4837 = vunpack.c.l.b16 %v4777
        %v4838 = vunpack.c.h.b16 %v4777
        %v4839 = vunpack.c.l.b16 %v4778
        %v4840 = vunpack.c.h.b16 %v4778
        %v4841 = vunpack.c.l.b16 %v4779
        %v4842 = vunpack.c.h.b16 %v4779
        %v4843 = vunpack.c.l.b16 %v4780
        %v4844 = vunpack.c.h.b16 %v4780
        %v4845 = vunpack.c.l.b16 %v4781
        %v4846 = vunpack.c.h.b16 %v4781
        %v4847 = vunpack.c.l.b16 %v4782
        %v4848 = vunpack.c.h.b16 %v4782
        %v4849 = vunpack.c.l.b16 %v4783
        %v4850 = vunpack.c.h.b16 %v4783
        %v4851 = vunpack.c.l.b16 %v4784
        %v4852 = vunpack.c.h.b16 %v4784
        %v4853 = vunpack.c.l.b16 %v4785
        %v4854 = vunpack.c.h.b16 %v4785
        %v4855 = vunpack.c.l.b16 %v4786
        %v4856 = vunpack.c.h.b16 %v4786
        %v4857 = vunpack.c.l.b16 %v4787
        %v4858 = vunpack.c.h.b16 %v4787
        %v4859 = vunpack.c.l.b16 %v4788
        %v4860 = vunpack.c.h.b16 %v4788
        %v4861 = vunpack.c.l.b16 %v4789
        %v4862 = vunpack.c.h.b16 %v4789
        %v4863 = vunpack.c.l.b16 %v4790
        %v4864 = vunpack.c.h.b16 %v4790
        %v4865 = vunpack.c.l.b16 %v4791
        %v4866 = vunpack.c.h.b16 %v4791
        %v4867 = vunpack.c.l.b16 %v4792
        %v4868 = vunpack.c.h.b16 %v4792
        %v4869 = vunpack.c.l.b16 %v4793
        %v4870 = vunpack.c.h.b16 %v4793
        %v4871 = vunpack.c.l.b16 %v4794
        %v4872 = vunpack.c.h.b16 %v4794
        %v4873 = vunpack.c.l.b16 %v4795
        %v4874 = vunpack.c.h.b16 %v4795
        %v4875 = vunpack.c.l.b16 %v4796
        %v4876 = vunpack.c.h.b16 %v4796
        %v4877 = vunpack.c.l.b16 %v4797
        %v4878 = vunpack.c.h.b16 %v4797
        %v4879 = vpack.c.b16 %v4831, %v4825
        %v4880 = vpack.c.b16 %v4832, %v4826
        %v4881 = vpack.c.b16 %v4833, %v4827
        %v4882 = vpack.c.b16 %v4834, %v4828
        %v4883 = vpack.c.b16 %v4835, %v4829
        %v4884 = vpack.c.b16 %v4836, %v4830
        %v4885 = vpack.c.b16 %v4843, %v4837
        %v4886 = vpack.c.b16 %v4844, %v4838
        %v4887 = vpack.c.b16 %v4845, %v4839
        %v4888 = vpack.c.b16 %v4846, %v4840
        %v4889 = vpack.c.b16 %v4847, %v4841
        %v4890 = vpack.c.b16 %v4848, %v4842
        %v4891 = vpack.c.b16 %v4855, %v4849
        %v4892 = vpack.c.b16 %v4856, %v4850
        %v4893 = vpack.c.b16 %v4857, %v4851
        %v4894 = vpack.c.b16 %v4858, %v4852
        %v4895 = vpack.c.b16 %v4859, %v4853
        %v4896 = vpack.c.b16 %v4860, %v4854
        %v4897 = vpack.c.b16 %v4867, %v4861
        %v4898 = vpack.c.b16 %v4868, %v4862
        %v4899 = vpack.c.b16 %v4869, %v4863
        %v4900 = vpack.c.b16 %v4870, %v4864
        %v4901 = vpack.c.b16 %v4871, %v4865
        %v4902 = vpack.c.b16 %v4872, %v4866
        %v4903 = vpack.c.b16 %v4873, %v4873
        %v4904 = vpack.c.b16 %v4874, %v4874
        %v4905 = vpack.c.b16 %v4875, %v4875
        %v4906 = vpack.c.b16 %v4876, %v4876
        %v4907 = vpack.c.b16 %v4877, %v4877
        %v4908 = vpack.c.b16 %v4878, %v4878
        %v4935 = vsel %vm4534, %v4884, 0
        %v4938 = vsel %vm4534, %v4890, 0
        %v4941 = vsel %vm4534, %v4896, 0
        %v4944 = vsel %vm4534, %v4902, 0
        %v4947 = vsel %vm4534, %v4908, 0
        %4949 = vmatprep.subr.bf16.mxu0 0
        %4950 = vmatpush1.bf16.msra.mxu0 %v4325
        %4951 = vmatprep.subr.bf16.mxu0 0
        %4952 = vmatpush1.bf16.msra.mxu0 %v4326
        %4953 = vmatprep.subr.bf16.mxu0 0
        %4954 = vmatpush1.bf16.msra.mxu0 %v4327
        %4955 = vmatprep.subr.bf16.mxu0 0
        %4956 = vmatpush1.bf16.msra.mxu0 %v4328
        %4957 = vmatprep.subr.bf16.mxu0 0
        %4958 = vmatpush1.bf16.msra.mxu0 %v4329
        %4959 = vmatprep.subr.bf16.mxu0 0
        %4960 = vmatpush1.bf16.msra.mxu0 %v4330
        %4961 = vmatprep.subr.bf16.mxu0 0
        %4962 = vmatpush1.bf16.msra.mxu0 %v4331
        %4963 = vmatprep.subr.bf16.mxu0 0
        %4964 = vmatpush1.bf16.msra.mxu0 %v4332
        %4965 = vmatprep.subr.bf16.mxu0 0
        %4966 = vmatpush1.bf16.msra.mxu0 %v4333
        %4967 = vmatprep.subr.bf16.mxu0 0
        %4968 = vmatpush1.bf16.msra.mxu0 %v4334
        %4969 = vmatprep.subr.bf16.mxu0 0
        %4970 = vmatpush1.bf16.msra.mxu0 %v4335
        %4971 = vmatprep.subr.bf16.mxu0 0
        %4972 = vmatpush1.bf16.msra.mxu0 %v4336
        %4973 = vmatprep.subr.bf16.mxu0 0
        %4974 = vmatpush1.bf16.msra.mxu0 %v4337
        %4975 = vmatprep.subr.bf16.mxu0 0
        %4976 = vmatpush1.bf16.msra.mxu0 %v4338
        %4977 = vmatprep.subr.bf16.mxu0 0
        %4978 = vmatpush1.bf16.msra.mxu0 %v4339
        %4979 = vmatprep.subr.bf16.mxu0 0
        %4980 = vmatpush1.bf16.msra.mxu0 %v4340
        %4981 = vmatprep.mubr.bf16.mxu0 %v4880
        %4982 = vmatmul.mubr.bf16.gmra.mrb[0].mxu0 %v4879
        %v4983 = vpop.f32.mrb[0].mxu0
        %v4984 = vadd.f32 0.0, %v4983
        %v4985 = vpop.f32.mrb[0].mxu0
        %v4986 = vpop.f32.mrb[0].mxu0
        %v4987 = vadd.f32 0.0, %v4986
        %v4988 = vpop.f32.mrb[0].mxu0
        %4989 = vmatprep.mubr.bf16.mxu0 %v4886
        %4990 = vmatmul.mubr.bf16.gmra.mrb[0].mxu0 %v4885
        %v4991 = vpop.f32.mrb[0].mxu0
        %v4992 = vadd.f32 0.0, %v4991
        %v4993 = vpop.f32.mrb[0].mxu0
        %v4994 = vpop.f32.mrb[0].mxu0
        %v4995 = vadd.f32 0.0, %v4994
        %v4996 = vpop.f32.mrb[0].mxu0
        %4997 = vmatprep.mubr.bf16.mxu0 %v4892
        %4998 = vmatmul.mubr.bf16.gmra.mrb[0].mxu0 %v4891
        %v4999 = vpop.f32.mrb[0].mxu0
        %v5000 = vadd.f32 0.0, %v4999
        %v5001 = vpop.f32.mrb[0].mxu0
        %v5002 = vpop.f32.mrb[0].mxu0
        %v5003 = vadd.f32 0.0, %v5002
        %v5004 = vpop.f32.mrb[0].mxu0
        %5005 = vmatprep.mubr.bf16.mxu0 %v4898
        %5006 = vmatmul.mubr.bf16.gmra.mrb[0].mxu0 %v4897
        %v5007 = vpop.f32.mrb[0].mxu0
        %v5008 = vadd.f32 0.0, %v5007
        %v5009 = vpop.f32.mrb[0].mxu0
        %v5010 = vpop.f32.mrb[0].mxu0
        %v5011 = vadd.f32 0.0, %v5010
        %v5012 = vpop.f32.mrb[0].mxu0
        %5013 = vmatprep.mubr.bf16.mxu0 %v4904
        %5014 = vmatmul.mubr.bf16.gmra.mrb[0].mxu0 %v4903
        %v5015 = vpop.f32.mrb[0].mxu0
        %v5016 = vadd.f32 0.0, %v5015
        %v5017 = vpop.f32.mrb[0].mxu0
        %v5018 = vpop.f32.mrb[0].mxu0
        %v5019 = vpop.f32.mrb[0].mxu0
        %5020 = vdwg.mxu0
        %5021 = vmatprep.subr.bf16.mxu0 0
        %5022 = vmatpush1.bf16.msra.mxu0 %v4341
        %5023 = vmatprep.subr.bf16.mxu0 0
        %5024 = vmatpush1.bf16.msra.mxu0 %v4342
        %5025 = vmatprep.subr.bf16.mxu0 0
        %5026 = vmatpush1.bf16.msra.mxu0 %v4343
        %5027 = vmatprep.subr.bf16.mxu0 0
        %5028 = vmatpush1.bf16.msra.mxu0 %v4344
        %5029 = vmatprep.subr.bf16.mxu0 0
        %5030 = vmatpush1.bf16.msra.mxu0 %v4345
        %5031 = vmatprep.subr.bf16.mxu0 0
        %5032 = vmatpush1.bf16.msra.mxu0 %v4346
        %5033 = vmatprep.subr.bf16.mxu0 0
        %5034 = vmatpush1.bf16.msra.mxu0 %v4347
        %5035 = vmatprep.subr.bf16.mxu0 0
        %5036 = vmatpush1.bf16.msra.mxu0 %v4348
        %5037 = vmatprep.subr.bf16.mxu0 0
        %5038 = vmatpush1.bf16.msra.mxu0 %v4349
        %5039 = vmatprep.subr.bf16.mxu0 0
        %5040 = vmatpush1.bf16.msra.mxu0 %v4350
        %5041 = vmatprep.subr.bf16.mxu0 0
        %5042 = vmatpush1.bf16.msra.mxu0 %v4351
        %5043 = vmatprep.subr.bf16.mxu0 0
        %5044 = vmatpush1.bf16.msra.mxu0 %v4352
        %5045 = vmatprep.subr.bf16.mxu0 0
        %5046 = vmatpush1.bf16.msra.mxu0 %v4353
        %5047 = vmatprep.subr.bf16.mxu0 0
        %5048 = vmatpush1.bf16.msra.mxu0 %v4354
        %5049 = vmatprep.subr.bf16.mxu0 0
        %5050 = vmatpush1.bf16.msra.mxu0 %v4355
        %5051 = vmatprep.subr.bf16.mxu0 0
        %5052 = vmatpush1.bf16.msra.mxu0 %v4356
        %5053 = vmatprep.mubr.bf16.mxu0 %v4882
        %5054 = vmatmul.mubr.bf16.gmra.mrb[0].mxu0 %v4881
        %v5055 = vpop.f32.mrb[0].mxu0
        %v5056 = vadd.f32 %v4984, %v5055
        %v5057 = vpop.f32.mrb[0].mxu0
        %v5058 = vpop.f32.mrb[0].mxu0
        %v5059 = vadd.f32 %v4987, %v5058
        %v5060 = vpop.f32.mrb[0].mxu0
        %5061 = vmatprep.mubr.bf16.mxu0 %v4888
        %5062 = vmatmul.mubr.bf16.gmra.mrb[0].mxu0 %v4887
        %v5063 = vpop.f32.mrb[0].mxu0
        %v5064 = vadd.f32 %v4992, %v5063
        %v5065 = vpop.f32.mrb[0].mxu0
        %v5066 = vpop.f32.mrb[0].mxu0
        %v5067 = vadd.f32 %v4995, %v5066
        %v5068 = vpop.f32.mrb[0].mxu0
        %5069 = vmatprep.mubr.bf16.mxu0 %v4894
        %5070 = vmatmul.mubr.bf16.gmra.mrb[0].mxu0 %v4893
        %v5071 = vpop.f32.mrb[0].mxu0
        %v5072 = vadd.f32 %v5000, %v5071
        %v5073 = vpop.f32.mrb[0].mxu0
        %v5074 = vpop.f32.mrb[0].mxu0
        %v5075 = vadd.f32 %v5003, %v5074
        %v5076 = vpop.f32.mrb[0].mxu0
        %5077 = vmatprep.mubr.bf16.mxu0 %v4900
        %5078 = vmatmul.mubr.bf16.gmra.mrb[0].mxu0 %v4899
        %v5079 = vpop.f32.mrb[0].mxu0
        %v5080 = vadd.f32 %v5008, %v5079
        %v5081 = vpop.f32.mrb[0].mxu0
        %v5082 = vpop.f32.mrb[0].mxu0
        %v5083 = vadd.f32 %v5011, %v5082
        %v5084 = vpop.f32.mrb[0].mxu0
        %5085 = vmatprep.mubr.bf16.mxu0 %v4906
        %5086 = vmatmul.mubr.bf16.gmra.mrb[0].mxu0 %v4905
        %v5087 = vpop.f32.mrb[0].mxu0
        %v5088 = vadd.f32 %v5016, %v5087
        %v5089 = vpop.f32.mrb[0].mxu0
        %v5090 = vpop.f32.mrb[0].mxu0
        %v5091 = vpop.f32.mrb[0].mxu0
        %5092 = vdwg.mxu0
        %5093 = vmatprep.subr.bf16.mxu0 0
        %5094 = vmatpush1.bf16.msra.mxu0 %v4357
        %5095 = vmatprep.subr.bf16.mxu0 0
        %5096 = vmatpush1.bf16.msra.mxu0 %v4358
        %5097 = vmatprep.subr.bf16.mxu0 0
        %5098 = vmatpush1.bf16.msra.mxu0 %v4359
        %5099 = vmatprep.subr.bf16.mxu0 0
        %5100 = vmatpush1.bf16.msra.mxu0 %v4360
        %5101 = vmatprep.subr.bf16.mxu0 0
        %5102 = vmatpush1.bf16.msra.mxu0 %v4361
        %5103 = vmatprep.subr.bf16.mxu0 0
        %5104 = vmatpush1.bf16.msra.mxu0 %v4362
        %5105 = vmatprep.subr.bf16.mxu0 0
        %5106 = vmatpush1.bf16.msra.mxu0 %v4363
        %5107 = vmatprep.subr.bf16.mxu0 0
        %5108 = vmatpush1.bf16.msra.mxu0 %v4364
        %5109 = vmatprep.subr.bf16.mxu0 0
        %5110 = vmatpush1.bf16.msra.mxu0 %v4365
        %5111 = vmatprep.subr.bf16.mxu0 0
        %5112 = vmatpush1.bf16.msra.mxu0 %v4366
        %5113 = vmatprep.subr.bf16.mxu0 0
        %5114 = vmatpush1.bf16.msra.mxu0 %v4367
        %5115 = vmatprep.subr.bf16.mxu0 0
        %5116 = vmatpush1.bf16.msra.mxu0 %v4368
        %5117 = vmatprep.subr.bf16.mxu0 0
        %5118 = vmatpush1.bf16.msra.mxu0 %v4369
        %5119 = vmatprep.subr.bf16.mxu0 0
        %5120 = vmatpush1.bf16.msra.mxu0 %v4552
        %5121 = vmatprep.subr.bf16.mxu0 0
        %5122 = vmatpush1.bf16.msra.mxu0 0
        %5123 = vmatprep.subr.bf16.mxu0 0
        %5124 = vmatpush1.bf16.msra.mxu0 0
        %5125 = vmatprep.mubr.bf16.mxu0 %v4935
        %5126 = vmatmul.mubr.bf16.gmra.mrb[0].mxu0 %v4883
        %v5127 = vpop.f32.mrb[0].mxu0
        %v5128 = vadd.f32 %v5056, %v5127
        %v5129 = vpop.f32.mrb[0].mxu0
        %v5130 = vpop.f32.mrb[0].mxu0
        %v5131 = vadd.f32 %v5059, %v5130
        %v5132 = vpop.f32.mrb[0].mxu0
        %5133 = vmatprep.mubr.bf16.mxu0 %v4938
        %5134 = vmatmul.mubr.bf16.gmra.mrb[0].mxu0 %v4889
        %v5135 = vpop.f32.mrb[0].mxu0
        %v5136 = vadd.f32 %v5064, %v5135
        %v5137 = vpop.f32.mrb[0].mxu0
        %v5138 = vpop.f32.mrb[0].mxu0
        %v5139 = vadd.f32 %v5067, %v5138
        %v5140 = vpop.f32.mrb[0].mxu0
        %5141 = vmatprep.mubr.bf16.mxu0 %v4941
        %5142 = vmatmul.mubr.bf16.gmra.mrb[0].mxu0 %v4895
        %v5143 = vpop.f32.mrb[0].mxu0
        %v5144 = vadd.f32 %v5072, %v5143
        %v5145 = vpop.f32.mrb[0].mxu0
        %v5146 = vpop.f32.mrb[0].mxu0
        %v5147 = vadd.f32 %v5075, %v5146
        %v5148 = vpop.f32.mrb[0].mxu0
        %5149 = vmatprep.mubr.bf16.mxu0 %v4944
        %5150 = vmatmul.mubr.bf16.gmra.mrb[0].mxu0 %v4901
        %v5151 = vpop.f32.mrb[0].mxu0
        %v5152 = vadd.f32 %v5080, %v5151
        %v5153 = vpop.f32.mrb[0].mxu0
        %v5154 = vpop.f32.mrb[0].mxu0
        %v5155 = vadd.f32 %v5083, %v5154
        %v5156 = vpop.f32.mrb[0].mxu0
        %5157 = vmatprep.mubr.bf16.mxu0 %v4947
        %5158 = vmatmul.mubr.bf16.gmra.mrb[0].mxu0 %v4907
        %v5159 = vpop.f32.mrb[0].mxu0
        %v5160 = vadd.f32 %v5088, %v5159
        %v5161 = vpop.f32.mrb[0].mxu0
        %v5162 = vpop.f32.mrb[0].mxu0
        %v5163 = vpop.f32.mrb[0].mxu0
        %5164 = vdwg.mxu0
        %5174 = vrot.lane.b32.xlu0 %v5128, 64
        %v5175 = vpop.permute.xlu0 %5174
        %5176 = vrot.lane.b32.xlu0 %v5131, 64
        %v5177 = vpop.permute.xlu0 %5176
        %5178 = vrot.lane.b32.xlu0 %v5136, 64
        %v5179 = vpop.permute.xlu0 %5178
        %5180 = vrot.lane.b32.xlu0 %v5139, 64
        %v5181 = vpop.permute.xlu0 %5180
        %5182 = vrot.lane.b32.xlu0 %v5144, 64
        %v5183 = vpop.permute.xlu0 %5182
        %5184 = vrot.lane.b32.xlu0 %v5147, 64
        %v5185 = vpop.permute.xlu0 %5184
        %5186 = vrot.lane.b32.xlu0 %v5152, 64
        %v5187 = vpop.permute.xlu0 %5186
        %5188 = vrot.lane.b32.xlu0 %v5155, 64
        %v5189 = vpop.permute.xlu0 %5188
        %5190 = vrot.lane.b32.xlu0 %v5160, 64
        %v5191 = vpop.permute.xlu0 %5190
        %v5201 = vsel %vm2120, %v4733, %v5175
        %v5202 = vsel %vm2120, %v4736, %v5177
        %v5203 = vsel %vm2120, %v4741, %v5179
        %v5204 = vsel %vm2120, %v4744, %v5181
        %v5205 = vsel %vm2120, %v4749, %v5183
        %v5206 = vsel %vm2120, %v4752, %v5185
        %v5207 = vsel %vm2120, %v4757, %v5187
        %v5208 = vsel %vm2120, %v4760, %v5189
        %v5209 = vsel %vm2120, %v4765, %v5191
        %v5210 = vpack.c.bf16 %v5202, %v5201
        %v5211 = vpack.c.bf16 %v5204, %v5203
        %v5212 = vpack.c.bf16 %v5206, %v5205
        %v5213 = vpack.c.bf16 %v5208, %v5207
        %v5214 = vpack.c.bf16 %v5209, %v5209
        %v5220 = vunpack.c.l.b16 %v5210
        %v5221 = vunpack.c.h.b16 %v5210
        %v5222 = vunpack.c.l.b16 %v5211
        %v5223 = vunpack.c.h.b16 %v5211
        %v5224 = vunpack.c.l.b16 %v5212
        %v5225 = vunpack.c.h.b16 %v5212
        %v5226 = vunpack.c.l.b16 %v5213
        %v5227 = vunpack.c.h.b16 %v5213
        %v5228 = vunpack.c.l.b16 %v5214
        %v5229 = vpack.c.b16 %v5220, %v5220
        %v5230 = vpack.c.b16 %v5221, %v5221
        %v5231 = vpack.c.b16 %v5222, %v5222
        %v5232 = vpack.c.b16 %v5223, %v5223
        %v5233 = vpack.c.b16 %v5224, %v5224
        %v5234 = vpack.c.b16 %v5225, %v5225
        %v5235 = vpack.c.b16 %v5226, %v5226
        %v5236 = vpack.c.b16 %v5227, %v5227
        %v5237 = vpack.c.b16 %v5228, %v5228
        %5247 = vst [vmem:[%s264] sm:$0xf] %v5229
        %5248 = vst [vmem:[%s264 + $0x4] sm:$0xf] %v5230
        %5249 = vst [vmem:[%s264 + $0x8] sm:$0xf] %v5231
        %5250 = vst [vmem:[%s264 + $0xc] sm:$0xf] %v5232
        %5251 = vst [vmem:[%s264 + $0x10] sm:$0xf] %v5233
        %5252 = vst [vmem:[%s264 + $0x14] sm:$0xf] %v5234
        %5253 = vst [vmem:[%s264 + $0x18] sm:$0xf] %v5235
        %5254 = vst [vmem:[%s264 + $0x1c] sm:$0xf] %v5236
        %5255 = vst [vmem:[%s264 + $0x20] sm:$0xf] %v5237
        %p5256 = scmp.lt.s32.totalorder %s18, 1
        %s5257 = scalar_select %p5256, %s18, 1
        %s5258 = smul.addr %s5257, 9
        %s5259 = smul.addr %s5258, 4
        %s5260 = scalar_lea.vmem %s6, %s5259
        // Predicated region
        $region49: #{net_forward.2} parent=43 // pred_check
          %p5261 = pneg %p167
        $region50: #{net_forward.2} parent=43 // pred_check_branch
          %5263 = sbr.rel (%p5261) target = $region52
        $region51: #{net_forward.2} parent=43 // pred_region
          _
        $region52: #{net_forward.2} parent=43 // pred_fallthru
          _
      $region44: #{net_forward.2} parent=5 // pred_fallthru
        _
      %p5264 = scmp.le.s32.totalorder 2, %s13
      // Predicated region
      $region53: #{net_forward.2} parent=5 // pred_check
        %p5265 = pneg %p5264
      $region54: #{net_forward.2} parent=5 // pred_check_branch
        %5267 = sbr.rel (%p5265) target = $region56
      $region55: #{net_forward.2} parent=5 // pred_region
        %s5268 = ssub.s32 %s13, 2
        // Predicated region
        $region57: #{net_forward.2} parent=55 // pred_check
          %p5269 = pneg %p173
        $region58: #{net_forward.2} parent=55 // pred_check_branch
          %5271 = sbr.rel (%p5269) target = $region60
        $region59: #{net_forward.2} parent=55 // pred_region
          %p5272 = scmp.lt.s32.totalorder %s19, 1
          %s5273 = scalar_select %p5272, %s19, 1
          %s5274 = smul.addr %s5273, 9
          %s5275 = smul.addr %s5274, 4
          %s5276 = scalar_lea.vmem %s6, %s5275
        $region60: #{net_forward.2} parent=55 // pred_fallthru
          _
      $region56: #{net_forward.2} parent=5 // pred_fallthru
        _
    $region6: #{net_forward.2} parent=1 // loop_footer
      %s17 = sadd.s32 1, %s13
    $region7: #{net_forward.2} parent=1 // loop_footer_branch
      %12 = sbr.rel target = $region3
    $region8: #{net_forward.2} parent=1 // loop_exit
      _
    %5277 = vsyncpa [#allocation5], 1
    %s5278 = scalar_lea.sflag [#allocation5], 1
    %5279 = vsyncpa %s5278, 1

// kernel: net_forward.3
$region0: #{net_forward.3}
  #allocation0 [shape = 'u32[]', space=smem, size = 0x4, offset = 0x4, fixed_abs, tag = 'smem constant byte address 0x4 - core index']
  #allocation1 [shape = 'u32[144,128]{1,0:T(1,128)}', space=vmem, size = 0x12000, scoped, tag = 'internal scratch']
  %s0 = inlined_call_operand.vmem [shape: bf16[2,9216], index: 0, kind: input, shape index: {}]
  %s1 = inlined_call_operand.vmem [shape: bf16[9216,128], index: 1, kind: input, shape index: {}]
  %s2 = inlined_call_operand.vmem [shape: f32[1,128], index: 2, kind: input, shape index: {}]
  %s3 = inlined_call_operand.vmem [shape: f32[128,10], index: 3, kind: input, shape index: {}]
  %s4 = inlined_call_operand.vmem [shape: f32[1,10], index: 4, kind: input, shape index: {}]
  %s5 = inlined_call_operand.hbm [shape: f32[2,10], index: 5, kind: output, shape index: {}]
  %s6 = sld [smem:[#allocation0]]
  $region30: #{net_forward.3} parent=0
    _
  %s8 = ssub.s32 1, %s6
  %s9 = scalar_select 0, %s8, %s6
  $region1: #{net_forward.3} parent=0
    #allocation2 [shape = 'u8[1024]{0}', space=vmem, size = 0x400, scoped, tag = 'output window, operand 0, single buffered']
    #allocation3 [shape = 's32[1]{0}', space=sflag, size = 0x4, scoped, tag = 'scoped memory for net_forward.3']
    %10 = vsyncpa [#allocation3], 0
    // Predicated region
    $region2: #{net_forward.3} parent=1 // pred_check
      _
    $region3: #{net_forward.3} parent=1 // pred_check_branch
      %12 = sbr.rel (0) target = $region5
    $region4: #{net_forward.3} parent=1 // pred_region
      _
    $region5: #{net_forward.3} parent=1 // pred_fallthru
      _
    // Predicated region
    $region6: #{net_forward.3} parent=1 // pred_check
      _
    $region7: #{net_forward.3} parent=1 // pred_check_branch
      %14 = sbr.rel (0) target = $region9
    $region8: #{net_forward.3} parent=1 // pred_region
      _
    $region9: #{net_forward.3} parent=1 // pred_fallthru
      _
    // Predicated region
    $region10: #{net_forward.3} parent=1 // pred_check
      _
    $region11: #{net_forward.3} parent=1 // pred_check_branch
      %16 = sbr.rel (0) target = $region13
    $region12: #{net_forward.3} parent=1 // pred_region
      _
    $region13: #{net_forward.3} parent=1 // pred_fallthru
      _
    // Predicated region
    $region14: #{net_forward.3} parent=1 // pred_check
      _
    $region15: #{net_forward.3} parent=1 // pred_check_branch
      %18 = sbr.rel (0) target = $region17
    $region16: #{net_forward.3} parent=1 // pred_region
      _
    $region17: #{net_forward.3} parent=1 // pred_fallthru
      _
    // Predicated region
    $region18: #{net_forward.3} parent=1 // pred_check
      _
    $region19: #{net_forward.3} parent=1 // pred_check_branch
      %20 = sbr.rel (0) target = $region21
    $region20: #{net_forward.3} parent=1 // pred_region
      _
    $region21: #{net_forward.3} parent=1 // pred_fallthru
      _
    %v22 = vld [vmem:[%s0] sm:$0xff]
    %v23 = vld [vmem:[%s0 + $0x8] sm:$0xff]
    %v24 = vld [vmem:[%s0 + $0x10] sm:$0xff]
    %v25 = vld [vmem:[%s0 + $0x18] sm:$0xff]
    %v26 = vld [vmem:[%s0 + $0x20] sm:$0xff]
    %v27 = vld [vmem:[%s0 + $0x28] sm:$0xff]
    %v28 = vld [vmem:[%s0 + $0x30] sm:$0xff]
    %v29 = vld [vmem:[%s0 + $0x38] sm:$0xff]
    %v30 = vld [vmem:[%s0 + $0x40] sm:$0xff]
    %v31 = vld [vmem:[%s1] sm:$0xf]
    %v32 = vld [vmem:[%s1 + $0x4] sm:$0xf]
    %v33 = vld [vmem:[%s1 + $0x8] sm:$0xf]
    %v34 = vld [vmem:[%s1 + $0xc] sm:$0xf]
    %v35 = vld [vmem:[%s1 + $0x10] sm:$0xf]
    %v36 = vld [vmem:[%s1 + $0x14] sm:$0xf]
    %v37 = vld [vmem:[%s1 + $0x18] sm:$0xf]
    %v38 = vld [vmem:[%s1 + $0x1c] sm:$0xf]
    %v39 = vld [vmem:[%s1 + $0x20] sm:$0xf]
    %v40 = vld [vmem:[%s1 + $0x24] sm:$0xf]
    %v41 = vld [vmem:[%s1 + $0x28] sm:$0xf]
    %v42 = vld [vmem:[%s1 + $0x2c] sm:$0xf]
    %v43 = vld [vmem:[%s1 + $0x30] sm:$0xf]
    %v44 = vld [vmem:[%s1 + $0x34] sm:$0xf]
    %v45 = vld [vmem:[%s1 + $0x38] sm:$0xf]
    %v46 = vld [vmem:[%s1 + $0x3c] sm:$0xf]
    %v47 = vld [vmem:[%s1 + $0x40] sm:$0xf]
    %v48 = vld [vmem:[%s1 + $0x44] sm:$0xf]
    %v49 = vld [vmem:[%s1 + $0x48] sm:$0xf]
    %v50 = vld [vmem:[%s1 + $0x4c] sm:$0xf]
    %v51 = vld [vmem:[%s1 + $0x50] sm:$0xf]
    %v52 = vld [vmem:[%s1 + $0x54] sm:$0xf]
    %v53 = vld [vmem:[%s1 + $0x58] sm:$0xf]
    %v54 = vld [vmem:[%s1 + $0x5c] sm:$0xf]
    %v55 = vld [vmem:[%s1 + $0x60] sm:$0xf]
    %v56 = vld [vmem:[%s1 + $0x64] sm:$0xf]
    %v57 = vld [vmem:[%s1 + $0x68] sm:$0xf]
    %v58 = vld [vmem:[%s1 + $0x6c] sm:$0xf]
    %v59 = vld [vmem:[%s1 + $0x70] sm:$0xf]
    %v60 = vld [vmem:[%s1 + $0x74] sm:$0xf]
    %v61 = vld [vmem:[%s1 + $0x78] sm:$0xf]
    %v62 = vld [vmem:[%s1 + $0x7c] sm:$0xf]
    %v63 = vld [vmem:[%s1 + $0x80] sm:$0xf]
    %v64 = vld [vmem:[%s1 + $0x84] sm:$0xf]
    %v65 = vld [vmem:[%s1 + $0x88] sm:$0xf]
    %v66 = vld [vmem:[%s1 + $0x8c] sm:$0xf]
    %v67 = vld [vmem:[%s1 + $0x90] sm:$0xf]
    %v68 = vld [vmem:[%s1 + $0x94] sm:$0xf]
    %v69 = vld [vmem:[%s1 + $0x98] sm:$0xf]
    %v70 = vld [vmem:[%s1 + $0x9c] sm:$0xf]
    %v71 = vld [vmem:[%s1 + $0xa0] sm:$0xf]
    %v72 = vld [vmem:[%s1 + $0xa4] sm:$0xf]
    %v73 = vld [vmem:[%s1 + $0xa8] sm:$0xf]
    %v74 = vld [vmem:[%s1 + $0xac] sm:$0xf]
    %v75 = vld [vmem:[%s1 + $0xb0] sm:$0xf]
    %v76 = vld [vmem:[%s1 + $0xb4] sm:$0xf]
    %v77 = vld [vmem:[%s1 + $0xb8] sm:$0xf]
    %v78 = vld [vmem:[%s1 + $0xbc] sm:$0xf]
    %v79 = vld [vmem:[%s1 + $0xc0] sm:$0xf]
    %v80 = vld [vmem:[%s1 + $0xc4] sm:$0xf]
    %v81 = vld [vmem:[%s1 + $0xc8] sm:$0xf]
    %v82 = vld [vmem:[%s1 + $0xcc] sm:$0xf]
    %v83 = vld [vmem:[%s1 + $0xd0] sm:$0xf]
    %v84 = vld [vmem:[%s1 + $0xd4] sm:$0xf]
    %v85 = vld [vmem:[%s1 + $0xd8] sm:$0xf]
    %v86 = vld [vmem:[%s1 + $0xdc] sm:$0xf]
    %v87 = vld [vmem:[%s1 + $0xe0] sm:$0xf]
    %v88 = vld [vmem:[%s1 + $0xe4] sm:$0xf]
    %v89 = vld [vmem:[%s1 + $0xe8] sm:$0xf]
    %v90 = vld [vmem:[%s1 + $0xec] sm:$0xf]
    %v91 = vld [vmem:[%s1 + $0xf0] sm:$0xf]
    %v92 = vld [vmem:[%s1 + $0xf4] sm:$0xf]
    %v93 = vld [vmem:[%s1 + $0xf8] sm:$0xf]
    %v94 = vld [vmem:[%s1 + $0xfc] sm:$0xf]
    %v95 = vld [vmem:[%s1 + $0x100] sm:$0xf]
    %v96 = vld [vmem:[%s1 + $0x104] sm:$0xf]
    %v97 = vld [vmem:[%s1 + $0x108] sm:$0xf]
    %v98 = vld [vmem:[%s1 + $0x10c] sm:$0xf]
    %v99 = vld [vmem:[%s1 + $0x110] sm:$0xf]
    %v100 = vld [vmem:[%s1 + $0x114] sm:$0xf]
    %v101 = vld [vmem:[%s1 + $0x118] sm:$0xf]
    %v102 = vld [vmem:[%s1 + $0x11c] sm:$0xf]
    %v103 = vld [vmem:[%s1 + $0x120] sm:$0xf]
    %v104 = vld [vmem:[%s1 + $0x124] sm:$0xf]
    %v105 = vld [vmem:[%s1 + $0x128] sm:$0xf]
    %v106 = vld [vmem:[%s1 + $0x12c] sm:$0xf]
    %v107 = vld [vmem:[%s1 + $0x130] sm:$0xf]
    %v108 = vld [vmem:[%s1 + $0x134] sm:$0xf]
    %v109 = vld [vmem:[%s1 + $0x138] sm:$0xf]
    %v110 = vld [vmem:[%s1 + $0x13c] sm:$0xf]
    %v111 = vld [vmem:[%s1 + $0x140] sm:$0xf]
    %v112 = vld [vmem:[%s1 + $0x144] sm:$0xf]
    %v113 = vld [vmem:[%s1 + $0x148] sm:$0xf]
    %v114 = vld [vmem:[%s1 + $0x14c] sm:$0xf]
    %v115 = vld [vmem:[%s1 + $0x150] sm:$0xf]
    %v116 = vld [vmem:[%s1 + $0x154] sm:$0xf]
    %v117 = vld [vmem:[%s1 + $0x158] sm:$0xf]
    %v118 = vld [vmem:[%s1 + $0x15c] sm:$0xf]
    %v119 = vld [vmem:[%s1 + $0x160] sm:$0xf]
    %v120 = vld [vmem:[%s1 + $0x164] sm:$0xf]
    %v121 = vld [vmem:[%s1 + $0x168] sm:$0xf]
    %v122 = vld [vmem:[%s1 + $0x16c] sm:$0xf]
    %v123 = vld [vmem:[%s1 + $0x170] sm:$0xf]
    %v124 = vld [vmem:[%s1 + $0x174] sm:$0xf]
    %v125 = vld [vmem:[%s1 + $0x178] sm:$0xf]
    %v126 = vld [vmem:[%s1 + $0x17c] sm:$0xf]
    %v127 = vld [vmem:[%s1 + $0x180] sm:$0xf]
    %v128 = vld [vmem:[%s1 + $0x184] sm:$0xf]
    %v129 = vld [vmem:[%s1 + $0x188] sm:$0xf]
    %v130 = vld [vmem:[%s1 + $0x18c] sm:$0xf]
    %v131 = vld [vmem:[%s1 + $0x190] sm:$0xf]
    %v132 = vld [vmem:[%s1 + $0x194] sm:$0xf]
    %v133 = vld [vmem:[%s1 + $0x198] sm:$0xf]
    %v134 = vld [vmem:[%s1 + $0x19c] sm:$0xf]
    %v135 = vld [vmem:[%s1 + $0x1a0] sm:$0xf]
    %v136 = vld [vmem:[%s1 + $0x1a4] sm:$0xf]
    %v137 = vld [vmem:[%s1 + $0x1a8] sm:$0xf]
    %v138 = vld [vmem:[%s1 + $0x1ac] sm:$0xf]
    %v139 = vld [vmem:[%s1 + $0x1b0] sm:$0xf]
    %v140 = vld [vmem:[%s1 + $0x1b4] sm:$0xf]
    %v141 = vld [vmem:[%s1 + $0x1b8] sm:$0xf]
    %v142 = vld [vmem:[%s1 + $0x1bc] sm:$0xf]
    %v143 = vld [vmem:[%s1 + $0x1c0] sm:$0xf]
    %v144 = vld [vmem:[%s1 + $0x1c4] sm:$0xf]
    %v145 = vld [vmem:[%s1 + $0x1c8] sm:$0xf]
    %v146 = vld [vmem:[%s1 + $0x1cc] sm:$0xf]
    %v147 = vld [vmem:[%s1 + $0x1d0] sm:$0xf]
    %v148 = vld [vmem:[%s1 + $0x1d4] sm:$0xf]
    %v149 = vld [vmem:[%s1 + $0x1d8] sm:$0xf]
    %v150 = vld [vmem:[%s1 + $0x1dc] sm:$0xf]
    %v151 = vld [vmem:[%s1 + $0x1e0] sm:$0xf]
    %v152 = vld [vmem:[%s1 + $0x1e4] sm:$0xf]
    %v153 = vld [vmem:[%s1 + $0x1e8] sm:$0xf]
    %v154 = vld [vmem:[%s1 + $0x1ec] sm:$0xf]
    %v155 = vld [vmem:[%s1 + $0x1f0] sm:$0xf]
    %v156 = vld [vmem:[%s1 + $0x1f4] sm:$0xf]
    %v157 = vld [vmem:[%s1 + $0x1f8] sm:$0xf]
    %v158 = vld [vmem:[%s1 + $0x1fc] sm:$0xf]
    %v159 = vld [vmem:[%s1 + $0x200] sm:$0xf]
    %v160 = vld [vmem:[%s1 + $0x204] sm:$0xf]
    %v161 = vld [vmem:[%s1 + $0x208] sm:$0xf]
    %v162 = vld [vmem:[%s1 + $0x20c] sm:$0xf]
    %v163 = vld [vmem:[%s1 + $0x210] sm:$0xf]
    %v164 = vld [vmem:[%s1 + $0x214] sm:$0xf]
    %v165 = vld [vmem:[%s1 + $0x218] sm:$0xf]
    %v166 = vld [vmem:[%s1 + $0x21c] sm:$0xf]
    %v167 = vld [vmem:[%s1 + $0x220] sm:$0xf]
    %v168 = vld [vmem:[%s1 + $0x224] sm:$0xf]
    %v169 = vld [vmem:[%s1 + $0x228] sm:$0xf]
    %v170 = vld [vmem:[%s1 + $0x22c] sm:$0xf]
    %v171 = vld [vmem:[%s1 + $0x230] sm:$0xf]
    %v172 = vld [vmem:[%s1 + $0x234] sm:$0xf]
    %v173 = vld [vmem:[%s1 + $0x238] sm:$0xf]
    %v174 = vld [vmem:[%s1 + $0x23c] sm:$0xf]
    %v175 = vld [vmem:[%s1 + $0x240] sm:$0xf]
    %v176 = vld [vmem:[%s1 + $0x244] sm:$0xf]
    %v177 = vld [vmem:[%s1 + $0x248] sm:$0xf]
    %v178 = vld [vmem:[%s1 + $0x24c] sm:$0xf]
    %v179 = vld [vmem:[%s1 + $0x250] sm:$0xf]
    %v180 = vld [vmem:[%s1 + $0x254] sm:$0xf]
    %v181 = vld [vmem:[%s1 + $0x258] sm:$0xf]
    %v182 = vld [vmem:[%s1 + $0x25c] sm:$0xf]
    %v183 = vld [vmem:[%s1 + $0x260] sm:$0xf]
    %v184 = vld [vmem:[%s1 + $0x264] sm:$0xf]
    %v185 = vld [vmem:[%s1 + $0x268] sm:$0xf]
    %v186 = vld [vmem:[%s1 + $0x26c] sm:$0xf]
    %v187 = vld [vmem:[%s1 + $0x270] sm:$0xf]
    %v188 = vld [vmem:[%s1 + $0x274] sm:$0xf]
    %v189 = vld [vmem:[%s1 + $0x278] sm:$0xf]
    %v190 = vld [vmem:[%s1 + $0x27c] sm:$0xf]
    %v191 = vld [vmem:[%s1 + $0x280] sm:$0xf]
    %v192 = vld [vmem:[%s1 + $0x284] sm:$0xf]
    %v193 = vld [vmem:[%s1 + $0x288] sm:$0xf]
    %v194 = vld [vmem:[%s1 + $0x28c] sm:$0xf]
    %v195 = vld [vmem:[%s1 + $0x290] sm:$0xf]
    %v196 = vld [vmem:[%s1 + $0x294] sm:$0xf]
    %v197 = vld [vmem:[%s1 + $0x298] sm:$0xf]
    %v198 = vld [vmem:[%s1 + $0x29c] sm:$0xf]
    %v199 = vld [vmem:[%s1 + $0x2a0] sm:$0xf]
    %v200 = vld [vmem:[%s1 + $0x2a4] sm:$0xf]
    %v201 = vld [vmem:[%s1 + $0x2a8] sm:$0xf]
    %v202 = vld [vmem:[%s1 + $0x2ac] sm:$0xf]
    %v203 = vld [vmem:[%s1 + $0x2b0] sm:$0xf]
    %v204 = vld [vmem:[%s1 + $0x2b4] sm:$0xf]
    %v205 = vld [vmem:[%s1 + $0x2b8] sm:$0xf]
    %v206 = vld [vmem:[%s1 + $0x2bc] sm:$0xf]
    %v207 = vld [vmem:[%s1 + $0x2c0] sm:$0xf]
    %v208 = vld [vmem:[%s1 + $0x2c4] sm:$0xf]
    %v209 = vld [vmem:[%s1 + $0x2c8] sm:$0xf]
    %v210 = vld [vmem:[%s1 + $0x2cc] sm:$0xf]
    %v211 = vld [vmem:[%s1 + $0x2d0] sm:$0xf]
    %v212 = vld [vmem:[%s1 + $0x2d4] sm:$0xf]
    %v213 = vld [vmem:[%s1 + $0x2d8] sm:$0xf]
    %v214 = vld [vmem:[%s1 + $0x2dc] sm:$0xf]
    %v215 = vld [vmem:[%s1 + $0x2e0] sm:$0xf]
    %v216 = vld [vmem:[%s1 + $0x2e4] sm:$0xf]
    %v217 = vld [vmem:[%s1 + $0x2e8] sm:$0xf]
    %v218 = vld [vmem:[%s1 + $0x2ec] sm:$0xf]
    %v219 = vld [vmem:[%s1 + $0x2f0] sm:$0xf]
    %v220 = vld [vmem:[%s1 + $0x2f4] sm:$0xf]
    %v221 = vld [vmem:[%s1 + $0x2f8] sm:$0xf]
    %v222 = vld [vmem:[%s1 + $0x2fc] sm:$0xf]
    %v223 = vld [vmem:[%s1 + $0x300] sm:$0xf]
    %v224 = vld [vmem:[%s1 + $0x304] sm:$0xf]
    %v225 = vld [vmem:[%s1 + $0x308] sm:$0xf]
    %v226 = vld [vmem:[%s1 + $0x30c] sm:$0xf]
    %v227 = vld [vmem:[%s1 + $0x310] sm:$0xf]
    %v228 = vld [vmem:[%s1 + $0x314] sm:$0xf]
    %v229 = vld [vmem:[%s1 + $0x318] sm:$0xf]
    %v230 = vld [vmem:[%s1 + $0x31c] sm:$0xf]
    %v231 = vld [vmem:[%s1 + $0x320] sm:$0xf]
    %v232 = vld [vmem:[%s1 + $0x324] sm:$0xf]
    %v233 = vld [vmem:[%s1 + $0x328] sm:$0xf]
    %v234 = vld [vmem:[%s1 + $0x32c] sm:$0xf]
    %v235 = vld [vmem:[%s1 + $0x330] sm:$0xf]
    %v236 = vld [vmem:[%s1 + $0x334] sm:$0xf]
    %v237 = vld [vmem:[%s1 + $0x338] sm:$0xf]
    %v238 = vld [vmem:[%s1 + $0x33c] sm:$0xf]
    %v239 = vld [vmem:[%s1 + $0x340] sm:$0xf]
    %v240 = vld [vmem:[%s1 + $0x344] sm:$0xf]
    %v241 = vld [vmem:[%s1 + $0x348] sm:$0xf]
    %v242 = vld [vmem:[%s1 + $0x34c] sm:$0xf]
    %v243 = vld [vmem:[%s1 + $0x350] sm:$0xf]
    %v244 = vld [vmem:[%s1 + $0x354] sm:$0xf]
    %v245 = vld [vmem:[%s1 + $0x358] sm:$0xf]
    %v246 = vld [vmem:[%s1 + $0x35c] sm:$0xf]
    %v247 = vld [vmem:[%s1 + $0x360] sm:$0xf]
    %v248 = vld [vmem:[%s1 + $0x364] sm:$0xf]
    %v249 = vld [vmem:[%s1 + $0x368] sm:$0xf]
    %v250 = vld [vmem:[%s1 + $0x36c] sm:$0xf]
    %v251 = vld [vmem:[%s1 + $0x370] sm:$0xf]
    %v252 = vld [vmem:[%s1 + $0x374] sm:$0xf]
    %v253 = vld [vmem:[%s1 + $0x378] sm:$0xf]
    %v254 = vld [vmem:[%s1 + $0x37c] sm:$0xf]
    %v255 = vld [vmem:[%s1 + $0x380] sm:$0xf]
    %v256 = vld [vmem:[%s1 + $0x384] sm:$0xf]
    %v257 = vld [vmem:[%s1 + $0x388] sm:$0xf]
    %v258 = vld [vmem:[%s1 + $0x38c] sm:$0xf]
    %v259 = vld [vmem:[%s1 + $0x390] sm:$0xf]
    %v260 = vld [vmem:[%s1 + $0x394] sm:$0xf]
    %v261 = vld [vmem:[%s1 + $0x398] sm:$0xf]
    %v262 = vld [vmem:[%s1 + $0x39c] sm:$0xf]
    %v263 = vld [vmem:[%s1 + $0x3a0] sm:$0xf]
    %v264 = vld [vmem:[%s1 + $0x3a4] sm:$0xf]
    %v265 = vld [vmem:[%s1 + $0x3a8] sm:$0xf]
    %v266 = vld [vmem:[%s1 + $0x3ac] sm:$0xf]
    %v267 = vld [vmem:[%s1 + $0x3b0] sm:$0xf]
    %v268 = vld [vmem:[%s1 + $0x3b4] sm:$0xf]
    %v269 = vld [vmem:[%s1 + $0x3b8] sm:$0xf]
    %v270 = vld [vmem:[%s1 + $0x3bc] sm:$0xf]
    %v271 = vld [vmem:[%s1 + $0x3c0] sm:$0xf]
    %v272 = vld [vmem:[%s1 + $0x3c4] sm:$0xf]
    %v273 = vld [vmem:[%s1 + $0x3c8] sm:$0xf]
    %v274 = vld [vmem:[%s1 + $0x3cc] sm:$0xf]
    %v275 = vld [vmem:[%s1 + $0x3d0] sm:$0xf]
    %v276 = vld [vmem:[%s1 + $0x3d4] sm:$0xf]
    %v277 = vld [vmem:[%s1 + $0x3d8] sm:$0xf]
    %v278 = vld [vmem:[%s1 + $0x3dc] sm:$0xf]
    %v279 = vld [vmem:[%s1 + $0x3e0] sm:$0xf]
    %v280 = vld [vmem:[%s1 + $0x3e4] sm:$0xf]
    %v281 = vld [vmem:[%s1 + $0x3e8] sm:$0xf]
    %v282 = vld [vmem:[%s1 + $0x3ec] sm:$0xf]
    %v283 = vld [vmem:[%s1 + $0x3f0] sm:$0xf]
    %v284 = vld [vmem:[%s1 + $0x3f4] sm:$0xf]
    %v285 = vld [vmem:[%s1 + $0x3f8] sm:$0xf]
    %v286 = vld [vmem:[%s1 + $0x3fc] sm:$0xf]
    %v287 = vld [vmem:[%s1 + $0x400] sm:$0xf]
    %v288 = vld [vmem:[%s1 + $0x404] sm:$0xf]
    %v289 = vld [vmem:[%s1 + $0x408] sm:$0xf]
    %v290 = vld [vmem:[%s1 + $0x40c] sm:$0xf]
    %v291 = vld [vmem:[%s1 + $0x410] sm:$0xf]
    %v292 = vld [vmem:[%s1 + $0x414] sm:$0xf]
    %v293 = vld [vmem:[%s1 + $0x418] sm:$0xf]
    %v294 = vld [vmem:[%s1 + $0x41c] sm:$0xf]
    %v295 = vld [vmem:[%s1 + $0x420] sm:$0xf]
    %v296 = vld [vmem:[%s1 + $0x424] sm:$0xf]
    %v297 = vld [vmem:[%s1 + $0x428] sm:$0xf]
    %v298 = vld [vmem:[%s1 + $0x42c] sm:$0xf]
    %v299 = vld [vmem:[%s1 + $0x430] sm:$0xf]
    %v300 = vld [vmem:[%s1 + $0x434] sm:$0xf]
    %v301 = vld [vmem:[%s1 + $0x438] sm:$0xf]
    %v302 = vld [vmem:[%s1 + $0x43c] sm:$0xf]
    %v303 = vld [vmem:[%s1 + $0x440] sm:$0xf]
    %v304 = vld [vmem:[%s1 + $0x444] sm:$0xf]
    %v305 = vld [vmem:[%s1 + $0x448] sm:$0xf]
    %v306 = vld [vmem:[%s1 + $0x44c] sm:$0xf]
    %v307 = vld [vmem:[%s1 + $0x450] sm:$0xf]
    %v308 = vld [vmem:[%s1 + $0x454] sm:$0xf]
    %v309 = vld [vmem:[%s1 + $0x458] sm:$0xf]
    %v310 = vld [vmem:[%s1 + $0x45c] sm:$0xf]
    %v311 = vld [vmem:[%s1 + $0x460] sm:$0xf]
    %v312 = vld [vmem:[%s1 + $0x464] sm:$0xf]
    %v313 = vld [vmem:[%s1 + $0x468] sm:$0xf]
    %v314 = vld [vmem:[%s1 + $0x46c] sm:$0xf]
    %v315 = vld [vmem:[%s1 + $0x470] sm:$0xf]
    %v316 = vld [vmem:[%s1 + $0x474] sm:$0xf]
    %v317 = vld [vmem:[%s1 + $0x478] sm:$0xf]
    %v318 = vld [vmem:[%s1 + $0x47c] sm:$0xf]
    %v319 = vld [vmem:[%s1 + $0x480] sm:$0xf]
    %v320 = vld [vmem:[%s1 + $0x484] sm:$0xf]
    %v321 = vld [vmem:[%s1 + $0x488] sm:$0xf]
    %v322 = vld [vmem:[%s1 + $0x48c] sm:$0xf]
    %v323 = vld [vmem:[%s1 + $0x490] sm:$0xf]
    %v324 = vld [vmem:[%s1 + $0x494] sm:$0xf]
    %v325 = vld [vmem:[%s1 + $0x498] sm:$0xf]
    %v326 = vld [vmem:[%s1 + $0x49c] sm:$0xf]
    %v327 = vld [vmem:[%s1 + $0x4a0] sm:$0xf]
    %v328 = vld [vmem:[%s1 + $0x4a4] sm:$0xf]
    %v329 = vld [vmem:[%s1 + $0x4a8] sm:$0xf]
    %v330 = vld [vmem:[%s1 + $0x4ac] sm:$0xf]
    %v331 = vld [vmem:[%s1 + $0x4b0] sm:$0xf]
    %v332 = vld [vmem:[%s1 + $0x4b4] sm:$0xf]
    %v333 = vld [vmem:[%s1 + $0x4b8] sm:$0xf]
    %v334 = vld [vmem:[%s1 + $0x4bc] sm:$0xf]
    %v335 = vld [vmem:[%s1 + $0x4c0] sm:$0xf]
    %v336 = vld [vmem:[%s1 + $0x4c4] sm:$0xf]
    %v337 = vld [vmem:[%s1 + $0x4c8] sm:$0xf]
    %v338 = vld [vmem:[%s1 + $0x4cc] sm:$0xf]
    %v339 = vld [vmem:[%s1 + $0x4d0] sm:$0xf]
    %v340 = vld [vmem:[%s1 + $0x4d4] sm:$0xf]
    %v341 = vld [vmem:[%s1 + $0x4d8] sm:$0xf]
    %v342 = vld [vmem:[%s1 + $0x4dc] sm:$0xf]
    %v343 = vld [vmem:[%s1 + $0x4e0] sm:$0xf]
    %v344 = vld [vmem:[%s1 + $0x4e4] sm:$0xf]
    %v345 = vld [vmem:[%s1 + $0x4e8] sm:$0xf]
    %v346 = vld [vmem:[%s1 + $0x4ec] sm:$0xf]
    %v347 = vld [vmem:[%s1 + $0x4f0] sm:$0xf]
    %v348 = vld [vmem:[%s1 + $0x4f4] sm:$0xf]
    %v349 = vld [vmem:[%s1 + $0x4f8] sm:$0xf]
    %v350 = vld [vmem:[%s1 + $0x4fc] sm:$0xf]
    %v351 = vld [vmem:[%s1 + $0x500] sm:$0xf]
    %v352 = vld [vmem:[%s1 + $0x504] sm:$0xf]
    %v353 = vld [vmem:[%s1 + $0x508] sm:$0xf]
    %v354 = vld [vmem:[%s1 + $0x50c] sm:$0xf]
    %v355 = vld [vmem:[%s1 + $0x510] sm:$0xf]
    %v356 = vld [vmem:[%s1 + $0x514] sm:$0xf]
    %v357 = vld [vmem:[%s1 + $0x518] sm:$0xf]
    %v358 = vld [vmem:[%s1 + $0x51c] sm:$0xf]
    %v359 = vld [vmem:[%s1 + $0x520] sm:$0xf]
    %v360 = vld [vmem:[%s1 + $0x524] sm:$0xf]
    %v361 = vld [vmem:[%s1 + $0x528] sm:$0xf]
    %v362 = vld [vmem:[%s1 + $0x52c] sm:$0xf]
    %v363 = vld [vmem:[%s1 + $0x530] sm:$0xf]
    %v364 = vld [vmem:[%s1 + $0x534] sm:$0xf]
    %v365 = vld [vmem:[%s1 + $0x538] sm:$0xf]
    %v366 = vld [vmem:[%s1 + $0x53c] sm:$0xf]
    %v367 = vld [vmem:[%s1 + $0x540] sm:$0xf]
    %v368 = vld [vmem:[%s1 + $0x544] sm:$0xf]
    %v369 = vld [vmem:[%s1 + $0x548] sm:$0xf]
    %v370 = vld [vmem:[%s1 + $0x54c] sm:$0xf]
    %v371 = vld [vmem:[%s1 + $0x550] sm:$0xf]
    %v372 = vld [vmem:[%s1 + $0x554] sm:$0xf]
    %v373 = vld [vmem:[%s1 + $0x558] sm:$0xf]
    %v374 = vld [vmem:[%s1 + $0x55c] sm:$0xf]
    %v375 = vld [vmem:[%s1 + $0x560] sm:$0xf]
    %v376 = vld [vmem:[%s1 + $0x564] sm:$0xf]
    %v377 = vld [vmem:[%s1 + $0x568] sm:$0xf]
    %v378 = vld [vmem:[%s1 + $0x56c] sm:$0xf]
    %v379 = vld [vmem:[%s1 + $0x570] sm:$0xf]
    %v380 = vld [vmem:[%s1 + $0x574] sm:$0xf]
    %v381 = vld [vmem:[%s1 + $0x578] sm:$0xf]
    %v382 = vld [vmem:[%s1 + $0x57c] sm:$0xf]
    %v383 = vld [vmem:[%s1 + $0x580] sm:$0xf]
    %v384 = vld [vmem:[%s1 + $0x584] sm:$0xf]
    %v385 = vld [vmem:[%s1 + $0x588] sm:$0xf]
    %v386 = vld [vmem:[%s1 + $0x58c] sm:$0xf]
    %v387 = vld [vmem:[%s1 + $0x590] sm:$0xf]
    %v388 = vld [vmem:[%s1 + $0x594] sm:$0xf]
    %v389 = vld [vmem:[%s1 + $0x598] sm:$0xf]
    %v390 = vld [vmem:[%s1 + $0x59c] sm:$0xf]
    %v391 = vld [vmem:[%s1 + $0x5a0] sm:$0xf]
    %v392 = vld [vmem:[%s1 + $0x5a4] sm:$0xf]
    %v393 = vld [vmem:[%s1 + $0x5a8] sm:$0xf]
    %v394 = vld [vmem:[%s1 + $0x5ac] sm:$0xf]
    %v395 = vld [vmem:[%s1 + $0x5b0] sm:$0xf]
    %v396 = vld [vmem:[%s1 + $0x5b4] sm:$0xf]
    %v397 = vld [vmem:[%s1 + $0x5b8] sm:$0xf]
    %v398 = vld [vmem:[%s1 + $0x5bc] sm:$0xf]
    %v399 = vld [vmem:[%s1 + $0x5c0] sm:$0xf]
    %v400 = vld [vmem:[%s1 + $0x5c4] sm:$0xf]
    %v401 = vld [vmem:[%s1 + $0x5c8] sm:$0xf]
    %v402 = vld [vmem:[%s1 + $0x5cc] sm:$0xf]
    %v403 = vld [vmem:[%s1 + $0x5d0] sm:$0xf]
    %v404 = vld [vmem:[%s1 + $0x5d4] sm:$0xf]
    %v405 = vld [vmem:[%s1 + $0x5d8] sm:$0xf]
    %v406 = vld [vmem:[%s1 + $0x5dc] sm:$0xf]
    %v407 = vld [vmem:[%s1 + $0x5e0] sm:$0xf]
    %v408 = vld [vmem:[%s1 + $0x5e4] sm:$0xf]
    %v409 = vld [vmem:[%s1 + $0x5e8] sm:$0xf]
    %v410 = vld [vmem:[%s1 + $0x5ec] sm:$0xf]
    %v411 = vld [vmem:[%s1 + $0x5f0] sm:$0xf]
    %v412 = vld [vmem:[%s1 + $0x5f4] sm:$0xf]
    %v413 = vld [vmem:[%s1 + $0x5f8] sm:$0xf]
    %v414 = vld [vmem:[%s1 + $0x5fc] sm:$0xf]
    %v415 = vld [vmem:[%s1 + $0x600] sm:$0xf]
    %v416 = vld [vmem:[%s1 + $0x604] sm:$0xf]
    %v417 = vld [vmem:[%s1 + $0x608] sm:$0xf]
    %v418 = vld [vmem:[%s1 + $0x60c] sm:$0xf]
    %v419 = vld [vmem:[%s1 + $0x610] sm:$0xf]
    %v420 = vld [vmem:[%s1 + $0x614] sm:$0xf]
    %v421 = vld [vmem:[%s1 + $0x618] sm:$0xf]
    %v422 = vld [vmem:[%s1 + $0x61c] sm:$0xf]
    %v423 = vld [vmem:[%s1 + $0x620] sm:$0xf]
    %v424 = vld [vmem:[%s1 + $0x624] sm:$0xf]
    %v425 = vld [vmem:[%s1 + $0x628] sm:$0xf]
    %v426 = vld [vmem:[%s1 + $0x62c] sm:$0xf]
    %v427 = vld [vmem:[%s1 + $0x630] sm:$0xf]
    %v428 = vld [vmem:[%s1 + $0x634] sm:$0xf]
    %v429 = vld [vmem:[%s1 + $0x638] sm:$0xf]
    %v430 = vld [vmem:[%s1 + $0x63c] sm:$0xf]
    %v431 = vld [vmem:[%s1 + $0x640] sm:$0xf]
    %v432 = vld [vmem:[%s1 + $0x644] sm:$0xf]
    %v433 = vld [vmem:[%s1 + $0x648] sm:$0xf]
    %v434 = vld [vmem:[%s1 + $0x64c] sm:$0xf]
    %v435 = vld [vmem:[%s1 + $0x650] sm:$0xf]
    %v436 = vld [vmem:[%s1 + $0x654] sm:$0xf]
    %v437 = vld [vmem:[%s1 + $0x658] sm:$0xf]
    %v438 = vld [vmem:[%s1 + $0x65c] sm:$0xf]
    %v439 = vld [vmem:[%s1 + $0x660] sm:$0xf]
    %v440 = vld [vmem:[%s1 + $0x664] sm:$0xf]
    %v441 = vld [vmem:[%s1 + $0x668] sm:$0xf]
    %v442 = vld [vmem:[%s1 + $0x66c] sm:$0xf]
    %v443 = vld [vmem:[%s1 + $0x670] sm:$0xf]
    %v444 = vld [vmem:[%s1 + $0x674] sm:$0xf]
    %v445 = vld [vmem:[%s1 + $0x678] sm:$0xf]
    %v446 = vld [vmem:[%s1 + $0x67c] sm:$0xf]
    %v447 = vld [vmem:[%s1 + $0x680] sm:$0xf]
    %v448 = vld [vmem:[%s1 + $0x684] sm:$0xf]
    %v449 = vld [vmem:[%s1 + $0x688] sm:$0xf]
    %v450 = vld [vmem:[%s1 + $0x68c] sm:$0xf]
    %v451 = vld [vmem:[%s1 + $0x690] sm:$0xf]
    %v452 = vld [vmem:[%s1 + $0x694] sm:$0xf]
    %v453 = vld [vmem:[%s1 + $0x698] sm:$0xf]
    %v454 = vld [vmem:[%s1 + $0x69c] sm:$0xf]
    %v455 = vld [vmem:[%s1 + $0x6a0] sm:$0xf]
    %v456 = vld [vmem:[%s1 + $0x6a4] sm:$0xf]
    %v457 = vld [vmem:[%s1 + $0x6a8] sm:$0xf]
    %v458 = vld [vmem:[%s1 + $0x6ac] sm:$0xf]
    %v459 = vld [vmem:[%s1 + $0x6b0] sm:$0xf]
    %v460 = vld [vmem:[%s1 + $0x6b4] sm:$0xf]
    %v461 = vld [vmem:[%s1 + $0x6b8] sm:$0xf]
    %v462 = vld [vmem:[%s1 + $0x6bc] sm:$0xf]
    %v463 = vld [vmem:[%s1 + $0x6c0] sm:$0xf]
    %v464 = vld [vmem:[%s1 + $0x6c4] sm:$0xf]
    %v465 = vld [vmem:[%s1 + $0x6c8] sm:$0xf]
    %v466 = vld [vmem:[%s1 + $0x6cc] sm:$0xf]
    %v467 = vld [vmem:[%s1 + $0x6d0] sm:$0xf]
    %v468 = vld [vmem:[%s1 + $0x6d4] sm:$0xf]
    %v469 = vld [vmem:[%s1 + $0x6d8] sm:$0xf]
    %v470 = vld [vmem:[%s1 + $0x6dc] sm:$0xf]
    %v471 = vld [vmem:[%s1 + $0x6e0] sm:$0xf]
    %v472 = vld [vmem:[%s1 + $0x6e4] sm:$0xf]
    %v473 = vld [vmem:[%s1 + $0x6e8] sm:$0xf]
    %v474 = vld [vmem:[%s1 + $0x6ec] sm:$0xf]
    %v475 = vld [vmem:[%s1 + $0x6f0] sm:$0xf]
    %v476 = vld [vmem:[%s1 + $0x6f4] sm:$0xf]
    %v477 = vld [vmem:[%s1 + $0x6f8] sm:$0xf]
    %v478 = vld [vmem:[%s1 + $0x6fc] sm:$0xf]
    %v479 = vld [vmem:[%s1 + $0x700] sm:$0xf]
    %v480 = vld [vmem:[%s1 + $0x704] sm:$0xf]
    %v481 = vld [vmem:[%s1 + $0x708] sm:$0xf]
    %v482 = vld [vmem:[%s1 + $0x70c] sm:$0xf]
    %v483 = vld [vmem:[%s1 + $0x710] sm:$0xf]
    %v484 = vld [vmem:[%s1 + $0x714] sm:$0xf]
    %v485 = vld [vmem:[%s1 + $0x718] sm:$0xf]
    %v486 = vld [vmem:[%s1 + $0x71c] sm:$0xf]
    %v487 = vld [vmem:[%s1 + $0x720] sm:$0xf]
    %v488 = vld [vmem:[%s1 + $0x724] sm:$0xf]
    %v489 = vld [vmem:[%s1 + $0x728] sm:$0xf]
    %v490 = vld [vmem:[%s1 + $0x72c] sm:$0xf]
    %v491 = vld [vmem:[%s1 + $0x730] sm:$0xf]
    %v492 = vld [vmem:[%s1 + $0x734] sm:$0xf]
    %v493 = vld [vmem:[%s1 + $0x738] sm:$0xf]
    %v494 = vld [vmem:[%s1 + $0x73c] sm:$0xf]
    %v495 = vld [vmem:[%s1 + $0x740] sm:$0xf]
    %v496 = vld [vmem:[%s1 + $0x744] sm:$0xf]
    %v497 = vld [vmem:[%s1 + $0x748] sm:$0xf]
    %v498 = vld [vmem:[%s1 + $0x74c] sm:$0xf]
    %v499 = vld [vmem:[%s1 + $0x750] sm:$0xf]
    %v500 = vld [vmem:[%s1 + $0x754] sm:$0xf]
    %v501 = vld [vmem:[%s1 + $0x758] sm:$0xf]
    %v502 = vld [vmem:[%s1 + $0x75c] sm:$0xf]
    %v503 = vld [vmem:[%s1 + $0x760] sm:$0xf]
    %v504 = vld [vmem:[%s1 + $0x764] sm:$0xf]
    %v505 = vld [vmem:[%s1 + $0x768] sm:$0xf]
    %v506 = vld [vmem:[%s1 + $0x76c] sm:$0xf]
    %v507 = vld [vmem:[%s1 + $0x770] sm:$0xf]
    %v508 = vld [vmem:[%s1 + $0x774] sm:$0xf]
    %v509 = vld [vmem:[%s1 + $0x778] sm:$0xf]
    %v510 = vld [vmem:[%s1 + $0x77c] sm:$0xf]
    %v511 = vld [vmem:[%s1 + $0x780] sm:$0xf]
    %v512 = vld [vmem:[%s1 + $0x784] sm:$0xf]
    %v513 = vld [vmem:[%s1 + $0x788] sm:$0xf]
    %v514 = vld [vmem:[%s1 + $0x78c] sm:$0xf]
    %v515 = vld [vmem:[%s1 + $0x790] sm:$0xf]
    %v516 = vld [vmem:[%s1 + $0x794] sm:$0xf]
    %v517 = vld [vmem:[%s1 + $0x798] sm:$0xf]
    %v518 = vld [vmem:[%s1 + $0x79c] sm:$0xf]
    %v519 = vld [vmem:[%s1 + $0x7a0] sm:$0xf]
    %v520 = vld [vmem:[%s1 + $0x7a4] sm:$0xf]
    %v521 = vld [vmem:[%s1 + $0x7a8] sm:$0xf]
    %v522 = vld [vmem:[%s1 + $0x7ac] sm:$0xf]
    %v523 = vld [vmem:[%s1 + $0x7b0] sm:$0xf]
    %v524 = vld [vmem:[%s1 + $0x7b4] sm:$0xf]
    %v525 = vld [vmem:[%s1 + $0x7b8] sm:$0xf]
    %v526 = vld [vmem:[%s1 + $0x7bc] sm:$0xf]
    %v527 = vld [vmem:[%s1 + $0x7c0] sm:$0xf]
    %v528 = vld [vmem:[%s1 + $0x7c4] sm:$0xf]
    %v529 = vld [vmem:[%s1 + $0x7c8] sm:$0xf]
    %v530 = vld [vmem:[%s1 + $0x7cc] sm:$0xf]
    %v531 = vld [vmem:[%s1 + $0x7d0] sm:$0xf]
    %v532 = vld [vmem:[%s1 + $0x7d4] sm:$0xf]
    %v533 = vld [vmem:[%s1 + $0x7d8] sm:$0xf]
    %v534 = vld [vmem:[%s1 + $0x7dc] sm:$0xf]
    %v535 = vld [vmem:[%s1 + $0x7e0] sm:$0xf]
    %v536 = vld [vmem:[%s1 + $0x7e4] sm:$0xf]
    %v537 = vld [vmem:[%s1 + $0x7e8] sm:$0xf]
    %v538 = vld [vmem:[%s1 + $0x7ec] sm:$0xf]
    %v539 = vld [vmem:[%s1 + $0x7f0] sm:$0xf]
    %v540 = vld [vmem:[%s1 + $0x7f4] sm:$0xf]
    %v541 = vld [vmem:[%s1 + $0x7f8] sm:$0xf]
    %v542 = vld [vmem:[%s1 + $0x7fc] sm:$0xf]
    %v543 = vld [vmem:[%s1 + $0x800] sm:$0xf]
    %v544 = vld [vmem:[%s1 + $0x804] sm:$0xf]
    %v545 = vld [vmem:[%s1 + $0x808] sm:$0xf]
    %v546 = vld [vmem:[%s1 + $0x80c] sm:$0xf]
    %v547 = vld [vmem:[%s1 + $0x810] sm:$0xf]
    %v548 = vld [vmem:[%s1 + $0x814] sm:$0xf]
    %v549 = vld [vmem:[%s1 + $0x818] sm:$0xf]
    %v550 = vld [vmem:[%s1 + $0x81c] sm:$0xf]
    %v551 = vld [vmem:[%s1 + $0x820] sm:$0xf]
    %v552 = vld [vmem:[%s1 + $0x824] sm:$0xf]
    %v553 = vld [vmem:[%s1 + $0x828] sm:$0xf]
    %v554 = vld [vmem:[%s1 + $0x82c] sm:$0xf]
    %v555 = vld [vmem:[%s1 + $0x830] sm:$0xf]
    %v556 = vld [vmem:[%s1 + $0x834] sm:$0xf]
    %v557 = vld [vmem:[%s1 + $0x838] sm:$0xf]
    %v558 = vld [vmem:[%s1 + $0x83c] sm:$0xf]
    %v559 = vld [vmem:[%s1 + $0x840] sm:$0xf]
    %v560 = vld [vmem:[%s1 + $0x844] sm:$0xf]
    %v561 = vld [vmem:[%s1 + $0x848] sm:$0xf]
    %v562 = vld [vmem:[%s1 + $0x84c] sm:$0xf]
    %v563 = vld [vmem:[%s1 + $0x850] sm:$0xf]
    %v564 = vld [vmem:[%s1 + $0x854] sm:$0xf]
    %v565 = vld [vmem:[%s1 + $0x858] sm:$0xf]
    %v566 = vld [vmem:[%s1 + $0x85c] sm:$0xf]
    %v567 = vld [vmem:[%s1 + $0x860] sm:$0xf]
    %v568 = vld [vmem:[%s1 + $0x864] sm:$0xf]
    %v569 = vld [vmem:[%s1 + $0x868] sm:$0xf]
    %v570 = vld [vmem:[%s1 + $0x86c] sm:$0xf]
    %v571 = vld [vmem:[%s1 + $0x870] sm:$0xf]
    %v572 = vld [vmem:[%s1 + $0x874] sm:$0xf]
    %v573 = vld [vmem:[%s1 + $0x878] sm:$0xf]
    %v574 = vld [vmem:[%s1 + $0x87c] sm:$0xf]
    %v575 = vld [vmem:[%s1 + $0x880] sm:$0xf]
    %v576 = vld [vmem:[%s1 + $0x884] sm:$0xf]
    %v577 = vld [vmem:[%s1 + $0x888] sm:$0xf]
    %v578 = vld [vmem:[%s1 + $0x88c] sm:$0xf]
    %v579 = vld [vmem:[%s1 + $0x890] sm:$0xf]
    %v580 = vld [vmem:[%s1 + $0x894] sm:$0xf]
    %v581 = vld [vmem:[%s1 + $0x898] sm:$0xf]
    %v582 = vld [vmem:[%s1 + $0x89c] sm:$0xf]
    %v583 = vld [vmem:[%s1 + $0x8a0] sm:$0xf]
    %v584 = vld [vmem:[%s1 + $0x8a4] sm:$0xf]
    %v585 = vld [vmem:[%s1 + $0x8a8] sm:$0xf]
    %v586 = vld [vmem:[%s1 + $0x8ac] sm:$0xf]
    %v587 = vld [vmem:[%s1 + $0x8b0] sm:$0xf]
    %v588 = vld [vmem:[%s1 + $0x8b4] sm:$0xf]
    %v589 = vld [vmem:[%s1 + $0x8b8] sm:$0xf]
    %v590 = vld [vmem:[%s1 + $0x8bc] sm:$0xf]
    %v591 = vld [vmem:[%s1 + $0x8c0] sm:$0xf]
    %v592 = vld [vmem:[%s1 + $0x8c4] sm:$0xf]
    %v593 = vld [vmem:[%s1 + $0x8c8] sm:$0xf]
    %v594 = vld [vmem:[%s1 + $0x8cc] sm:$0xf]
    %v595 = vld [vmem:[%s1 + $0x8d0] sm:$0xf]
    %v596 = vld [vmem:[%s1 + $0x8d4] sm:$0xf]
    %v597 = vld [vmem:[%s1 + $0x8d8] sm:$0xf]
    %v598 = vld [vmem:[%s1 + $0x8dc] sm:$0xf]
    %v599 = vld [vmem:[%s1 + $0x8e0] sm:$0xf]
    %v600 = vld [vmem:[%s1 + $0x8e4] sm:$0xf]
    %v601 = vld [vmem:[%s1 + $0x8e8] sm:$0xf]
    %v602 = vld [vmem:[%s1 + $0x8ec] sm:$0xf]
    %v603 = vld [vmem:[%s1 + $0x8f0] sm:$0xf]
    %v604 = vld [vmem:[%s1 + $0x8f4] sm:$0xf]
    %v605 = vld [vmem:[%s1 + $0x8f8] sm:$0xf]
    %v606 = vld [vmem:[%s1 + $0x8fc] sm:$0xf]
    %v607 = vld [vmem:[%s1 + $0x900] sm:$0xf]
    %v608 = vld [vmem:[%s1 + $0x904] sm:$0xf]
    %v609 = vld [vmem:[%s1 + $0x908] sm:$0xf]
    %v610 = vld [vmem:[%s1 + $0x90c] sm:$0xf]
    %v611 = vld [vmem:[%s1 + $0x910] sm:$0xf]
    %v612 = vld [vmem:[%s1 + $0x914] sm:$0xf]
    %v613 = vld [vmem:[%s1 + $0x918] sm:$0xf]
    %v614 = vld [vmem:[%s1 + $0x91c] sm:$0xf]
    %v615 = vld [vmem:[%s1 + $0x920] sm:$0xf]
    %v616 = vld [vmem:[%s1 + $0x924] sm:$0xf]
    %v617 = vld [vmem:[%s1 + $0x928] sm:$0xf]
    %v618 = vld [vmem:[%s1 + $0x92c] sm:$0xf]
    %v619 = vld [vmem:[%s1 + $0x930] sm:$0xf]
    %v620 = vld [vmem:[%s1 + $0x934] sm:$0xf]
    %v621 = vld [vmem:[%s1 + $0x938] sm:$0xf]
    %v622 = vld [vmem:[%s1 + $0x93c] sm:$0xf]
    %v623 = vld [vmem:[%s1 + $0x940] sm:$0xf]
    %v624 = vld [vmem:[%s1 + $0x944] sm:$0xf]
    %v625 = vld [vmem:[%s1 + $0x948] sm:$0xf]
    %v626 = vld [vmem:[%s1 + $0x94c] sm:$0xf]
    %v627 = vld [vmem:[%s1 + $0x950] sm:$0xf]
    %v628 = vld [vmem:[%s1 + $0x954] sm:$0xf]
    %v629 = vld [vmem:[%s1 + $0x958] sm:$0xf]
    %v630 = vld [vmem:[%s1 + $0x95c] sm:$0xf]
    %v631 = vld [vmem:[%s1 + $0x960] sm:$0xf]
    %v632 = vld [vmem:[%s1 + $0x964] sm:$0xf]
    %v633 = vld [vmem:[%s1 + $0x968] sm:$0xf]
    %v634 = vld [vmem:[%s1 + $0x96c] sm:$0xf]
    %v635 = vld [vmem:[%s1 + $0x970] sm:$0xf]
    %v636 = vld [vmem:[%s1 + $0x974] sm:$0xf]
    %v637 = vld [vmem:[%s1 + $0x978] sm:$0xf]
    %v638 = vld [vmem:[%s1 + $0x97c] sm:$0xf]
    %v639 = vld [vmem:[%s1 + $0x980] sm:$0xf]
    %v640 = vld [vmem:[%s1 + $0x984] sm:$0xf]
    %v641 = vld [vmem:[%s1 + $0x988] sm:$0xf]
    %v642 = vld [vmem:[%s1 + $0x98c] sm:$0xf]
    %v643 = vld [vmem:[%s1 + $0x990] sm:$0xf]
    %v644 = vld [vmem:[%s1 + $0x994] sm:$0xf]
    %v645 = vld [vmem:[%s1 + $0x998] sm:$0xf]
    %v646 = vld [vmem:[%s1 + $0x99c] sm:$0xf]
    %v647 = vld [vmem:[%s1 + $0x9a0] sm:$0xf]
    %v648 = vld [vmem:[%s1 + $0x9a4] sm:$0xf]
    %v649 = vld [vmem:[%s1 + $0x9a8] sm:$0xf]
    %v650 = vld [vmem:[%s1 + $0x9ac] sm:$0xf]
    %v651 = vld [vmem:[%s1 + $0x9b0] sm:$0xf]
    %v652 = vld [vmem:[%s1 + $0x9b4] sm:$0xf]
    %v653 = vld [vmem:[%s1 + $0x9b8] sm:$0xf]
    %v654 = vld [vmem:[%s1 + $0x9bc] sm:$0xf]
    %v655 = vld [vmem:[%s1 + $0x9c0] sm:$0xf]
    %v656 = vld [vmem:[%s1 + $0x9c4] sm:$0xf]
    %v657 = vld [vmem:[%s1 + $0x9c8] sm:$0xf]
    %v658 = vld [vmem:[%s1 + $0x9cc] sm:$0xf]
    %v659 = vld [vmem:[%s1 + $0x9d0] sm:$0xf]
    %v660 = vld [vmem:[%s1 + $0x9d4] sm:$0xf]
    %v661 = vld [vmem:[%s1 + $0x9d8] sm:$0xf]
    %v662 = vld [vmem:[%s1 + $0x9dc] sm:$0xf]
    %v663 = vld [vmem:[%s1 + $0x9e0] sm:$0xf]
    %v664 = vld [vmem:[%s1 + $0x9e4] sm:$0xf]
    %v665 = vld [vmem:[%s1 + $0x9e8] sm:$0xf]
    %v666 = vld [vmem:[%s1 + $0x9ec] sm:$0xf]
    %v667 = vld [vmem:[%s1 + $0x9f0] sm:$0xf]
    %v668 = vld [vmem:[%s1 + $0x9f4] sm:$0xf]
    %v669 = vld [vmem:[%s1 + $0x9f8] sm:$0xf]
    %v670 = vld [vmem:[%s1 + $0x9fc] sm:$0xf]
    %v671 = vld [vmem:[%s1 + $0xa00] sm:$0xf]
    %v672 = vld [vmem:[%s1 + $0xa04] sm:$0xf]
    %v673 = vld [vmem:[%s1 + $0xa08] sm:$0xf]
    %v674 = vld [vmem:[%s1 + $0xa0c] sm:$0xf]
    %v675 = vld [vmem:[%s1 + $0xa10] sm:$0xf]
    %v676 = vld [vmem:[%s1 + $0xa14] sm:$0xf]
    %v677 = vld [vmem:[%s1 + $0xa18] sm:$0xf]
    %v678 = vld [vmem:[%s1 + $0xa1c] sm:$0xf]
    %v679 = vld [vmem:[%s1 + $0xa20] sm:$0xf]
    %v680 = vld [vmem:[%s1 + $0xa24] sm:$0xf]
    %v681 = vld [vmem:[%s1 + $0xa28] sm:$0xf]
    %v682 = vld [vmem:[%s1 + $0xa2c] sm:$0xf]
    %v683 = vld [vmem:[%s1 + $0xa30] sm:$0xf]
    %v684 = vld [vmem:[%s1 + $0xa34] sm:$0xf]
    %v685 = vld [vmem:[%s1 + $0xa38] sm:$0xf]
    %v686 = vld [vmem:[%s1 + $0xa3c] sm:$0xf]
    %v687 = vld [vmem:[%s1 + $0xa40] sm:$0xf]
    %v688 = vld [vmem:[%s1 + $0xa44] sm:$0xf]
    %v689 = vld [vmem:[%s1 + $0xa48] sm:$0xf]
    %v690 = vld [vmem:[%s1 + $0xa4c] sm:$0xf]
    %v691 = vld [vmem:[%s1 + $0xa50] sm:$0xf]
    %v692 = vld [vmem:[%s1 + $0xa54] sm:$0xf]
    %v693 = vld [vmem:[%s1 + $0xa58] sm:$0xf]
    %v694 = vld [vmem:[%s1 + $0xa5c] sm:$0xf]
    %v695 = vld [vmem:[%s1 + $0xa60] sm:$0xf]
    %v696 = vld [vmem:[%s1 + $0xa64] sm:$0xf]
    %v697 = vld [vmem:[%s1 + $0xa68] sm:$0xf]
    %v698 = vld [vmem:[%s1 + $0xa6c] sm:$0xf]
    %v699 = vld [vmem:[%s1 + $0xa70] sm:$0xf]
    %v700 = vld [vmem:[%s1 + $0xa74] sm:$0xf]
    %v701 = vld [vmem:[%s1 + $0xa78] sm:$0xf]
    %v702 = vld [vmem:[%s1 + $0xa7c] sm:$0xf]
    %v703 = vld [vmem:[%s1 + $0xa80] sm:$0xf]
    %v704 = vld [vmem:[%s1 + $0xa84] sm:$0xf]
    %v705 = vld [vmem:[%s1 + $0xa88] sm:$0xf]
    %v706 = vld [vmem:[%s1 + $0xa8c] sm:$0xf]
    %v707 = vld [vmem:[%s1 + $0xa90] sm:$0xf]
    %v708 = vld [vmem:[%s1 + $0xa94] sm:$0xf]
    %v709 = vld [vmem:[%s1 + $0xa98] sm:$0xf]
    %v710 = vld [vmem:[%s1 + $0xa9c] sm:$0xf]
    %v711 = vld [vmem:[%s1 + $0xaa0] sm:$0xf]
    %v712 = vld [vmem:[%s1 + $0xaa4] sm:$0xf]
    %v713 = vld [vmem:[%s1 + $0xaa8] sm:$0xf]
    %v714 = vld [vmem:[%s1 + $0xaac] sm:$0xf]
    %v715 = vld [vmem:[%s1 + $0xab0] sm:$0xf]
    %v716 = vld [vmem:[%s1 + $0xab4] sm:$0xf]
    %v717 = vld [vmem:[%s1 + $0xab8] sm:$0xf]
    %v718 = vld [vmem:[%s1 + $0xabc] sm:$0xf]
    %v719 = vld [vmem:[%s1 + $0xac0] sm:$0xf]
    %v720 = vld [vmem:[%s1 + $0xac4] sm:$0xf]
    %v721 = vld [vmem:[%s1 + $0xac8] sm:$0xf]
    %v722 = vld [vmem:[%s1 + $0xacc] sm:$0xf]
    %v723 = vld [vmem:[%s1 + $0xad0] sm:$0xf]
    %v724 = vld [vmem:[%s1 + $0xad4] sm:$0xf]
    %v725 = vld [vmem:[%s1 + $0xad8] sm:$0xf]
    %v726 = vld [vmem:[%s1 + $0xadc] sm:$0xf]
    %v727 = vld [vmem:[%s1 + $0xae0] sm:$0xf]
    %v728 = vld [vmem:[%s1 + $0xae4] sm:$0xf]
    %v729 = vld [vmem:[%s1 + $0xae8] sm:$0xf]
    %v730 = vld [vmem:[%s1 + $0xaec] sm:$0xf]
    %v731 = vld [vmem:[%s1 + $0xaf0] sm:$0xf]
    %v732 = vld [vmem:[%s1 + $0xaf4] sm:$0xf]
    %v733 = vld [vmem:[%s1 + $0xaf8] sm:$0xf]
    %v734 = vld [vmem:[%s1 + $0xafc] sm:$0xf]
    %v735 = vld [vmem:[%s1 + $0xb00] sm:$0xf]
    %v736 = vld [vmem:[%s1 + $0xb04] sm:$0xf]
    %v737 = vld [vmem:[%s1 + $0xb08] sm:$0xf]
    %v738 = vld [vmem:[%s1 + $0xb0c] sm:$0xf]
    %v739 = vld [vmem:[%s1 + $0xb10] sm:$0xf]
    %v740 = vld [vmem:[%s1 + $0xb14] sm:$0xf]
    %v741 = vld [vmem:[%s1 + $0xb18] sm:$0xf]
    %v742 = vld [vmem:[%s1 + $0xb1c] sm:$0xf]
    %v743 = vld [vmem:[%s1 + $0xb20] sm:$0xf]
    %v744 = vld [vmem:[%s1 + $0xb24] sm:$0xf]
    %v745 = vld [vmem:[%s1 + $0xb28] sm:$0xf]
    %v746 = vld [vmem:[%s1 + $0xb2c] sm:$0xf]
    %v747 = vld [vmem:[%s1 + $0xb30] sm:$0xf]
    %v748 = vld [vmem:[%s1 + $0xb34] sm:$0xf]
    %v749 = vld [vmem:[%s1 + $0xb38] sm:$0xf]
    %v750 = vld [vmem:[%s1 + $0xb3c] sm:$0xf]
    %v751 = vld [vmem:[%s1 + $0xb40] sm:$0xf]
    %v752 = vld [vmem:[%s1 + $0xb44] sm:$0xf]
    %v753 = vld [vmem:[%s1 + $0xb48] sm:$0xf]
    %v754 = vld [vmem:[%s1 + $0xb4c] sm:$0xf]
    %v755 = vld [vmem:[%s1 + $0xb50] sm:$0xf]
    %v756 = vld [vmem:[%s1 + $0xb54] sm:$0xf]
    %v757 = vld [vmem:[%s1 + $0xb58] sm:$0xf]
    %v758 = vld [vmem:[%s1 + $0xb5c] sm:$0xf]
    %v759 = vld [vmem:[%s1 + $0xb60] sm:$0xf]
    %v760 = vld [vmem:[%s1 + $0xb64] sm:$0xf]
    %v761 = vld [vmem:[%s1 + $0xb68] sm:$0xf]
    %v762 = vld [vmem:[%s1 + $0xb6c] sm:$0xf]
    %v763 = vld [vmem:[%s1 + $0xb70] sm:$0xf]
    %v764 = vld [vmem:[%s1 + $0xb74] sm:$0xf]
    %v765 = vld [vmem:[%s1 + $0xb78] sm:$0xf]
    %v766 = vld [vmem:[%s1 + $0xb7c] sm:$0xf]
    %v767 = vld [vmem:[%s1 + $0xb80] sm:$0xf]
    %v768 = vld [vmem:[%s1 + $0xb84] sm:$0xf]
    %v769 = vld [vmem:[%s1 + $0xb88] sm:$0xf]
    %v770 = vld [vmem:[%s1 + $0xb8c] sm:$0xf]
    %v771 = vld [vmem:[%s1 + $0xb90] sm:$0xf]
    %v772 = vld [vmem:[%s1 + $0xb94] sm:$0xf]
    %v773 = vld [vmem:[%s1 + $0xb98] sm:$0xf]
    %v774 = vld [vmem:[%s1 + $0xb9c] sm:$0xf]
    %v775 = vld [vmem:[%s1 + $0xba0] sm:$0xf]
    %v776 = vld [vmem:[%s1 + $0xba4] sm:$0xf]
    %v777 = vld [vmem:[%s1 + $0xba8] sm:$0xf]
    %v778 = vld [vmem:[%s1 + $0xbac] sm:$0xf]
    %v779 = vld [vmem:[%s1 + $0xbb0] sm:$0xf]
    %v780 = vld [vmem:[%s1 + $0xbb4] sm:$0xf]
    %v781 = vld [vmem:[%s1 + $0xbb8] sm:$0xf]
    %v782 = vld [vmem:[%s1 + $0xbbc] sm:$0xf]
    %v783 = vld [vmem:[%s1 + $0xbc0] sm:$0xf]
    %v784 = vld [vmem:[%s1 + $0xbc4] sm:$0xf]
    %v785 = vld [vmem:[%s1 + $0xbc8] sm:$0xf]
    %v786 = vld [vmem:[%s1 + $0xbcc] sm:$0xf]
    %v787 = vld [vmem:[%s1 + $0xbd0] sm:$0xf]
    %v788 = vld [vmem:[%s1 + $0xbd4] sm:$0xf]
    %v789 = vld [vmem:[%s1 + $0xbd8] sm:$0xf]
    %v790 = vld [vmem:[%s1 + $0xbdc] sm:$0xf]
    %v791 = vld [vmem:[%s1 + $0xbe0] sm:$0xf]
    %v792 = vld [vmem:[%s1 + $0xbe4] sm:$0xf]
    %v793 = vld [vmem:[%s1 + $0xbe8] sm:$0xf]
    %v794 = vld [vmem:[%s1 + $0xbec] sm:$0xf]
    %v795 = vld [vmem:[%s1 + $0xbf0] sm:$0xf]
    %v796 = vld [vmem:[%s1 + $0xbf4] sm:$0xf]
    %v797 = vld [vmem:[%s1 + $0xbf8] sm:$0xf]
    %v798 = vld [vmem:[%s1 + $0xbfc] sm:$0xf]
    %v799 = vld [vmem:[%s1 + $0xc00] sm:$0xf]
    %v800 = vld [vmem:[%s1 + $0xc04] sm:$0xf]
    %v801 = vld [vmem:[%s1 + $0xc08] sm:$0xf]
    %v802 = vld [vmem:[%s1 + $0xc0c] sm:$0xf]
    %v803 = vld [vmem:[%s1 + $0xc10] sm:$0xf]
    %v804 = vld [vmem:[%s1 + $0xc14] sm:$0xf]
    %v805 = vld [vmem:[%s1 + $0xc18] sm:$0xf]
    %v806 = vld [vmem:[%s1 + $0xc1c] sm:$0xf]
    %v807 = vld [vmem:[%s1 + $0xc20] sm:$0xf]
    %v808 = vld [vmem:[%s1 + $0xc24] sm:$0xf]
    %v809 = vld [vmem:[%s1 + $0xc28] sm:$0xf]
    %v810 = vld [vmem:[%s1 + $0xc2c] sm:$0xf]
    %v811 = vld [vmem:[%s1 + $0xc30] sm:$0xf]
    %v812 = vld [vmem:[%s1 + $0xc34] sm:$0xf]
    %v813 = vld [vmem:[%s1 + $0xc38] sm:$0xf]
    %v814 = vld [vmem:[%s1 + $0xc3c] sm:$0xf]
    %v815 = vld [vmem:[%s1 + $0xc40] sm:$0xf]
    %v816 = vld [vmem:[%s1 + $0xc44] sm:$0xf]
    %v817 = vld [vmem:[%s1 + $0xc48] sm:$0xf]
    %v818 = vld [vmem:[%s1 + $0xc4c] sm:$0xf]
    %v819 = vld [vmem:[%s1 + $0xc50] sm:$0xf]
    %v820 = vld [vmem:[%s1 + $0xc54] sm:$0xf]
    %v821 = vld [vmem:[%s1 + $0xc58] sm:$0xf]
    %v822 = vld [vmem:[%s1 + $0xc5c] sm:$0xf]
    %v823 = vld [vmem:[%s1 + $0xc60] sm:$0xf]
    %v824 = vld [vmem:[%s1 + $0xc64] sm:$0xf]
    %v825 = vld [vmem:[%s1 + $0xc68] sm:$0xf]
    %v826 = vld [vmem:[%s1 + $0xc6c] sm:$0xf]
    %v827 = vld [vmem:[%s1 + $0xc70] sm:$0xf]
    %v828 = vld [vmem:[%s1 + $0xc74] sm:$0xf]
    %v829 = vld [vmem:[%s1 + $0xc78] sm:$0xf]
    %v830 = vld [vmem:[%s1 + $0xc7c] sm:$0xf]
    %v831 = vld [vmem:[%s1 + $0xc80] sm:$0xf]
    %v832 = vld [vmem:[%s1 + $0xc84] sm:$0xf]
    %v833 = vld [vmem:[%s1 + $0xc88] sm:$0xf]
    %v834 = vld [vmem:[%s1 + $0xc8c] sm:$0xf]
    %v835 = vld [vmem:[%s1 + $0xc90] sm:$0xf]
    %v836 = vld [vmem:[%s1 + $0xc94] sm:$0xf]
    %v837 = vld [vmem:[%s1 + $0xc98] sm:$0xf]
    %v838 = vld [vmem:[%s1 + $0xc9c] sm:$0xf]
    %v839 = vld [vmem:[%s1 + $0xca0] sm:$0xf]
    %v840 = vld [vmem:[%s1 + $0xca4] sm:$0xf]
    %v841 = vld [vmem:[%s1 + $0xca8] sm:$0xf]
    %v842 = vld [vmem:[%s1 + $0xcac] sm:$0xf]
    %v843 = vld [vmem:[%s1 + $0xcb0] sm:$0xf]
    %v844 = vld [vmem:[%s1 + $0xcb4] sm:$0xf]
    %v845 = vld [vmem:[%s1 + $0xcb8] sm:$0xf]
    %v846 = vld [vmem:[%s1 + $0xcbc] sm:$0xf]
    %v847 = vld [vmem:[%s1 + $0xcc0] sm:$0xf]
    %v848 = vld [vmem:[%s1 + $0xcc4] sm:$0xf]
    %v849 = vld [vmem:[%s1 + $0xcc8] sm:$0xf]
    %v850 = vld [vmem:[%s1 + $0xccc] sm:$0xf]
    %v851 = vld [vmem:[%s1 + $0xcd0] sm:$0xf]
    %v852 = vld [vmem:[%s1 + $0xcd4] sm:$0xf]
    %v853 = vld [vmem:[%s1 + $0xcd8] sm:$0xf]
    %v854 = vld [vmem:[%s1 + $0xcdc] sm:$0xf]
    %v855 = vld [vmem:[%s1 + $0xce0] sm:$0xf]
    %v856 = vld [vmem:[%s1 + $0xce4] sm:$0xf]
    %v857 = vld [vmem:[%s1 + $0xce8] sm:$0xf]
    %v858 = vld [vmem:[%s1 + $0xcec] sm:$0xf]
    %v859 = vld [vmem:[%s1 + $0xcf0] sm:$0xf]
    %v860 = vld [vmem:[%s1 + $0xcf4] sm:$0xf]
    %v861 = vld [vmem:[%s1 + $0xcf8] sm:$0xf]
    %v862 = vld [vmem:[%s1 + $0xcfc] sm:$0xf]
    %v863 = vld [vmem:[%s1 + $0xd00] sm:$0xf]
    %v864 = vld [vmem:[%s1 + $0xd04] sm:$0xf]
    %v865 = vld [vmem:[%s1 + $0xd08] sm:$0xf]
    %v866 = vld [vmem:[%s1 + $0xd0c] sm:$0xf]
    %v867 = vld [vmem:[%s1 + $0xd10] sm:$0xf]
    %v868 = vld [vmem:[%s1 + $0xd14] sm:$0xf]
    %v869 = vld [vmem:[%s1 + $0xd18] sm:$0xf]
    %v870 = vld [vmem:[%s1 + $0xd1c] sm:$0xf]
    %v871 = vld [vmem:[%s1 + $0xd20] sm:$0xf]
    %v872 = vld [vmem:[%s1 + $0xd24] sm:$0xf]
    %v873 = vld [vmem:[%s1 + $0xd28] sm:$0xf]
    %v874 = vld [vmem:[%s1 + $0xd2c] sm:$0xf]
    %v875 = vld [vmem:[%s1 + $0xd30] sm:$0xf]
    %v876 = vld [vmem:[%s1 + $0xd34] sm:$0xf]
    %v877 = vld [vmem:[%s1 + $0xd38] sm:$0xf]
    %v878 = vld [vmem:[%s1 + $0xd3c] sm:$0xf]
    %v879 = vld [vmem:[%s1 + $0xd40] sm:$0xf]
    %v880 = vld [vmem:[%s1 + $0xd44] sm:$0xf]
    %v881 = vld [vmem:[%s1 + $0xd48] sm:$0xf]
    %v882 = vld [vmem:[%s1 + $0xd4c] sm:$0xf]
    %v883 = vld [vmem:[%s1 + $0xd50] sm:$0xf]
    %v884 = vld [vmem:[%s1 + $0xd54] sm:$0xf]
    %v885 = vld [vmem:[%s1 + $0xd58] sm:$0xf]
    %v886 = vld [vmem:[%s1 + $0xd5c] sm:$0xf]
    %v887 = vld [vmem:[%s1 + $0xd60] sm:$0xf]
    %v888 = vld [vmem:[%s1 + $0xd64] sm:$0xf]
    %v889 = vld [vmem:[%s1 + $0xd68] sm:$0xf]
    %v890 = vld [vmem:[%s1 + $0xd6c] sm:$0xf]
    %v891 = vld [vmem:[%s1 + $0xd70] sm:$0xf]
    %v892 = vld [vmem:[%s1 + $0xd74] sm:$0xf]
    %v893 = vld [vmem:[%s1 + $0xd78] sm:$0xf]
    %v894 = vld [vmem:[%s1 + $0xd7c] sm:$0xf]
    %v895 = vld [vmem:[%s1 + $0xd80] sm:$0xf]
    %v896 = vld [vmem:[%s1 + $0xd84] sm:$0xf]
    %v897 = vld [vmem:[%s1 + $0xd88] sm:$0xf]
    %v898 = vld [vmem:[%s1 + $0xd8c] sm:$0xf]
    %v899 = vld [vmem:[%s1 + $0xd90] sm:$0xf]
    %v900 = vld [vmem:[%s1 + $0xd94] sm:$0xf]
    %v901 = vld [vmem:[%s1 + $0xd98] sm:$0xf]
    %v902 = vld [vmem:[%s1 + $0xd9c] sm:$0xf]
    %v903 = vld [vmem:[%s1 + $0xda0] sm:$0xf]
    %v904 = vld [vmem:[%s1 + $0xda4] sm:$0xf]
    %v905 = vld [vmem:[%s1 + $0xda8] sm:$0xf]
    %v906 = vld [vmem:[%s1 + $0xdac] sm:$0xf]
    %v907 = vld [vmem:[%s1 + $0xdb0] sm:$0xf]
    %v908 = vld [vmem:[%s1 + $0xdb4] sm:$0xf]
    %v909 = vld [vmem:[%s1 + $0xdb8] sm:$0xf]
    %v910 = vld [vmem:[%s1 + $0xdbc] sm:$0xf]
    %v911 = vld [vmem:[%s1 + $0xdc0] sm:$0xf]
    %v912 = vld [vmem:[%s1 + $0xdc4] sm:$0xf]
    %v913 = vld [vmem:[%s1 + $0xdc8] sm:$0xf]
    %v914 = vld [vmem:[%s1 + $0xdcc] sm:$0xf]
    %v915 = vld [vmem:[%s1 + $0xdd0] sm:$0xf]
    %v916 = vld [vmem:[%s1 + $0xdd4] sm:$0xf]
    %v917 = vld [vmem:[%s1 + $0xdd8] sm:$0xf]
    %v918 = vld [vmem:[%s1 + $0xddc] sm:$0xf]
    %v919 = vld [vmem:[%s1 + $0xde0] sm:$0xf]
    %v920 = vld [vmem:[%s1 + $0xde4] sm:$0xf]
    %v921 = vld [vmem:[%s1 + $0xde8] sm:$0xf]
    %v922 = vld [vmem:[%s1 + $0xdec] sm:$0xf]
    %v923 = vld [vmem:[%s1 + $0xdf0] sm:$0xf]
    %v924 = vld [vmem:[%s1 + $0xdf4] sm:$0xf]
    %v925 = vld [vmem:[%s1 + $0xdf8] sm:$0xf]
    %v926 = vld [vmem:[%s1 + $0xdfc] sm:$0xf]
    %v927 = vld [vmem:[%s1 + $0xe00] sm:$0xf]
    %v928 = vld [vmem:[%s1 + $0xe04] sm:$0xf]
    %v929 = vld [vmem:[%s1 + $0xe08] sm:$0xf]
    %v930 = vld [vmem:[%s1 + $0xe0c] sm:$0xf]
    %v931 = vld [vmem:[%s1 + $0xe10] sm:$0xf]
    %v932 = vld [vmem:[%s1 + $0xe14] sm:$0xf]
    %v933 = vld [vmem:[%s1 + $0xe18] sm:$0xf]
    %v934 = vld [vmem:[%s1 + $0xe1c] sm:$0xf]
    %v935 = vld [vmem:[%s1 + $0xe20] sm:$0xf]
    %v936 = vld [vmem:[%s1 + $0xe24] sm:$0xf]
    %v937 = vld [vmem:[%s1 + $0xe28] sm:$0xf]
    %v938 = vld [vmem:[%s1 + $0xe2c] sm:$0xf]
    %v939 = vld [vmem:[%s1 + $0xe30] sm:$0xf]
    %v940 = vld [vmem:[%s1 + $0xe34] sm:$0xf]
    %v941 = vld [vmem:[%s1 + $0xe38] sm:$0xf]
    %v942 = vld [vmem:[%s1 + $0xe3c] sm:$0xf]
    %v943 = vld [vmem:[%s1 + $0xe40] sm:$0xf]
    %v944 = vld [vmem:[%s1 + $0xe44] sm:$0xf]
    %v945 = vld [vmem:[%s1 + $0xe48] sm:$0xf]
    %v946 = vld [vmem:[%s1 + $0xe4c] sm:$0xf]
    %v947 = vld [vmem:[%s1 + $0xe50] sm:$0xf]
    %v948 = vld [vmem:[%s1 + $0xe54] sm:$0xf]
    %v949 = vld [vmem:[%s1 + $0xe58] sm:$0xf]
    %v950 = vld [vmem:[%s1 + $0xe5c] sm:$0xf]
    %v951 = vld [vmem:[%s1 + $0xe60] sm:$0xf]
    %v952 = vld [vmem:[%s1 + $0xe64] sm:$0xf]
    %v953 = vld [vmem:[%s1 + $0xe68] sm:$0xf]
    %v954 = vld [vmem:[%s1 + $0xe6c] sm:$0xf]
    %v955 = vld [vmem:[%s1 + $0xe70] sm:$0xf]
    %v956 = vld [vmem:[%s1 + $0xe74] sm:$0xf]
    %v957 = vld [vmem:[%s1 + $0xe78] sm:$0xf]
    %v958 = vld [vmem:[%s1 + $0xe7c] sm:$0xf]
    %v959 = vld [vmem:[%s1 + $0xe80] sm:$0xf]
    %v960 = vld [vmem:[%s1 + $0xe84] sm:$0xf]
    %v961 = vld [vmem:[%s1 + $0xe88] sm:$0xf]
    %v962 = vld [vmem:[%s1 + $0xe8c] sm:$0xf]
    %v963 = vld [vmem:[%s1 + $0xe90] sm:$0xf]
    %v964 = vld [vmem:[%s1 + $0xe94] sm:$0xf]
    %v965 = vld [vmem:[%s1 + $0xe98] sm:$0xf]
    %v966 = vld [vmem:[%s1 + $0xe9c] sm:$0xf]
    %v967 = vld [vmem:[%s1 + $0xea0] sm:$0xf]
    %v968 = vld [vmem:[%s1 + $0xea4] sm:$0xf]
    %v969 = vld [vmem:[%s1 + $0xea8] sm:$0xf]
    %v970 = vld [vmem:[%s1 + $0xeac] sm:$0xf]
    %v971 = vld [vmem:[%s1 + $0xeb0] sm:$0xf]
    %v972 = vld [vmem:[%s1 + $0xeb4] sm:$0xf]
    %v973 = vld [vmem:[%s1 + $0xeb8] sm:$0xf]
    %v974 = vld [vmem:[%s1 + $0xebc] sm:$0xf]
    %v975 = vld [vmem:[%s1 + $0xec0] sm:$0xf]
    %v976 = vld [vmem:[%s1 + $0xec4] sm:$0xf]
    %v977 = vld [vmem:[%s1 + $0xec8] sm:$0xf]
    %v978 = vld [vmem:[%s1 + $0xecc] sm:$0xf]
    %v979 = vld [vmem:[%s1 + $0xed0] sm:$0xf]
    %v980 = vld [vmem:[%s1 + $0xed4] sm:$0xf]
    %v981 = vld [vmem:[%s1 + $0xed8] sm:$0xf]
    %v982 = vld [vmem:[%s1 + $0xedc] sm:$0xf]
    %v983 = vld [vmem:[%s1 + $0xee0] sm:$0xf]
    %v984 = vld [vmem:[%s1 + $0xee4] sm:$0xf]
    %v985 = vld [vmem:[%s1 + $0xee8] sm:$0xf]
    %v986 = vld [vmem:[%s1 + $0xeec] sm:$0xf]
    %v987 = vld [vmem:[%s1 + $0xef0] sm:$0xf]
    %v988 = vld [vmem:[%s1 + $0xef4] sm:$0xf]
    %v989 = vld [vmem:[%s1 + $0xef8] sm:$0xf]
    %v990 = vld [vmem:[%s1 + $0xefc] sm:$0xf]
    %v991 = vld [vmem:[%s1 + $0xf00] sm:$0xf]
    %v992 = vld [vmem:[%s1 + $0xf04] sm:$0xf]
    %v993 = vld [vmem:[%s1 + $0xf08] sm:$0xf]
    %v994 = vld [vmem:[%s1 + $0xf0c] sm:$0xf]
    %v995 = vld [vmem:[%s1 + $0xf10] sm:$0xf]
    %v996 = vld [vmem:[%s1 + $0xf14] sm:$0xf]
    %v997 = vld [vmem:[%s1 + $0xf18] sm:$0xf]
    %v998 = vld [vmem:[%s1 + $0xf1c] sm:$0xf]
    %v999 = vld [vmem:[%s1 + $0xf20] sm:$0xf]
    %v1000 = vld [vmem:[%s1 + $0xf24] sm:$0xf]
    %v1001 = vld [vmem:[%s1 + $0xf28] sm:$0xf]
    %v1002 = vld [vmem:[%s1 + $0xf2c] sm:$0xf]
    %v1003 = vld [vmem:[%s1 + $0xf30] sm:$0xf]
    %v1004 = vld [vmem:[%s1 + $0xf34] sm:$0xf]
    %v1005 = vld [vmem:[%s1 + $0xf38] sm:$0xf]
    %v1006 = vld [vmem:[%s1 + $0xf3c] sm:$0xf]
    %v1007 = vld [vmem:[%s1 + $0xf40] sm:$0xf]
    %v1008 = vld [vmem:[%s1 + $0xf44] sm:$0xf]
    %v1009 = vld [vmem:[%s1 + $0xf48] sm:$0xf]
    %v1010 = vld [vmem:[%s1 + $0xf4c] sm:$0xf]
    %v1011 = vld [vmem:[%s1 + $0xf50] sm:$0xf]
    %v1012 = vld [vmem:[%s1 + $0xf54] sm:$0xf]
    %v1013 = vld [vmem:[%s1 + $0xf58] sm:$0xf]
    %v1014 = vld [vmem:[%s1 + $0xf5c] sm:$0xf]
    %v1015 = vld [vmem:[%s1 + $0xf60] sm:$0xf]
    %v1016 = vld [vmem:[%s1 + $0xf64] sm:$0xf]
    %v1017 = vld [vmem:[%s1 + $0xf68] sm:$0xf]
    %v1018 = vld [vmem:[%s1 + $0xf6c] sm:$0xf]
    %v1019 = vld [vmem:[%s1 + $0xf70] sm:$0xf]
    %v1020 = vld [vmem:[%s1 + $0xf74] sm:$0xf]
    %v1021 = vld [vmem:[%s1 + $0xf78] sm:$0xf]
    %v1022 = vld [vmem:[%s1 + $0xf7c] sm:$0xf]
    %v1023 = vld [vmem:[%s1 + $0xf80] sm:$0xf]
    %v1024 = vld [vmem:[%s1 + $0xf84] sm:$0xf]
    %v1025 = vld [vmem:[%s1 + $0xf88] sm:$0xf]
    %v1026 = vld [vmem:[%s1 + $0xf8c] sm:$0xf]
    %v1027 = vld [vmem:[%s1 + $0xf90] sm:$0xf]
    %v1028 = vld [vmem:[%s1 + $0xf94] sm:$0xf]
    %v1029 = vld [vmem:[%s1 + $0xf98] sm:$0xf]
    %v1030 = vld [vmem:[%s1 + $0xf9c] sm:$0xf]
    %v1031 = vld [vmem:[%s1 + $0xfa0] sm:$0xf]
    %v1032 = vld [vmem:[%s1 + $0xfa4] sm:$0xf]
    %v1033 = vld [vmem:[%s1 + $0xfa8] sm:$0xf]
    %v1034 = vld [vmem:[%s1 + $0xfac] sm:$0xf]
    %v1035 = vld [vmem:[%s1 + $0xfb0] sm:$0xf]
    %v1036 = vld [vmem:[%s1 + $0xfb4] sm:$0xf]
    %v1037 = vld [vmem:[%s1 + $0xfb8] sm:$0xf]
    %v1038 = vld [vmem:[%s1 + $0xfbc] sm:$0xf]
    %v1039 = vld [vmem:[%s1 + $0xfc0] sm:$0xf]
    %v1040 = vld [vmem:[%s1 + $0xfc4] sm:$0xf]
    %v1041 = vld [vmem:[%s1 + $0xfc8] sm:$0xf]
    %v1042 = vld [vmem:[%s1 + $0xfcc] sm:$0xf]
    %v1043 = vld [vmem:[%s1 + $0xfd0] sm:$0xf]
    %v1044 = vld [vmem:[%s1 + $0xfd4] sm:$0xf]
    %v1045 = vld [vmem:[%s1 + $0xfd8] sm:$0xf]
    %v1046 = vld [vmem:[%s1 + $0xfdc] sm:$0xf]
    %v1047 = vld [vmem:[%s1 + $0xfe0] sm:$0xf]
    %v1048 = vld [vmem:[%s1 + $0xfe4] sm:$0xf]
    %v1049 = vld [vmem:[%s1 + $0xfe8] sm:$0xf]
    %v1050 = vld [vmem:[%s1 + $0xfec] sm:$0xf]
    %v1051 = vld [vmem:[%s1 + $0xff0] sm:$0xf]
    %v1052 = vld [vmem:[%s1 + $0xff4] sm:$0xf]
    %v1053 = vld [vmem:[%s1 + $0xff8] sm:$0xf]
    %v1054 = vld [vmem:[%s1 + $0xffc] sm:$0xf]
    %v1055 = vld [vmem:[%s1 + $0x1000] sm:$0xf]
    %v1056 = vld [vmem:[%s1 + $0x1004] sm:$0xf]
    %v1057 = vld [vmem:[%s1 + $0x1008] sm:$0xf]
    %v1058 = vld [vmem:[%s1 + $0x100c] sm:$0xf]
    %v1059 = vld [vmem:[%s1 + $0x1010] sm:$0xf]
    %v1060 = vld [vmem:[%s1 + $0x1014] sm:$0xf]
    %v1061 = vld [vmem:[%s1 + $0x1018] sm:$0xf]
    %v1062 = vld [vmem:[%s1 + $0x101c] sm:$0xf]
    %v1063 = vld [vmem:[%s1 + $0x1020] sm:$0xf]
    %v1064 = vld [vmem:[%s1 + $0x1024] sm:$0xf]
    %v1065 = vld [vmem:[%s1 + $0x1028] sm:$0xf]
    %v1066 = vld [vmem:[%s1 + $0x102c] sm:$0xf]
    %v1067 = vld [vmem:[%s1 + $0x1030] sm:$0xf]
    %v1068 = vld [vmem:[%s1 + $0x1034] sm:$0xf]
    %v1069 = vld [vmem:[%s1 + $0x1038] sm:$0xf]
    %v1070 = vld [vmem:[%s1 + $0x103c] sm:$0xf]
    %v1071 = vld [vmem:[%s1 + $0x1040] sm:$0xf]
    %v1072 = vld [vmem:[%s1 + $0x1044] sm:$0xf]
    %v1073 = vld [vmem:[%s1 + $0x1048] sm:$0xf]
    %v1074 = vld [vmem:[%s1 + $0x104c] sm:$0xf]
    %v1075 = vld [vmem:[%s1 + $0x1050] sm:$0xf]
    %v1076 = vld [vmem:[%s1 + $0x1054] sm:$0xf]
    %v1077 = vld [vmem:[%s1 + $0x1058] sm:$0xf]
    %v1078 = vld [vmem:[%s1 + $0x105c] sm:$0xf]
    %v1079 = vld [vmem:[%s1 + $0x1060] sm:$0xf]
    %v1080 = vld [vmem:[%s1 + $0x1064] sm:$0xf]
    %v1081 = vld [vmem:[%s1 + $0x1068] sm:$0xf]
    %v1082 = vld [vmem:[%s1 + $0x106c] sm:$0xf]
    %v1083 = vld [vmem:[%s1 + $0x1070] sm:$0xf]
    %v1084 = vld [vmem:[%s1 + $0x1074] sm:$0xf]
    %v1085 = vld [vmem:[%s1 + $0x1078] sm:$0xf]
    %v1086 = vld [vmem:[%s1 + $0x107c] sm:$0xf]
    %v1087 = vld [vmem:[%s1 + $0x1080] sm:$0xf]
    %v1088 = vld [vmem:[%s1 + $0x1084] sm:$0xf]
    %v1089 = vld [vmem:[%s1 + $0x1088] sm:$0xf]
    %v1090 = vld [vmem:[%s1 + $0x108c] sm:$0xf]
    %v1091 = vld [vmem:[%s1 + $0x1090] sm:$0xf]
    %v1092 = vld [vmem:[%s1 + $0x1094] sm:$0xf]
    %v1093 = vld [vmem:[%s1 + $0x1098] sm:$0xf]
    %v1094 = vld [vmem:[%s1 + $0x109c] sm:$0xf]
    %v1095 = vld [vmem:[%s1 + $0x10a0] sm:$0xf]
    %v1096 = vld [vmem:[%s1 + $0x10a4] sm:$0xf]
    %v1097 = vld [vmem:[%s1 + $0x10a8] sm:$0xf]
    %v1098 = vld [vmem:[%s1 + $0x10ac] sm:$0xf]
    %v1099 = vld [vmem:[%s1 + $0x10b0] sm:$0xf]
    %v1100 = vld [vmem:[%s1 + $0x10b4] sm:$0xf]
    %v1101 = vld [vmem:[%s1 + $0x10b8] sm:$0xf]
    %v1102 = vld [vmem:[%s1 + $0x10bc] sm:$0xf]
    %v1103 = vld [vmem:[%s1 + $0x10c0] sm:$0xf]
    %v1104 = vld [vmem:[%s1 + $0x10c4] sm:$0xf]
    %v1105 = vld [vmem:[%s1 + $0x10c8] sm:$0xf]
    %v1106 = vld [vmem:[%s1 + $0x10cc] sm:$0xf]
    %v1107 = vld [vmem:[%s1 + $0x10d0] sm:$0xf]
    %v1108 = vld [vmem:[%s1 + $0x10d4] sm:$0xf]
    %v1109 = vld [vmem:[%s1 + $0x10d8] sm:$0xf]
    %v1110 = vld [vmem:[%s1 + $0x10dc] sm:$0xf]
    %v1111 = vld [vmem:[%s1 + $0x10e0] sm:$0xf]
    %v1112 = vld [vmem:[%s1 + $0x10e4] sm:$0xf]
    %v1113 = vld [vmem:[%s1 + $0x10e8] sm:$0xf]
    %v1114 = vld [vmem:[%s1 + $0x10ec] sm:$0xf]
    %v1115 = vld [vmem:[%s1 + $0x10f0] sm:$0xf]
    %v1116 = vld [vmem:[%s1 + $0x10f4] sm:$0xf]
    %v1117 = vld [vmem:[%s1 + $0x10f8] sm:$0xf]
    %v1118 = vld [vmem:[%s1 + $0x10fc] sm:$0xf]
    %v1119 = vld [vmem:[%s1 + $0x1100] sm:$0xf]
    %v1120 = vld [vmem:[%s1 + $0x1104] sm:$0xf]
    %v1121 = vld [vmem:[%s1 + $0x1108] sm:$0xf]
    %v1122 = vld [vmem:[%s1 + $0x110c] sm:$0xf]
    %v1123 = vld [vmem:[%s1 + $0x1110] sm:$0xf]
    %v1124 = vld [vmem:[%s1 + $0x1114] sm:$0xf]
    %v1125 = vld [vmem:[%s1 + $0x1118] sm:$0xf]
    %v1126 = vld [vmem:[%s1 + $0x111c] sm:$0xf]
    %v1127 = vld [vmem:[%s1 + $0x1120] sm:$0xf]
    %v1128 = vld [vmem:[%s1 + $0x1124] sm:$0xf]
    %v1129 = vld [vmem:[%s1 + $0x1128] sm:$0xf]
    %v1130 = vld [vmem:[%s1 + $0x112c] sm:$0xf]
    %v1131 = vld [vmem:[%s1 + $0x1130] sm:$0xf]
    %v1132 = vld [vmem:[%s1 + $0x1134] sm:$0xf]
    %v1133 = vld [vmem:[%s1 + $0x1138] sm:$0xf]
    %v1134 = vld [vmem:[%s1 + $0x113c] sm:$0xf]
    %v1135 = vld [vmem:[%s1 + $0x1140] sm:$0xf]
    %v1136 = vld [vmem:[%s1 + $0x1144] sm:$0xf]
    %v1137 = vld [vmem:[%s1 + $0x1148] sm:$0xf]
    %v1138 = vld [vmem:[%s1 + $0x114c] sm:$0xf]
    %v1139 = vld [vmem:[%s1 + $0x1150] sm:$0xf]
    %v1140 = vld [vmem:[%s1 + $0x1154] sm:$0xf]
    %v1141 = vld [vmem:[%s1 + $0x1158] sm:$0xf]
    %v1142 = vld [vmem:[%s1 + $0x115c] sm:$0xf]
    %v1143 = vld [vmem:[%s1 + $0x1160] sm:$0xf]
    %v1144 = vld [vmem:[%s1 + $0x1164] sm:$0xf]
    %v1145 = vld [vmem:[%s1 + $0x1168] sm:$0xf]
    %v1146 = vld [vmem:[%s1 + $0x116c] sm:$0xf]
    %v1147 = vld [vmem:[%s1 + $0x1170] sm:$0xf]
    %v1148 = vld [vmem:[%s1 + $0x1174] sm:$0xf]
    %v1149 = vld [vmem:[%s1 + $0x1178] sm:$0xf]
    %v1150 = vld [vmem:[%s1 + $0x117c] sm:$0xf]
    %v1151 = vld [vmem:[%s1 + $0x1180] sm:$0xf]
    %v1152 = vld [vmem:[%s1 + $0x1184] sm:$0xf]
    %v1153 = vld [vmem:[%s1 + $0x1188] sm:$0xf]
    %v1154 = vld [vmem:[%s1 + $0x118c] sm:$0xf]
    %v1155 = vld [vmem:[%s1 + $0x1190] sm:$0xf]
    %v1156 = vld [vmem:[%s1 + $0x1194] sm:$0xf]
    %v1157 = vld [vmem:[%s1 + $0x1198] sm:$0xf]
    %v1158 = vld [vmem:[%s1 + $0x119c] sm:$0xf]
    %v1159 = vld [vmem:[%s1 + $0x11a0] sm:$0xf]
    %v1160 = vld [vmem:[%s1 + $0x11a4] sm:$0xf]
    %v1161 = vld [vmem:[%s1 + $0x11a8] sm:$0xf]
    %v1162 = vld [vmem:[%s1 + $0x11ac] sm:$0xf]
    %v1163 = vld [vmem:[%s1 + $0x11b0] sm:$0xf]
    %v1164 = vld [vmem:[%s1 + $0x11b4] sm:$0xf]
    %v1165 = vld [vmem:[%s1 + $0x11b8] sm:$0xf]
    %v1166 = vld [vmem:[%s1 + $0x11bc] sm:$0xf]
    %v1167 = vld [vmem:[%s1 + $0x11c0] sm:$0xf]
    %v1168 = vld [vmem:[%s1 + $0x11c4] sm:$0xf]
    %v1169 = vld [vmem:[%s1 + $0x11c8] sm:$0xf]
    %v1170 = vld [vmem:[%s1 + $0x11cc] sm:$0xf]
    %v1171 = vld [vmem:[%s1 + $0x11d0] sm:$0xf]
    %v1172 = vld [vmem:[%s1 + $0x11d4] sm:$0xf]
    %v1173 = vld [vmem:[%s1 + $0x11d8] sm:$0xf]
    %v1174 = vld [vmem:[%s1 + $0x11dc] sm:$0xf]
    %v1175 = vld [vmem:[%s1 + $0x11e0] sm:$0xf]
    %v1176 = vld [vmem:[%s1 + $0x11e4] sm:$0xf]
    %v1177 = vld [vmem:[%s1 + $0x11e8] sm:$0xf]
    %v1178 = vld [vmem:[%s1 + $0x11ec] sm:$0xf]
    %v1179 = vld [vmem:[%s1 + $0x11f0] sm:$0xf]
    %v1180 = vld [vmem:[%s1 + $0x11f4] sm:$0xf]
    %v1181 = vld [vmem:[%s1 + $0x11f8] sm:$0xf]
    %v1182 = vld [vmem:[%s1 + $0x11fc] sm:$0xf]
    %v1183 = vld [vmem:[%s2] sm:$0x1]
    %v1185 = vlaneseq
    %v1186 = vshrl.u32 %v1185, 7
    %v1187 = vsub.s32 0, %v1186
    %v1188 = vrot.slane %v1183, %v1187
    %v1199 = vcombine.high %v22, %v22
    %v1201 = vunpack.c.l.s4 1966171168
    %v1202 = vunpack.c.0.s8 %v1201
    %v1203 = vlaneseq
    %v1204 = vshrl.u32 %v1203, 7
    %v1205 = vsub.s32 %v1202, %v1204
    %v1206 = vrot.slane %v22, %v1205
    %v1208 = vunpack.c.l.s4 1966171168
    %v1209 = vunpack.c.0.s8 %v1208
    %v1210 = vlaneseq
    %v1211 = vshrl.u32 %v1210, 7
    %v1212 = vsub.s32 %v1209, %v1211
    %v1213 = vrot.slane %v1199, %v1212
    %v1214 = vcombine.high %v1206, %v1206
    %v1215 = vcombine.high %v1213, %v1213
    %v1217 = vunpack.c.l.s4 1966171168
    %v1218 = vunpack.c.0.s8 %v1217
    %v1219 = vlaneseq
    %v1220 = vshrl.u32 %v1219, 7
    %v1221 = vsub.s32 %v1218, %v1220
    %v1222 = vrot.slane %v1206, %v1221
    %v1224 = vunpack.c.l.s4 1966171168
    %v1225 = vunpack.c.0.s8 %v1224
    %v1226 = vlaneseq
    %v1227 = vshrl.u32 %v1226, 7
    %v1228 = vsub.s32 %v1225, %v1227
    %v1229 = vrot.slane %v1213, %v1228
    %v1231 = vunpack.c.l.s4 1966171168
    %v1232 = vunpack.c.0.s8 %v1231
    %v1233 = vlaneseq
    %v1234 = vshrl.u32 %v1233, 7
    %v1235 = vsub.s32 %v1232, %v1234
    %v1236 = vrot.slane %v1214, %v1235
    %v1238 = vunpack.c.l.s4 1966171168
    %v1239 = vunpack.c.0.s8 %v1238
    %v1240 = vlaneseq
    %v1241 = vshrl.u32 %v1240, 7
    %v1242 = vsub.s32 %v1239, %v1241
    %v1243 = vrot.slane %v1215, %v1242
    %v1244 = vcombine.high %v1222, %v1222
    %v1245 = vcombine.high %v1229, %v1229
    %v1246 = vcombine.high %v1236, %v1236
    %v1247 = vcombine.high %v1243, %v1243
    %v1248 = vcombine.high %v23, %v23
    %v1250 = vunpack.c.l.s4 1966171168
    %v1251 = vunpack.c.0.s8 %v1250
    %v1252 = vlaneseq
    %v1253 = vshrl.u32 %v1252, 7
    %v1254 = vsub.s32 %v1251, %v1253
    %v1255 = vrot.slane %v23, %v1254
    %v1257 = vunpack.c.l.s4 1966171168
    %v1258 = vunpack.c.0.s8 %v1257
    %v1259 = vlaneseq
    %v1260 = vshrl.u32 %v1259, 7
    %v1261 = vsub.s32 %v1258, %v1260
    %v1262 = vrot.slane %v1248, %v1261
    %v1263 = vcombine.high %v1255, %v1255
    %v1264 = vcombine.high %v1262, %v1262
    %v1266 = vunpack.c.l.s4 1966171168
    %v1267 = vunpack.c.0.s8 %v1266
    %v1268 = vlaneseq
    %v1269 = vshrl.u32 %v1268, 7
    %v1270 = vsub.s32 %v1267, %v1269
    %v1271 = vrot.slane %v1255, %v1270
    %v1273 = vunpack.c.l.s4 1966171168
    %v1274 = vunpack.c.0.s8 %v1273
    %v1275 = vlaneseq
    %v1276 = vshrl.u32 %v1275, 7
    %v1277 = vsub.s32 %v1274, %v1276
    %v1278 = vrot.slane %v1262, %v1277
    %v1280 = vunpack.c.l.s4 1966171168
    %v1281 = vunpack.c.0.s8 %v1280
    %v1282 = vlaneseq
    %v1283 = vshrl.u32 %v1282, 7
    %v1284 = vsub.s32 %v1281, %v1283
    %v1285 = vrot.slane %v1263, %v1284
    %v1287 = vunpack.c.l.s4 1966171168
    %v1288 = vunpack.c.0.s8 %v1287
    %v1289 = vlaneseq
    %v1290 = vshrl.u32 %v1289, 7
    %v1291 = vsub.s32 %v1288, %v1290
    %v1292 = vrot.slane %v1264, %v1291
    %v1293 = vcombine.high %v1271, %v1271
    %v1294 = vcombine.high %v1278, %v1278
    %v1295 = vcombine.high %v1285, %v1285
    %v1296 = vcombine.high %v1292, %v1292
    %v1297 = vcombine.high %v24, %v24
    %v1299 = vunpack.c.l.s4 1966171168
    %v1300 = vunpack.c.0.s8 %v1299
    %v1301 = vlaneseq
    %v1302 = vshrl.u32 %v1301, 7
    %v1303 = vsub.s32 %v1300, %v1302
    %v1304 = vrot.slane %v24, %v1303
    %v1306 = vunpack.c.l.s4 1966171168
    %v1307 = vunpack.c.0.s8 %v1306
    %v1308 = vlaneseq
    %v1309 = vshrl.u32 %v1308, 7
    %v1310 = vsub.s32 %v1307, %v1309
    %v1311 = vrot.slane %v1297, %v1310
    %v1312 = vcombine.high %v1304, %v1304
    %v1313 = vcombine.high %v1311, %v1311
    %v1315 = vunpack.c.l.s4 1966171168
    %v1316 = vunpack.c.0.s8 %v1315
    %v1317 = vlaneseq
    %v1318 = vshrl.u32 %v1317, 7
    %v1319 = vsub.s32 %v1316, %v1318
    %v1320 = vrot.slane %v1304, %v1319
    %v1322 = vunpack.c.l.s4 1966171168
    %v1323 = vunpack.c.0.s8 %v1322
    %v1324 = vlaneseq
    %v1325 = vshrl.u32 %v1324, 7
    %v1326 = vsub.s32 %v1323, %v1325
    %v1327 = vrot.slane %v1311, %v1326
    %v1329 = vunpack.c.l.s4 1966171168
    %v1330 = vunpack.c.0.s8 %v1329
    %v1331 = vlaneseq
    %v1332 = vshrl.u32 %v1331, 7
    %v1333 = vsub.s32 %v1330, %v1332
    %v1334 = vrot.slane %v1312, %v1333
    %v1336 = vunpack.c.l.s4 1966171168
    %v1337 = vunpack.c.0.s8 %v1336
    %v1338 = vlaneseq
    %v1339 = vshrl.u32 %v1338, 7
    %v1340 = vsub.s32 %v1337, %v1339
    %v1341 = vrot.slane %v1313, %v1340
    %v1342 = vcombine.high %v1320, %v1320
    %v1343 = vcombine.high %v1327, %v1327
    %v1344 = vcombine.high %v1334, %v1334
    %v1345 = vcombine.high %v1341, %v1341
    %v1346 = vcombine.high %v25, %v25
    %v1348 = vunpack.c.l.s4 1966171168
    %v1349 = vunpack.c.0.s8 %v1348
    %v1350 = vlaneseq
    %v1351 = vshrl.u32 %v1350, 7
    %v1352 = vsub.s32 %v1349, %v1351
    %v1353 = vrot.slane %v25, %v1352
    %v1355 = vunpack.c.l.s4 1966171168
    %v1356 = vunpack.c.0.s8 %v1355
    %v1357 = vlaneseq
    %v1358 = vshrl.u32 %v1357, 7
    %v1359 = vsub.s32 %v1356, %v1358
    %v1360 = vrot.slane %v1346, %v1359
    %v1361 = vcombine.high %v1353, %v1353
    %v1362 = vcombine.high %v1360, %v1360
    %v1364 = vunpack.c.l.s4 1966171168
    %v1365 = vunpack.c.0.s8 %v1364
    %v1366 = vlaneseq
    %v1367 = vshrl.u32 %v1366, 7
    %v1368 = vsub.s32 %v1365, %v1367
    %v1369 = vrot.slane %v1353, %v1368
    %v1371 = vunpack.c.l.s4 1966171168
    %v1372 = vunpack.c.0.s8 %v1371
    %v1373 = vlaneseq
    %v1374 = vshrl.u32 %v1373, 7
    %v1375 = vsub.s32 %v1372, %v1374
    %v1376 = vrot.slane %v1360, %v1375
    %v1378 = vunpack.c.l.s4 1966171168
    %v1379 = vunpack.c.0.s8 %v1378
    %v1380 = vlaneseq
    %v1381 = vshrl.u32 %v1380, 7
    %v1382 = vsub.s32 %v1379, %v1381
    %v1383 = vrot.slane %v1361, %v1382
    %v1385 = vunpack.c.l.s4 1966171168
    %v1386 = vunpack.c.0.s8 %v1385
    %v1387 = vlaneseq
    %v1388 = vshrl.u32 %v1387, 7
    %v1389 = vsub.s32 %v1386, %v1388
    %v1390 = vrot.slane %v1362, %v1389
    %v1391 = vcombine.high %v1369, %v1369
    %v1392 = vcombine.high %v1376, %v1376
    %v1393 = vcombine.high %v1383, %v1383
    %v1394 = vcombine.high %v1390, %v1390
    %v1395 = vcombine.high %v26, %v26
    %v1397 = vunpack.c.l.s4 1966171168
    %v1398 = vunpack.c.0.s8 %v1397
    %v1399 = vlaneseq
    %v1400 = vshrl.u32 %v1399, 7
    %v1401 = vsub.s32 %v1398, %v1400
    %v1402 = vrot.slane %v26, %v1401
    %v1404 = vunpack.c.l.s4 1966171168
    %v1405 = vunpack.c.0.s8 %v1404
    %v1406 = vlaneseq
    %v1407 = vshrl.u32 %v1406, 7
    %v1408 = vsub.s32 %v1405, %v1407
    %v1409 = vrot.slane %v1395, %v1408
    %v1410 = vcombine.high %v1402, %v1402
    %v1411 = vcombine.high %v1409, %v1409
    %v1413 = vunpack.c.l.s4 1966171168
    %v1414 = vunpack.c.0.s8 %v1413
    %v1415 = vlaneseq
    %v1416 = vshrl.u32 %v1415, 7
    %v1417 = vsub.s32 %v1414, %v1416
    %v1418 = vrot.slane %v1402, %v1417
    %v1420 = vunpack.c.l.s4 1966171168
    %v1421 = vunpack.c.0.s8 %v1420
    %v1422 = vlaneseq
    %v1423 = vshrl.u32 %v1422, 7
    %v1424 = vsub.s32 %v1421, %v1423
    %v1425 = vrot.slane %v1409, %v1424
    %v1427 = vunpack.c.l.s4 1966171168
    %v1428 = vunpack.c.0.s8 %v1427
    %v1429 = vlaneseq
    %v1430 = vshrl.u32 %v1429, 7
    %v1431 = vsub.s32 %v1428, %v1430
    %v1432 = vrot.slane %v1410, %v1431
    %v1434 = vunpack.c.l.s4 1966171168
    %v1435 = vunpack.c.0.s8 %v1434
    %v1436 = vlaneseq
    %v1437 = vshrl.u32 %v1436, 7
    %v1438 = vsub.s32 %v1435, %v1437
    %v1439 = vrot.slane %v1411, %v1438
    %v1440 = vcombine.high %v1418, %v1418
    %v1441 = vcombine.high %v1425, %v1425
    %v1442 = vcombine.high %v1432, %v1432
    %v1443 = vcombine.high %v1439, %v1439
    %v1444 = vcombine.high %v27, %v27
    %v1446 = vunpack.c.l.s4 1966171168
    %v1447 = vunpack.c.0.s8 %v1446
    %v1448 = vlaneseq
    %v1449 = vshrl.u32 %v1448, 7
    %v1450 = vsub.s32 %v1447, %v1449
    %v1451 = vrot.slane %v27, %v1450
    %v1453 = vunpack.c.l.s4 1966171168
    %v1454 = vunpack.c.0.s8 %v1453
    %v1455 = vlaneseq
    %v1456 = vshrl.u32 %v1455, 7
    %v1457 = vsub.s32 %v1454, %v1456
    %v1458 = vrot.slane %v1444, %v1457
    %v1459 = vcombine.high %v1451, %v1451
    %v1460 = vcombine.high %v1458, %v1458
    %v1462 = vunpack.c.l.s4 1966171168
    %v1463 = vunpack.c.0.s8 %v1462
    %v1464 = vlaneseq
    %v1465 = vshrl.u32 %v1464, 7
    %v1466 = vsub.s32 %v1463, %v1465
    %v1467 = vrot.slane %v1451, %v1466
    %v1469 = vunpack.c.l.s4 1966171168
    %v1470 = vunpack.c.0.s8 %v1469
    %v1471 = vlaneseq
    %v1472 = vshrl.u32 %v1471, 7
    %v1473 = vsub.s32 %v1470, %v1472
    %v1474 = vrot.slane %v1458, %v1473
    %v1476 = vunpack.c.l.s4 1966171168
    %v1477 = vunpack.c.0.s8 %v1476
    %v1478 = vlaneseq
    %v1479 = vshrl.u32 %v1478, 7
    %v1480 = vsub.s32 %v1477, %v1479
    %v1481 = vrot.slane %v1459, %v1480
    %v1483 = vunpack.c.l.s4 1966171168
    %v1484 = vunpack.c.0.s8 %v1483
    %v1485 = vlaneseq
    %v1486 = vshrl.u32 %v1485, 7
    %v1487 = vsub.s32 %v1484, %v1486
    %v1488 = vrot.slane %v1460, %v1487
    %v1489 = vcombine.high %v1467, %v1467
    %v1490 = vcombine.high %v1474, %v1474
    %v1491 = vcombine.high %v1481, %v1481
    %v1492 = vcombine.high %v1488, %v1488
    %v1493 = vcombine.high %v28, %v28
    %v1495 = vunpack.c.l.s4 1966171168
    %v1496 = vunpack.c.0.s8 %v1495
    %v1497 = vlaneseq
    %v1498 = vshrl.u32 %v1497, 7
    %v1499 = vsub.s32 %v1496, %v1498
    %v1500 = vrot.slane %v28, %v1499
    %v1502 = vunpack.c.l.s4 1966171168
    %v1503 = vunpack.c.0.s8 %v1502
    %v1504 = vlaneseq
    %v1505 = vshrl.u32 %v1504, 7
    %v1506 = vsub.s32 %v1503, %v1505
    %v1507 = vrot.slane %v1493, %v1506
    %v1508 = vcombine.high %v1500, %v1500
    %v1509 = vcombine.high %v1507, %v1507
    %v1511 = vunpack.c.l.s4 1966171168
    %v1512 = vunpack.c.0.s8 %v1511
    %v1513 = vlaneseq
    %v1514 = vshrl.u32 %v1513, 7
    %v1515 = vsub.s32 %v1512, %v1514
    %v1516 = vrot.slane %v1500, %v1515
    %v1518 = vunpack.c.l.s4 1966171168
    %v1519 = vunpack.c.0.s8 %v1518
    %v1520 = vlaneseq
    %v1521 = vshrl.u32 %v1520, 7
    %v1522 = vsub.s32 %v1519, %v1521
    %v1523 = vrot.slane %v1507, %v1522
    %v1525 = vunpack.c.l.s4 1966171168
    %v1526 = vunpack.c.0.s8 %v1525
    %v1527 = vlaneseq
    %v1528 = vshrl.u32 %v1527, 7
    %v1529 = vsub.s32 %v1526, %v1528
    %v1530 = vrot.slane %v1508, %v1529
    %v1532 = vunpack.c.l.s4 1966171168
    %v1533 = vunpack.c.0.s8 %v1532
    %v1534 = vlaneseq
    %v1535 = vshrl.u32 %v1534, 7
    %v1536 = vsub.s32 %v1533, %v1535
    %v1537 = vrot.slane %v1509, %v1536
    %v1538 = vcombine.high %v1516, %v1516
    %v1539 = vcombine.high %v1523, %v1523
    %v1540 = vcombine.high %v1530, %v1530
    %v1541 = vcombine.high %v1537, %v1537
    %v1542 = vcombine.high %v29, %v29
    %v1544 = vunpack.c.l.s4 1966171168
    %v1545 = vunpack.c.0.s8 %v1544
    %v1546 = vlaneseq
    %v1547 = vshrl.u32 %v1546, 7
    %v1548 = vsub.s32 %v1545, %v1547
    %v1549 = vrot.slane %v29, %v1548
    %v1551 = vunpack.c.l.s4 1966171168
    %v1552 = vunpack.c.0.s8 %v1551
    %v1553 = vlaneseq
    %v1554 = vshrl.u32 %v1553, 7
    %v1555 = vsub.s32 %v1552, %v1554
    %v1556 = vrot.slane %v1542, %v1555
    %v1557 = vcombine.high %v1549, %v1549
    %v1558 = vcombine.high %v1556, %v1556
    %v1560 = vunpack.c.l.s4 1966171168
    %v1561 = vunpack.c.0.s8 %v1560
    %v1562 = vlaneseq
    %v1563 = vshrl.u32 %v1562, 7
    %v1564 = vsub.s32 %v1561, %v1563
    %v1565 = vrot.slane %v1549, %v1564
    %v1567 = vunpack.c.l.s4 1966171168
    %v1568 = vunpack.c.0.s8 %v1567
    %v1569 = vlaneseq
    %v1570 = vshrl.u32 %v1569, 7
    %v1571 = vsub.s32 %v1568, %v1570
    %v1572 = vrot.slane %v1556, %v1571
    %v1574 = vunpack.c.l.s4 1966171168
    %v1575 = vunpack.c.0.s8 %v1574
    %v1576 = vlaneseq
    %v1577 = vshrl.u32 %v1576, 7
    %v1578 = vsub.s32 %v1575, %v1577
    %v1579 = vrot.slane %v1557, %v1578
    %v1581 = vunpack.c.l.s4 1966171168
    %v1582 = vunpack.c.0.s8 %v1581
    %v1583 = vlaneseq
    %v1584 = vshrl.u32 %v1583, 7
    %v1585 = vsub.s32 %v1582, %v1584
    %v1586 = vrot.slane %v1558, %v1585
    %v1587 = vcombine.high %v1565, %v1565
    %v1588 = vcombine.high %v1572, %v1572
    %v1589 = vcombine.high %v1579, %v1579
    %v1590 = vcombine.high %v1586, %v1586
    %v1591 = vcombine.high %v30, %v30
    %v1593 = vunpack.c.l.s4 1966171168
    %v1594 = vunpack.c.0.s8 %v1593
    %v1595 = vlaneseq
    %v1596 = vshrl.u32 %v1595, 7
    %v1597 = vsub.s32 %v1594, %v1596
    %v1598 = vrot.slane %v30, %v1597
    %v1600 = vunpack.c.l.s4 1966171168
    %v1601 = vunpack.c.0.s8 %v1600
    %v1602 = vlaneseq
    %v1603 = vshrl.u32 %v1602, 7
    %v1604 = vsub.s32 %v1601, %v1603
    %v1605 = vrot.slane %v1591, %v1604
    %v1606 = vcombine.high %v1598, %v1598
    %v1607 = vcombine.high %v1605, %v1605
    %v1609 = vunpack.c.l.s4 1966171168
    %v1610 = vunpack.c.0.s8 %v1609
    %v1611 = vlaneseq
    %v1612 = vshrl.u32 %v1611, 7
    %v1613 = vsub.s32 %v1610, %v1612
    %v1614 = vrot.slane %v1598, %v1613
    %v1616 = vunpack.c.l.s4 1966171168
    %v1617 = vunpack.c.0.s8 %v1616
    %v1618 = vlaneseq
    %v1619 = vshrl.u32 %v1618, 7
    %v1620 = vsub.s32 %v1617, %v1619
    %v1621 = vrot.slane %v1605, %v1620
    %v1623 = vunpack.c.l.s4 1966171168
    %v1624 = vunpack.c.0.s8 %v1623
    %v1625 = vlaneseq
    %v1626 = vshrl.u32 %v1625, 7
    %v1627 = vsub.s32 %v1624, %v1626
    %v1628 = vrot.slane %v1606, %v1627
    %v1630 = vunpack.c.l.s4 1966171168
    %v1631 = vunpack.c.0.s8 %v1630
    %v1632 = vlaneseq
    %v1633 = vshrl.u32 %v1632, 7
    %v1634 = vsub.s32 %v1631, %v1633
    %v1635 = vrot.slane %v1607, %v1634
    %v1636 = vcombine.high %v1614, %v1614
    %v1637 = vcombine.high %v1621, %v1621
    %v1638 = vcombine.high %v1628, %v1628
    %v1639 = vcombine.high %v1635, %v1635
    %v2864 = vunpack.c.l.b16 %v31
    %v2865 = vunpack.c.l.b16 %v32
    %v2866 = vunpack.c.l.b16 %v33
    %v2867 = vunpack.c.l.b16 %v34
    %v2868 = vunpack.c.l.b16 %v35
    %v2869 = vunpack.c.l.b16 %v36
    %v2870 = vunpack.c.l.b16 %v37
    %v2871 = vunpack.c.l.b16 %v38
    %v2872 = vunpack.c.l.b16 %v39
    %v2873 = vunpack.c.l.b16 %v40
    %v2874 = vunpack.c.l.b16 %v41
    %v2875 = vunpack.c.l.b16 %v42
    %v2876 = vunpack.c.l.b16 %v43
    %v2877 = vunpack.c.l.b16 %v44
    %v2878 = vunpack.c.l.b16 %v45
    %v2879 = vunpack.c.l.b16 %v46
    %v2880 = vunpack.c.l.b16 %v47
    %v2881 = vunpack.c.l.b16 %v48
    %v2882 = vunpack.c.l.b16 %v49
    %v2883 = vunpack.c.l.b16 %v50
    %v2884 = vunpack.c.l.b16 %v51
    %v2885 = vunpack.c.l.b16 %v52
    %v2886 = vunpack.c.l.b16 %v53
    %v2887 = vunpack.c.l.b16 %v54
    %v2888 = vunpack.c.l.b16 %v55
    %v2889 = vunpack.c.l.b16 %v56
    %v2890 = vunpack.c.l.b16 %v57
    %v2891 = vunpack.c.l.b16 %v58
    %v2892 = vunpack.c.l.b16 %v59
    %v2893 = vunpack.c.l.b16 %v60
    %v2894 = vunpack.c.l.b16 %v61
    %v2895 = vunpack.c.l.b16 %v62
    %v2896 = vunpack.c.l.b16 %v63
    %v2897 = vunpack.c.l.b16 %v64
    %v2898 = vunpack.c.l.b16 %v65
    %v2899 = vunpack.c.l.b16 %v66
    %v2900 = vunpack.c.l.b16 %v67
    %v2901 = vunpack.c.l.b16 %v68
    %v2902 = vunpack.c.l.b16 %v69
    %v2903 = vunpack.c.l.b16 %v70
    %v2904 = vunpack.c.l.b16 %v71
    %v2905 = vunpack.c.l.b16 %v72
    %v2906 = vunpack.c.l.b16 %v73
    %v2907 = vunpack.c.l.b16 %v74
    %v2908 = vunpack.c.l.b16 %v75
    %v2909 = vunpack.c.l.b16 %v76
    %v2910 = vunpack.c.l.b16 %v77
    %v2911 = vunpack.c.l.b16 %v78
    %v2912 = vunpack.c.l.b16 %v79
    %v2913 = vunpack.c.l.b16 %v80
    %v2914 = vunpack.c.l.b16 %v81
    %v2915 = vunpack.c.l.b16 %v82
    %v2916 = vunpack.c.l.b16 %v83
    %v2917 = vunpack.c.l.b16 %v84
    %v2918 = vunpack.c.l.b16 %v85
    %v2919 = vunpack.c.l.b16 %v86
    %v2920 = vunpack.c.l.b16 %v87
    %v2921 = vunpack.c.l.b16 %v88
    %v2922 = vunpack.c.l.b16 %v89
    %v2923 = vunpack.c.l.b16 %v90
    %v2924 = vunpack.c.l.b16 %v91
    %v2925 = vunpack.c.l.b16 %v92
    %v2926 = vunpack.c.l.b16 %v93
    %v2927 = vunpack.c.l.b16 %v94
    %v2928 = vunpack.c.l.b16 %v95
    %v2929 = vunpack.c.l.b16 %v96
    %v2930 = vunpack.c.l.b16 %v97
    %v2931 = vunpack.c.l.b16 %v98
    %v2932 = vunpack.c.l.b16 %v99
    %v2933 = vunpack.c.l.b16 %v100
    %v2934 = vunpack.c.l.b16 %v101
    %v2935 = vunpack.c.l.b16 %v102
    %v2936 = vunpack.c.l.b16 %v103
    %v2937 = vunpack.c.l.b16 %v104
    %v2938 = vunpack.c.l.b16 %v105
    %v2939 = vunpack.c.l.b16 %v106
    %v2940 = vunpack.c.l.b16 %v107
    %v2941 = vunpack.c.l.b16 %v108
    %v2942 = vunpack.c.l.b16 %v109
    %v2943 = vunpack.c.l.b16 %v110
    %v2944 = vunpack.c.l.b16 %v111
    %v2945 = vunpack.c.l.b16 %v112
    %v2946 = vunpack.c.l.b16 %v113
    %v2947 = vunpack.c.l.b16 %v114
    %v2948 = vunpack.c.l.b16 %v115
    %v2949 = vunpack.c.l.b16 %v116
    %v2950 = vunpack.c.l.b16 %v117
    %v2951 = vunpack.c.l.b16 %v118
    %v2952 = vunpack.c.l.b16 %v119
    %v2953 = vunpack.c.l.b16 %v120
    %v2954 = vunpack.c.l.b16 %v121
    %v2955 = vunpack.c.l.b16 %v122
    %v2956 = vunpack.c.l.b16 %v123
    %v2957 = vunpack.c.l.b16 %v124
    %v2958 = vunpack.c.l.b16 %v125
    %v2959 = vunpack.c.l.b16 %v126
    %v2960 = vunpack.c.l.b16 %v127
    %v2961 = vunpack.c.l.b16 %v128
    %v2962 = vunpack.c.l.b16 %v129
    %v2963 = vunpack.c.l.b16 %v130
    %v2964 = vunpack.c.l.b16 %v131
    %v2965 = vunpack.c.l.b16 %v132
    %v2966 = vunpack.c.l.b16 %v133
    %v2967 = vunpack.c.l.b16 %v134
    %v2968 = vunpack.c.l.b16 %v135
    %v2969 = vunpack.c.l.b16 %v136
    %v2970 = vunpack.c.l.b16 %v137
    %v2971 = vunpack.c.l.b16 %v138
    %v2972 = vunpack.c.l.b16 %v139
    %v2973 = vunpack.c.l.b16 %v140
    %v2974 = vunpack.c.l.b16 %v141
    %v2975 = vunpack.c.l.b16 %v142
    %v2976 = vunpack.c.l.b16 %v143
    %v2977 = vunpack.c.l.b16 %v144
    %v2978 = vunpack.c.l.b16 %v145
    %v2979 = vunpack.c.l.b16 %v146
    %v2980 = vunpack.c.l.b16 %v147
    %v2981 = vunpack.c.l.b16 %v148
    %v2982 = vunpack.c.l.b16 %v149
    %v2983 = vunpack.c.l.b16 %v150
    %v2984 = vunpack.c.l.b16 %v151
    %v2985 = vunpack.c.l.b16 %v152
    %v2986 = vunpack.c.l.b16 %v153
    %v2987 = vunpack.c.l.b16 %v154
    %v2988 = vunpack.c.l.b16 %v155
    %v2989 = vunpack.c.l.b16 %v156
    %v2990 = vunpack.c.l.b16 %v157
    %v2991 = vunpack.c.l.b16 %v158
    %v2992 = vunpack.c.l.b16 %v159
    %v2993 = vunpack.c.l.b16 %v160
    %v2994 = vunpack.c.l.b16 %v161
    %v2995 = vunpack.c.l.b16 %v162
    %v2996 = vunpack.c.l.b16 %v163
    %v2997 = vunpack.c.l.b16 %v164
    %v2998 = vunpack.c.l.b16 %v165
    %v2999 = vunpack.c.l.b16 %v166
    %v3000 = vunpack.c.l.b16 %v167
    %v3001 = vunpack.c.l.b16 %v168
    %v3002 = vunpack.c.l.b16 %v169
    %v3003 = vunpack.c.l.b16 %v170
    %v3004 = vunpack.c.l.b16 %v171
    %v3005 = vunpack.c.l.b16 %v172
    %v3006 = vunpack.c.l.b16 %v173
    %v3007 = vunpack.c.l.b16 %v174
    %v3008 = vunpack.c.l.b16 %v175
    %v3009 = vunpack.c.l.b16 %v176
    %v3010 = vunpack.c.l.b16 %v177
    %v3011 = vunpack.c.l.b16 %v178
    %v3012 = vunpack.c.l.b16 %v179
    %v3013 = vunpack.c.l.b16 %v180
    %v3014 = vunpack.c.l.b16 %v181
    %v3015 = vunpack.c.l.b16 %v182
    %v3016 = vunpack.c.l.b16 %v183
    %v3017 = vunpack.c.l.b16 %v184
    %v3018 = vunpack.c.l.b16 %v185
    %v3019 = vunpack.c.l.b16 %v186
    %v3020 = vunpack.c.l.b16 %v187
    %v3021 = vunpack.c.l.b16 %v188
    %v3022 = vunpack.c.l.b16 %v189
    %v3023 = vunpack.c.l.b16 %v190
    %v3024 = vunpack.c.l.b16 %v191
    %v3025 = vunpack.c.l.b16 %v192
    %v3026 = vunpack.c.l.b16 %v193
    %v3027 = vunpack.c.l.b16 %v194
    %v3028 = vunpack.c.l.b16 %v195
    %v3029 = vunpack.c.l.b16 %v196
    %v3030 = vunpack.c.l.b16 %v197
    %v3031 = vunpack.c.l.b16 %v198
    %v3032 = vunpack.c.l.b16 %v199
    %v3033 = vunpack.c.l.b16 %v200
    %v3034 = vunpack.c.l.b16 %v201
    %v3035 = vunpack.c.l.b16 %v202
    %v3036 = vunpack.c.l.b16 %v203
    %v3037 = vunpack.c.l.b16 %v204
    %v3038 = vunpack.c.l.b16 %v205
    %v3039 = vunpack.c.l.b16 %v206
    %v3040 = vunpack.c.l.b16 %v207
    %v3041 = vunpack.c.l.b16 %v208
    %v3042 = vunpack.c.l.b16 %v209
    %v3043 = vunpack.c.l.b16 %v210
    %v3044 = vunpack.c.l.b16 %v211
    %v3045 = vunpack.c.l.b16 %v212
    %v3046 = vunpack.c.l.b16 %v213
    %v3047 = vunpack.c.l.b16 %v214
    %v3048 = vunpack.c.l.b16 %v215
    %v3049 = vunpack.c.l.b16 %v216
    %v3050 = vunpack.c.l.b16 %v217
    %v3051 = vunpack.c.l.b16 %v218
    %v3052 = vunpack.c.l.b16 %v219
    %v3053 = vunpack.c.l.b16 %v220
    %v3054 = vunpack.c.l.b16 %v221
    %v3055 = vunpack.c.l.b16 %v222
    %v3056 = vunpack.c.l.b16 %v223
    %v3057 = vunpack.c.l.b16 %v224
    %v3058 = vunpack.c.l.b16 %v225
    %v3059 = vunpack.c.l.b16 %v226
    %v3060 = vunpack.c.l.b16 %v227
    %v3061 = vunpack.c.l.b16 %v228
    %v3062 = vunpack.c.l.b16 %v229
    %v3063 = vunpack.c.l.b16 %v230
    %v3064 = vunpack.c.l.b16 %v231
    %v3065 = vunpack.c.l.b16 %v232
    %v3066 = vunpack.c.l.b16 %v233
    %v3067 = vunpack.c.l.b16 %v234
    %v3068 = vunpack.c.l.b16 %v235
    %v3069 = vunpack.c.l.b16 %v236
    %v3070 = vunpack.c.l.b16 %v237
    %v3071 = vunpack.c.l.b16 %v238
    %v3072 = vunpack.c.l.b16 %v239
    %v3073 = vunpack.c.l.b16 %v240
    %v3074 = vunpack.c.l.b16 %v241
    %v3075 = vunpack.c.l.b16 %v242
    %v3076 = vunpack.c.l.b16 %v243
    %v3077 = vunpack.c.l.b16 %v244
    %v3078 = vunpack.c.l.b16 %v245
    %v3079 = vunpack.c.l.b16 %v246
    %v3080 = vunpack.c.l.b16 %v247
    %v3081 = vunpack.c.l.b16 %v248
    %v3082 = vunpack.c.l.b16 %v249
    %v3083 = vunpack.c.l.b16 %v250
    %v3084 = vunpack.c.l.b16 %v251
    %v3085 = vunpack.c.l.b16 %v252
    %v3086 = vunpack.c.l.b16 %v253
    %v3087 = vunpack.c.l.b16 %v254
    %v3088 = vunpack.c.l.b16 %v255
    %v3089 = vunpack.c.l.b16 %v256
    %v3090 = vunpack.c.l.b16 %v257
    %v3091 = vunpack.c.l.b16 %v258
    %v3092 = vunpack.c.l.b16 %v259
    %v3093 = vunpack.c.l.b16 %v260
    %v3094 = vunpack.c.l.b16 %v261
    %v3095 = vunpack.c.l.b16 %v262
    %v3096 = vunpack.c.l.b16 %v263
    %v3097 = vunpack.c.l.b16 %v264
    %v3098 = vunpack.c.l.b16 %v265
    %v3099 = vunpack.c.l.b16 %v266
    %v3100 = vunpack.c.l.b16 %v267
    %v3101 = vunpack.c.l.b16 %v268
    %v3102 = vunpack.c.l.b16 %v269
    %v3103 = vunpack.c.l.b16 %v270
    %v3104 = vunpack.c.l.b16 %v271
    %v3105 = vunpack.c.l.b16 %v272
    %v3106 = vunpack.c.l.b16 %v273
    %v3107 = vunpack.c.l.b16 %v274
    %v3108 = vunpack.c.l.b16 %v275
    %v3109 = vunpack.c.l.b16 %v276
    %v3110 = vunpack.c.l.b16 %v277
    %v3111 = vunpack.c.l.b16 %v278
    %v3112 = vunpack.c.l.b16 %v279
    %v3113 = vunpack.c.l.b16 %v280
    %v3114 = vunpack.c.l.b16 %v281
    %v3115 = vunpack.c.l.b16 %v282
    %v3116 = vunpack.c.l.b16 %v283
    %v3117 = vunpack.c.l.b16 %v284
    %v3118 = vunpack.c.l.b16 %v285
    %v3119 = vunpack.c.l.b16 %v286
    %v3120 = vunpack.c.l.b16 %v287
    %v3121 = vunpack.c.l.b16 %v288
    %v3122 = vunpack.c.l.b16 %v289
    %v3123 = vunpack.c.l.b16 %v290
    %v3124 = vunpack.c.l.b16 %v291
    %v3125 = vunpack.c.l.b16 %v292
    %v3126 = vunpack.c.l.b16 %v293
    %v3127 = vunpack.c.l.b16 %v294
    %v3128 = vunpack.c.l.b16 %v295
    %v3129 = vunpack.c.l.b16 %v296
    %v3130 = vunpack.c.l.b16 %v297
    %v3131 = vunpack.c.l.b16 %v298
    %v3132 = vunpack.c.l.b16 %v299
    %v3133 = vunpack.c.l.b16 %v300
    %v3134 = vunpack.c.l.b16 %v301
    %v3135 = vunpack.c.l.b16 %v302
    %v3136 = vunpack.c.l.b16 %v303
    %v3137 = vunpack.c.l.b16 %v304
    %v3138 = vunpack.c.l.b16 %v305
    %v3139 = vunpack.c.l.b16 %v306
    %v3140 = vunpack.c.l.b16 %v307
    %v3141 = vunpack.c.l.b16 %v308
    %v3142 = vunpack.c.l.b16 %v309
    %v3143 = vunpack.c.l.b16 %v310
    %v3144 = vunpack.c.l.b16 %v311
    %v3145 = vunpack.c.l.b16 %v312
    %v3146 = vunpack.c.l.b16 %v313
    %v3147 = vunpack.c.l.b16 %v314
    %v3148 = vunpack.c.l.b16 %v315
    %v3149 = vunpack.c.l.b16 %v316
    %v3150 = vunpack.c.l.b16 %v317
    %v3151 = vunpack.c.l.b16 %v318
    %v3152 = vunpack.c.l.b16 %v319
    %v3153 = vunpack.c.l.b16 %v320
    %v3154 = vunpack.c.l.b16 %v321
    %v3155 = vunpack.c.l.b16 %v322
    %v3156 = vunpack.c.l.b16 %v323
    %v3157 = vunpack.c.l.b16 %v324
    %v3158 = vunpack.c.l.b16 %v325
    %v3159 = vunpack.c.l.b16 %v326
    %v3160 = vunpack.c.l.b16 %v327
    %v3161 = vunpack.c.l.b16 %v328
    %v3162 = vunpack.c.l.b16 %v329
    %v3163 = vunpack.c.l.b16 %v330
    %v3164 = vunpack.c.l.b16 %v331
    %v3165 = vunpack.c.l.b16 %v332
    %v3166 = vunpack.c.l.b16 %v333
    %v3167 = vunpack.c.l.b16 %v334
    %v3168 = vunpack.c.l.b16 %v335
    %v3169 = vunpack.c.l.b16 %v336
    %v3170 = vunpack.c.l.b16 %v337
    %v3171 = vunpack.c.l.b16 %v338
    %v3172 = vunpack.c.l.b16 %v339
    %v3173 = vunpack.c.l.b16 %v340
    %v3174 = vunpack.c.l.b16 %v341
    %v3175 = vunpack.c.l.b16 %v342
    %v3176 = vunpack.c.l.b16 %v343
    %v3177 = vunpack.c.l.b16 %v344
    %v3178 = vunpack.c.l.b16 %v345
    %v3179 = vunpack.c.l.b16 %v346
    %v3180 = vunpack.c.l.b16 %v347
    %v3181 = vunpack.c.l.b16 %v348
    %v3182 = vunpack.c.l.b16 %v349
    %v3183 = vunpack.c.l.b16 %v350
    %v3184 = vunpack.c.l.b16 %v351
    %v3185 = vunpack.c.l.b16 %v352
    %v3186 = vunpack.c.l.b16 %v353
    %v3187 = vunpack.c.l.b16 %v354
    %v3188 = vunpack.c.l.b16 %v355
    %v3189 = vunpack.c.l.b16 %v356
    %v3190 = vunpack.c.l.b16 %v357
    %v3191 = vunpack.c.l.b16 %v358
    %v3192 = vunpack.c.l.b16 %v359
    %v3193 = vunpack.c.l.b16 %v360
    %v3194 = vunpack.c.l.b16 %v361
    %v3195 = vunpack.c.l.b16 %v362
    %v3196 = vunpack.c.l.b16 %v363
    %v3197 = vunpack.c.l.b16 %v364
    %v3198 = vunpack.c.l.b16 %v365
    %v3199 = vunpack.c.l.b16 %v366
    %v3200 = vunpack.c.l.b16 %v367
    %v3201 = vunpack.c.l.b16 %v368
    %v3202 = vunpack.c.l.b16 %v369
    %v3203 = vunpack.c.l.b16 %v370
    %v3204 = vunpack.c.l.b16 %v371
    %v3205 = vunpack.c.l.b16 %v372
    %v3206 = vunpack.c.l.b16 %v373
    %v3207 = vunpack.c.l.b16 %v374
    %v3208 = vunpack.c.l.b16 %v375
    %v3209 = vunpack.c.l.b16 %v376
    %v3210 = vunpack.c.l.b16 %v377
    %v3211 = vunpack.c.l.b16 %v378
    %v3212 = vunpack.c.l.b16 %v379
    %v3213 = vunpack.c.l.b16 %v380
    %v3214 = vunpack.c.l.b16 %v381
    %v3215 = vunpack.c.l.b16 %v382
    %v3216 = vunpack.c.l.b16 %v383
    %v3217 = vunpack.c.l.b16 %v384
    %v3218 = vunpack.c.l.b16 %v385
    %v3219 = vunpack.c.l.b16 %v386
    %v3220 = vunpack.c.l.b16 %v387
    %v3221 = vunpack.c.l.b16 %v388
    %v3222 = vunpack.c.l.b16 %v389
    %v3223 = vunpack.c.l.b16 %v390
    %v3224 = vunpack.c.l.b16 %v391
    %v3225 = vunpack.c.l.b16 %v392
    %v3226 = vunpack.c.l.b16 %v393
    %v3227 = vunpack.c.l.b16 %v394
    %v3228 = vunpack.c.l.b16 %v395
    %v3229 = vunpack.c.l.b16 %v396
    %v3230 = vunpack.c.l.b16 %v397
    %v3231 = vunpack.c.l.b16 %v398
    %v3232 = vunpack.c.l.b16 %v399
    %v3233 = vunpack.c.l.b16 %v400
    %v3234 = vunpack.c.l.b16 %v401
    %v3235 = vunpack.c.l.b16 %v402
    %v3236 = vunpack.c.l.b16 %v403
    %v3237 = vunpack.c.l.b16 %v404
    %v3238 = vunpack.c.l.b16 %v405
    %v3239 = vunpack.c.l.b16 %v406
    %v3240 = vunpack.c.l.b16 %v407
    %v3241 = vunpack.c.l.b16 %v408
    %v3242 = vunpack.c.l.b16 %v409
    %v3243 = vunpack.c.l.b16 %v410
    %v3244 = vunpack.c.l.b16 %v411
    %v3245 = vunpack.c.l.b16 %v412
    %v3246 = vunpack.c.l.b16 %v413
    %v3247 = vunpack.c.l.b16 %v414
    %v3248 = vunpack.c.l.b16 %v415
    %v3249 = vunpack.c.l.b16 %v416
    %v3250 = vunpack.c.l.b16 %v417
    %v3251 = vunpack.c.l.b16 %v418
    %v3252 = vunpack.c.l.b16 %v419
    %v3253 = vunpack.c.l.b16 %v420
    %v3254 = vunpack.c.l.b16 %v421
    %v3255 = vunpack.c.l.b16 %v422
    %v3256 = vunpack.c.l.b16 %v423
    %v3257 = vunpack.c.l.b16 %v424
    %v3258 = vunpack.c.l.b16 %v425
    %v3259 = vunpack.c.l.b16 %v426
    %v3260 = vunpack.c.l.b16 %v427
    %v3261 = vunpack.c.l.b16 %v428
    %v3262 = vunpack.c.l.b16 %v429
    %v3263 = vunpack.c.l.b16 %v430
    %v3264 = vunpack.c.l.b16 %v431
    %v3265 = vunpack.c.l.b16 %v432
    %v3266 = vunpack.c.l.b16 %v433
    %v3267 = vunpack.c.l.b16 %v434
    %v3268 = vunpack.c.l.b16 %v435
    %v3269 = vunpack.c.l.b16 %v436
    %v3270 = vunpack.c.l.b16 %v437
    %v3271 = vunpack.c.l.b16 %v438
    %v3272 = vunpack.c.l.b16 %v439
    %v3273 = vunpack.c.l.b16 %v440
    %v3274 = vunpack.c.l.b16 %v441
    %v3275 = vunpack.c.l.b16 %v442
    %v3276 = vunpack.c.l.b16 %v443
    %v3277 = vunpack.c.l.b16 %v444
    %v3278 = vunpack.c.l.b16 %v445
    %v3279 = vunpack.c.l.b16 %v446
    %v3280 = vunpack.c.l.b16 %v447
    %v3281 = vunpack.c.l.b16 %v448
    %v3282 = vunpack.c.l.b16 %v449
    %v3283 = vunpack.c.l.b16 %v450
    %v3284 = vunpack.c.l.b16 %v451
    %v3285 = vunpack.c.l.b16 %v452
    %v3286 = vunpack.c.l.b16 %v453
    %v3287 = vunpack.c.l.b16 %v454
    %v3288 = vunpack.c.l.b16 %v455
    %v3289 = vunpack.c.l.b16 %v456
    %v3290 = vunpack.c.l.b16 %v457
    %v3291 = vunpack.c.l.b16 %v458
    %v3292 = vunpack.c.l.b16 %v459
    %v3293 = vunpack.c.l.b16 %v460
    %v3294 = vunpack.c.l.b16 %v461
    %v3295 = vunpack.c.l.b16 %v462
    %v3296 = vunpack.c.l.b16 %v463
    %v3297 = vunpack.c.l.b16 %v464
    %v3298 = vunpack.c.l.b16 %v465
    %v3299 = vunpack.c.l.b16 %v466
    %v3300 = vunpack.c.l.b16 %v467
    %v3301 = vunpack.c.l.b16 %v468
    %v3302 = vunpack.c.l.b16 %v469
    %v3303 = vunpack.c.l.b16 %v470
    %v3304 = vunpack.c.l.b16 %v471
    %v3305 = vunpack.c.l.b16 %v472
    %v3306 = vunpack.c.l.b16 %v473
    %v3307 = vunpack.c.l.b16 %v474
    %v3308 = vunpack.c.l.b16 %v475
    %v3309 = vunpack.c.l.b16 %v476
    %v3310 = vunpack.c.l.b16 %v477
    %v3311 = vunpack.c.l.b16 %v478
    %v3312 = vunpack.c.l.b16 %v479
    %v3313 = vunpack.c.l.b16 %v480
    %v3314 = vunpack.c.l.b16 %v481
    %v3315 = vunpack.c.l.b16 %v482
    %v3316 = vunpack.c.l.b16 %v483
    %v3317 = vunpack.c.l.b16 %v484
    %v3318 = vunpack.c.l.b16 %v485
    %v3319 = vunpack.c.l.b16 %v486
    %v3320 = vunpack.c.l.b16 %v487
    %v3321 = vunpack.c.l.b16 %v488
    %v3322 = vunpack.c.l.b16 %v489
    %v3323 = vunpack.c.l.b16 %v490
    %v3324 = vunpack.c.l.b16 %v491
    %v3325 = vunpack.c.l.b16 %v492
    %v3326 = vunpack.c.l.b16 %v493
    %v3327 = vunpack.c.l.b16 %v494
    %v3328 = vunpack.c.l.b16 %v495
    %v3329 = vunpack.c.l.b16 %v496
    %v3330 = vunpack.c.l.b16 %v497
    %v3331 = vunpack.c.l.b16 %v498
    %v3332 = vunpack.c.l.b16 %v499
    %v3333 = vunpack.c.l.b16 %v500
    %v3334 = vunpack.c.l.b16 %v501
    %v3335 = vunpack.c.l.b16 %v502
    %v3336 = vunpack.c.l.b16 %v503
    %v3337 = vunpack.c.l.b16 %v504
    %v3338 = vunpack.c.l.b16 %v505
    %v3339 = vunpack.c.l.b16 %v506
    %v3340 = vunpack.c.l.b16 %v507
    %v3341 = vunpack.c.l.b16 %v508
    %v3342 = vunpack.c.l.b16 %v509
    %v3343 = vunpack.c.l.b16 %v510
    %v3344 = vunpack.c.l.b16 %v511
    %v3345 = vunpack.c.l.b16 %v512
    %v3346 = vunpack.c.l.b16 %v513
    %v3347 = vunpack.c.l.b16 %v514
    %v3348 = vunpack.c.l.b16 %v515
    %v3349 = vunpack.c.l.b16 %v516
    %v3350 = vunpack.c.l.b16 %v517
    %v3351 = vunpack.c.l.b16 %v518
    %v3352 = vunpack.c.l.b16 %v519
    %v3353 = vunpack.c.l.b16 %v520
    %v3354 = vunpack.c.l.b16 %v521
    %v3355 = vunpack.c.l.b16 %v522
    %v3356 = vunpack.c.l.b16 %v523
    %v3357 = vunpack.c.l.b16 %v524
    %v3358 = vunpack.c.l.b16 %v525
    %v3359 = vunpack.c.l.b16 %v526
    %v3360 = vunpack.c.l.b16 %v527
    %v3361 = vunpack.c.l.b16 %v528
    %v3362 = vunpack.c.l.b16 %v529
    %v3363 = vunpack.c.l.b16 %v530
    %v3364 = vunpack.c.l.b16 %v531
    %v3365 = vunpack.c.l.b16 %v532
    %v3366 = vunpack.c.l.b16 %v533
    %v3367 = vunpack.c.l.b16 %v534
    %v3368 = vunpack.c.l.b16 %v535
    %v3369 = vunpack.c.l.b16 %v536
    %v3370 = vunpack.c.l.b16 %v537
    %v3371 = vunpack.c.l.b16 %v538
    %v3372 = vunpack.c.l.b16 %v539
    %v3373 = vunpack.c.l.b16 %v540
    %v3374 = vunpack.c.l.b16 %v541
    %v3375 = vunpack.c.l.b16 %v542
    %v3376 = vunpack.c.l.b16 %v543
    %v3377 = vunpack.c.l.b16 %v544
    %v3378 = vunpack.c.l.b16 %v545
    %v3379 = vunpack.c.l.b16 %v546
    %v3380 = vunpack.c.l.b16 %v547
    %v3381 = vunpack.c.l.b16 %v548
    %v3382 = vunpack.c.l.b16 %v549
    %v3383 = vunpack.c.l.b16 %v550
    %v3384 = vunpack.c.l.b16 %v551
    %v3385 = vunpack.c.l.b16 %v552
    %v3386 = vunpack.c.l.b16 %v553
    %v3387 = vunpack.c.l.b16 %v554
    %v3388 = vunpack.c.l.b16 %v555
    %v3389 = vunpack.c.l.b16 %v556
    %v3390 = vunpack.c.l.b16 %v557
    %v3391 = vunpack.c.l.b16 %v558
    %v3392 = vunpack.c.l.b16 %v559
    %v3393 = vunpack.c.l.b16 %v560
    %v3394 = vunpack.c.l.b16 %v561
    %v3395 = vunpack.c.l.b16 %v562
    %v3396 = vunpack.c.l.b16 %v563
    %v3397 = vunpack.c.l.b16 %v564
    %v3398 = vunpack.c.l.b16 %v565
    %v3399 = vunpack.c.l.b16 %v566
    %v3400 = vunpack.c.l.b16 %v567
    %v3401 = vunpack.c.l.b16 %v568
    %v3402 = vunpack.c.l.b16 %v569
    %v3403 = vunpack.c.l.b16 %v570
    %v3404 = vunpack.c.l.b16 %v571
    %v3405 = vunpack.c.l.b16 %v572
    %v3406 = vunpack.c.l.b16 %v573
    %v3407 = vunpack.c.l.b16 %v574
    %v3408 = vunpack.c.l.b16 %v575
    %v3409 = vunpack.c.l.b16 %v576
    %v3410 = vunpack.c.l.b16 %v577
    %v3411 = vunpack.c.l.b16 %v578
    %v3412 = vunpack.c.l.b16 %v579
    %v3413 = vunpack.c.l.b16 %v580
    %v3414 = vunpack.c.l.b16 %v581
    %v3415 = vunpack.c.l.b16 %v582
    %v3416 = vunpack.c.l.b16 %v583
    %v3417 = vunpack.c.l.b16 %v584
    %v3418 = vunpack.c.l.b16 %v585
    %v3419 = vunpack.c.l.b16 %v586
    %v3420 = vunpack.c.l.b16 %v587
    %v3421 = vunpack.c.l.b16 %v588
    %v3422 = vunpack.c.l.b16 %v589
    %v3423 = vunpack.c.l.b16 %v590
    %v3424 = vunpack.c.l.b16 %v591
    %v3425 = vunpack.c.l.b16 %v592
    %v3426 = vunpack.c.l.b16 %v593
    %v3427 = vunpack.c.l.b16 %v594
    %v3428 = vunpack.c.l.b16 %v595
    %v3429 = vunpack.c.l.b16 %v596
    %v3430 = vunpack.c.l.b16 %v597
    %v3431 = vunpack.c.l.b16 %v598
    %v3432 = vunpack.c.l.b16 %v599
    %v3433 = vunpack.c.l.b16 %v600
    %v3434 = vunpack.c.l.b16 %v601
    %v3435 = vunpack.c.l.b16 %v602
    %v3436 = vunpack.c.l.b16 %v603
    %v3437 = vunpack.c.l.b16 %v604
    %v3438 = vunpack.c.l.b16 %v605
    %v3439 = vunpack.c.l.b16 %v606
    %v3440 = vunpack.c.l.b16 %v607
    %v3441 = vunpack.c.l.b16 %v608
    %v3442 = vunpack.c.l.b16 %v609
    %v3443 = vunpack.c.l.b16 %v610
    %v3444 = vunpack.c.l.b16 %v611
    %v3445 = vunpack.c.l.b16 %v612
    %v3446 = vunpack.c.l.b16 %v613
    %v3447 = vunpack.c.l.b16 %v614
    %v3448 = vunpack.c.l.b16 %v615
    %v3449 = vunpack.c.l.b16 %v616
    %v3450 = vunpack.c.l.b16 %v617
    %v3451 = vunpack.c.l.b16 %v618
    %v3452 = vunpack.c.l.b16 %v619
    %v3453 = vunpack.c.l.b16 %v620
    %v3454 = vunpack.c.l.b16 %v621
    %v3455 = vunpack.c.l.b16 %v622
    %v3456 = vunpack.c.l.b16 %v623
    %v3457 = vunpack.c.l.b16 %v624
    %v3458 = vunpack.c.l.b16 %v625
    %v3459 = vunpack.c.l.b16 %v626
    %v3460 = vunpack.c.l.b16 %v627
    %v3461 = vunpack.c.l.b16 %v628
    %v3462 = vunpack.c.l.b16 %v629
    %v3463 = vunpack.c.l.b16 %v630
    %v3464 = vunpack.c.l.b16 %v631
    %v3465 = vunpack.c.l.b16 %v632
    %v3466 = vunpack.c.l.b16 %v633
    %v3467 = vunpack.c.l.b16 %v634
    %v3468 = vunpack.c.l.b16 %v635
    %v3469 = vunpack.c.l.b16 %v636
    %v3470 = vunpack.c.l.b16 %v637
    %v3471 = vunpack.c.l.b16 %v638
    %v3472 = vunpack.c.l.b16 %v639
    %v3473 = vunpack.c.l.b16 %v640
    %v3474 = vunpack.c.l.b16 %v641
    %v3475 = vunpack.c.l.b16 %v642
    %v3476 = vunpack.c.l.b16 %v643
    %v3477 = vunpack.c.l.b16 %v644
    %v3478 = vunpack.c.l.b16 %v645
    %v3479 = vunpack.c.l.b16 %v646
    %v3480 = vunpack.c.l.b16 %v647
    %v3481 = vunpack.c.l.b16 %v648
    %v3482 = vunpack.c.l.b16 %v649
    %v3483 = vunpack.c.l.b16 %v650
    %v3484 = vunpack.c.l.b16 %v651
    %v3485 = vunpack.c.l.b16 %v652
    %v3486 = vunpack.c.l.b16 %v653
    %v3487 = vunpack.c.l.b16 %v654
    %v3488 = vunpack.c.l.b16 %v655
    %v3489 = vunpack.c.l.b16 %v656
    %v3490 = vunpack.c.l.b16 %v657
    %v3491 = vunpack.c.l.b16 %v658
    %v3492 = vunpack.c.l.b16 %v659
    %v3493 = vunpack.c.l.b16 %v660
    %v3494 = vunpack.c.l.b16 %v661
    %v3495 = vunpack.c.l.b16 %v662
    %v3496 = vunpack.c.l.b16 %v663
    %v3497 = vunpack.c.l.b16 %v664
    %v3498 = vunpack.c.l.b16 %v665
    %v3499 = vunpack.c.l.b16 %v666
    %v3500 = vunpack.c.l.b16 %v667
    %v3501 = vunpack.c.l.b16 %v668
    %v3502 = vunpack.c.l.b16 %v669
    %v3503 = vunpack.c.l.b16 %v670
    %v3504 = vunpack.c.l.b16 %v671
    %v3505 = vunpack.c.l.b16 %v672
    %v3506 = vunpack.c.l.b16 %v673
    %v3507 = vunpack.c.l.b16 %v674
    %v3508 = vunpack.c.l.b16 %v675
    %v3509 = vunpack.c.l.b16 %v676
    %v3510 = vunpack.c.l.b16 %v677
    %v3511 = vunpack.c.l.b16 %v678
    %v3512 = vunpack.c.l.b16 %v679
    %v3513 = vunpack.c.l.b16 %v680
    %v3514 = vunpack.c.l.b16 %v681
    %v3515 = vunpack.c.l.b16 %v682
    %v3516 = vunpack.c.l.b16 %v683
    %v3517 = vunpack.c.l.b16 %v684
    %v3518 = vunpack.c.l.b16 %v685
    %v3519 = vunpack.c.l.b16 %v686
    %v3520 = vunpack.c.l.b16 %v687
    %v3521 = vunpack.c.l.b16 %v688
    %v3522 = vunpack.c.l.b16 %v689
    %v3523 = vunpack.c.l.b16 %v690
    %v3524 = vunpack.c.l.b16 %v691
    %v3525 = vunpack.c.l.b16 %v692
    %v3526 = vunpack.c.l.b16 %v693
    %v3527 = vunpack.c.l.b16 %v694
    %v3528 = vunpack.c.l.b16 %v695
    %v3529 = vunpack.c.l.b16 %v696
    %v3530 = vunpack.c.l.b16 %v697
    %v3531 = vunpack.c.l.b16 %v698
    %v3532 = vunpack.c.l.b16 %v699
    %v3533 = vunpack.c.l.b16 %v700
    %v3534 = vunpack.c.l.b16 %v701
    %v3535 = vunpack.c.l.b16 %v702
    %v3536 = vunpack.c.l.b16 %v703
    %v3537 = vunpack.c.l.b16 %v704
    %v3538 = vunpack.c.l.b16 %v705
    %v3539 = vunpack.c.l.b16 %v706
    %v3540 = vunpack.c.l.b16 %v707
    %v3541 = vunpack.c.l.b16 %v708
    %v3542 = vunpack.c.l.b16 %v709
    %v3543 = vunpack.c.l.b16 %v710
    %v3544 = vunpack.c.l.b16 %v711
    %v3545 = vunpack.c.l.b16 %v712
    %v3546 = vunpack.c.l.b16 %v713
    %v3547 = vunpack.c.l.b16 %v714
    %v3548 = vunpack.c.l.b16 %v715
    %v3549 = vunpack.c.l.b16 %v716
    %v3550 = vunpack.c.l.b16 %v717
    %v3551 = vunpack.c.l.b16 %v718
    %v3552 = vunpack.c.l.b16 %v719
    %v3553 = vunpack.c.l.b16 %v720
    %v3554 = vunpack.c.l.b16 %v721
    %v3555 = vunpack.c.l.b16 %v722
    %v3556 = vunpack.c.l.b16 %v723
    %v3557 = vunpack.c.l.b16 %v724
    %v3558 = vunpack.c.l.b16 %v725
    %v3559 = vunpack.c.l.b16 %v726
    %v3560 = vunpack.c.l.b16 %v727
    %v3561 = vunpack.c.l.b16 %v728
    %v3562 = vunpack.c.l.b16 %v729
    %v3563 = vunpack.c.l.b16 %v730
    %v3564 = vunpack.c.l.b16 %v731
    %v3565 = vunpack.c.l.b16 %v732
    %v3566 = vunpack.c.l.b16 %v733
    %v3567 = vunpack.c.l.b16 %v734
    %v3568 = vunpack.c.l.b16 %v735
    %v3569 = vunpack.c.l.b16 %v736
    %v3570 = vunpack.c.l.b16 %v737
    %v3571 = vunpack.c.l.b16 %v738
    %v3572 = vunpack.c.l.b16 %v739
    %v3573 = vunpack.c.l.b16 %v740
    %v3574 = vunpack.c.l.b16 %v741
    %v3575 = vunpack.c.l.b16 %v742
    %v3576 = vunpack.c.l.b16 %v743
    %v3577 = vunpack.c.l.b16 %v744
    %v3578 = vunpack.c.l.b16 %v745
    %v3579 = vunpack.c.l.b16 %v746
    %v3580 = vunpack.c.l.b16 %v747
    %v3581 = vunpack.c.l.b16 %v748
    %v3582 = vunpack.c.l.b16 %v749
    %v3583 = vunpack.c.l.b16 %v750
    %v3584 = vunpack.c.l.b16 %v751
    %v3585 = vunpack.c.l.b16 %v752
    %v3586 = vunpack.c.l.b16 %v753
    %v3587 = vunpack.c.l.b16 %v754
    %v3588 = vunpack.c.l.b16 %v755
    %v3589 = vunpack.c.l.b16 %v756
    %v3590 = vunpack.c.l.b16 %v757
    %v3591 = vunpack.c.l.b16 %v758
    %v3592 = vunpack.c.l.b16 %v759
    %v3593 = vunpack.c.l.b16 %v760
    %v3594 = vunpack.c.l.b16 %v761
    %v3595 = vunpack.c.l.b16 %v762
    %v3596 = vunpack.c.l.b16 %v763
    %v3597 = vunpack.c.l.b16 %v764
    %v3598 = vunpack.c.l.b16 %v765
    %v3599 = vunpack.c.l.b16 %v766
    %v3600 = vunpack.c.l.b16 %v767
    %v3601 = vunpack.c.l.b16 %v768
    %v3602 = vunpack.c.l.b16 %v769
    %v3603 = vunpack.c.l.b16 %v770
    %v3604 = vunpack.c.l.b16 %v771
    %v3605 = vunpack.c.l.b16 %v772
    %v3606 = vunpack.c.l.b16 %v773
    %v3607 = vunpack.c.l.b16 %v774
    %v3608 = vunpack.c.l.b16 %v775
    %v3609 = vunpack.c.l.b16 %v776
    %v3610 = vunpack.c.l.b16 %v777
    %v3611 = vunpack.c.l.b16 %v778
    %v3612 = vunpack.c.l.b16 %v779
    %v3613 = vunpack.c.l.b16 %v780
    %v3614 = vunpack.c.l.b16 %v781
    %v3615 = vunpack.c.l.b16 %v782
    %v3616 = vunpack.c.l.b16 %v783
    %v3617 = vunpack.c.l.b16 %v784
    %v3618 = vunpack.c.l.b16 %v785
    %v3619 = vunpack.c.l.b16 %v786
    %v3620 = vunpack.c.l.b16 %v787
    %v3621 = vunpack.c.l.b16 %v788
    %v3622 = vunpack.c.l.b16 %v789
    %v3623 = vunpack.c.l.b16 %v790
    %v3624 = vunpack.c.l.b16 %v791
    %v3625 = vunpack.c.l.b16 %v792
    %v3626 = vunpack.c.l.b16 %v793
    %v3627 = vunpack.c.l.b16 %v794
    %v3628 = vunpack.c.l.b16 %v795
    %v3629 = vunpack.c.l.b16 %v796
    %v3630 = vunpack.c.l.b16 %v797
    %v3631 = vunpack.c.l.b16 %v798
    %v3632 = vunpack.c.l.b16 %v799
    %v3633 = vunpack.c.l.b16 %v800
    %v3634 = vunpack.c.l.b16 %v801
    %v3635 = vunpack.c.l.b16 %v802
    %v3636 = vunpack.c.l.b16 %v803
    %v3637 = vunpack.c.l.b16 %v804
    %v3638 = vunpack.c.l.b16 %v805
    %v3639 = vunpack.c.l.b16 %v806
    %v3640 = vunpack.c.l.b16 %v807
    %v3641 = vunpack.c.l.b16 %v808
    %v3642 = vunpack.c.l.b16 %v809
    %v3643 = vunpack.c.l.b16 %v810
    %v3644 = vunpack.c.l.b16 %v811
    %v3645 = vunpack.c.l.b16 %v812
    %v3646 = vunpack.c.l.b16 %v813
    %v3647 = vunpack.c.l.b16 %v814
    %v3648 = vunpack.c.l.b16 %v815
    %v3649 = vunpack.c.l.b16 %v816
    %v3650 = vunpack.c.l.b16 %v817
    %v3651 = vunpack.c.l.b16 %v818
    %v3652 = vunpack.c.l.b16 %v819
    %v3653 = vunpack.c.l.b16 %v820
    %v3654 = vunpack.c.l.b16 %v821
    %v3655 = vunpack.c.l.b16 %v822
    %v3656 = vunpack.c.l.b16 %v823
    %v3657 = vunpack.c.l.b16 %v824
    %v3658 = vunpack.c.l.b16 %v825
    %v3659 = vunpack.c.l.b16 %v826
    %v3660 = vunpack.c.l.b16 %v827
    %v3661 = vunpack.c.l.b16 %v828
    %v3662 = vunpack.c.l.b16 %v829
    %v3663 = vunpack.c.l.b16 %v830
    %v3664 = vunpack.c.l.b16 %v831
    %v3665 = vunpack.c.l.b16 %v832
    %v3666 = vunpack.c.l.b16 %v833
    %v3667 = vunpack.c.l.b16 %v834
    %v3668 = vunpack.c.l.b16 %v835
    %v3669 = vunpack.c.l.b16 %v836
    %v3670 = vunpack.c.l.b16 %v837
    %v3671 = vunpack.c.l.b16 %v838
    %v3672 = vunpack.c.l.b16 %v839
    %v3673 = vunpack.c.l.b16 %v840
    %v3674 = vunpack.c.l.b16 %v841
    %v3675 = vunpack.c.l.b16 %v842
    %v3676 = vunpack.c.l.b16 %v843
    %v3677 = vunpack.c.l.b16 %v844
    %v3678 = vunpack.c.l.b16 %v845
    %v3679 = vunpack.c.l.b16 %v846
    %v3680 = vunpack.c.l.b16 %v847
    %v3681 = vunpack.c.l.b16 %v848
    %v3682 = vunpack.c.l.b16 %v849
    %v3683 = vunpack.c.l.b16 %v850
    %v3684 = vunpack.c.l.b16 %v851
    %v3685 = vunpack.c.l.b16 %v852
    %v3686 = vunpack.c.l.b16 %v853
    %v3687 = vunpack.c.l.b16 %v854
    %v3688 = vunpack.c.l.b16 %v855
    %v3689 = vunpack.c.l.b16 %v856
    %v3690 = vunpack.c.l.b16 %v857
    %v3691 = vunpack.c.l.b16 %v858
    %v3692 = vunpack.c.l.b16 %v859
    %v3693 = vunpack.c.l.b16 %v860
    %v3694 = vunpack.c.l.b16 %v861
    %v3695 = vunpack.c.l.b16 %v862
    %v3696 = vunpack.c.l.b16 %v863
    %v3697 = vunpack.c.l.b16 %v864
    %v3698 = vunpack.c.l.b16 %v865
    %v3699 = vunpack.c.l.b16 %v866
    %v3700 = vunpack.c.l.b16 %v867
    %v3701 = vunpack.c.l.b16 %v868
    %v3702 = vunpack.c.l.b16 %v869
    %v3703 = vunpack.c.l.b16 %v870
    %v3704 = vunpack.c.l.b16 %v871
    %v3705 = vunpack.c.l.b16 %v872
    %v3706 = vunpack.c.l.b16 %v873
    %v3707 = vunpack.c.l.b16 %v874
    %v3708 = vunpack.c.l.b16 %v875
    %v3709 = vunpack.c.l.b16 %v876
    %v3710 = vunpack.c.l.b16 %v877
    %v3711 = vunpack.c.l.b16 %v878
    %v3712 = vunpack.c.l.b16 %v879
    %v3713 = vunpack.c.l.b16 %v880
    %v3714 = vunpack.c.l.b16 %v881
    %v3715 = vunpack.c.l.b16 %v882
    %v3716 = vunpack.c.l.b16 %v883
    %v3717 = vunpack.c.l.b16 %v884
    %v3718 = vunpack.c.l.b16 %v885
    %v3719 = vunpack.c.l.b16 %v886
    %v3720 = vunpack.c.l.b16 %v887
    %v3721 = vunpack.c.l.b16 %v888
    %v3722 = vunpack.c.l.b16 %v889
    %v3723 = vunpack.c.l.b16 %v890
    %v3724 = vunpack.c.l.b16 %v891
    %v3725 = vunpack.c.l.b16 %v892
    %v3726 = vunpack.c.l.b16 %v893
    %v3727 = vunpack.c.l.b16 %v894
    %v3728 = vunpack.c.l.b16 %v895
    %v3729 = vunpack.c.l.b16 %v896
    %v3730 = vunpack.c.l.b16 %v897
    %v3731 = vunpack.c.l.b16 %v898
    %v3732 = vunpack.c.l.b16 %v899
    %v3733 = vunpack.c.l.b16 %v900
    %v3734 = vunpack.c.l.b16 %v901
    %v3735 = vunpack.c.l.b16 %v902
    %v3736 = vunpack.c.l.b16 %v903
    %v3737 = vunpack.c.l.b16 %v904
    %v3738 = vunpack.c.l.b16 %v905
    %v3739 = vunpack.c.l.b16 %v906
    %v3740 = vunpack.c.l.b16 %v907
    %v3741 = vunpack.c.l.b16 %v908
    %v3742 = vunpack.c.l.b16 %v909
    %v3743 = vunpack.c.l.b16 %v910
    %v3744 = vunpack.c.l.b16 %v911
    %v3745 = vunpack.c.l.b16 %v912
    %v3746 = vunpack.c.l.b16 %v913
    %v3747 = vunpack.c.l.b16 %v914
    %v3748 = vunpack.c.l.b16 %v915
    %v3749 = vunpack.c.l.b16 %v916
    %v3750 = vunpack.c.l.b16 %v917
    %v3751 = vunpack.c.l.b16 %v918
    %v3752 = vunpack.c.l.b16 %v919
    %v3753 = vunpack.c.l.b16 %v920
    %v3754 = vunpack.c.l.b16 %v921
    %v3755 = vunpack.c.l.b16 %v922
    %v3756 = vunpack.c.l.b16 %v923
    %v3757 = vunpack.c.l.b16 %v924
    %v3758 = vunpack.c.l.b16 %v925
    %v3759 = vunpack.c.l.b16 %v926
    %v3760 = vunpack.c.l.b16 %v927
    %v3761 = vunpack.c.l.b16 %v928
    %v3762 = vunpack.c.l.b16 %v929
    %v3763 = vunpack.c.l.b16 %v930
    %v3764 = vunpack.c.l.b16 %v931
    %v3765 = vunpack.c.l.b16 %v932
    %v3766 = vunpack.c.l.b16 %v933
    %v3767 = vunpack.c.l.b16 %v934
    %v3768 = vunpack.c.l.b16 %v935
    %v3769 = vunpack.c.l.b16 %v936
    %v3770 = vunpack.c.l.b16 %v937
    %v3771 = vunpack.c.l.b16 %v938
    %v3772 = vunpack.c.l.b16 %v939
    %v3773 = vunpack.c.l.b16 %v940
    %v3774 = vunpack.c.l.b16 %v941
    %v3775 = vunpack.c.l.b16 %v942
    %v3776 = vunpack.c.l.b16 %v943
    %v3777 = vunpack.c.l.b16 %v944
    %v3778 = vunpack.c.l.b16 %v945
    %v3779 = vunpack.c.l.b16 %v946
    %v3780 = vunpack.c.l.b16 %v947
    %v3781 = vunpack.c.l.b16 %v948
    %v3782 = vunpack.c.l.b16 %v949
    %v3783 = vunpack.c.l.b16 %v950
    %v3784 = vunpack.c.l.b16 %v951
    %v3785 = vunpack.c.l.b16 %v952
    %v3786 = vunpack.c.l.b16 %v953
    %v3787 = vunpack.c.l.b16 %v954
    %v3788 = vunpack.c.l.b16 %v955
    %v3789 = vunpack.c.l.b16 %v956
    %v3790 = vunpack.c.l.b16 %v957
    %v3791 = vunpack.c.l.b16 %v958
    %v3792 = vunpack.c.l.b16 %v959
    %v3793 = vunpack.c.l.b16 %v960
    %v3794 = vunpack.c.l.b16 %v961
    %v3795 = vunpack.c.l.b16 %v962
    %v3796 = vunpack.c.l.b16 %v963
    %v3797 = vunpack.c.l.b16 %v964
    %v3798 = vunpack.c.l.b16 %v965
    %v3799 = vunpack.c.l.b16 %v966
    %v3800 = vunpack.c.l.b16 %v967
    %v3801 = vunpack.c.l.b16 %v968
    %v3802 = vunpack.c.l.b16 %v969
    %v3803 = vunpack.c.l.b16 %v970
    %v3804 = vunpack.c.l.b16 %v971
    %v3805 = vunpack.c.l.b16 %v972
    %v3806 = vunpack.c.l.b16 %v973
    %v3807 = vunpack.c.l.b16 %v974
    %v3808 = vunpack.c.l.b16 %v975
    %v3809 = vunpack.c.l.b16 %v976
    %v3810 = vunpack.c.l.b16 %v977
    %v3811 = vunpack.c.l.b16 %v978
    %v3812 = vunpack.c.l.b16 %v979
    %v3813 = vunpack.c.l.b16 %v980
    %v3814 = vunpack.c.l.b16 %v981
    %v3815 = vunpack.c.l.b16 %v982
    %v3816 = vunpack.c.l.b16 %v983
    %v3817 = vunpack.c.l.b16 %v984
    %v3818 = vunpack.c.l.b16 %v985
    %v3819 = vunpack.c.l.b16 %v986
    %v3820 = vunpack.c.l.b16 %v987
    %v3821 = vunpack.c.l.b16 %v988
    %v3822 = vunpack.c.l.b16 %v989
    %v3823 = vunpack.c.l.b16 %v990
    %v3824 = vunpack.c.l.b16 %v991
    %v3825 = vunpack.c.l.b16 %v992
    %v3826 = vunpack.c.l.b16 %v993
    %v3827 = vunpack.c.l.b16 %v994
    %v3828 = vunpack.c.l.b16 %v995
    %v3829 = vunpack.c.l.b16 %v996
    %v3830 = vunpack.c.l.b16 %v997
    %v3831 = vunpack.c.l.b16 %v998
    %v3832 = vunpack.c.l.b16 %v999
    %v3833 = vunpack.c.l.b16 %v1000
    %v3834 = vunpack.c.l.b16 %v1001
    %v3835 = vunpack.c.l.b16 %v1002
    %v3836 = vunpack.c.l.b16 %v1003
    %v3837 = vunpack.c.l.b16 %v1004
    %v3838 = vunpack.c.l.b16 %v1005
    %v3839 = vunpack.c.l.b16 %v1006
    %v3840 = vunpack.c.l.b16 %v1007
    %v3841 = vunpack.c.l.b16 %v1008
    %v3842 = vunpack.c.l.b16 %v1009
    %v3843 = vunpack.c.l.b16 %v1010
    %v3844 = vunpack.c.l.b16 %v1011
    %v3845 = vunpack.c.l.b16 %v1012
    %v3846 = vunpack.c.l.b16 %v1013
    %v3847 = vunpack.c.l.b16 %v1014
    %v3848 = vunpack.c.l.b16 %v1015
    %v3849 = vunpack.c.l.b16 %v1016
    %v3850 = vunpack.c.l.b16 %v1017
    %v3851 = vunpack.c.l.b16 %v1018
    %v3852 = vunpack.c.l.b16 %v1019
    %v3853 = vunpack.c.l.b16 %v1020
    %v3854 = vunpack.c.l.b16 %v1021
    %v3855 = vunpack.c.l.b16 %v1022
    %v3856 = vunpack.c.l.b16 %v1023
    %v3857 = vunpack.c.l.b16 %v1024
    %v3858 = vunpack.c.l.b16 %v1025
    %v3859 = vunpack.c.l.b16 %v1026
    %v3860 = vunpack.c.l.b16 %v1027
    %v3861 = vunpack.c.l.b16 %v1028
    %v3862 = vunpack.c.l.b16 %v1029
    %v3863 = vunpack.c.l.b16 %v1030
    %v3864 = vunpack.c.l.b16 %v1031
    %v3865 = vunpack.c.l.b16 %v1032
    %v3866 = vunpack.c.l.b16 %v1033
    %v3867 = vunpack.c.l.b16 %v1034
    %v3868 = vunpack.c.l.b16 %v1035
    %v3869 = vunpack.c.l.b16 %v1036
    %v3870 = vunpack.c.l.b16 %v1037
    %v3871 = vunpack.c.l.b16 %v1038
    %v3872 = vunpack.c.l.b16 %v1039
    %v3873 = vunpack.c.l.b16 %v1040
    %v3874 = vunpack.c.l.b16 %v1041
    %v3875 = vunpack.c.l.b16 %v1042
    %v3876 = vunpack.c.l.b16 %v1043
    %v3877 = vunpack.c.l.b16 %v1044
    %v3878 = vunpack.c.l.b16 %v1045
    %v3879 = vunpack.c.l.b16 %v1046
    %v3880 = vunpack.c.l.b16 %v1047
    %v3881 = vunpack.c.l.b16 %v1048
    %v3882 = vunpack.c.l.b16 %v1049
    %v3883 = vunpack.c.l.b16 %v1050
    %v3884 = vunpack.c.l.b16 %v1051
    %v3885 = vunpack.c.l.b16 %v1052
    %v3886 = vunpack.c.l.b16 %v1053
    %v3887 = vunpack.c.l.b16 %v1054
    %v3888 = vunpack.c.l.b16 %v1055
    %v3889 = vunpack.c.l.b16 %v1056
    %v3890 = vunpack.c.l.b16 %v1057
    %v3891 = vunpack.c.l.b16 %v1058
    %v3892 = vunpack.c.l.b16 %v1059
    %v3893 = vunpack.c.l.b16 %v1060
    %v3894 = vunpack.c.l.b16 %v1061
    %v3895 = vunpack.c.l.b16 %v1062
    %v3896 = vunpack.c.l.b16 %v1063
    %v3897 = vunpack.c.l.b16 %v1064
    %v3898 = vunpack.c.l.b16 %v1065
    %v3899 = vunpack.c.l.b16 %v1066
    %v3900 = vunpack.c.l.b16 %v1067
    %v3901 = vunpack.c.l.b16 %v1068
    %v3902 = vunpack.c.l.b16 %v1069
    %v3903 = vunpack.c.l.b16 %v1070
    %v3904 = vunpack.c.l.b16 %v1071
    %v3905 = vunpack.c.l.b16 %v1072
    %v3906 = vunpack.c.l.b16 %v1073
    %v3907 = vunpack.c.l.b16 %v1074
    %v3908 = vunpack.c.l.b16 %v1075
    %v3909 = vunpack.c.l.b16 %v1076
    %v3910 = vunpack.c.l.b16 %v1077
    %v3911 = vunpack.c.l.b16 %v1078
    %v3912 = vunpack.c.l.b16 %v1079
    %v3913 = vunpack.c.l.b16 %v1080
    %v3914 = vunpack.c.l.b16 %v1081
    %v3915 = vunpack.c.l.b16 %v1082
    %v3916 = vunpack.c.l.b16 %v1083
    %v3917 = vunpack.c.l.b16 %v1084
    %v3918 = vunpack.c.l.b16 %v1085
    %v3919 = vunpack.c.l.b16 %v1086
    %v3920 = vunpack.c.l.b16 %v1087
    %v3921 = vunpack.c.l.b16 %v1088
    %v3922 = vunpack.c.l.b16 %v1089
    %v3923 = vunpack.c.l.b16 %v1090
    %v3924 = vunpack.c.l.b16 %v1091
    %v3925 = vunpack.c.l.b16 %v1092
    %v3926 = vunpack.c.l.b16 %v1093
    %v3927 = vunpack.c.l.b16 %v1094
    %v3928 = vunpack.c.l.b16 %v1095
    %v3929 = vunpack.c.l.b16 %v1096
    %v3930 = vunpack.c.l.b16 %v1097
    %v3931 = vunpack.c.l.b16 %v1098
    %v3932 = vunpack.c.l.b16 %v1099
    %v3933 = vunpack.c.l.b16 %v1100
    %v3934 = vunpack.c.l.b16 %v1101
    %v3935 = vunpack.c.l.b16 %v1102
    %v3936 = vunpack.c.l.b16 %v1103
    %v3937 = vunpack.c.l.b16 %v1104
    %v3938 = vunpack.c.l.b16 %v1105
    %v3939 = vunpack.c.l.b16 %v1106
    %v3940 = vunpack.c.l.b16 %v1107
    %v3941 = vunpack.c.l.b16 %v1108
    %v3942 = vunpack.c.l.b16 %v1109
    %v3943 = vunpack.c.l.b16 %v1110
    %v3944 = vunpack.c.l.b16 %v1111
    %v3945 = vunpack.c.l.b16 %v1112
    %v3946 = vunpack.c.l.b16 %v1113
    %v3947 = vunpack.c.l.b16 %v1114
    %v3948 = vunpack.c.l.b16 %v1115
    %v3949 = vunpack.c.l.b16 %v1116
    %v3950 = vunpack.c.l.b16 %v1117
    %v3951 = vunpack.c.l.b16 %v1118
    %v3952 = vunpack.c.l.b16 %v1119
    %v3953 = vunpack.c.l.b16 %v1120
    %v3954 = vunpack.c.l.b16 %v1121
    %v3955 = vunpack.c.l.b16 %v1122
    %v3956 = vunpack.c.l.b16 %v1123
    %v3957 = vunpack.c.l.b16 %v1124
    %v3958 = vunpack.c.l.b16 %v1125
    %v3959 = vunpack.c.l.b16 %v1126
    %v3960 = vunpack.c.l.b16 %v1127
    %v3961 = vunpack.c.l.b16 %v1128
    %v3962 = vunpack.c.l.b16 %v1129
    %v3963 = vunpack.c.l.b16 %v1130
    %v3964 = vunpack.c.l.b16 %v1131
    %v3965 = vunpack.c.l.b16 %v1132
    %v3966 = vunpack.c.l.b16 %v1133
    %v3967 = vunpack.c.l.b16 %v1134
    %v3968 = vunpack.c.l.b16 %v1135
    %v3969 = vunpack.c.l.b16 %v1136
    %v3970 = vunpack.c.l.b16 %v1137
    %v3971 = vunpack.c.l.b16 %v1138
    %v3972 = vunpack.c.l.b16 %v1139
    %v3973 = vunpack.c.l.b16 %v1140
    %v3974 = vunpack.c.l.b16 %v1141
    %v3975 = vunpack.c.l.b16 %v1142
    %v3976 = vunpack.c.l.b16 %v1143
    %v3977 = vunpack.c.l.b16 %v1144
    %v3978 = vunpack.c.l.b16 %v1145
    %v3979 = vunpack.c.l.b16 %v1146
    %v3980 = vunpack.c.l.b16 %v1147
    %v3981 = vunpack.c.l.b16 %v1148
    %v3982 = vunpack.c.l.b16 %v1149
    %v3983 = vunpack.c.l.b16 %v1150
    %v3984 = vunpack.c.l.b16 %v1151
    %v3985 = vunpack.c.l.b16 %v1152
    %v3986 = vunpack.c.l.b16 %v1153
    %v3987 = vunpack.c.l.b16 %v1154
    %v3988 = vunpack.c.l.b16 %v1155
    %v3989 = vunpack.c.l.b16 %v1156
    %v3990 = vunpack.c.l.b16 %v1157
    %v3991 = vunpack.c.l.b16 %v1158
    %v3992 = vunpack.c.l.b16 %v1159
    %v3993 = vunpack.c.l.b16 %v1160
    %v3994 = vunpack.c.l.b16 %v1161
    %v3995 = vunpack.c.l.b16 %v1162
    %v3996 = vunpack.c.l.b16 %v1163
    %v3997 = vunpack.c.l.b16 %v1164
    %v3998 = vunpack.c.l.b16 %v1165
    %v3999 = vunpack.c.l.b16 %v1166
    %v4000 = vunpack.c.l.b16 %v1167
    %v4001 = vunpack.c.l.b16 %v1168
    %v4002 = vunpack.c.l.b16 %v1169
    %v4003 = vunpack.c.l.b16 %v1170
    %v4004 = vunpack.c.l.b16 %v1171
    %v4005 = vunpack.c.l.b16 %v1172
    %v4006 = vunpack.c.l.b16 %v1173
    %v4007 = vunpack.c.l.b16 %v1174
    %v4008 = vunpack.c.l.b16 %v1175
    %v4009 = vunpack.c.l.b16 %v1176
    %v4010 = vunpack.c.l.b16 %v1177
    %v4011 = vunpack.c.l.b16 %v1178
    %v4012 = vunpack.c.l.b16 %v1179
    %v4013 = vunpack.c.l.b16 %v1180
    %v4014 = vunpack.c.l.b16 %v1181
    %v4015 = vunpack.c.l.b16 %v1182
    %v4016 = vpack.c.b16 %v2865, %v2864
    %v4017 = vpack.c.b16 %v2867, %v2866
    %v4018 = vpack.c.b16 %v2869, %v2868
    %v4019 = vpack.c.b16 %v2871, %v2870
    %v4020 = vpack.c.b16 %v2873, %v2872
    %v4021 = vpack.c.b16 %v2875, %v2874
    %v4022 = vpack.c.b16 %v2877, %v2876
    %v4023 = vpack.c.b16 %v2879, %v2878
    %v4024 = vpack.c.b16 %v2881, %v2880
    %v4025 = vpack.c.b16 %v2883, %v2882
    %v4026 = vpack.c.b16 %v2885, %v2884
    %v4027 = vpack.c.b16 %v2887, %v2886
    %v4028 = vpack.c.b16 %v2889, %v2888
    %v4029 = vpack.c.b16 %v2891, %v2890
    %v4030 = vpack.c.b16 %v2893, %v2892
    %v4031 = vpack.c.b16 %v2895, %v2894
    %v4032 = vpack.c.b16 %v2897, %v2896
    %v4033 = vpack.c.b16 %v2899, %v2898
    %v4034 = vpack.c.b16 %v2901, %v2900
    %v4035 = vpack.c.b16 %v2903, %v2902
    %v4036 = vpack.c.b16 %v2905, %v2904
    %v4037 = vpack.c.b16 %v2907, %v2906
    %v4038 = vpack.c.b16 %v2909, %v2908
    %v4039 = vpack.c.b16 %v2911, %v2910
    %v4040 = vpack.c.b16 %v2913, %v2912
    %v4041 = vpack.c.b16 %v2915, %v2914
    %v4042 = vpack.c.b16 %v2917, %v2916
    %v4043 = vpack.c.b16 %v2919, %v2918
    %v4044 = vpack.c.b16 %v2921, %v2920
    %v4045 = vpack.c.b16 %v2923, %v2922
    %v4046 = vpack.c.b16 %v2925, %v2924
    %v4047 = vpack.c.b16 %v2927, %v2926
    %v4048 = vpack.c.b16 %v2929, %v2928
    %v4049 = vpack.c.b16 %v2931, %v2930
    %v4050 = vpack.c.b16 %v2933, %v2932
    %v4051 = vpack.c.b16 %v2935, %v2934
    %v4052 = vpack.c.b16 %v2937, %v2936
    %v4053 = vpack.c.b16 %v2939, %v2938
    %v4054 = vpack.c.b16 %v2941, %v2940
    %v4055 = vpack.c.b16 %v2943, %v2942
    %v4056 = vpack.c.b16 %v2945, %v2944
    %v4057 = vpack.c.b16 %v2947, %v2946
    %v4058 = vpack.c.b16 %v2949, %v2948
    %v4059 = vpack.c.b16 %v2951, %v2950
    %v4060 = vpack.c.b16 %v2953, %v2952
    %v4061 = vpack.c.b16 %v2955, %v2954
    %v4062 = vpack.c.b16 %v2957, %v2956
    %v4063 = vpack.c.b16 %v2959, %v2958
    %v4064 = vpack.c.b16 %v2961, %v2960
    %v4065 = vpack.c.b16 %v2963, %v2962
    %v4066 = vpack.c.b16 %v2965, %v2964
    %v4067 = vpack.c.b16 %v2967, %v2966
    %v4068 = vpack.c.b16 %v2969, %v2968
    %v4069 = vpack.c.b16 %v2971, %v2970
    %v4070 = vpack.c.b16 %v2973, %v2972
    %v4071 = vpack.c.b16 %v2975, %v2974
    %v4072 = vpack.c.b16 %v2977, %v2976
    %v4073 = vpack.c.b16 %v2979, %v2978
    %v4074 = vpack.c.b16 %v2981, %v2980
    %v4075 = vpack.c.b16 %v2983, %v2982
    %v4076 = vpack.c.b16 %v2985, %v2984
    %v4077 = vpack.c.b16 %v2987, %v2986
    %v4078 = vpack.c.b16 %v2989, %v2988
    %v4079 = vpack.c.b16 %v2991, %v2990
    %v4080 = vpack.c.b16 %v2993, %v2992
    %v4081 = vpack.c.b16 %v2995, %v2994
    %v4082 = vpack.c.b16 %v2997, %v2996
    %v4083 = vpack.c.b16 %v2999, %v2998
    %v4084 = vpack.c.b16 %v3001, %v3000
    %v4085 = vpack.c.b16 %v3003, %v3002
    %v4086 = vpack.c.b16 %v3005, %v3004
    %v4087 = vpack.c.b16 %v3007, %v3006
    %v4088 = vpack.c.b16 %v3009, %v3008
    %v4089 = vpack.c.b16 %v3011, %v3010
    %v4090 = vpack.c.b16 %v3013, %v3012
    %v4091 = vpack.c.b16 %v3015, %v3014
    %v4092 = vpack.c.b16 %v3017, %v3016
    %v4093 = vpack.c.b16 %v3019, %v3018
    %v4094 = vpack.c.b16 %v3021, %v3020
    %v4095 = vpack.c.b16 %v3023, %v3022
    %v4096 = vpack.c.b16 %v3025, %v3024
    %v4097 = vpack.c.b16 %v3027, %v3026
    %v4098 = vpack.c.b16 %v3029, %v3028
    %v4099 = vpack.c.b16 %v3031, %v3030
    %v4100 = vpack.c.b16 %v3033, %v3032
    %v4101 = vpack.c.b16 %v3035, %v3034
    %v4102 = vpack.c.b16 %v3037, %v3036
    %v4103 = vpack.c.b16 %v3039, %v3038
    %v4104 = vpack.c.b16 %v3041, %v3040
    %v4105 = vpack.c.b16 %v3043, %v3042
    %v4106 = vpack.c.b16 %v3045, %v3044
    %v4107 = vpack.c.b16 %v3047, %v3046
    %v4108 = vpack.c.b16 %v3049, %v3048
    %v4109 = vpack.c.b16 %v3051, %v3050
    %v4110 = vpack.c.b16 %v3053, %v3052
    %v4111 = vpack.c.b16 %v3055, %v3054
    %v4112 = vpack.c.b16 %v3057, %v3056
    %v4113 = vpack.c.b16 %v3059, %v3058
    %v4114 = vpack.c.b16 %v3061, %v3060
    %v4115 = vpack.c.b16 %v3063, %v3062
    %v4116 = vpack.c.b16 %v3065, %v3064
    %v4117 = vpack.c.b16 %v3067, %v3066
    %v4118 = vpack.c.b16 %v3069, %v3068
    %v4119 = vpack.c.b16 %v3071, %v3070
    %v4120 = vpack.c.b16 %v3073, %v3072
    %v4121 = vpack.c.b16 %v3075, %v3074
    %v4122 = vpack.c.b16 %v3077, %v3076
    %v4123 = vpack.c.b16 %v3079, %v3078
    %v4124 = vpack.c.b16 %v3081, %v3080
    %v4125 = vpack.c.b16 %v3083, %v3082
    %v4126 = vpack.c.b16 %v3085, %v3084
    %v4127 = vpack.c.b16 %v3087, %v3086
    %v4128 = vpack.c.b16 %v3089, %v3088
    %v4129 = vpack.c.b16 %v3091, %v3090
    %v4130 = vpack.c.b16 %v3093, %v3092
    %v4131 = vpack.c.b16 %v3095, %v3094
    %v4132 = vpack.c.b16 %v3097, %v3096
    %v4133 = vpack.c.b16 %v3099, %v3098
    %v4134 = vpack.c.b16 %v3101, %v3100
    %v4135 = vpack.c.b16 %v3103, %v3102
    %v4136 = vpack.c.b16 %v3105, %v3104
    %v4137 = vpack.c.b16 %v3107, %v3106
    %v4138 = vpack.c.b16 %v3109, %v3108
    %v4139 = vpack.c.b16 %v3111, %v3110
    %v4140 = vpack.c.b16 %v3113, %v3112
    %v4141 = vpack.c.b16 %v3115, %v3114
    %v4142 = vpack.c.b16 %v3117, %v3116
    %v4143 = vpack.c.b16 %v3119, %v3118
    %v4144 = vpack.c.b16 %v3121, %v3120
    %v4145 = vpack.c.b16 %v3123, %v3122
    %v4146 = vpack.c.b16 %v3125, %v3124
    %v4147 = vpack.c.b16 %v3127, %v3126
    %v4148 = vpack.c.b16 %v3129, %v3128
    %v4149 = vpack.c.b16 %v3131, %v3130
    %v4150 = vpack.c.b16 %v3133, %v3132
    %v4151 = vpack.c.b16 %v3135, %v3134
    %v4152 = vpack.c.b16 %v3137, %v3136
    %v4153 = vpack.c.b16 %v3139, %v3138
    %v4154 = vpack.c.b16 %v3141, %v3140
    %v4155 = vpack.c.b16 %v3143, %v3142
    %v4156 = vpack.c.b16 %v3145, %v3144
    %v4157 = vpack.c.b16 %v3147, %v3146
    %v4158 = vpack.c.b16 %v3149, %v3148
    %v4159 = vpack.c.b16 %v3151, %v3150
    %v4160 = vpack.c.b16 %v3153, %v3152
    %v4161 = vpack.c.b16 %v3155, %v3154
    %v4162 = vpack.c.b16 %v3157, %v3156
    %v4163 = vpack.c.b16 %v3159, %v3158
    %v4164 = vpack.c.b16 %v3161, %v3160
    %v4165 = vpack.c.b16 %v3163, %v3162
    %v4166 = vpack.c.b16 %v3165, %v3164
    %v4167 = vpack.c.b16 %v3167, %v3166
    %v4168 = vpack.c.b16 %v3169, %v3168
    %v4169 = vpack.c.b16 %v3171, %v3170
    %v4170 = vpack.c.b16 %v3173, %v3172
    %v4171 = vpack.c.b16 %v3175, %v3174
    %v4172 = vpack.c.b16 %v3177, %v3176
    %v4173 = vpack.c.b16 %v3179, %v3178
    %v4174 = vpack.c.b16 %v3181, %v3180
    %v4175 = vpack.c.b16 %v3183, %v3182
    %v4176 = vpack.c.b16 %v3185, %v3184
    %v4177 = vpack.c.b16 %v3187, %v3186
    %v4178 = vpack.c.b16 %v3189, %v3188
    %v4179 = vpack.c.b16 %v3191, %v3190
    %v4180 = vpack.c.b16 %v3193, %v3192
    %v4181 = vpack.c.b16 %v3195, %v3194
    %v4182 = vpack.c.b16 %v3197, %v3196
    %v4183 = vpack.c.b16 %v3199, %v3198
    %v4184 = vpack.c.b16 %v3201, %v3200
    %v4185 = vpack.c.b16 %v3203, %v3202
    %v4186 = vpack.c.b16 %v3205, %v3204
    %v4187 = vpack.c.b16 %v3207, %v3206
    %v4188 = vpack.c.b16 %v3209, %v3208
    %v4189 = vpack.c.b16 %v3211, %v3210
    %v4190 = vpack.c.b16 %v3213, %v3212
    %v4191 = vpack.c.b16 %v3215, %v3214
    %v4192 = vpack.c.b16 %v3217, %v3216
    %v4193 = vpack.c.b16 %v3219, %v3218
    %v4194 = vpack.c.b16 %v3221, %v3220
    %v4195 = vpack.c.b16 %v3223, %v3222
    %v4196 = vpack.c.b16 %v3225, %v3224
    %v4197 = vpack.c.b16 %v3227, %v3226
    %v4198 = vpack.c.b16 %v3229, %v3228
    %v4199 = vpack.c.b16 %v3231, %v3230
    %v4200 = vpack.c.b16 %v3233, %v3232
    %v4201 = vpack.c.b16 %v3235, %v3234
    %v4202 = vpack.c.b16 %v3237, %v3236
    %v4203 = vpack.c.b16 %v3239, %v3238
    %v4204 = vpack.c.b16 %v3241, %v3240
    %v4205 = vpack.c.b16 %v3243, %v3242
    %v4206 = vpack.c.b16 %v3245, %v3244
    %v4207 = vpack.c.b16 %v3247, %v3246
    %v4208 = vpack.c.b16 %v3249, %v3248
    %v4209 = vpack.c.b16 %v3251, %v3250
    %v4210 = vpack.c.b16 %v3253, %v3252
    %v4211 = vpack.c.b16 %v3255, %v3254
    %v4212 = vpack.c.b16 %v3257, %v3256
    %v4213 = vpack.c.b16 %v3259, %v3258
    %v4214 = vpack.c.b16 %v3261, %v3260
    %v4215 = vpack.c.b16 %v3263, %v3262
    %v4216 = vpack.c.b16 %v3265, %v3264
    %v4217 = vpack.c.b16 %v3267, %v3266
    %v4218 = vpack.c.b16 %v3269, %v3268
    %v4219 = vpack.c.b16 %v3271, %v3270
    %v4220 = vpack.c.b16 %v3273, %v3272
    %v4221 = vpack.c.b16 %v3275, %v3274
    %v4222 = vpack.c.b16 %v3277, %v3276
    %v4223 = vpack.c.b16 %v3279, %v3278
    %v4224 = vpack.c.b16 %v3281, %v3280
    %v4225 = vpack.c.b16 %v3283, %v3282
    %v4226 = vpack.c.b16 %v3285, %v3284
    %v4227 = vpack.c.b16 %v3287, %v3286
    %v4228 = vpack.c.b16 %v3289, %v3288
    %v4229 = vpack.c.b16 %v3291, %v3290
    %v4230 = vpack.c.b16 %v3293, %v3292
    %v4231 = vpack.c.b16 %v3295, %v3294
    %v4232 = vpack.c.b16 %v3297, %v3296
    %v4233 = vpack.c.b16 %v3299, %v3298
    %v4234 = vpack.c.b16 %v3301, %v3300
    %v4235 = vpack.c.b16 %v3303, %v3302
    %v4236 = vpack.c.b16 %v3305, %v3304
    %v4237 = vpack.c.b16 %v3307, %v3306
    %v4238 = vpack.c.b16 %v3309, %v3308
    %v4239 = vpack.c.b16 %v3311, %v3310
    %v4240 = vpack.c.b16 %v3313, %v3312
    %v4241 = vpack.c.b16 %v3315, %v3314
    %v4242 = vpack.c.b16 %v3317, %v3316
    %v4243 = vpack.c.b16 %v3319, %v3318
    %v4244 = vpack.c.b16 %v3321, %v3320
    %v4245 = vpack.c.b16 %v3323, %v3322
    %v4246 = vpack.c.b16 %v3325, %v3324
    %v4247 = vpack.c.b16 %v3327, %v3326
    %v4248 = vpack.c.b16 %v3329, %v3328
    %v4249 = vpack.c.b16 %v3331, %v3330
    %v4250 = vpack.c.b16 %v3333, %v3332
    %v4251 = vpack.c.b16 %v3335, %v3334
    %v4252 = vpack.c.b16 %v3337, %v3336
    %v4253 = vpack.c.b16 %v3339, %v3338
    %v4254 = vpack.c.b16 %v3341, %v3340
    %v4255 = vpack.c.b16 %v3343, %v3342
    %v4256 = vpack.c.b16 %v3345, %v3344
    %v4257 = vpack.c.b16 %v3347, %v3346
    %v4258 = vpack.c.b16 %v3349, %v3348
    %v4259 = vpack.c.b16 %v3351, %v3350
    %v4260 = vpack.c.b16 %v3353, %v3352
    %v4261 = vpack.c.b16 %v3355, %v3354
    %v4262 = vpack.c.b16 %v3357, %v3356
    %v4263 = vpack.c.b16 %v3359, %v3358
    %v4264 = vpack.c.b16 %v3361, %v3360
    %v4265 = vpack.c.b16 %v3363, %v3362
    %v4266 = vpack.c.b16 %v3365, %v3364
    %v4267 = vpack.c.b16 %v3367, %v3366
    %v4268 = vpack.c.b16 %v3369, %v3368
    %v4269 = vpack.c.b16 %v3371, %v3370
    %v4270 = vpack.c.b16 %v3373, %v3372
    %v4271 = vpack.c.b16 %v3375, %v3374
    %v4272 = vpack.c.b16 %v3377, %v3376
    %v4273 = vpack.c.b16 %v3379, %v3378
    %v4274 = vpack.c.b16 %v3381, %v3380
    %v4275 = vpack.c.b16 %v3383, %v3382
    %v4276 = vpack.c.b16 %v3385, %v3384
    %v4277 = vpack.c.b16 %v3387, %v3386
    %v4278 = vpack.c.b16 %v3389, %v3388
    %v4279 = vpack.c.b16 %v3391, %v3390
    %v4280 = vpack.c.b16 %v3393, %v3392
    %v4281 = vpack.c.b16 %v3395, %v3394
    %v4282 = vpack.c.b16 %v3397, %v3396
    %v4283 = vpack.c.b16 %v3399, %v3398
    %v4284 = vpack.c.b16 %v3401, %v3400
    %v4285 = vpack.c.b16 %v3403, %v3402
    %v4286 = vpack.c.b16 %v3405, %v3404
    %v4287 = vpack.c.b16 %v3407, %v3406
    %v4288 = vpack.c.b16 %v3409, %v3408
    %v4289 = vpack.c.b16 %v3411, %v3410
    %v4290 = vpack.c.b16 %v3413, %v3412
    %v4291 = vpack.c.b16 %v3415, %v3414
    %v4292 = vpack.c.b16 %v3417, %v3416
    %v4293 = vpack.c.b16 %v3419, %v3418
    %v4294 = vpack.c.b16 %v3421, %v3420
    %v4295 = vpack.c.b16 %v3423, %v3422
    %v4296 = vpack.c.b16 %v3425, %v3424
    %v4297 = vpack.c.b16 %v3427, %v3426
    %v4298 = vpack.c.b16 %v3429, %v3428
    %v4299 = vpack.c.b16 %v3431, %v3430
    %v4300 = vpack.c.b16 %v3433, %v3432
    %v4301 = vpack.c.b16 %v3435, %v3434
    %v4302 = vpack.c.b16 %v3437, %v3436
    %v4303 = vpack.c.b16 %v3439, %v3438
    %v4304 = vpack.c.b16 %v3441, %v3440
    %v4305 = vpack.c.b16 %v3443, %v3442
    %v4306 = vpack.c.b16 %v3445, %v3444
    %v4307 = vpack.c.b16 %v3447, %v3446
    %v4308 = vpack.c.b16 %v3449, %v3448
    %v4309 = vpack.c.b16 %v3451, %v3450
    %v4310 = vpack.c.b16 %v3453, %v3452
    %v4311 = vpack.c.b16 %v3455, %v3454
    %v4312 = vpack.c.b16 %v3457, %v3456
    %v4313 = vpack.c.b16 %v3459, %v3458
    %v4314 = vpack.c.b16 %v3461, %v3460
    %v4315 = vpack.c.b16 %v3463, %v3462
    %v4316 = vpack.c.b16 %v3465, %v3464
    %v4317 = vpack.c.b16 %v3467, %v3466
    %v4318 = vpack.c.b16 %v3469, %v3468
    %v4319 = vpack.c.b16 %v3471, %v3470
    %v4320 = vpack.c.b16 %v3473, %v3472
    %v4321 = vpack.c.b16 %v3475, %v3474
    %v4322 = vpack.c.b16 %v3477, %v3476
    %v4323 = vpack.c.b16 %v3479, %v3478
    %v4324 = vpack.c.b16 %v3481, %v3480
    %v4325 = vpack.c.b16 %v3483, %v3482
    %v4326 = vpack.c.b16 %v3485, %v3484
    %v4327 = vpack.c.b16 %v3487, %v3486
    %v4328 = vpack.c.b16 %v3489, %v3488
    %v4329 = vpack.c.b16 %v3491, %v3490
    %v4330 = vpack.c.b16 %v3493, %v3492
    %v4331 = vpack.c.b16 %v3495, %v3494
    %v4332 = vpack.c.b16 %v3497, %v3496
    %v4333 = vpack.c.b16 %v3499, %v3498
    %v4334 = vpack.c.b16 %v3501, %v3500
    %v4335 = vpack.c.b16 %v3503, %v3502
    %v4336 = vpack.c.b16 %v3505, %v3504
    %v4337 = vpack.c.b16 %v3507, %v3506
    %v4338 = vpack.c.b16 %v3509, %v3508
    %v4339 = vpack.c.b16 %v3511, %v3510
    %v4340 = vpack.c.b16 %v3513, %v3512
    %v4341 = vpack.c.b16 %v3515, %v3514
    %v4342 = vpack.c.b16 %v3517, %v3516
    %v4343 = vpack.c.b16 %v3519, %v3518
    %v4344 = vpack.c.b16 %v3521, %v3520
    %v4345 = vpack.c.b16 %v3523, %v3522
    %v4346 = vpack.c.b16 %v3525, %v3524
    %v4347 = vpack.c.b16 %v3527, %v3526
    %v4348 = vpack.c.b16 %v3529, %v3528
    %v4349 = vpack.c.b16 %v3531, %v3530
    %v4350 = vpack.c.b16 %v3533, %v3532
    %v4351 = vpack.c.b16 %v3535, %v3534
    %v4352 = vpack.c.b16 %v3537, %v3536
    %v4353 = vpack.c.b16 %v3539, %v3538
    %v4354 = vpack.c.b16 %v3541, %v3540
    %v4355 = vpack.c.b16 %v3543, %v3542
    %v4356 = vpack.c.b16 %v3545, %v3544
    %v4357 = vpack.c.b16 %v3547, %v3546
    %v4358 = vpack.c.b16 %v3549, %v3548
    %v4359 = vpack.c.b16 %v3551, %v3550
    %v4360 = vpack.c.b16 %v3553, %v3552
    %v4361 = vpack.c.b16 %v3555, %v3554
    %v4362 = vpack.c.b16 %v3557, %v3556
    %v4363 = vpack.c.b16 %v3559, %v3558
    %v4364 = vpack.c.b16 %v3561, %v3560
    %v4365 = vpack.c.b16 %v3563, %v3562
    %v4366 = vpack.c.b16 %v3565, %v3564
    %v4367 = vpack.c.b16 %v3567, %v3566
    %v4368 = vpack.c.b16 %v3569, %v3568
    %v4369 = vpack.c.b16 %v3571, %v3570
    %v4370 = vpack.c.b16 %v3573, %v3572
    %v4371 = vpack.c.b16 %v3575, %v3574
    %v4372 = vpack.c.b16 %v3577, %v3576
    %v4373 = vpack.c.b16 %v3579, %v3578
    %v4374 = vpack.c.b16 %v3581, %v3580
    %v4375 = vpack.c.b16 %v3583, %v3582
    %v4376 = vpack.c.b16 %v3585, %v3584
    %v4377 = vpack.c.b16 %v3587, %v3586
    %v4378 = vpack.c.b16 %v3589, %v3588
    %v4379 = vpack.c.b16 %v3591, %v3590
    %v4380 = vpack.c.b16 %v3593, %v3592
    %v4381 = vpack.c.b16 %v3595, %v3594
    %v4382 = vpack.c.b16 %v3597, %v3596
    %v4383 = vpack.c.b16 %v3599, %v3598
    %v4384 = vpack.c.b16 %v3601, %v3600
    %v4385 = vpack.c.b16 %v3603, %v3602
    %v4386 = vpack.c.b16 %v3605, %v3604
    %v4387 = vpack.c.b16 %v3607, %v3606
    %v4388 = vpack.c.b16 %v3609, %v3608
    %v4389 = vpack.c.b16 %v3611, %v3610
    %v4390 = vpack.c.b16 %v3613, %v3612
    %v4391 = vpack.c.b16 %v3615, %v3614
    %v4392 = vpack.c.b16 %v3617, %v3616
    %v4393 = vpack.c.b16 %v3619, %v3618
    %v4394 = vpack.c.b16 %v3621, %v3620
    %v4395 = vpack.c.b16 %v3623, %v3622
    %v4396 = vpack.c.b16 %v3625, %v3624
    %v4397 = vpack.c.b16 %v3627, %v3626
    %v4398 = vpack.c.b16 %v3629, %v3628
    %v4399 = vpack.c.b16 %v3631, %v3630
    %v4400 = vpack.c.b16 %v3633, %v3632
    %v4401 = vpack.c.b16 %v3635, %v3634
    %v4402 = vpack.c.b16 %v3637, %v3636
    %v4403 = vpack.c.b16 %v3639, %v3638
    %v4404 = vpack.c.b16 %v3641, %v3640
    %v4405 = vpack.c.b16 %v3643, %v3642
    %v4406 = vpack.c.b16 %v3645, %v3644
    %v4407 = vpack.c.b16 %v3647, %v3646
    %v4408 = vpack.c.b16 %v3649, %v3648
    %v4409 = vpack.c.b16 %v3651, %v3650
    %v4410 = vpack.c.b16 %v3653, %v3652
    %v4411 = vpack.c.b16 %v3655, %v3654
    %v4412 = vpack.c.b16 %v3657, %v3656
    %v4413 = vpack.c.b16 %v3659, %v3658
    %v4414 = vpack.c.b16 %v3661, %v3660
    %v4415 = vpack.c.b16 %v3663, %v3662
    %v4416 = vpack.c.b16 %v3665, %v3664
    %v4417 = vpack.c.b16 %v3667, %v3666
    %v4418 = vpack.c.b16 %v3669, %v3668
    %v4419 = vpack.c.b16 %v3671, %v3670
    %v4420 = vpack.c.b16 %v3673, %v3672
    %v4421 = vpack.c.b16 %v3675, %v3674
    %v4422 = vpack.c.b16 %v3677, %v3676
    %v4423 = vpack.c.b16 %v3679, %v3678
    %v4424 = vpack.c.b16 %v3681, %v3680
    %v4425 = vpack.c.b16 %v3683, %v3682
    %v4426 = vpack.c.b16 %v3685, %v3684
    %v4427 = vpack.c.b16 %v3687, %v3686
    %v4428 = vpack.c.b16 %v3689, %v3688
    %v4429 = vpack.c.b16 %v3691, %v3690
    %v4430 = vpack.c.b16 %v3693, %v3692
    %v4431 = vpack.c.b16 %v3695, %v3694
    %v4432 = vpack.c.b16 %v3697, %v3696
    %v4433 = vpack.c.b16 %v3699, %v3698
    %v4434 = vpack.c.b16 %v3701, %v3700
    %v4435 = vpack.c.b16 %v3703, %v3702
    %v4436 = vpack.c.b16 %v3705, %v3704
    %v4437 = vpack.c.b16 %v3707, %v3706
    %v4438 = vpack.c.b16 %v3709, %v3708
    %v4439 = vpack.c.b16 %v3711, %v3710
    %v4440 = vpack.c.b16 %v3713, %v3712
    %v4441 = vpack.c.b16 %v3715, %v3714
    %v4442 = vpack.c.b16 %v3717, %v3716
    %v4443 = vpack.c.b16 %v3719, %v3718
    %v4444 = vpack.c.b16 %v3721, %v3720
    %v4445 = vpack.c.b16 %v3723, %v3722
    %v4446 = vpack.c.b16 %v3725, %v3724
    %v4447 = vpack.c.b16 %v3727, %v3726
    %v4448 = vpack.c.b16 %v3729, %v3728
    %v4449 = vpack.c.b16 %v3731, %v3730
    %v4450 = vpack.c.b16 %v3733, %v3732
    %v4451 = vpack.c.b16 %v3735, %v3734
    %v4452 = vpack.c.b16 %v3737, %v3736
    %v4453 = vpack.c.b16 %v3739, %v3738
    %v4454 = vpack.c.b16 %v3741, %v3740
    %v4455 = vpack.c.b16 %v3743, %v3742
    %v4456 = vpack.c.b16 %v3745, %v3744
    %v4457 = vpack.c.b16 %v3747, %v3746
    %v4458 = vpack.c.b16 %v3749, %v3748
    %v4459 = vpack.c.b16 %v3751, %v3750
    %v4460 = vpack.c.b16 %v3753, %v3752
    %v4461 = vpack.c.b16 %v3755, %v3754
    %v4462 = vpack.c.b16 %v3757, %v3756
    %v4463 = vpack.c.b16 %v3759, %v3758
    %v4464 = vpack.c.b16 %v3761, %v3760
    %v4465 = vpack.c.b16 %v3763, %v3762
    %v4466 = vpack.c.b16 %v3765, %v3764
    %v4467 = vpack.c.b16 %v3767, %v3766
    %v4468 = vpack.c.b16 %v3769, %v3768
    %v4469 = vpack.c.b16 %v3771, %v3770
    %v4470 = vpack.c.b16 %v3773, %v3772
    %v4471 = vpack.c.b16 %v3775, %v3774
    %v4472 = vpack.c.b16 %v3777, %v3776
    %v4473 = vpack.c.b16 %v3779, %v3778
    %v4474 = vpack.c.b16 %v3781, %v3780
    %v4475 = vpack.c.b16 %v3783, %v3782
    %v4476 = vpack.c.b16 %v3785, %v3784
    %v4477 = vpack.c.b16 %v3787, %v3786
    %v4478 = vpack.c.b16 %v3789, %v3788
    %v4479 = vpack.c.b16 %v3791, %v3790
    %v4480 = vpack.c.b16 %v3793, %v3792
    %v4481 = vpack.c.b16 %v3795, %v3794
    %v4482 = vpack.c.b16 %v3797, %v3796
    %v4483 = vpack.c.b16 %v3799, %v3798
    %v4484 = vpack.c.b16 %v3801, %v3800
    %v4485 = vpack.c.b16 %v3803, %v3802
    %v4486 = vpack.c.b16 %v3805, %v3804
    %v4487 = vpack.c.b16 %v3807, %v3806
    %v4488 = vpack.c.b16 %v3809, %v3808
    %v4489 = vpack.c.b16 %v3811, %v3810
    %v4490 = vpack.c.b16 %v3813, %v3812
    %v4491 = vpack.c.b16 %v3815, %v3814
    %v4492 = vpack.c.b16 %v3817, %v3816
    %v4493 = vpack.c.b16 %v3819, %v3818
    %v4494 = vpack.c.b16 %v3821, %v3820
    %v4495 = vpack.c.b16 %v3823, %v3822
    %v4496 = vpack.c.b16 %v3825, %v3824
    %v4497 = vpack.c.b16 %v3827, %v3826
    %v4498 = vpack.c.b16 %v3829, %v3828
    %v4499 = vpack.c.b16 %v3831, %v3830
    %v4500 = vpack.c.b16 %v3833, %v3832
    %v4501 = vpack.c.b16 %v3835, %v3834
    %v4502 = vpack.c.b16 %v3837, %v3836
    %v4503 = vpack.c.b16 %v3839, %v3838
    %v4504 = vpack.c.b16 %v3841, %v3840
    %v4505 = vpack.c.b16 %v3843, %v3842
    %v4506 = vpack.c.b16 %v3845, %v3844
    %v4507 = vpack.c.b16 %v3847, %v3846
    %v4508 = vpack.c.b16 %v3849, %v3848
    %v4509 = vpack.c.b16 %v3851, %v3850
    %v4510 = vpack.c.b16 %v3853, %v3852
    %v4511 = vpack.c.b16 %v3855, %v3854
    %v4512 = vpack.c.b16 %v3857, %v3856
    %v4513 = vpack.c.b16 %v3859, %v3858
    %v4514 = vpack.c.b16 %v3861, %v3860
    %v4515 = vpack.c.b16 %v3863, %v3862
    %v4516 = vpack.c.b16 %v3865, %v3864
    %v4517 = vpack.c.b16 %v3867, %v3866
    %v4518 = vpack.c.b16 %v3869, %v3868
    %v4519 = vpack.c.b16 %v3871, %v3870
    %v4520 = vpack.c.b16 %v3873, %v3872
    %v4521 = vpack.c.b16 %v3875, %v3874
    %v4522 = vpack.c.b16 %v3877, %v3876
    %v4523 = vpack.c.b16 %v3879, %v3878
    %v4524 = vpack.c.b16 %v3881, %v3880
    %v4525 = vpack.c.b16 %v3883, %v3882
    %v4526 = vpack.c.b16 %v3885, %v3884
    %v4527 = vpack.c.b16 %v3887, %v3886
    %v4528 = vpack.c.b16 %v3889, %v3888
    %v4529 = vpack.c.b16 %v3891, %v3890
    %v4530 = vpack.c.b16 %v3893, %v3892
    %v4531 = vpack.c.b16 %v3895, %v3894
    %v4532 = vpack.c.b16 %v3897, %v3896
    %v4533 = vpack.c.b16 %v3899, %v3898
    %v4534 = vpack.c.b16 %v3901, %v3900
    %v4535 = vpack.c.b16 %v3903, %v3902
    %v4536 = vpack.c.b16 %v3905, %v3904
    %v4537 = vpack.c.b16 %v3907, %v3906
    %v4538 = vpack.c.b16 %v3909, %v3908
    %v4539 = vpack.c.b16 %v3911, %v3910
    %v4540 = vpack.c.b16 %v3913, %v3912
    %v4541 = vpack.c.b16 %v3915, %v3914
    %v4542 = vpack.c.b16 %v3917, %v3916
    %v4543 = vpack.c.b16 %v3919, %v3918
    %v4544 = vpack.c.b16 %v3921, %v3920
    %v4545 = vpack.c.b16 %v3923, %v3922
    %v4546 = vpack.c.b16 %v3925, %v3924
    %v4547 = vpack.c.b16 %v3927, %v3926
    %v4548 = vpack.c.b16 %v3929, %v3928
    %v4549 = vpack.c.b16 %v3931, %v3930
    %v4550 = vpack.c.b16 %v3933, %v3932
    %v4551 = vpack.c.b16 %v3935, %v3934
    %v4552 = vpack.c.b16 %v3937, %v3936
    %v4553 = vpack.c.b16 %v3939, %v3938
    %v4554 = vpack.c.b16 %v3941, %v3940
    %v4555 = vpack.c.b16 %v3943, %v3942
    %v4556 = vpack.c.b16 %v3945, %v3944
    %v4557 = vpack.c.b16 %v3947, %v3946
    %v4558 = vpack.c.b16 %v3949, %v3948
    %v4559 = vpack.c.b16 %v3951, %v3950
    %v4560 = vpack.c.b16 %v3953, %v3952
    %v4561 = vpack.c.b16 %v3955, %v3954
    %v4562 = vpack.c.b16 %v3957, %v3956
    %v4563 = vpack.c.b16 %v3959, %v3958
    %v4564 = vpack.c.b16 %v3961, %v3960
    %v4565 = vpack.c.b16 %v3963, %v3962
    %v4566 = vpack.c.b16 %v3965, %v3964
    %v4567 = vpack.c.b16 %v3967, %v3966
    %v4568 = vpack.c.b16 %v3969, %v3968
    %v4569 = vpack.c.b16 %v3971, %v3970
    %v4570 = vpack.c.b16 %v3973, %v3972
    %v4571 = vpack.c.b16 %v3975, %v3974
    %v4572 = vpack.c.b16 %v3977, %v3976
    %v4573 = vpack.c.b16 %v3979, %v3978
    %v4574 = vpack.c.b16 %v3981, %v3980
    %v4575 = vpack.c.b16 %v3983, %v3982
    %v4576 = vpack.c.b16 %v3985, %v3984
    %v4577 = vpack.c.b16 %v3987, %v3986
    %v4578 = vpack.c.b16 %v3989, %v3988
    %v4579 = vpack.c.b16 %v3991, %v3990
    %v4580 = vpack.c.b16 %v3993, %v3992
    %v4581 = vpack.c.b16 %v3995, %v3994
    %v4582 = vpack.c.b16 %v3997, %v3996
    %v4583 = vpack.c.b16 %v3999, %v3998
    %v4584 = vpack.c.b16 %v4001, %v4000
    %v4585 = vpack.c.b16 %v4003, %v4002
    %v4586 = vpack.c.b16 %v4005, %v4004
    %v4587 = vpack.c.b16 %v4007, %v4006
    %v4588 = vpack.c.b16 %v4009, %v4008
    %v4589 = vpack.c.b16 %v4011, %v4010
    %v4590 = vpack.c.b16 %v4013, %v4012
    %v4591 = vpack.c.b16 %v4015, %v4014
    %5168 = vmatprep.subr.bf16.mxu0 0
    %5169 = vmatpush1.bf16.msra.mxu0 %v4016
    %5170 = vmatprep.subr.bf16.mxu0 0
    %5171 = vmatpush1.bf16.msra.mxu0 %v4017
    %5172 = vmatprep.subr.bf16.mxu0 0
    %5173 = vmatpush1.bf16.msra.mxu0 %v4018
    %5174 = vmatprep.subr.bf16.mxu0 0
    %5175 = vmatpush1.bf16.msra.mxu0 %v4019
    %5176 = vmatprep.subr.bf16.mxu0 0
    %5177 = vmatpush1.bf16.msra.mxu0 %v4020
    %5178 = vmatprep.subr.bf16.mxu0 0
    %5179 = vmatpush1.bf16.msra.mxu0 %v4021
    %5180 = vmatprep.subr.bf16.mxu0 0
    %5181 = vmatpush1.bf16.msra.mxu0 %v4022
    %5182 = vmatprep.subr.bf16.mxu0 0
    %5183 = vmatpush1.bf16.msra.mxu0 %v4023
    %5184 = vmatprep.subr.bf16.mxu0 0
    %5185 = vmatpush1.bf16.msra.mxu0 %v4024
    %5186 = vmatprep.subr.bf16.mxu0 0
    %5187 = vmatpush1.bf16.msra.mxu0 %v4025
    %5188 = vmatprep.subr.bf16.mxu0 0
    %5189 = vmatpush1.bf16.msra.mxu0 %v4026
    %5190 = vmatprep.subr.bf16.mxu0 0
    %5191 = vmatpush1.bf16.msra.mxu0 %v4027
    %5192 = vmatprep.subr.bf16.mxu0 0
    %5193 = vmatpush1.bf16.msra.mxu0 %v4028
    %5194 = vmatprep.subr.bf16.mxu0 0
    %5195 = vmatpush1.bf16.msra.mxu0 %v4029
    %5196 = vmatprep.subr.bf16.mxu0 0
    %5197 = vmatpush1.bf16.msra.mxu0 %v4030
    %5198 = vmatprep.subr.bf16.mxu0 0
    %5199 = vmatpush1.bf16.msra.mxu0 %v4031
    %5200 = vmatprep.mubr.bf16.mxu0 %v1236
    %5201 = vmatmul.mubr.bf16.gmra.mrb[0].mxu0 %v1222
    %v5202 = vpop.f32.mrb[0].mxu0
    %v5203 = vadd.f32 %v1188, %v5202
    %v5204 = vpop.f32.mrb[0].mxu0
    %v5205 = vpop.f32.mrb[0].mxu0
    %v5206 = vpop.f32.mrb[0].mxu0
    %5207 = vdwg.mxu0
    %5208 = vmatprep.subr.bf16.mxu0 0
    %5209 = vmatpush1.bf16.msra.mxu0 %v4032
    %5210 = vmatprep.subr.bf16.mxu0 0
    %5211 = vmatpush1.bf16.msra.mxu0 %v4033
    %5212 = vmatprep.subr.bf16.mxu0 0
    %5213 = vmatpush1.bf16.msra.mxu0 %v4034
    %5214 = vmatprep.subr.bf16.mxu0 0
    %5215 = vmatpush1.bf16.msra.mxu0 %v4035
    %5216 = vmatprep.subr.bf16.mxu0 0
    %5217 = vmatpush1.bf16.msra.mxu0 %v4036
    %5218 = vmatprep.subr.bf16.mxu0 0
    %5219 = vmatpush1.bf16.msra.mxu0 %v4037
    %5220 = vmatprep.subr.bf16.mxu0 0
    %5221 = vmatpush1.bf16.msra.mxu0 %v4038
    %5222 = vmatprep.subr.bf16.mxu0 0
    %5223 = vmatpush1.bf16.msra.mxu0 %v4039
    %5224 = vmatprep.subr.bf16.mxu0 0
    %5225 = vmatpush1.bf16.msra.mxu0 %v4040
    %5226 = vmatprep.subr.bf16.mxu0 0
    %5227 = vmatpush1.bf16.msra.mxu0 %v4041
    %5228 = vmatprep.subr.bf16.mxu0 0
    %5229 = vmatpush1.bf16.msra.mxu0 %v4042
    %5230 = vmatprep.subr.bf16.mxu0 0
    %5231 = vmatpush1.bf16.msra.mxu0 %v4043
    %5232 = vmatprep.subr.bf16.mxu0 0
    %5233 = vmatpush1.bf16.msra.mxu0 %v4044
    %5234 = vmatprep.subr.bf16.mxu0 0
    %5235 = vmatpush1.bf16.msra.mxu0 %v4045
    %5236 = vmatprep.subr.bf16.mxu0 0
    %5237 = vmatpush1.bf16.msra.mxu0 %v4046
    %5238 = vmatprep.subr.bf16.mxu0 0
    %5239 = vmatpush1.bf16.msra.mxu0 %v4047
    %5240 = vmatprep.mubr.bf16.mxu0 %v1246
    %5241 = vmatmul.mubr.bf16.gmra.mrb[0].mxu0 %v1244
    %v5242 = vpop.f32.mrb[0].mxu0
    %v5243 = vadd.f32 %v5203, %v5242
    %v5244 = vpop.f32.mrb[0].mxu0
    %v5245 = vpop.f32.mrb[0].mxu0
    %v5246 = vpop.f32.mrb[0].mxu0
    %5247 = vdwg.mxu0
    %5248 = vmatprep.subr.bf16.mxu0 0
    %5249 = vmatpush1.bf16.msra.mxu0 %v4048
    %5250 = vmatprep.subr.bf16.mxu0 0
    %5251 = vmatpush1.bf16.msra.mxu0 %v4049
    %5252 = vmatprep.subr.bf16.mxu0 0
    %5253 = vmatpush1.bf16.msra.mxu0 %v4050
    %5254 = vmatprep.subr.bf16.mxu0 0
    %5255 = vmatpush1.bf16.msra.mxu0 %v4051
    %5256 = vmatprep.subr.bf16.mxu0 0
    %5257 = vmatpush1.bf16.msra.mxu0 %v4052
    %5258 = vmatprep.subr.bf16.mxu0 0
    %5259 = vmatpush1.bf16.msra.mxu0 %v4053
    %5260 = vmatprep.subr.bf16.mxu0 0
    %5261 = vmatpush1.bf16.msra.mxu0 %v4054
    %5262 = vmatprep.subr.bf16.mxu0 0
    %5263 = vmatpush1.bf16.msra.mxu0 %v4055
    %5264 = vmatprep.subr.bf16.mxu0 0
    %5265 = vmatpush1.bf16.msra.mxu0 %v4056
    %5266 = vmatprep.subr.bf16.mxu0 0
    %5267 = vmatpush1.bf16.msra.mxu0 %v4057
    %5268 = vmatprep.subr.bf16.mxu0 0
    %5269 = vmatpush1.bf16.msra.mxu0 %v4058
    %5270 = vmatprep.subr.bf16.mxu0 0
    %5271 = vmatpush1.bf16.msra.mxu0 %v4059
    %5272 = vmatprep.subr.bf16.mxu0 0
    %5273 = vmatpush1.bf16.msra.mxu0 %v4060
    %5274 = vmatprep.subr.bf16.mxu0 0
    %5275 = vmatpush1.bf16.msra.mxu0 %v4061
    %5276 = vmatprep.subr.bf16.mxu0 0
    %5277 = vmatpush1.bf16.msra.mxu0 %v4062
    %5278 = vmatprep.subr.bf16.mxu0 0
    %5279 = vmatpush1.bf16.msra.mxu0 %v4063
    %5280 = vmatprep.mubr.bf16.mxu0 %v1243
    %5281 = vmatmul.mubr.bf16.gmra.mrb[0].mxu0 %v1229
    %v5282 = vpop.f32.mrb[0].mxu0
    %v5283 = vadd.f32 %v5243, %v5282
    %v5284 = vpop.f32.mrb[0].mxu0
    %v5285 = vpop.f32.mrb[0].mxu0
    %v5286 = vpop.f32.mrb[0].mxu0
    %5287 = vdwg.mxu0
    %5288 = vmatprep.subr.bf16.mxu0 0
    %5289 = vmatpush1.bf16.msra.mxu0 %v4064
    %5290 = vmatprep.subr.bf16.mxu0 0
    %5291 = vmatpush1.bf16.msra.mxu0 %v4065
    %5292 = vmatprep.subr.bf16.mxu0 0
    %5293 = vmatpush1.bf16.msra.mxu0 %v4066
    %5294 = vmatprep.subr.bf16.mxu0 0
    %5295 = vmatpush1.bf16.msra.mxu0 %v4067
    %5296 = vmatprep.subr.bf16.mxu0 0
    %5297 = vmatpush1.bf16.msra.mxu0 %v4068
    %5298 = vmatprep.subr.bf16.mxu0 0
    %5299 = vmatpush1.bf16.msra.mxu0 %v4069
    %5300 = vmatprep.subr.bf16.mxu0 0
    %5301 = vmatpush1.bf16.msra.mxu0 %v4070
    %5302 = vmatprep.subr.bf16.mxu0 0
    %5303 = vmatpush1.bf16.msra.mxu0 %v4071
    %5304 = vmatprep.subr.bf16.mxu0 0
    %5305 = vmatpush1.bf16.msra.mxu0 %v4072
    %5306 = vmatprep.subr.bf16.mxu0 0
    %5307 = vmatpush1.bf16.msra.mxu0 %v4073
    %5308 = vmatprep.subr.bf16.mxu0 0
    %5309 = vmatpush1.bf16.msra.mxu0 %v4074
    %5310 = vmatprep.subr.bf16.mxu0 0
    %5311 = vmatpush1.bf16.msra.mxu0 %v4075
    %5312 = vmatprep.subr.bf16.mxu0 0
    %5313 = vmatpush1.bf16.msra.mxu0 %v4076
    %5314 = vmatprep.subr.bf16.mxu0 0
    %5315 = vmatpush1.bf16.msra.mxu0 %v4077
    %5316 = vmatprep.subr.bf16.mxu0 0
    %5317 = vmatpush1.bf16.msra.mxu0 %v4078
    %5318 = vmatprep.subr.bf16.mxu0 0
    %5319 = vmatpush1.bf16.msra.mxu0 %v4079
    %5320 = vmatprep.mubr.bf16.mxu0 %v1247
    %5321 = vmatmul.mubr.bf16.gmra.mrb[0].mxu0 %v1245
    %v5322 = vpop.f32.mrb[0].mxu0
    %v5323 = vadd.f32 %v5283, %v5322
    %v5324 = vpop.f32.mrb[0].mxu0
    %v5325 = vpop.f32.mrb[0].mxu0
    %v5326 = vpop.f32.mrb[0].mxu0
    %5327 = vdwg.mxu0
    %5328 = vmatprep.subr.bf16.mxu0 0
    %5329 = vmatpush1.bf16.msra.mxu0 %v4080
    %5330 = vmatprep.subr.bf16.mxu0 0
    %5331 = vmatpush1.bf16.msra.mxu0 %v4081
    %5332 = vmatprep.subr.bf16.mxu0 0
    %5333 = vmatpush1.bf16.msra.mxu0 %v4082
    %5334 = vmatprep.subr.bf16.mxu0 0
    %5335 = vmatpush1.bf16.msra.mxu0 %v4083
    %5336 = vmatprep.subr.bf16.mxu0 0
    %5337 = vmatpush1.bf16.msra.mxu0 %v4084
    %5338 = vmatprep.subr.bf16.mxu0 0
    %5339 = vmatpush1.bf16.msra.mxu0 %v4085
    %5340 = vmatprep.subr.bf16.mxu0 0
    %5341 = vmatpush1.bf16.msra.mxu0 %v4086
    %5342 = vmatprep.subr.bf16.mxu0 0
    %5343 = vmatpush1.bf16.msra.mxu0 %v4087
    %5344 = vmatprep.subr.bf16.mxu0 0
    %5345 = vmatpush1.bf16.msra.mxu0 %v4088
    %5346 = vmatprep.subr.bf16.mxu0 0
    %5347 = vmatpush1.bf16.msra.mxu0 %v4089
    %5348 = vmatprep.subr.bf16.mxu0 0
    %5349 = vmatpush1.bf16.msra.mxu0 %v4090
    %5350 = vmatprep.subr.bf16.mxu0 0
    %5351 = vmatpush1.bf16.msra.mxu0 %v4091
    %5352 = vmatprep.subr.bf16.mxu0 0
    %5353 = vmatpush1.bf16.msra.mxu0 %v4092
    %5354 = vmatprep.subr.bf16.mxu0 0
    %5355 = vmatpush1.bf16.msra.mxu0 %v4093
    %5356 = vmatprep.subr.bf16.mxu0 0
    %5357 = vmatpush1.bf16.msra.mxu0 %v4094
    %5358 = vmatprep.subr.bf16.mxu0 0
    %5359 = vmatpush1.bf16.msra.mxu0 %v4095
    %5360 = vmatprep.mubr.bf16.mxu0 %v1285
    %5361 = vmatmul.mubr.bf16.gmra.mrb[0].mxu0 %v1271
    %v5362 = vpop.f32.mrb[0].mxu0
    %v5363 = vadd.f32 %v5323, %v5362
    %v5364 = vpop.f32.mrb[0].mxu0
    %v5365 = vpop.f32.mrb[0].mxu0
    %v5366 = vpop.f32.mrb[0].mxu0
    %5367 = vdwg.mxu0
    %5368 = vmatprep.subr.bf16.mxu0 0
    %5369 = vmatpush1.bf16.msra.mxu0 %v4096
    %5370 = vmatprep.subr.bf16.mxu0 0
    %5371 = vmatpush1.bf16.msra.mxu0 %v4097
    %5372 = vmatprep.subr.bf16.mxu0 0
    %5373 = vmatpush1.bf16.msra.mxu0 %v4098
    %5374 = vmatprep.subr.bf16.mxu0 0
    %5375 = vmatpush1.bf16.msra.mxu0 %v4099
    %5376 = vmatprep.subr.bf16.mxu0 0
    %5377 = vmatpush1.bf16.msra.mxu0 %v4100
    %5378 = vmatprep.subr.bf16.mxu0 0
    %5379 = vmatpush1.bf16.msra.mxu0 %v4101
    %5380 = vmatprep.subr.bf16.mxu0 0
    %5381 = vmatpush1.bf16.msra.mxu0 %v4102
    %5382 = vmatprep.subr.bf16.mxu0 0
    %5383 = vmatpush1.bf16.msra.mxu0 %v4103
    %5384 = vmatprep.subr.bf16.mxu0 0
    %5385 = vmatpush1.bf16.msra.mxu0 %v4104
    %5386 = vmatprep.subr.bf16.mxu0 0
    %5387 = vmatpush1.bf16.msra.mxu0 %v4105
    %5388 = vmatprep.subr.bf16.mxu0 0
    %5389 = vmatpush1.bf16.msra.mxu0 %v4106
    %5390 = vmatprep.subr.bf16.mxu0 0
    %5391 = vmatpush1.bf16.msra.mxu0 %v4107
    %5392 = vmatprep.subr.bf16.mxu0 0
    %5393 = vmatpush1.bf16.msra.mxu0 %v4108
    %5394 = vmatprep.subr.bf16.mxu0 0
    %5395 = vmatpush1.bf16.msra.mxu0 %v4109
    %5396 = vmatprep.subr.bf16.mxu0 0
    %5397 = vmatpush1.bf16.msra.mxu0 %v4110
    %5398 = vmatprep.subr.bf16.mxu0 0
    %5399 = vmatpush1.bf16.msra.mxu0 %v4111
    %5400 = vmatprep.mubr.bf16.mxu0 %v1295
    %5401 = vmatmul.mubr.bf16.gmra.mrb[0].mxu0 %v1293
    %v5402 = vpop.f32.mrb[0].mxu0
    %v5403 = vadd.f32 %v5363, %v5402
    %v5404 = vpop.f32.mrb[0].mxu0
    %v5405 = vpop.f32.mrb[0].mxu0
    %v5406 = vpop.f32.mrb[0].mxu0
    %5407 = vdwg.mxu0
    %5408 = vmatprep.subr.bf16.mxu0 0
    %5409 = vmatpush1.bf16.msra.mxu0 %v4112
    %5410 = vmatprep.subr.bf16.mxu0 0
    %5411 = vmatpush1.bf16.msra.mxu0 %v4113
    %5412 = vmatprep.subr.bf16.mxu0 0
    %5413 = vmatpush1.bf16.msra.mxu0 %v4114
    %5414 = vmatprep.subr.bf16.mxu0 0
    %5415 = vmatpush1.bf16.msra.mxu0 %v4115
    %5416 = vmatprep.subr.bf16.mxu0 0
    %5417 = vmatpush1.bf16.msra.mxu0 %v4116
    %5418 = vmatprep.subr.bf16.mxu0 0
    %5419 = vmatpush1.bf16.msra.mxu0 %v4117
    %5420 = vmatprep.subr.bf16.mxu0 0
    %5421 = vmatpush1.bf16.msra.mxu0 %v4118
    %5422 = vmatprep.subr.bf16.mxu0 0
    %5423 = vmatpush1.bf16.msra.mxu0 %v4119
    %5424 = vmatprep.subr.bf16.mxu0 0
    %5425 = vmatpush1.bf16.msra.mxu0 %v4120
    %5426 = vmatprep.subr.bf16.mxu0 0
    %5427 = vmatpush1.bf16.msra.mxu0 %v4121
    %5428 = vmatprep.subr.bf16.mxu0 0
    %5429 = vmatpush1.bf16.msra.mxu0 %v4122
    %5430 = vmatprep.subr.bf16.mxu0 0
    %5431 = vmatpush1.bf16.msra.mxu0 %v4123
    %5432 = vmatprep.subr.bf16.mxu0 0
    %5433 = vmatpush1.bf16.msra.mxu0 %v4124
    %5434 = vmatprep.subr.bf16.mxu0 0
    %5435 = vmatpush1.bf16.msra.mxu0 %v4125
    %5436 = vmatprep.subr.bf16.mxu0 0
    %5437 = vmatpush1.bf16.msra.mxu0 %v4126
    %5438 = vmatprep.subr.bf16.mxu0 0
    %5439 = vmatpush1.bf16.msra.mxu0 %v4127
    %5440 = vmatprep.mubr.bf16.mxu0 %v1292
    %5441 = vmatmul.mubr.bf16.gmra.mrb[0].mxu0 %v1278
    %v5442 = vpop.f32.mrb[0].mxu0
    %v5443 = vadd.f32 %v5403, %v5442
    %v5444 = vpop.f32.mrb[0].mxu0
    %v5445 = vpop.f32.mrb[0].mxu0
    %v5446 = vpop.f32.mrb[0].mxu0
    %5447 = vdwg.mxu0
    %5448 = vmatprep.subr.bf16.mxu0 0
    %5449 = vmatpush1.bf16.msra.mxu0 %v4128
    %5450 = vmatprep.subr.bf16.mxu0 0
    %5451 = vmatpush1.bf16.msra.mxu0 %v4129
    %5452 = vmatprep.subr.bf16.mxu0 0
    %5453 = vmatpush1.bf16.msra.mxu0 %v4130
    %5454 = vmatprep.subr.bf16.mxu0 0
    %5455 = vmatpush1.bf16.msra.mxu0 %v4131
    %5456 = vmatprep.subr.bf16.mxu0 0
    %5457 = vmatpush1.bf16.msra.mxu0 %v4132
    %5458 = vmatprep.subr.bf16.mxu0 0
    %5459 = vmatpush1.bf16.msra.mxu0 %v4133
    %5460 = vmatprep.subr.bf16.mxu0 0
    %5461 = vmatpush1.bf16.msra.mxu0 %v4134
    %5462 = vmatprep.subr.bf16.mxu0 0
    %5463 = vmatpush1.bf16.msra.mxu0 %v4135
    %5464 = vmatprep.subr.bf16.mxu0 0
    %5465 = vmatpush1.bf16.msra.mxu0 %v4136
    %5466 = vmatprep.subr.bf16.mxu0 0
    %5467 = vmatpush1.bf16.msra.mxu0 %v4137
    %5468 = vmatprep.subr.bf16.mxu0 0
    %5469 = vmatpush1.bf16.msra.mxu0 %v4138
    %5470 = vmatprep.subr.bf16.mxu0 0
    %5471 = vmatpush1.bf16.msra.mxu0 %v4139
    %5472 = vmatprep.subr.bf16.mxu0 0
    %5473 = vmatpush1.bf16.msra.mxu0 %v4140
    %5474 = vmatprep.subr.bf16.mxu0 0
    %5475 = vmatpush1.bf16.msra.mxu0 %v4141
    %5476 = vmatprep.subr.bf16.mxu0 0
    %5477 = vmatpush1.bf16.msra.mxu0 %v4142
    %5478 = vmatprep.subr.bf16.mxu0 0
    %5479 = vmatpush1.bf16.msra.mxu0 %v4143
    %5480 = vmatprep.mubr.bf16.mxu0 %v1296
    %5481 = vmatmul.mubr.bf16.gmra.mrb[0].mxu0 %v1294
    %v5482 = vpop.f32.mrb[0].mxu0
    %v5483 = vadd.f32 %v5443, %v5482
    %v5484 = vpop.f32.mrb[0].mxu0
    %v5485 = vpop.f32.mrb[0].mxu0
    %v5486 = vpop.f32.mrb[0].mxu0
    %5487 = vdwg.mxu0
    %5488 = vmatprep.subr.bf16.mxu0 0
    %5489 = vmatpush1.bf16.msra.mxu0 %v4144
    %5490 = vmatprep.subr.bf16.mxu0 0
    %5491 = vmatpush1.bf16.msra.mxu0 %v4145
    %5492 = vmatprep.subr.bf16.mxu0 0
    %5493 = vmatpush1.bf16.msra.mxu0 %v4146
    %5494 = vmatprep.subr.bf16.mxu0 0
    %5495 = vmatpush1.bf16.msra.mxu0 %v4147
    %5496 = vmatprep.subr.bf16.mxu0 0
    %5497 = vmatpush1.bf16.msra.mxu0 %v4148
    %5498 = vmatprep.subr.bf16.mxu0 0
    %5499 = vmatpush1.bf16.msra.mxu0 %v4149
    %5500 = vmatprep.subr.bf16.mxu0 0
    %5501 = vmatpush1.bf16.msra.mxu0 %v4150
    %5502 = vmatprep.subr.bf16.mxu0 0
    %5503 = vmatpush1.bf16.msra.mxu0 %v4151
    %5504 = vmatprep.subr.bf16.mxu0 0
    %5505 = vmatpush1.bf16.msra.mxu0 %v4152
    %5506 = vmatprep.subr.bf16.mxu0 0
    %5507 = vmatpush1.bf16.msra.mxu0 %v4153
    %5508 = vmatprep.subr.bf16.mxu0 0
    %5509 = vmatpush1.bf16.msra.mxu0 %v4154
    %5510 = vmatprep.subr.bf16.mxu0 0
    %5511 = vmatpush1.bf16.msra.mxu0 %v4155
    %5512 = vmatprep.subr.bf16.mxu0 0
    %5513 = vmatpush1.bf16.msra.mxu0 %v4156
    %5514 = vmatprep.subr.bf16.mxu0 0
    %5515 = vmatpush1.bf16.msra.mxu0 %v4157
    %5516 = vmatprep.subr.bf16.mxu0 0
    %5517 = vmatpush1.bf16.msra.mxu0 %v4158
    %5518 = vmatprep.subr.bf16.mxu0 0
    %5519 = vmatpush1.bf16.msra.mxu0 %v4159
    %5520 = vmatprep.mubr.bf16.mxu0 %v1334
    %5521 = vmatmul.mubr.bf16.gmra.mrb[0].mxu0 %v1320
    %v5522 = vpop.f32.mrb[0].mxu0
    %v5523 = vadd.f32 %v5483, %v5522
    %v5524 = vpop.f32.mrb[0].mxu0
    %v5525 = vpop.f32.mrb[0].mxu0
    %v5526 = vpop.f32.mrb[0].mxu0
    %5527 = vdwg.mxu0
    %5528 = vmatprep.subr.bf16.mxu0 0
    %5529 = vmatpush1.bf16.msra.mxu0 %v4160
    %5530 = vmatprep.subr.bf16.mxu0 0
    %5531 = vmatpush1.bf16.msra.mxu0 %v4161
    %5532 = vmatprep.subr.bf16.mxu0 0
    %5533 = vmatpush1.bf16.msra.mxu0 %v4162
    %5534 = vmatprep.subr.bf16.mxu0 0
    %5535 = vmatpush1.bf16.msra.mxu0 %v4163
    %5536 = vmatprep.subr.bf16.mxu0 0
    %5537 = vmatpush1.bf16.msra.mxu0 %v4164
    %5538 = vmatprep.subr.bf16.mxu0 0
    %5539 = vmatpush1.bf16.msra.mxu0 %v4165
    %5540 = vmatprep.subr.bf16.mxu0 0
    %5541 = vmatpush1.bf16.msra.mxu0 %v4166
    %5542 = vmatprep.subr.bf16.mxu0 0
    %5543 = vmatpush1.bf16.msra.mxu0 %v4167
    %5544 = vmatprep.subr.bf16.mxu0 0
    %5545 = vmatpush1.bf16.msra.mxu0 %v4168
    %5546 = vmatprep.subr.bf16.mxu0 0
    %5547 = vmatpush1.bf16.msra.mxu0 %v4169
    %5548 = vmatprep.subr.bf16.mxu0 0
    %5549 = vmatpush1.bf16.msra.mxu0 %v4170
    %5550 = vmatprep.subr.bf16.mxu0 0
    %5551 = vmatpush1.bf16.msra.mxu0 %v4171
    %5552 = vmatprep.subr.bf16.mxu0 0
    %5553 = vmatpush1.bf16.msra.mxu0 %v4172
    %5554 = vmatprep.subr.bf16.mxu0 0
    %5555 = vmatpush1.bf16.msra.mxu0 %v4173
    %5556 = vmatprep.subr.bf16.mxu0 0
    %5557 = vmatpush1.bf16.msra.mxu0 %v4174
    %5558 = vmatprep.subr.bf16.mxu0 0
    %5559 = vmatpush1.bf16.msra.mxu0 %v4175
    %5560 = vmatprep.mubr.bf16.mxu0 %v1344
    %5561 = vmatmul.mubr.bf16.gmra.mrb[0].mxu0 %v1342
    %v5562 = vpop.f32.mrb[0].mxu0
    %v5563 = vadd.f32 %v5523, %v5562
    %v5564 = vpop.f32.mrb[0].mxu0
    %v5565 = vpop.f32.mrb[0].mxu0
    %v5566 = vpop.f32.mrb[0].mxu0
    %5567 = vdwg.mxu0
    %5568 = vmatprep.subr.bf16.mxu0 0
    %5569 = vmatpush1.bf16.msra.mxu0 %v4176
    %5570 = vmatprep.subr.bf16.mxu0 0
    %5571 = vmatpush1.bf16.msra.mxu0 %v4177
    %5572 = vmatprep.subr.bf16.mxu0 0
    %5573 = vmatpush1.bf16.msra.mxu0 %v4178
    %5574 = vmatprep.subr.bf16.mxu0 0
    %5575 = vmatpush1.bf16.msra.mxu0 %v4179
    %5576 = vmatprep.subr.bf16.mxu0 0
    %5577 = vmatpush1.bf16.msra.mxu0 %v4180
    %5578 = vmatprep.subr.bf16.mxu0 0
    %5579 = vmatpush1.bf16.msra.mxu0 %v4181
    %5580 = vmatprep.subr.bf16.mxu0 0
    %5581 = vmatpush1.bf16.msra.mxu0 %v4182
    %5582 = vmatprep.subr.bf16.mxu0 0
    %5583 = vmatpush1.bf16.msra.mxu0 %v4183
    %5584 = vmatprep.subr.bf16.mxu0 0
    %5585 = vmatpush1.bf16.msra.mxu0 %v4184
    %5586 = vmatprep.subr.bf16.mxu0 0
    %5587 = vmatpush1.bf16.msra.mxu0 %v4185
    %5588 = vmatprep.subr.bf16.mxu0 0
    %5589 = vmatpush1.bf16.msra.mxu0 %v4186
    %5590 = vmatprep.subr.bf16.mxu0 0
    %5591 = vmatpush1.bf16.msra.mxu0 %v4187
    %5592 = vmatprep.subr.bf16.mxu0 0
    %5593 = vmatpush1.bf16.msra.mxu0 %v4188
    %5594 = vmatprep.subr.bf16.mxu0 0
    %5595 = vmatpush1.bf16.msra.mxu0 %v4189
    %5596 = vmatprep.subr.bf16.mxu0 0
    %5597 = vmatpush1.bf16.msra.mxu0 %v4190
    %5598 = vmatprep.subr.bf16.mxu0 0
    %5599 = vmatpush1.bf16.msra.mxu0 %v4191
    %5600 = vmatprep.mubr.bf16.mxu0 %v1341
    %5601 = vmatmul.mubr.bf16.gmra.mrb[0].mxu0 %v1327
    %v5602 = vpop.f32.mrb[0].mxu0
    %v5603 = vadd.f32 %v5563, %v5602
    %v5604 = vpop.f32.mrb[0].mxu0
    %v5605 = vpop.f32.mrb[0].mxu0
    %v5606 = vpop.f32.mrb[0].mxu0
    %5607 = vdwg.mxu0
    %5608 = vmatprep.subr.bf16.mxu0 0
    %5609 = vmatpush1.bf16.msra.mxu0 %v4192
    %5610 = vmatprep.subr.bf16.mxu0 0
    %5611 = vmatpush1.bf16.msra.mxu0 %v4193
    %5612 = vmatprep.subr.bf16.mxu0 0
    %5613 = vmatpush1.bf16.msra.mxu0 %v4194
    %5614 = vmatprep.subr.bf16.mxu0 0
    %5615 = vmatpush1.bf16.msra.mxu0 %v4195
    %5616 = vmatprep.subr.bf16.mxu0 0
    %5617 = vmatpush1.bf16.msra.mxu0 %v4196
    %5618 = vmatprep.subr.bf16.mxu0 0
    %5619 = vmatpush1.bf16.msra.mxu0 %v4197
    %5620 = vmatprep.subr.bf16.mxu0 0
    %5621 = vmatpush1.bf16.msra.mxu0 %v4198
    %5622 = vmatprep.subr.bf16.mxu0 0
    %5623 = vmatpush1.bf16.msra.mxu0 %v4199
    %5624 = vmatprep.subr.bf16.mxu0 0
    %5625 = vmatpush1.bf16.msra.mxu0 %v4200
    %5626 = vmatprep.subr.bf16.mxu0 0
    %5627 = vmatpush1.bf16.msra.mxu0 %v4201
    %5628 = vmatprep.subr.bf16.mxu0 0
    %5629 = vmatpush1.bf16.msra.mxu0 %v4202
    %5630 = vmatprep.subr.bf16.mxu0 0
    %5631 = vmatpush1.bf16.msra.mxu0 %v4203
    %5632 = vmatprep.subr.bf16.mxu0 0
    %5633 = vmatpush1.bf16.msra.mxu0 %v4204
    %5634 = vmatprep.subr.bf16.mxu0 0
    %5635 = vmatpush1.bf16.msra.mxu0 %v4205
    %5636 = vmatprep.subr.bf16.mxu0 0
    %5637 = vmatpush1.bf16.msra.mxu0 %v4206
    %5638 = vmatprep.subr.bf16.mxu0 0
    %5639 = vmatpush1.bf16.msra.mxu0 %v4207
    %5640 = vmatprep.mubr.bf16.mxu0 %v1345
    %5641 = vmatmul.mubr.bf16.gmra.mrb[0].mxu0 %v1343
    %v5642 = vpop.f32.mrb[0].mxu0
    %v5643 = vadd.f32 %v5603, %v5642
    %v5644 = vpop.f32.mrb[0].mxu0
    %v5645 = vpop.f32.mrb[0].mxu0
    %v5646 = vpop.f32.mrb[0].mxu0
    %5647 = vdwg.mxu0
    %5648 = vmatprep.subr.bf16.mxu0 0
    %5649 = vmatpush1.bf16.msra.mxu0 %v4208
    %5650 = vmatprep.subr.bf16.mxu0 0
    %5651 = vmatpush1.bf16.msra.mxu0 %v4209
    %5652 = vmatprep.subr.bf16.mxu0 0
    %5653 = vmatpush1.bf16.msra.mxu0 %v4210
    %5654 = vmatprep.subr.bf16.mxu0 0
    %5655 = vmatpush1.bf16.msra.mxu0 %v4211
    %5656 = vmatprep.subr.bf16.mxu0 0
    %5657 = vmatpush1.bf16.msra.mxu0 %v4212
    %5658 = vmatprep.subr.bf16.mxu0 0
    %5659 = vmatpush1.bf16.msra.mxu0 %v4213
    %5660 = vmatprep.subr.bf16.mxu0 0
    %5661 = vmatpush1.bf16.msra.mxu0 %v4214
    %5662 = vmatprep.subr.bf16.mxu0 0
    %5663 = vmatpush1.bf16.msra.mxu0 %v4215
    %5664 = vmatprep.subr.bf16.mxu0 0
    %5665 = vmatpush1.bf16.msra.mxu0 %v4216
    %5666 = vmatprep.subr.bf16.mxu0 0
    %5667 = vmatpush1.bf16.msra.mxu0 %v4217
    %5668 = vmatprep.subr.bf16.mxu0 0
    %5669 = vmatpush1.bf16.msra.mxu0 %v4218
    %5670 = vmatprep.subr.bf16.mxu0 0
    %5671 = vmatpush1.bf16.msra.mxu0 %v4219
    %5672 = vmatprep.subr.bf16.mxu0 0
    %5673 = vmatpush1.bf16.msra.mxu0 %v4220
    %5674 = vmatprep.subr.bf16.mxu0 0
    %5675 = vmatpush1.bf16.msra.mxu0 %v4221
    %5676 = vmatprep.subr.bf16.mxu0 0
    %5677 = vmatpush1.bf16.msra.mxu0 %v4222
    %5678 = vmatprep.subr.bf16.mxu0 0
    %5679 = vmatpush1.bf16.msra.mxu0 %v4223
    %5680 = vmatprep.mubr.bf16.mxu0 %v1383
    %5681 = vmatmul.mubr.bf16.gmra.mrb[0].mxu0 %v1369
    %v5682 = vpop.f32.mrb[0].mxu0
    %v5683 = vadd.f32 %v5643, %v5682
    %v5684 = vpop.f32.mrb[0].mxu0
    %v5685 = vpop.f32.mrb[0].mxu0
    %v5686 = vpop.f32.mrb[0].mxu0
    %5687 = vdwg.mxu0
    %5688 = vmatprep.subr.bf16.mxu0 0
    %5689 = vmatpush1.bf16.msra.mxu0 %v4224
    %5690 = vmatprep.subr.bf16.mxu0 0
    %5691 = vmatpush1.bf16.msra.mxu0 %v4225
    %5692 = vmatprep.subr.bf16.mxu0 0
    %5693 = vmatpush1.bf16.msra.mxu0 %v4226
    %5694 = vmatprep.subr.bf16.mxu0 0
    %5695 = vmatpush1.bf16.msra.mxu0 %v4227
    %5696 = vmatprep.subr.bf16.mxu0 0
    %5697 = vmatpush1.bf16.msra.mxu0 %v4228
    %5698 = vmatprep.subr.bf16.mxu0 0
    %5699 = vmatpush1.bf16.msra.mxu0 %v4229
    %5700 = vmatprep.subr.bf16.mxu0 0
    %5701 = vmatpush1.bf16.msra.mxu0 %v4230
    %5702 = vmatprep.subr.bf16.mxu0 0
    %5703 = vmatpush1.bf16.msra.mxu0 %v4231
    %5704 = vmatprep.subr.bf16.mxu0 0
    %5705 = vmatpush1.bf16.msra.mxu0 %v4232
    %5706 = vmatprep.subr.bf16.mxu0 0
    %5707 = vmatpush1.bf16.msra.mxu0 %v4233
    %5708 = vmatprep.subr.bf16.mxu0 0
    %5709 = vmatpush1.bf16.msra.mxu0 %v4234
    %5710 = vmatprep.subr.bf16.mxu0 0
    %5711 = vmatpush1.bf16.msra.mxu0 %v4235
    %5712 = vmatprep.subr.bf16.mxu0 0
    %5713 = vmatpush1.bf16.msra.mxu0 %v4236
    %5714 = vmatprep.subr.bf16.mxu0 0
    %5715 = vmatpush1.bf16.msra.mxu0 %v4237
    %5716 = vmatprep.subr.bf16.mxu0 0
    %5717 = vmatpush1.bf16.msra.mxu0 %v4238
    %5718 = vmatprep.subr.bf16.mxu0 0
    %5719 = vmatpush1.bf16.msra.mxu0 %v4239
    %5720 = vmatprep.mubr.bf16.mxu0 %v1393
    %5721 = vmatmul.mubr.bf16.gmra.mrb[0].mxu0 %v1391
    %v5722 = vpop.f32.mrb[0].mxu0
    %v5723 = vadd.f32 %v5683, %v5722
    %v5724 = vpop.f32.mrb[0].mxu0
    %v5725 = vpop.f32.mrb[0].mxu0
    %v5726 = vpop.f32.mrb[0].mxu0
    %5727 = vdwg.mxu0
    %5728 = vmatprep.subr.bf16.mxu0 0
    %5729 = vmatpush1.bf16.msra.mxu0 %v4240
    %5730 = vmatprep.subr.bf16.mxu0 0
    %5731 = vmatpush1.bf16.msra.mxu0 %v4241
    %5732 = vmatprep.subr.bf16.mxu0 0
    %5733 = vmatpush1.bf16.msra.mxu0 %v4242
    %5734 = vmatprep.subr.bf16.mxu0 0
    %5735 = vmatpush1.bf16.msra.mxu0 %v4243
    %5736 = vmatprep.subr.bf16.mxu0 0
    %5737 = vmatpush1.bf16.msra.mxu0 %v4244
    %5738 = vmatprep.subr.bf16.mxu0 0
    %5739 = vmatpush1.bf16.msra.mxu0 %v4245
    %5740 = vmatprep.subr.bf16.mxu0 0
    %5741 = vmatpush1.bf16.msra.mxu0 %v4246
    %5742 = vmatprep.subr.bf16.mxu0 0
    %5743 = vmatpush1.bf16.msra.mxu0 %v4247
    %5744 = vmatprep.subr.bf16.mxu0 0
    %5745 = vmatpush1.bf16.msra.mxu0 %v4248
    %5746 = vmatprep.subr.bf16.mxu0 0
    %5747 = vmatpush1.bf16.msra.mxu0 %v4249
    %5748 = vmatprep.subr.bf16.mxu0 0
    %5749 = vmatpush1.bf16.msra.mxu0 %v4250
    %5750 = vmatprep.subr.bf16.mxu0 0
    %5751 = vmatpush1.bf16.msra.mxu0 %v4251
    %5752 = vmatprep.subr.bf16.mxu0 0
    %5753 = vmatpush1.bf16.msra.mxu0 %v4252
    %5754 = vmatprep.subr.bf16.mxu0 0
    %5755 = vmatpush1.bf16.msra.mxu0 %v4253
    %5756 = vmatprep.subr.bf16.mxu0 0
    %5757 = vmatpush1.bf16.msra.mxu0 %v4254
    %5758 = vmatprep.subr.bf16.mxu0 0
    %5759 = vmatpush1.bf16.msra.mxu0 %v4255
    %5760 = vmatprep.mubr.bf16.mxu0 %v1390
    %5761 = vmatmul.mubr.bf16.gmra.mrb[0].mxu0 %v1376
    %v5762 = vpop.f32.mrb[0].mxu0
    %v5763 = vadd.f32 %v5723, %v5762
    %v5764 = vpop.f32.mrb[0].mxu0
    %v5765 = vpop.f32.mrb[0].mxu0
    %v5766 = vpop.f32.mrb[0].mxu0
    %5767 = vdwg.mxu0
    %5768 = vmatprep.subr.bf16.mxu0 0
    %5769 = vmatpush1.bf16.msra.mxu0 %v4256
    %5770 = vmatprep.subr.bf16.mxu0 0
    %5771 = vmatpush1.bf16.msra.mxu0 %v4257
    %5772 = vmatprep.subr.bf16.mxu0 0
    %5773 = vmatpush1.bf16.msra.mxu0 %v4258
    %5774 = vmatprep.subr.bf16.mxu0 0
    %5775 = vmatpush1.bf16.msra.mxu0 %v4259
    %5776 = vmatprep.subr.bf16.mxu0 0
    %5777 = vmatpush1.bf16.msra.mxu0 %v4260
    %5778 = vmatprep.subr.bf16.mxu0 0
    %5779 = vmatpush1.bf16.msra.mxu0 %v4261
    %5780 = vmatprep.subr.bf16.mxu0 0
    %5781 = vmatpush1.bf16.msra.mxu0 %v4262
    %5782 = vmatprep.subr.bf16.mxu0 0
    %5783 = vmatpush1.bf16.msra.mxu0 %v4263
    %5784 = vmatprep.subr.bf16.mxu0 0
    %5785 = vmatpush1.bf16.msra.mxu0 %v4264
    %5786 = vmatprep.subr.bf16.mxu0 0
    %5787 = vmatpush1.bf16.msra.mxu0 %v4265
    %5788 = vmatprep.subr.bf16.mxu0 0
    %5789 = vmatpush1.bf16.msra.mxu0 %v4266
    %5790 = vmatprep.subr.bf16.mxu0 0
    %5791 = vmatpush1.bf16.msra.mxu0 %v4267
    %5792 = vmatprep.subr.bf16.mxu0 0
    %5793 = vmatpush1.bf16.msra.mxu0 %v4268
    %5794 = vmatprep.subr.bf16.mxu0 0
    %5795 = vmatpush1.bf16.msra.mxu0 %v4269
    %5796 = vmatprep.subr.bf16.mxu0 0
    %5797 = vmatpush1.bf16.msra.mxu0 %v4270
    %5798 = vmatprep.subr.bf16.mxu0 0
    %5799 = vmatpush1.bf16.msra.mxu0 %v4271
    %5800 = vmatprep.mubr.bf16.mxu0 %v1394
    %5801 = vmatmul.mubr.bf16.gmra.mrb[0].mxu0 %v1392
    %v5802 = vpop.f32.mrb[0].mxu0
    %v5803 = vadd.f32 %v5763, %v5802
    %v5804 = vpop.f32.mrb[0].mxu0
    %v5805 = vpop.f32.mrb[0].mxu0
    %v5806 = vpop.f32.mrb[0].mxu0
    %5807 = vdwg.mxu0
    %5808 = vmatprep.subr.bf16.mxu0 0
    %5809 = vmatpush1.bf16.msra.mxu0 %v4272
    %5810 = vmatprep.subr.bf16.mxu0 0
    %5811 = vmatpush1.bf16.msra.mxu0 %v4273
    %5812 = vmatprep.subr.bf16.mxu0 0
    %5813 = vmatpush1.bf16.msra.mxu0 %v4274
    %5814 = vmatprep.subr.bf16.mxu0 0
    %5815 = vmatpush1.bf16.msra.mxu0 %v4275
    %5816 = vmatprep.subr.bf16.mxu0 0
    %5817 = vmatpush1.bf16.msra.mxu0 %v4276
    %5818 = vmatprep.subr.bf16.mxu0 0
    %5819 = vmatpush1.bf16.msra.mxu0 %v4277
    %5820 = vmatprep.subr.bf16.mxu0 0
    %5821 = vmatpush1.bf16.msra.mxu0 %v4278
    %5822 = vmatprep.subr.bf16.mxu0 0
    %5823 = vmatpush1.bf16.msra.mxu0 %v4279
    %5824 = vmatprep.subr.bf16.mxu0 0
    %5825 = vmatpush1.bf16.msra.mxu0 %v4280
    %5826 = vmatprep.subr.bf16.mxu0 0
    %5827 = vmatpush1.bf16.msra.mxu0 %v4281
    %5828 = vmatprep.subr.bf16.mxu0 0
    %5829 = vmatpush1.bf16.msra.mxu0 %v4282
    %5830 = vmatprep.subr.bf16.mxu0 0
    %5831 = vmatpush1.bf16.msra.mxu0 %v4283
    %5832 = vmatprep.subr.bf16.mxu0 0
    %5833 = vmatpush1.bf16.msra.mxu0 %v4284
    %5834 = vmatprep.subr.bf16.mxu0 0
    %5835 = vmatpush1.bf16.msra.mxu0 %v4285
    %5836 = vmatprep.subr.bf16.mxu0 0
    %5837 = vmatpush1.bf16.msra.mxu0 %v4286
    %5838 = vmatprep.subr.bf16.mxu0 0
    %5839 = vmatpush1.bf16.msra.mxu0 %v4287
    %5840 = vmatprep.mubr.bf16.mxu0 %v1432
    %5841 = vmatmul.mubr.bf16.gmra.mrb[0].mxu0 %v1418
    %v5842 = vpop.f32.mrb[0].mxu0
    %v5843 = vadd.f32 %v5803, %v5842
    %v5844 = vpop.f32.mrb[0].mxu0
    %v5845 = vpop.f32.mrb[0].mxu0
    %v5846 = vpop.f32.mrb[0].mxu0
    %5847 = vdwg.mxu0
    %5848 = vmatprep.subr.bf16.mxu0 0
    %5849 = vmatpush1.bf16.msra.mxu0 %v4288
    %5850 = vmatprep.subr.bf16.mxu0 0
    %5851 = vmatpush1.bf16.msra.mxu0 %v4289
    %5852 = vmatprep.subr.bf16.mxu0 0
    %5853 = vmatpush1.bf16.msra.mxu0 %v4290
    %5854 = vmatprep.subr.bf16.mxu0 0
    %5855 = vmatpush1.bf16.msra.mxu0 %v4291
    %5856 = vmatprep.subr.bf16.mxu0 0
    %5857 = vmatpush1.bf16.msra.mxu0 %v4292
    %5858 = vmatprep.subr.bf16.mxu0 0
    %5859 = vmatpush1.bf16.msra.mxu0 %v4293
    %5860 = vmatprep.subr.bf16.mxu0 0
    %5861 = vmatpush1.bf16.msra.mxu0 %v4294
    %5862 = vmatprep.subr.bf16.mxu0 0
    %5863 = vmatpush1.bf16.msra.mxu0 %v4295
    %5864 = vmatprep.subr.bf16.mxu0 0
    %5865 = vmatpush1.bf16.msra.mxu0 %v4296
    %5866 = vmatprep.subr.bf16.mxu0 0
    %5867 = vmatpush1.bf16.msra.mxu0 %v4297
    %5868 = vmatprep.subr.bf16.mxu0 0
    %5869 = vmatpush1.bf16.msra.mxu0 %v4298
    %5870 = vmatprep.subr.bf16.mxu0 0
    %5871 = vmatpush1.bf16.msra.mxu0 %v4299
    %5872 = vmatprep.subr.bf16.mxu0 0
    %5873 = vmatpush1.bf16.msra.mxu0 %v4300
    %5874 = vmatprep.subr.bf16.mxu0 0
    %5875 = vmatpush1.bf16.msra.mxu0 %v4301
    %5876 = vmatprep.subr.bf16.mxu0 0
    %5877 = vmatpush1.bf16.msra.mxu0 %v4302
    %5878 = vmatprep.subr.bf16.mxu0 0
    %5879 = vmatpush1.bf16.msra.mxu0 %v4303
    %5880 = vmatprep.mubr.bf16.mxu0 %v1442
    %5881 = vmatmul.mubr.bf16.gmra.mrb[0].mxu0 %v1440
    %v5882 = vpop.f32.mrb[0].mxu0
    %v5883 = vadd.f32 %v5843, %v5882
    %v5884 = vpop.f32.mrb[0].mxu0
    %v5885 = vpop.f32.mrb[0].mxu0
    %v5886 = vpop.f32.mrb[0].mxu0
    %5887 = vdwg.mxu0
    %5888 = vmatprep.subr.bf16.mxu0 0
    %5889 = vmatpush1.bf16.msra.mxu0 %v4304
    %5890 = vmatprep.subr.bf16.mxu0 0
    %5891 = vmatpush1.bf16.msra.mxu0 %v4305
    %5892 = vmatprep.subr.bf16.mxu0 0
    %5893 = vmatpush1.bf16.msra.mxu0 %v4306
    %5894 = vmatprep.subr.bf16.mxu0 0
    %5895 = vmatpush1.bf16.msra.mxu0 %v4307
    %5896 = vmatprep.subr.bf16.mxu0 0
    %5897 = vmatpush1.bf16.msra.mxu0 %v4308
    %5898 = vmatprep.subr.bf16.mxu0 0
    %5899 = vmatpush1.bf16.msra.mxu0 %v4309
    %5900 = vmatprep.subr.bf16.mxu0 0
    %5901 = vmatpush1.bf16.msra.mxu0 %v4310
    %5902 = vmatprep.subr.bf16.mxu0 0
    %5903 = vmatpush1.bf16.msra.mxu0 %v4311
    %5904 = vmatprep.subr.bf16.mxu0 0
    %5905 = vmatpush1.bf16.msra.mxu0 %v4312
    %5906 = vmatprep.subr.bf16.mxu0 0
    %5907 = vmatpush1.bf16.msra.mxu0 %v4313
    %5908 = vmatprep.subr.bf16.mxu0 0
    %5909 = vmatpush1.bf16.msra.mxu0 %v4314
    %5910 = vmatprep.subr.bf16.mxu0 0
    %5911 = vmatpush1.bf16.msra.mxu0 %v4315
    %5912 = vmatprep.subr.bf16.mxu0 0
    %5913 = vmatpush1.bf16.msra.mxu0 %v4316
    %5914 = vmatprep.subr.bf16.mxu0 0
    %5915 = vmatpush1.bf16.msra.mxu0 %v4317
    %5916 = vmatprep.subr.bf16.mxu0 0
    %5917 = vmatpush1.bf16.msra.mxu0 %v4318
    %5918 = vmatprep.subr.bf16.mxu0 0
    %5919 = vmatpush1.bf16.msra.mxu0 %v4319
    %5920 = vmatprep.mubr.bf16.mxu0 %v1439
    %5921 = vmatmul.mubr.bf16.gmra.mrb[0].mxu0 %v1425
    %v5922 = vpop.f32.mrb[0].mxu0
    %v5923 = vadd.f32 %v5883, %v5922
    %v5924 = vpop.f32.mrb[0].mxu0
    %v5925 = vpop.f32.mrb[0].mxu0
    %v5926 = vpop.f32.mrb[0].mxu0
    %5927 = vdwg.mxu0
    %5928 = vmatprep.subr.bf16.mxu0 0
    %5929 = vmatpush1.bf16.msra.mxu0 %v4320
    %5930 = vmatprep.subr.bf16.mxu0 0
    %5931 = vmatpush1.bf16.msra.mxu0 %v4321
    %5932 = vmatprep.subr.bf16.mxu0 0
    %5933 = vmatpush1.bf16.msra.mxu0 %v4322
    %5934 = vmatprep.subr.bf16.mxu0 0
    %5935 = vmatpush1.bf16.msra.mxu0 %v4323
    %5936 = vmatprep.subr.bf16.mxu0 0
    %5937 = vmatpush1.bf16.msra.mxu0 %v4324
    %5938 = vmatprep.subr.bf16.mxu0 0
    %5939 = vmatpush1.bf16.msra.mxu0 %v4325
    %5940 = vmatprep.subr.bf16.mxu0 0
    %5941 = vmatpush1.bf16.msra.mxu0 %v4326
    %5942 = vmatprep.subr.bf16.mxu0 0
    %5943 = vmatpush1.bf16.msra.mxu0 %v4327
    %5944 = vmatprep.subr.bf16.mxu0 0
    %5945 = vmatpush1.bf16.msra.mxu0 %v4328
    %5946 = vmatprep.subr.bf16.mxu0 0
    %5947 = vmatpush1.bf16.msra.mxu0 %v4329
    %5948 = vmatprep.subr.bf16.mxu0 0
    %5949 = vmatpush1.bf16.msra.mxu0 %v4330
    %5950 = vmatprep.subr.bf16.mxu0 0
    %5951 = vmatpush1.bf16.msra.mxu0 %v4331
    %5952 = vmatprep.subr.bf16.mxu0 0
    %5953 = vmatpush1.bf16.msra.mxu0 %v4332
    %5954 = vmatprep.subr.bf16.mxu0 0
    %5955 = vmatpush1.bf16.msra.mxu0 %v4333
    %5956 = vmatprep.subr.bf16.mxu0 0
    %5957 = vmatpush1.bf16.msra.mxu0 %v4334
    %5958 = vmatprep.subr.bf16.mxu0 0
    %5959 = vmatpush1.bf16.msra.mxu0 %v4335
    %5960 = vmatprep.mubr.bf16.mxu0 %v1443
    %5961 = vmatmul.mubr.bf16.gmra.mrb[0].mxu0 %v1441
    %v5962 = vpop.f32.mrb[0].mxu0
    %v5963 = vadd.f32 %v5923, %v5962
    %v5964 = vpop.f32.mrb[0].mxu0
    %v5965 = vpop.f32.mrb[0].mxu0
    %v5966 = vpop.f32.mrb[0].mxu0
    %5967 = vdwg.mxu0
    %5968 = vmatprep.subr.bf16.mxu0 0
    %5969 = vmatpush1.bf16.msra.mxu0 %v4336
    %5970 = vmatprep.subr.bf16.mxu0 0
    %5971 = vmatpush1.bf16.msra.mxu0 %v4337
    %5972 = vmatprep.subr.bf16.mxu0 0
    %5973 = vmatpush1.bf16.msra.mxu0 %v4338
    %5974 = vmatprep.subr.bf16.mxu0 0
    %5975 = vmatpush1.bf16.msra.mxu0 %v4339
    %5976 = vmatprep.subr.bf16.mxu0 0
    %5977 = vmatpush1.bf16.msra.mxu0 %v4340
    %5978 = vmatprep.subr.bf16.mxu0 0
    %5979 = vmatpush1.bf16.msra.mxu0 %v4341
    %5980 = vmatprep.subr.bf16.mxu0 0
    %5981 = vmatpush1.bf16.msra.mxu0 %v4342
    %5982 = vmatprep.subr.bf16.mxu0 0
    %5983 = vmatpush1.bf16.msra.mxu0 %v4343
    %5984 = vmatprep.subr.bf16.mxu0 0
    %5985 = vmatpush1.bf16.msra.mxu0 %v4344
    %5986 = vmatprep.subr.bf16.mxu0 0
    %5987 = vmatpush1.bf16.msra.mxu0 %v4345
    %5988 = vmatprep.subr.bf16.mxu0 0
    %5989 = vmatpush1.bf16.msra.mxu0 %v4346
    %5990 = vmatprep.subr.bf16.mxu0 0
    %5991 = vmatpush1.bf16.msra.mxu0 %v4347
    %5992 = vmatprep.subr.bf16.mxu0 0
    %5993 = vmatpush1.bf16.msra.mxu0 %v4348
    %5994 = vmatprep.subr.bf16.mxu0 0
    %5995 = vmatpush1.bf16.msra.mxu0 %v4349
    %5996 = vmatprep.subr.bf16.mxu0 0
    %5997 = vmatpush1.bf16.msra.mxu0 %v4350
    %5998 = vmatprep.subr.bf16.mxu0 0
    %5999 = vmatpush1.bf16.msra.mxu0 %v4351
    %6000 = vmatprep.mubr.bf16.mxu0 %v1481
    %6001 = vmatmul.mubr.bf16.gmra.mrb[0].mxu0 %v1467
    %v6002 = vpop.f32.mrb[0].mxu0
    %v6003 = vadd.f32 %v5963, %v6002
    %v6004 = vpop.f32.mrb[0].mxu0
    %v6005 = vpop.f32.mrb[0].mxu0
    %v6006 = vpop.f32.mrb[0].mxu0
    %6007 = vdwg.mxu0
    %6008 = vmatprep.subr.bf16.mxu0 0
    %6009 = vmatpush1.bf16.msra.mxu0 %v4352
    %6010 = vmatprep.subr.bf16.mxu0 0
    %6011 = vmatpush1.bf16.msra.mxu0 %v4353
    %6012 = vmatprep.subr.bf16.mxu0 0
    %6013 = vmatpush1.bf16.msra.mxu0 %v4354
    %6014 = vmatprep.subr.bf16.mxu0 0
    %6015 = vmatpush1.bf16.msra.mxu0 %v4355
    %6016 = vmatprep.subr.bf16.mxu0 0
    %6017 = vmatpush1.bf16.msra.mxu0 %v4356
    %6018 = vmatprep.subr.bf16.mxu0 0
    %6019 = vmatpush1.bf16.msra.mxu0 %v4357
    %6020 = vmatprep.subr.bf16.mxu0 0
    %6021 = vmatpush1.bf16.msra.mxu0 %v4358
    %6022 = vmatprep.subr.bf16.mxu0 0
    %6023 = vmatpush1.bf16.msra.mxu0 %v4359
    %6024 = vmatprep.subr.bf16.mxu0 0
    %6025 = vmatpush1.bf16.msra.mxu0 %v4360
    %6026 = vmatprep.subr.bf16.mxu0 0
    %6027 = vmatpush1.bf16.msra.mxu0 %v4361
    %6028 = vmatprep.subr.bf16.mxu0 0
    %6029 = vmatpush1.bf16.msra.mxu0 %v4362
    %6030 = vmatprep.subr.bf16.mxu0 0
    %6031 = vmatpush1.bf16.msra.mxu0 %v4363
    %6032 = vmatprep.subr.bf16.mxu0 0
    %6033 = vmatpush1.bf16.msra.mxu0 %v4364
    %6034 = vmatprep.subr.bf16.mxu0 0
    %6035 = vmatpush1.bf16.msra.mxu0 %v4365
    %6036 = vmatprep.subr.bf16.mxu0 0
    %6037 = vmatpush1.bf16.msra.mxu0 %v4366
    %6038 = vmatprep.subr.bf16.mxu0 0
    %6039 = vmatpush1.bf16.msra.mxu0 %v4367
    %6040 = vmatprep.mubr.bf16.mxu0 %v1491
    %6041 = vmatmul.mubr.bf16.gmra.mrb[0].mxu0 %v1489
    %v6042 = vpop.f32.mrb[0].mxu0
    %v6043 = vadd.f32 %v6003, %v6042
    %v6044 = vpop.f32.mrb[0].mxu0
    %v6045 = vpop.f32.mrb[0].mxu0
    %v6046 = vpop.f32.mrb[0].mxu0
    %6047 = vdwg.mxu0
    %6048 = vmatprep.subr.bf16.mxu0 0
    %6049 = vmatpush1.bf16.msra.mxu0 %v4368
    %6050 = vmatprep.subr.bf16.mxu0 0
    %6051 = vmatpush1.bf16.msra.mxu0 %v4369
    %6052 = vmatprep.subr.bf16.mxu0 0
    %6053 = vmatpush1.bf16.msra.mxu0 %v4370
    %6054 = vmatprep.subr.bf16.mxu0 0
    %6055 = vmatpush1.bf16.msra.mxu0 %v4371
    %6056 = vmatprep.subr.bf16.mxu0 0
    %6057 = vmatpush1.bf16.msra.mxu0 %v4372
    %6058 = vmatprep.subr.bf16.mxu0 0
    %6059 = vmatpush1.bf16.msra.mxu0 %v4373
    %6060 = vmatprep.subr.bf16.mxu0 0
    %6061 = vmatpush1.bf16.msra.mxu0 %v4374
    %6062 = vmatprep.subr.bf16.mxu0 0
    %6063 = vmatpush1.bf16.msra.mxu0 %v4375
    %6064 = vmatprep.subr.bf16.mxu0 0
    %6065 = vmatpush1.bf16.msra.mxu0 %v4376
    %6066 = vmatprep.subr.bf16.mxu0 0
    %6067 = vmatpush1.bf16.msra.mxu0 %v4377
    %6068 = vmatprep.subr.bf16.mxu0 0
    %6069 = vmatpush1.bf16.msra.mxu0 %v4378
    %6070 = vmatprep.subr.bf16.mxu0 0
    %6071 = vmatpush1.bf16.msra.mxu0 %v4379
    %6072 = vmatprep.subr.bf16.mxu0 0
    %6073 = vmatpush1.bf16.msra.mxu0 %v4380
    %6074 = vmatprep.subr.bf16.mxu0 0
    %6075 = vmatpush1.bf16.msra.mxu0 %v4381
    %6076 = vmatprep.subr.bf16.mxu0 0
    %6077 = vmatpush1.bf16.msra.mxu0 %v4382
    %6078 = vmatprep.subr.bf16.mxu0 0
    %6079 = vmatpush1.bf16.msra.mxu0 %v4383
    %6080 = vmatprep.mubr.bf16.mxu0 %v1488
    %6081 = vmatmul.mubr.bf16.gmra.mrb[0].mxu0 %v1474
    %v6082 = vpop.f32.mrb[0].mxu0
    %v6083 = vadd.f32 %v6043, %v6082
    %v6084 = vpop.f32.mrb[0].mxu0
    %v6085 = vpop.f32.mrb[0].mxu0
    %v6086 = vpop.f32.mrb[0].mxu0
    %6087 = vdwg.mxu0
    %6088 = vmatprep.subr.bf16.mxu0 0
    %6089 = vmatpush1.bf16.msra.mxu0 %v4384
    %6090 = vmatprep.subr.bf16.mxu0 0
    %6091 = vmatpush1.bf16.msra.mxu0 %v4385
    %6092 = vmatprep.subr.bf16.mxu0 0
    %6093 = vmatpush1.bf16.msra.mxu0 %v4386
    %6094 = vmatprep.subr.bf16.mxu0 0
    %6095 = vmatpush1.bf16.msra.mxu0 %v4387
    %6096 = vmatprep.subr.bf16.mxu0 0
    %6097 = vmatpush1.bf16.msra.mxu0 %v4388
    %6098 = vmatprep.subr.bf16.mxu0 0
    %6099 = vmatpush1.bf16.msra.mxu0 %v4389
    %6100 = vmatprep.subr.bf16.mxu0 0
    %6101 = vmatpush1.bf16.msra.mxu0 %v4390
    %6102 = vmatprep.subr.bf16.mxu0 0
    %6103 = vmatpush1.bf16.msra.mxu0 %v4391
    %6104 = vmatprep.subr.bf16.mxu0 0
    %6105 = vmatpush1.bf16.msra.mxu0 %v4392
    %6106 = vmatprep.subr.bf16.mxu0 0
    %6107 = vmatpush1.bf16.msra.mxu0 %v4393
    %6108 = vmatprep.subr.bf16.mxu0 0
    %6109 = vmatpush1.bf16.msra.mxu0 %v4394
    %6110 = vmatprep.subr.bf16.mxu0 0
    %6111 = vmatpush1.bf16.msra.mxu0 %v4395
    %6112 = vmatprep.subr.bf16.mxu0 0
    %6113 = vmatpush1.bf16.msra.mxu0 %v4396
    %6114 = vmatprep.subr.bf16.mxu0 0
    %6115 = vmatpush1.bf16.msra.mxu0 %v4397
    %6116 = vmatprep.subr.bf16.mxu0 0
    %6117 = vmatpush1.bf16.msra.mxu0 %v4398
    %6118 = vmatprep.subr.bf16.mxu0 0
    %6119 = vmatpush1.bf16.msra.mxu0 %v4399
    %6120 = vmatprep.mubr.bf16.mxu0 %v1492
    %6121 = vmatmul.mubr.bf16.gmra.mrb[0].mxu0 %v1490
    %v6122 = vpop.f32.mrb[0].mxu0
    %v6123 = vadd.f32 %v6083, %v6122
    %v6124 = vpop.f32.mrb[0].mxu0
    %v6125 = vpop.f32.mrb[0].mxu0
    %v6126 = vpop.f32.mrb[0].mxu0
    %6127 = vdwg.mxu0
    %6128 = vmatprep.subr.bf16.mxu0 0
    %6129 = vmatpush1.bf16.msra.mxu0 %v4400
    %6130 = vmatprep.subr.bf16.mxu0 0
    %6131 = vmatpush1.bf16.msra.mxu0 %v4401
    %6132 = vmatprep.subr.bf16.mxu0 0
    %6133 = vmatpush1.bf16.msra.mxu0 %v4402
    %6134 = vmatprep.subr.bf16.mxu0 0
    %6135 = vmatpush1.bf16.msra.mxu0 %v4403
    %6136 = vmatprep.subr.bf16.mxu0 0
    %6137 = vmatpush1.bf16.msra.mxu0 %v4404
    %6138 = vmatprep.subr.bf16.mxu0 0
    %6139 = vmatpush1.bf16.msra.mxu0 %v4405
    %6140 = vmatprep.subr.bf16.mxu0 0
    %6141 = vmatpush1.bf16.msra.mxu0 %v4406
    %6142 = vmatprep.subr.bf16.mxu0 0
    %6143 = vmatpush1.bf16.msra.mxu0 %v4407
    %6144 = vmatprep.subr.bf16.mxu0 0
    %6145 = vmatpush1.bf16.msra.mxu0 %v4408
    %6146 = vmatprep.subr.bf16.mxu0 0
    %6147 = vmatpush1.bf16.msra.mxu0 %v4409
    %6148 = vmatprep.subr.bf16.mxu0 0
    %6149 = vmatpush1.bf16.msra.mxu0 %v4410
    %6150 = vmatprep.subr.bf16.mxu0 0
    %6151 = vmatpush1.bf16.msra.mxu0 %v4411
    %6152 = vmatprep.subr.bf16.mxu0 0
    %6153 = vmatpush1.bf16.msra.mxu0 %v4412
    %6154 = vmatprep.subr.bf16.mxu0 0
    %6155 = vmatpush1.bf16.msra.mxu0 %v4413
    %6156 = vmatprep.subr.bf16.mxu0 0
    %6157 = vmatpush1.bf16.msra.mxu0 %v4414
    %6158 = vmatprep.subr.bf16.mxu0 0
    %6159 = vmatpush1.bf16.msra.mxu0 %v4415
    %6160 = vmatprep.mubr.bf16.mxu0 %v1530
    %6161 = vmatmul.mubr.bf16.gmra.mrb[0].mxu0 %v1516
    %v6162 = vpop.f32.mrb[0].mxu0
    %v6163 = vadd.f32 %v6123, %v6162
    %v6164 = vpop.f32.mrb[0].mxu0
    %v6165 = vpop.f32.mrb[0].mxu0
    %v6166 = vpop.f32.mrb[0].mxu0
    %6167 = vdwg.mxu0
    %6168 = vmatprep.subr.bf16.mxu0 0
    %6169 = vmatpush1.bf16.msra.mxu0 %v4416
    %6170 = vmatprep.subr.bf16.mxu0 0
    %6171 = vmatpush1.bf16.msra.mxu0 %v4417
    %6172 = vmatprep.subr.bf16.mxu0 0
    %6173 = vmatpush1.bf16.msra.mxu0 %v4418
    %6174 = vmatprep.subr.bf16.mxu0 0
    %6175 = vmatpush1.bf16.msra.mxu0 %v4419
    %6176 = vmatprep.subr.bf16.mxu0 0
    %6177 = vmatpush1.bf16.msra.mxu0 %v4420
    %6178 = vmatprep.subr.bf16.mxu0 0
    %6179 = vmatpush1.bf16.msra.mxu0 %v4421
    %6180 = vmatprep.subr.bf16.mxu0 0
    %6181 = vmatpush1.bf16.msra.mxu0 %v4422
    %6182 = vmatprep.subr.bf16.mxu0 0
    %6183 = vmatpush1.bf16.msra.mxu0 %v4423
    %6184 = vmatprep.subr.bf16.mxu0 0
    %6185 = vmatpush1.bf16.msra.mxu0 %v4424
    %6186 = vmatprep.subr.bf16.mxu0 0
    %6187 = vmatpush1.bf16.msra.mxu0 %v4425
    %6188 = vmatprep.subr.bf16.mxu0 0
    %6189 = vmatpush1.bf16.msra.mxu0 %v4426
    %6190 = vmatprep.subr.bf16.mxu0 0
    %6191 = vmatpush1.bf16.msra.mxu0 %v4427
    %6192 = vmatprep.subr.bf16.mxu0 0
    %6193 = vmatpush1.bf16.msra.mxu0 %v4428
    %6194 = vmatprep.subr.bf16.mxu0 0
    %6195 = vmatpush1.bf16.msra.mxu0 %v4429
    %6196 = vmatprep.subr.bf16.mxu0 0
    %6197 = vmatpush1.bf16.msra.mxu0 %v4430
    %6198 = vmatprep.subr.bf16.mxu0 0
    %6199 = vmatpush1.bf16.msra.mxu0 %v4431
    %6200 = vmatprep.mubr.bf16.mxu0 %v1540
    %6201 = vmatmul.mubr.bf16.gmra.mrb[0].mxu0 %v1538
    %v6202 = vpop.f32.mrb[0].mxu0
    %v6203 = vadd.f32 %v6163, %v6202
    %v6204 = vpop.f32.mrb[0].mxu0
    %v6205 = vpop.f32.mrb[0].mxu0
    %v6206 = vpop.f32.mrb[0].mxu0
    %6207 = vdwg.mxu0
    %6208 = vmatprep.subr.bf16.mxu0 0
    %6209 = vmatpush1.bf16.msra.mxu0 %v4432
    %6210 = vmatprep.subr.bf16.mxu0 0
    %6211 = vmatpush1.bf16.msra.mxu0 %v4433
    %6212 = vmatprep.subr.bf16.mxu0 0
    %6213 = vmatpush1.bf16.msra.mxu0 %v4434
    %6214 = vmatprep.subr.bf16.mxu0 0
    %6215 = vmatpush1.bf16.msra.mxu0 %v4435
    %6216 = vmatprep.subr.bf16.mxu0 0
    %6217 = vmatpush1.bf16.msra.mxu0 %v4436
    %6218 = vmatprep.subr.bf16.mxu0 0
    %6219 = vmatpush1.bf16.msra.mxu0 %v4437
    %6220 = vmatprep.subr.bf16.mxu0 0
    %6221 = vmatpush1.bf16.msra.mxu0 %v4438
    %6222 = vmatprep.subr.bf16.mxu0 0
    %6223 = vmatpush1.bf16.msra.mxu0 %v4439
    %6224 = vmatprep.subr.bf16.mxu0 0
    %6225 = vmatpush1.bf16.msra.mxu0 %v4440
    %6226 = vmatprep.subr.bf16.mxu0 0
    %6227 = vmatpush1.bf16.msra.mxu0 %v4441
    %6228 = vmatprep.subr.bf16.mxu0 0
    %6229 = vmatpush1.bf16.msra.mxu0 %v4442
    %6230 = vmatprep.subr.bf16.mxu0 0
    %6231 = vmatpush1.bf16.msra.mxu0 %v4443
    %6232 = vmatprep.subr.bf16.mxu0 0
    %6233 = vmatpush1.bf16.msra.mxu0 %v4444
    %6234 = vmatprep.subr.bf16.mxu0 0
    %6235 = vmatpush1.bf16.msra.mxu0 %v4445
    %6236 = vmatprep.subr.bf16.mxu0 0
    %6237 = vmatpush1.bf16.msra.mxu0 %v4446
    %6238 = vmatprep.subr.bf16.mxu0 0
    %6239 = vmatpush1.bf16.msra.mxu0 %v4447
    %6240 = vmatprep.mubr.bf16.mxu0 %v1537
    %6241 = vmatmul.mubr.bf16.gmra.mrb[0].mxu0 %v1523
    %v6242 = vpop.f32.mrb[0].mxu0
    %v6243 = vadd.f32 %v6203, %v6242
    %v6244 = vpop.f32.mrb[0].mxu0
    %v6245 = vpop.f32.mrb[0].mxu0
    %v6246 = vpop.f32.mrb[0].mxu0
    %6247 = vdwg.mxu0
    %6248 = vmatprep.subr.bf16.mxu0 0
    %6249 = vmatpush1.bf16.msra.mxu0 %v4448
    %6250 = vmatprep.subr.bf16.mxu0 0
    %6251 = vmatpush1.bf16.msra.mxu0 %v4449
    %6252 = vmatprep.subr.bf16.mxu0 0
    %6253 = vmatpush1.bf16.msra.mxu0 %v4450
    %6254 = vmatprep.subr.bf16.mxu0 0
    %6255 = vmatpush1.bf16.msra.mxu0 %v4451
    %6256 = vmatprep.subr.bf16.mxu0 0
    %6257 = vmatpush1.bf16.msra.mxu0 %v4452
    %6258 = vmatprep.subr.bf16.mxu0 0
    %6259 = vmatpush1.bf16.msra.mxu0 %v4453
    %6260 = vmatprep.subr.bf16.mxu0 0
    %6261 = vmatpush1.bf16.msra.mxu0 %v4454
    %6262 = vmatprep.subr.bf16.mxu0 0
    %6263 = vmatpush1.bf16.msra.mxu0 %v4455
    %6264 = vmatprep.subr.bf16.mxu0 0
    %6265 = vmatpush1.bf16.msra.mxu0 %v4456
    %6266 = vmatprep.subr.bf16.mxu0 0
    %6267 = vmatpush1.bf16.msra.mxu0 %v4457
    %6268 = vmatprep.subr.bf16.mxu0 0
    %6269 = vmatpush1.bf16.msra.mxu0 %v4458
    %6270 = vmatprep.subr.bf16.mxu0 0
    %6271 = vmatpush1.bf16.msra.mxu0 %v4459
    %6272 = vmatprep.subr.bf16.mxu0 0
    %6273 = vmatpush1.bf16.msra.mxu0 %v4460
    %6274 = vmatprep.subr.bf16.mxu0 0
    %6275 = vmatpush1.bf16.msra.mxu0 %v4461
    %6276 = vmatprep.subr.bf16.mxu0 0
    %6277 = vmatpush1.bf16.msra.mxu0 %v4462
    %6278 = vmatprep.subr.bf16.mxu0 0
    %6279 = vmatpush1.bf16.msra.mxu0 %v4463
    %6280 = vmatprep.mubr.bf16.mxu0 %v1541
    %6281 = vmatmul.mubr.bf16.gmra.mrb[0].mxu0 %v1539
    %v6282 = vpop.f32.mrb[0].mxu0
    %v6283 = vadd.f32 %v6243, %v6282
    %v6284 = vpop.f32.mrb[0].mxu0
    %v6285 = vpop.f32.mrb[0].mxu0
    %v6286 = vpop.f32.mrb[0].mxu0
    %6287 = vdwg.mxu0
    %6288 = vmatprep.subr.bf16.mxu0 0
    %6289 = vmatpush1.bf16.msra.mxu0 %v4464
    %6290 = vmatprep.subr.bf16.mxu0 0
    %6291 = vmatpush1.bf16.msra.mxu0 %v4465
    %6292 = vmatprep.subr.bf16.mxu0 0
    %6293 = vmatpush1.bf16.msra.mxu0 %v4466
    %6294 = vmatprep.subr.bf16.mxu0 0
    %6295 = vmatpush1.bf16.msra.mxu0 %v4467
    %6296 = vmatprep.subr.bf16.mxu0 0
    %6297 = vmatpush1.bf16.msra.mxu0 %v4468
    %6298 = vmatprep.subr.bf16.mxu0 0
    %6299 = vmatpush1.bf16.msra.mxu0 %v4469
    %6300 = vmatprep.subr.bf16.mxu0 0
    %6301 = vmatpush1.bf16.msra.mxu0 %v4470
    %6302 = vmatprep.subr.bf16.mxu0 0
    %6303 = vmatpush1.bf16.msra.mxu0 %v4471
    %6304 = vmatprep.subr.bf16.mxu0 0
    %6305 = vmatpush1.bf16.msra.mxu0 %v4472
    %6306 = vmatprep.subr.bf16.mxu0 0
    %6307 = vmatpush1.bf16.msra.mxu0 %v4473
    %6308 = vmatprep.subr.bf16.mxu0 0
    %6309 = vmatpush1.bf16.msra.mxu0 %v4474
    %6310 = vmatprep.subr.bf16.mxu0 0
    %6311 = vmatpush1.bf16.msra.mxu0 %v4475
    %6312 = vmatprep.subr.bf16.mxu0 0
    %6313 = vmatpush1.bf16.msra.mxu0 %v4476
    %6314 = vmatprep.subr.bf16.mxu0 0
    %6315 = vmatpush1.bf16.msra.mxu0 %v4477
    %6316 = vmatprep.subr.bf16.mxu0 0
    %6317 = vmatpush1.bf16.msra.mxu0 %v4478
    %6318 = vmatprep.subr.bf16.mxu0 0
    %6319 = vmatpush1.bf16.msra.mxu0 %v4479
    %6320 = vmatprep.mubr.bf16.mxu0 %v1579
    %6321 = vmatmul.mubr.bf16.gmra.mrb[0].mxu0 %v1565
    %v6322 = vpop.f32.mrb[0].mxu0
    %v6323 = vadd.f32 %v6283, %v6322
    %v6324 = vpop.f32.mrb[0].mxu0
    %v6325 = vpop.f32.mrb[0].mxu0
    %v6326 = vpop.f32.mrb[0].mxu0
    %6327 = vdwg.mxu0
    %6328 = vmatprep.subr.bf16.mxu0 0
    %6329 = vmatpush1.bf16.msra.mxu0 %v4480
    %6330 = vmatprep.subr.bf16.mxu0 0
    %6331 = vmatpush1.bf16.msra.mxu0 %v4481
    %6332 = vmatprep.subr.bf16.mxu0 0
    %6333 = vmatpush1.bf16.msra.mxu0 %v4482
    %6334 = vmatprep.subr.bf16.mxu0 0
    %6335 = vmatpush1.bf16.msra.mxu0 %v4483
    %6336 = vmatprep.subr.bf16.mxu0 0
    %6337 = vmatpush1.bf16.msra.mxu0 %v4484
    %6338 = vmatprep.subr.bf16.mxu0 0
    %6339 = vmatpush1.bf16.msra.mxu0 %v4485
    %6340 = vmatprep.subr.bf16.mxu0 0
    %6341 = vmatpush1.bf16.msra.mxu0 %v4486
    %6342 = vmatprep.subr.bf16.mxu0 0
    %6343 = vmatpush1.bf16.msra.mxu0 %v4487
    %6344 = vmatprep.subr.bf16.mxu0 0
    %6345 = vmatpush1.bf16.msra.mxu0 %v4488
    %6346 = vmatprep.subr.bf16.mxu0 0
    %6347 = vmatpush1.bf16.msra.mxu0 %v4489
    %6348 = vmatprep.subr.bf16.mxu0 0
    %6349 = vmatpush1.bf16.msra.mxu0 %v4490
    %6350 = vmatprep.subr.bf16.mxu0 0
    %6351 = vmatpush1.bf16.msra.mxu0 %v4491
    %6352 = vmatprep.subr.bf16.mxu0 0
    %6353 = vmatpush1.bf16.msra.mxu0 %v4492
    %6354 = vmatprep.subr.bf16.mxu0 0
    %6355 = vmatpush1.bf16.msra.mxu0 %v4493
    %6356 = vmatprep.subr.bf16.mxu0 0
    %6357 = vmatpush1.bf16.msra.mxu0 %v4494
    %6358 = vmatprep.subr.bf16.mxu0 0
    %6359 = vmatpush1.bf16.msra.mxu0 %v4495
    %6360 = vmatprep.mubr.bf16.mxu0 %v1589
    %6361 = vmatmul.mubr.bf16.gmra.mrb[0].mxu0 %v1587
    %v6362 = vpop.f32.mrb[0].mxu0
    %v6363 = vadd.f32 %v6323, %v6362
    %v6364 = vpop.f32.mrb[0].mxu0
    %v6365 = vpop.f32.mrb[0].mxu0
    %v6366 = vpop.f32.mrb[0].mxu0
    %6367 = vdwg.mxu0
    %6368 = vmatprep.subr.bf16.mxu0 0
    %6369 = vmatpush1.bf16.msra.mxu0 %v4496
    %6370 = vmatprep.subr.bf16.mxu0 0
    %6371 = vmatpush1.bf16.msra.mxu0 %v4497
    %6372 = vmatprep.subr.bf16.mxu0 0
    %6373 = vmatpush1.bf16.msra.mxu0 %v4498
    %6374 = vmatprep.subr.bf16.mxu0 0
    %6375 = vmatpush1.bf16.msra.mxu0 %v4499
    %6376 = vmatprep.subr.bf16.mxu0 0
    %6377 = vmatpush1.bf16.msra.mxu0 %v4500
    %6378 = vmatprep.subr.bf16.mxu0 0
    %6379 = vmatpush1.bf16.msra.mxu0 %v4501
    %6380 = vmatprep.subr.bf16.mxu0 0
    %6381 = vmatpush1.bf16.msra.mxu0 %v4502
    %6382 = vmatprep.subr.bf16.mxu0 0
    %6383 = vmatpush1.bf16.msra.mxu0 %v4503
    %6384 = vmatprep.subr.bf16.mxu0 0
    %6385 = vmatpush1.bf16.msra.mxu0 %v4504
    %6386 = vmatprep.subr.bf16.mxu0 0
    %6387 = vmatpush1.bf16.msra.mxu0 %v4505
    %6388 = vmatprep.subr.bf16.mxu0 0
    %6389 = vmatpush1.bf16.msra.mxu0 %v4506
    %6390 = vmatprep.subr.bf16.mxu0 0
    %6391 = vmatpush1.bf16.msra.mxu0 %v4507
    %6392 = vmatprep.subr.bf16.mxu0 0
    %6393 = vmatpush1.bf16.msra.mxu0 %v4508
    %6394 = vmatprep.subr.bf16.mxu0 0
    %6395 = vmatpush1.bf16.msra.mxu0 %v4509
    %6396 = vmatprep.subr.bf16.mxu0 0
    %6397 = vmatpush1.bf16.msra.mxu0 %v4510
    %6398 = vmatprep.subr.bf16.mxu0 0
    %6399 = vmatpush1.bf16.msra.mxu0 %v4511
    %6400 = vmatprep.mubr.bf16.mxu0 %v1586
    %6401 = vmatmul.mubr.bf16.gmra.mrb[0].mxu0 %v1572
    %v6402 = vpop.f32.mrb[0].mxu0
    %v6403 = vadd.f32 %v6363, %v6402
    %v6404 = vpop.f32.mrb[0].mxu0
    %v6405 = vpop.f32.mrb[0].mxu0
    %v6406 = vpop.f32.mrb[0].mxu0
    %6407 = vdwg.mxu0
    %6408 = vmatprep.subr.bf16.mxu0 0
    %6409 = vmatpush1.bf16.msra.mxu0 %v4512
    %6410 = vmatprep.subr.bf16.mxu0 0
    %6411 = vmatpush1.bf16.msra.mxu0 %v4513
    %6412 = vmatprep.subr.bf16.mxu0 0
    %6413 = vmatpush1.bf16.msra.mxu0 %v4514
    %6414 = vmatprep.subr.bf16.mxu0 0
    %6415 = vmatpush1.bf16.msra.mxu0 %v4515
    %6416 = vmatprep.subr.bf16.mxu0 0
    %6417 = vmatpush1.bf16.msra.mxu0 %v4516
    %6418 = vmatprep.subr.bf16.mxu0 0
    %6419 = vmatpush1.bf16.msra.mxu0 %v4517
    %6420 = vmatprep.subr.bf16.mxu0 0
    %6421 = vmatpush1.bf16.msra.mxu0 %v4518
    %6422 = vmatprep.subr.bf16.mxu0 0
    %6423 = vmatpush1.bf16.msra.mxu0 %v4519
    %6424 = vmatprep.subr.bf16.mxu0 0
    %6425 = vmatpush1.bf16.msra.mxu0 %v4520
    %6426 = vmatprep.subr.bf16.mxu0 0
    %6427 = vmatpush1.bf16.msra.mxu0 %v4521
    %6428 = vmatprep.subr.bf16.mxu0 0
    %6429 = vmatpush1.bf16.msra.mxu0 %v4522
    %6430 = vmatprep.subr.bf16.mxu0 0
    %6431 = vmatpush1.bf16.msra.mxu0 %v4523
    %6432 = vmatprep.subr.bf16.mxu0 0
    %6433 = vmatpush1.bf16.msra.mxu0 %v4524
    %6434 = vmatprep.subr.bf16.mxu0 0
    %6435 = vmatpush1.bf16.msra.mxu0 %v4525
    %6436 = vmatprep.subr.bf16.mxu0 0
    %6437 = vmatpush1.bf16.msra.mxu0 %v4526
    %6438 = vmatprep.subr.bf16.mxu0 0
    %6439 = vmatpush1.bf16.msra.mxu0 %v4527
    %6440 = vmatprep.mubr.bf16.mxu0 %v1590
    %6441 = vmatmul.mubr.bf16.gmra.mrb[0].mxu0 %v1588
    %v6442 = vpop.f32.mrb[0].mxu0
    %v6443 = vadd.f32 %v6403, %v6442
    %v6444 = vpop.f32.mrb[0].mxu0
    %v6445 = vpop.f32.mrb[0].mxu0
    %v6446 = vpop.f32.mrb[0].mxu0
    %6447 = vdwg.mxu0
    %6448 = vmatprep.subr.bf16.mxu0 0
    %6449 = vmatpush1.bf16.msra.mxu0 %v4528
    %6450 = vmatprep.subr.bf16.mxu0 0
    %6451 = vmatpush1.bf16.msra.mxu0 %v4529
    %6452 = vmatprep.subr.bf16.mxu0 0
    %6453 = vmatpush1.bf16.msra.mxu0 %v4530
    %6454 = vmatprep.subr.bf16.mxu0 0
    %6455 = vmatpush1.bf16.msra.mxu0 %v4531
    %6456 = vmatprep.subr.bf16.mxu0 0
    %6457 = vmatpush1.bf16.msra.mxu0 %v4532
    %6458 = vmatprep.subr.bf16.mxu0 0
    %6459 = vmatpush1.bf16.msra.mxu0 %v4533
    %6460 = vmatprep.subr.bf16.mxu0 0
    %6461 = vmatpush1.bf16.msra.mxu0 %v4534
    %6462 = vmatprep.subr.bf16.mxu0 0
    %6463 = vmatpush1.bf16.msra.mxu0 %v4535
    %6464 = vmatprep.subr.bf16.mxu0 0
    %6465 = vmatpush1.bf16.msra.mxu0 %v4536
    %6466 = vmatprep.subr.bf16.mxu0 0
    %6467 = vmatpush1.bf16.msra.mxu0 %v4537
    %6468 = vmatprep.subr.bf16.mxu0 0
    %6469 = vmatpush1.bf16.msra.mxu0 %v4538
    %6470 = vmatprep.subr.bf16.mxu0 0
    %6471 = vmatpush1.bf16.msra.mxu0 %v4539
    %6472 = vmatprep.subr.bf16.mxu0 0
    %6473 = vmatpush1.bf16.msra.mxu0 %v4540
    %6474 = vmatprep.subr.bf16.mxu0 0
    %6475 = vmatpush1.bf16.msra.mxu0 %v4541
    %6476 = vmatprep.subr.bf16.mxu0 0
    %6477 = vmatpush1.bf16.msra.mxu0 %v4542
    %6478 = vmatprep.subr.bf16.mxu0 0
    %6479 = vmatpush1.bf16.msra.mxu0 %v4543
    %6480 = vmatprep.mubr.bf16.mxu0 %v1628
    %6481 = vmatmul.mubr.bf16.gmra.mrb[0].mxu0 %v1614
    %v6482 = vpop.f32.mrb[0].mxu0
    %v6483 = vadd.f32 %v6443, %v6482
    %v6484 = vpop.f32.mrb[0].mxu0
    %v6485 = vpop.f32.mrb[0].mxu0
    %v6486 = vpop.f32.mrb[0].mxu0
    %6487 = vdwg.mxu0
    %6488 = vmatprep.subr.bf16.mxu0 0
    %6489 = vmatpush1.bf16.msra.mxu0 %v4544
    %6490 = vmatprep.subr.bf16.mxu0 0
    %6491 = vmatpush1.bf16.msra.mxu0 %v4545
    %6492 = vmatprep.subr.bf16.mxu0 0
    %6493 = vmatpush1.bf16.msra.mxu0 %v4546
    %6494 = vmatprep.subr.bf16.mxu0 0
    %6495 = vmatpush1.bf16.msra.mxu0 %v4547
    %6496 = vmatprep.subr.bf16.mxu0 0
    %6497 = vmatpush1.bf16.msra.mxu0 %v4548
    %6498 = vmatprep.subr.bf16.mxu0 0
    %6499 = vmatpush1.bf16.msra.mxu0 %v4549
    %6500 = vmatprep.subr.bf16.mxu0 0
    %6501 = vmatpush1.bf16.msra.mxu0 %v4550
    %6502 = vmatprep.subr.bf16.mxu0 0
    %6503 = vmatpush1.bf16.msra.mxu0 %v4551
    %6504 = vmatprep.subr.bf16.mxu0 0
    %6505 = vmatpush1.bf16.msra.mxu0 %v4552
    %6506 = vmatprep.subr.bf16.mxu0 0
    %6507 = vmatpush1.bf16.msra.mxu0 %v4553
    %6508 = vmatprep.subr.bf16.mxu0 0
    %6509 = vmatpush1.bf16.msra.mxu0 %v4554
    %6510 = vmatprep.subr.bf16.mxu0 0
    %6511 = vmatpush1.bf16.msra.mxu0 %v4555
    %6512 = vmatprep.subr.bf16.mxu0 0
    %6513 = vmatpush1.bf16.msra.mxu0 %v4556
    %6514 = vmatprep.subr.bf16.mxu0 0
    %6515 = vmatpush1.bf16.msra.mxu0 %v4557
    %6516 = vmatprep.subr.bf16.mxu0 0
    %6517 = vmatpush1.bf16.msra.mxu0 %v4558
    %6518 = vmatprep.subr.bf16.mxu0 0
    %6519 = vmatpush1.bf16.msra.mxu0 %v4559
    %6520 = vmatprep.mubr.bf16.mxu0 %v1638
    %6521 = vmatmul.mubr.bf16.gmra.mrb[0].mxu0 %v1636
    %v6522 = vpop.f32.mrb[0].mxu0
    %v6523 = vadd.f32 %v6483, %v6522
    %v6524 = vpop.f32.mrb[0].mxu0
    %v6525 = vpop.f32.mrb[0].mxu0
    %v6526 = vpop.f32.mrb[0].mxu0
    %6527 = vdwg.mxu0
    %6528 = vmatprep.subr.bf16.mxu0 0
    %6529 = vmatpush1.bf16.msra.mxu0 %v4560
    %6530 = vmatprep.subr.bf16.mxu0 0
    %6531 = vmatpush1.bf16.msra.mxu0 %v4561
    %6532 = vmatprep.subr.bf16.mxu0 0
    %6533 = vmatpush1.bf16.msra.mxu0 %v4562
    %6534 = vmatprep.subr.bf16.mxu0 0
    %6535 = vmatpush1.bf16.msra.mxu0 %v4563
    %6536 = vmatprep.subr.bf16.mxu0 0
    %6537 = vmatpush1.bf16.msra.mxu0 %v4564
    %6538 = vmatprep.subr.bf16.mxu0 0
    %6539 = vmatpush1.bf16.msra.mxu0 %v4565
    %6540 = vmatprep.subr.bf16.mxu0 0
    %6541 = vmatpush1.bf16.msra.mxu0 %v4566
    %6542 = vmatprep.subr.bf16.mxu0 0
    %6543 = vmatpush1.bf16.msra.mxu0 %v4567
    %6544 = vmatprep.subr.bf16.mxu0 0
    %6545 = vmatpush1.bf16.msra.mxu0 %v4568
    %6546 = vmatprep.subr.bf16.mxu0 0
    %6547 = vmatpush1.bf16.msra.mxu0 %v4569
    %6548 = vmatprep.subr.bf16.mxu0 0
    %6549 = vmatpush1.bf16.msra.mxu0 %v4570
    %6550 = vmatprep.subr.bf16.mxu0 0
    %6551 = vmatpush1.bf16.msra.mxu0 %v4571
    %6552 = vmatprep.subr.bf16.mxu0 0
    %6553 = vmatpush1.bf16.msra.mxu0 %v4572
    %6554 = vmatprep.subr.bf16.mxu0 0
    %6555 = vmatpush1.bf16.msra.mxu0 %v4573
    %6556 = vmatprep.subr.bf16.mxu0 0
    %6557 = vmatpush1.bf16.msra.mxu0 %v4574
    %6558 = vmatprep.subr.bf16.mxu0 0
    %6559 = vmatpush1.bf16.msra.mxu0 %v4575
    %6560 = vmatprep.mubr.bf16.mxu0 %v1635
    %6561 = vmatmul.mubr.bf16.gmra.mrb[0].mxu0 %v1621
    %v6562 = vpop.f32.mrb[0].mxu0
    %v6563 = vadd.f32 %v6523, %v6562
    %v6564 = vpop.f32.mrb[0].mxu0
    %v6565 = vpop.f32.mrb[0].mxu0
    %v6566 = vpop.f32.mrb[0].mxu0
    %6567 = vdwg.mxu0
    %6568 = vmatprep.subr.bf16.mxu0 0
    %6569 = vmatpush1.bf16.msra.mxu0 %v4576
    %6570 = vmatprep.subr.bf16.mxu0 0
    %6571 = vmatpush1.bf16.msra.mxu0 %v4577
    %6572 = vmatprep.subr.bf16.mxu0 0
    %6573 = vmatpush1.bf16.msra.mxu0 %v4578
    %6574 = vmatprep.subr.bf16.mxu0 0
    %6575 = vmatpush1.bf16.msra.mxu0 %v4579
    %6576 = vmatprep.subr.bf16.mxu0 0
    %6577 = vmatpush1.bf16.msra.mxu0 %v4580
    %6578 = vmatprep.subr.bf16.mxu0 0
    %6579 = vmatpush1.bf16.msra.mxu0 %v4581
    %6580 = vmatprep.subr.bf16.mxu0 0
    %6581 = vmatpush1.bf16.msra.mxu0 %v4582
    %6582 = vmatprep.subr.bf16.mxu0 0
    %6583 = vmatpush1.bf16.msra.mxu0 %v4583
    %6584 = vmatprep.subr.bf16.mxu0 0
    %6585 = vmatpush1.bf16.msra.mxu0 %v4584
    %6586 = vmatprep.subr.bf16.mxu0 0
    %6587 = vmatpush1.bf16.msra.mxu0 %v4585
    %6588 = vmatprep.subr.bf16.mxu0 0
    %6589 = vmatpush1.bf16.msra.mxu0 %v4586
    %6590 = vmatprep.subr.bf16.mxu0 0
    %6591 = vmatpush1.bf16.msra.mxu0 %v4587
    %6592 = vmatprep.subr.bf16.mxu0 0
    %6593 = vmatpush1.bf16.msra.mxu0 %v4588
    %6594 = vmatprep.subr.bf16.mxu0 0
    %6595 = vmatpush1.bf16.msra.mxu0 %v4589
    %6596 = vmatprep.subr.bf16.mxu0 0
    %6597 = vmatpush1.bf16.msra.mxu0 %v4590
    %6598 = vmatprep.subr.bf16.mxu0 0
    %6599 = vmatpush1.bf16.msra.mxu0 %v4591
    %6600 = vmatprep.mubr.bf16.mxu0 %v1639
    %6601 = vmatmul.mubr.bf16.gmra.mrb[0].mxu0 %v1637
    %v6602 = vpop.f32.mrb[0].mxu0
    %v6603 = vadd.f32 %v6563, %v6602
    %v6604 = vpop.f32.mrb[0].mxu0
    %v6605 = vpop.f32.mrb[0].mxu0
    %v6606 = vpop.f32.mrb[0].mxu0
    %6607 = vdwg.mxu0
    %v6608 = vmax.f32 %v6603, 0.0
    %v6609 = vld [vmem:[%s3] sm:$0xff]
    %v6610 = vld [vmem:[%s3 + $0x8] sm:$0xff]
    %v6611 = vld [vmem:[%s3 + $0x10] sm:$0xff]
    %v6612 = vld [vmem:[%s3 + $0x18] sm:$0xff]
    %v6613 = vld [vmem:[%s3 + $0x20] sm:$0xff]
    %v6614 = vld [vmem:[%s3 + $0x28] sm:$0xff]
    %v6615 = vld [vmem:[%s3 + $0x30] sm:$0xff]
    %v6616 = vld [vmem:[%s3 + $0x38] sm:$0xff]
    %v6617 = vld [vmem:[%s3 + $0x40] sm:$0xff]
    %v6618 = vld [vmem:[%s3 + $0x48] sm:$0xff]
    %v6619 = vld [vmem:[%s3 + $0x50] sm:$0xff]
    %v6620 = vld [vmem:[%s3 + $0x58] sm:$0xff]
    %v6621 = vld [vmem:[%s3 + $0x60] sm:$0xff]
    %v6622 = vld [vmem:[%s3 + $0x68] sm:$0xff]
    %v6623 = vld [vmem:[%s3 + $0x70] sm:$0xff]
    %v6624 = vld [vmem:[%s3 + $0x78] sm:$0xff]
    %v6625 = vld [vmem:[%s4] sm:$0x1]
    %v6627 = vlaneseq
    %v6628 = vshrl.u32 %v6627, 7
    %v6629 = vsub.s32 0, %v6628
    %v6630 = vrot.slane %v6625, %v6629
    %6632 = vmatprep.subr.mxu0 0.0
    %6633 = vmatpush1.msra.mxu0 %v6609
    %6634 = vmatprep.subr.mxu0 0.0
    %6635 = vmatpush1.msra.mxu0 %v6610
    %6636 = vmatprep.subr.mxu0 0.0
    %6637 = vmatpush1.msra.mxu0 %v6611
    %6638 = vmatprep.subr.mxu0 0.0
    %6639 = vmatpush1.msra.mxu0 %v6612
    %6640 = vmatprep.subr.mxu0 0.0
    %6641 = vmatpush1.msra.mxu0 %v6613
    %6642 = vmatprep.subr.mxu0 0.0
    %6643 = vmatpush1.msra.mxu0 %v6614
    %6644 = vmatprep.subr.mxu0 0.0
    %6645 = vmatpush1.msra.mxu0 %v6615
    %6646 = vmatprep.subr.mxu0 0.0
    %6647 = vmatpush1.msra.mxu0 %v6616
    %6648 = vmatprep.subr.mxu0 0.0
    %6649 = vmatpush1.msra.mxu0 %v6617
    %6650 = vmatprep.subr.mxu0 0.0
    %6651 = vmatpush1.msra.mxu0 %v6618
    %6652 = vmatprep.subr.mxu0 0.0
    %6653 = vmatpush1.msra.mxu0 %v6619
    %6654 = vmatprep.subr.mxu0 0.0
    %6655 = vmatpush1.msra.mxu0 %v6620
    %6656 = vmatprep.subr.mxu0 0.0
    %6657 = vmatpush1.msra.mxu0 %v6621
    %6658 = vmatprep.subr.mxu0 0.0
    %6659 = vmatpush1.msra.mxu0 %v6622
    %6660 = vmatprep.subr.mxu0 0.0
    %6661 = vmatpush1.msra.mxu0 %v6623
    %6662 = vmatprep.subr.mxu0 0.0
    %6663 = vmatpush1.msra.mxu0 %v6624
    %6664 = vmatprep.subr.mxu0 0.0
    %6665 = vmatpush1.msra.mxu0 0.0
    %6666 = vmatprep.subr.mxu0 0.0
    %6667 = vmatpush1.msra.mxu0 0.0
    %6668 = vmatprep.subr.mxu0 0.0
    %6669 = vmatpush1.msra.mxu0 0.0
    %6670 = vmatprep.subr.mxu0 0.0
    %6671 = vmatpush1.msra.mxu0 0.0
    %6672 = vmatprep.subr.mxu0 0.0
    %6673 = vmatpush1.msra.mxu0 0.0
    %6674 = vmatprep.subr.mxu0 0.0
    %6675 = vmatpush1.msra.mxu0 0.0
    %6676 = vmatprep.subr.mxu0 0.0
    %6677 = vmatpush1.msra.mxu0 0.0
    %6678 = vmatprep.subr.mxu0 0.0
    %6679 = vmatpush1.msra.mxu0 0.0
    %6680 = vmatprep.subr.mxu0 0.0
    %6681 = vmatpush1.msra.mxu0 0.0
    %6682 = vmatprep.subr.mxu0 0.0
    %6683 = vmatpush1.msra.mxu0 0.0
    %6684 = vmatprep.subr.mxu0 0.0
    %6685 = vmatpush1.msra.mxu0 0.0
    %6686 = vmatprep.subr.mxu0 0.0
    %6687 = vmatpush1.msra.mxu0 0.0
    %6688 = vmatprep.subr.mxu0 0.0
    %6689 = vmatpush1.msra.mxu0 0.0
    %6690 = vmatprep.subr.mxu0 0.0
    %6691 = vmatpush1.msra.mxu0 0.0
    %6692 = vmatprep.subr.mxu0 0.0
    %6693 = vmatpush1.msra.mxu0 0.0
    %6694 = vmatprep.subr.mxu0 0.0
    %6695 = vmatpush1.msra.mxu0 0.0
    %6696 = vmatprep.mubr.f32.mxu0 0.0
    %6697 = vmatmul.mubr.f32.gmra.mrb[0].mxu0 %v6608
    %v6698 = vpop.f32.mrb[0].mxu0
    %v6699 = vadd.f32 %v6630, %v6698
    %v6700 = vpop.f32.mrb[0].mxu0
    %6701 = vdwg.mxu0
    %vm6702 = vcmask 74752
    %v6703 = vsel %vm6702, %v6699, -inf
    %6704 = vmax.xlane.f32.xlu0 %v6703
    %v6705 = vpop.xlane.xlu0 %6704
    %v6706 = vsub.f32 %v6699, %v6705
    %v6707 = vmul.f32 %v6706, 1.442695
    %v6708 = vpow.pop %v6707
    %v6709 = vsel %vm6702, %v6708, 0.0
    %6710 = vadd.xlane.f32.xlu0 %v6709
    %v6711 = vpop.xlane.xlu0 %6710
    %v6712 = vlog2.pop %v6711
    %v6713 = vmul.f32 %v6712, 0.6931472
    %v6714 = vsub.f32 %v6706, %v6713
    %6715 = vst.msk [vmem:[#allocation2] sm:$0x3] %vm6702, %v6714
    // Predicated region
    $region22: #{net_forward.3} parent=1 // pred_check
      _
    $region23: #{net_forward.3} parent=1 // pred_check_branch
      %6717 = sbr.rel (0) target = $region25
    $region24: #{net_forward.3} parent=1 // pred_region
      %s6719 = ssub.s32 32, 32
      %6720 = vsyncadd [#allocation3], %s6719
      %s6722 = sshll.u32 [#allocation2], 4
      %s6723 = int_to_ptr.vmem [resolvable:$true] %s6722
      %6725 = dma.vmem_to_hbm [thread:$0]  %s6723, 32, %s5, [#allocation3]
    $region25: #{net_forward.3} parent=1 // pred_fallthru
      _
    // Predicated region
    $region26: #{net_forward.3} parent=1 // pred_check
      _
    $region27: #{net_forward.3} parent=1 // pred_check_branch
      %6727 = sbr.rel (0) target = $region29
    $region28: #{net_forward.3} parent=1 // pred_region
      %6728 = dma.done [#allocation3], 32
    $region29: #{net_forward.3} parent=1 // pred_fallthru
      _
    %6729 = vsyncpa [#allocation3], 1

</llo_original>
